<compile_context>
chip_gen: v5e
topology: v5e:2x2
jax: 0.10.0
libtpu: 0.0.40
codegen_flags: <defaults>
</compile_context>

<pallas_src>
import functools

import jax
import jax.numpy as jnp
from jax.experimental import pallas as pl
from jax.experimental.pallas import tpu as pltpu

EPS = 1e-5
LANE = 128


# --------------------------------------------------------------------------
# Kernels
# --------------------------------------------------------------------------
def _conv_bn_stats_kernel(x_ref, w_ref, scale_ref, shift_ref,
                          out_ref, stats_ref,
                          pad_ref, col_ref, *, apply_affine_relu):
    """Per image: (optional BN-affine + relu) -> 3x3 conv as one im2col matmul.

    Writes the un-normalized conv output and per-channel partial BN stats
    (sum, sum of squares) so the wrapper can finish global mean/var.
    """
    _, H, W, Cp = x_ref.shape
    Hp, Wp = H + 2, W + 2

    x = x_ref[0]                                     # (H, W, Cp) f32
    if apply_affine_relu:
        scale = scale_ref[...].reshape(1, 1, Cp)
        shift = shift_ref[...].reshape(1, 1, Cp)
        x = jnp.maximum(x * scale + shift, 0.0)      # bn1 affine + relu (f32)
    y = x.astype(pad_ref.dtype)                      # bf16 MXU operand

    # Zero only the 1-pixel halo; the interior is fully overwritten below.
    zrow = jnp.zeros((1, Wp, Cp), pad_ref.dtype)
    zcol = jnp.zeros((Hp, 1, Cp), pad_ref.dtype)
    pad_ref[0:1, :, :] = zrow
    pad_ref[Hp - 1:Hp, :, :] = zrow
    pad_ref[:, 0:1, :] = zcol
    pad_ref[:, Wp - 1:Wp, :] = zcol
    pad_ref[1:H + 1, 1:W + 1, :] = y

    # im2col: 9 shifted taps -> (H*W, 9*Cp), each slot lane-aligned (k*Cp).
    for k in range(9):
        dh, dw = k // 3, k % 3
        tap = pad_ref[dh:dh + H, dw:dw + W, :].reshape(H * W, Cp)
        col_ref[:, k * Cp:(k + 1) * Cp] = tap

    # Single MXU matmul: bf16 x bf16 -> f32 accumulation.
    conv = jnp.dot(col_ref[...], w_ref[...], preferred_element_type=jnp.float32)

    # Fused partial BN statistics (one pass over the freshly computed tile).
    stats_ref[:, 0:1, :] = jnp.sum(conv, axis=0, keepdims=True).reshape(1, 1, Cp)
    stats_ref[:, 1:2, :] = jnp.sum(conv * conv, axis=0,
                                   keepdims=True).reshape(1, 1, Cp)

    out_ref[...] = conv.reshape(1, H, W, Cp)


def _bn_residual_relu_kernel(y_ref, scale_ref, shift_ref, x_ref, out_ref):
    """out = relu(bn2_affine(conv2_raw) + residual)  (all f32 VPU math)."""
    Cp = y_ref.shape[-1]
    scale = scale_ref[...].reshape(1, 1, 1, Cp)
    shift = shift_ref[...].reshape(1, 1, 1, Cp)
    out_ref[...] = jnp.maximum(y_ref[...] * scale + shift + x_ref[...], 0.0)


# --------------------------------------------------------------------------
# pallas_call wrappers
# --------------------------------------------------------------------------
def _conv_bn_stats(x, w, scale, shift, *, apply_affine_relu):
    N, H, W, Cp = x.shape
    kernel = functools.partial(_conv_bn_stats_kernel,
                               apply_affine_relu=apply_affine_relu)
    tile_bytes = (
        2 * 2 * (H * W * Cp * 4)            # x + out blocks, f32, double-buffered
        + 9 * Cp * Cp * 2                   # weights, bf16 (resident)
        + (H + 2) * (W + 2) * Cp * 2        # padded scratch, bf16
        + H * W * 9 * Cp * 2                # im2col scratch, bf16
        + 8 * Cp * 4                        # scale / shift / stats
    )
    vmem_limit = int(min(max(2 * tile_bytes, 32 << 20), 64 << 20))
    return pl.pallas_call(
        kernel,
        out_shape=(jax.ShapeDtypeStruct((N, H, W, Cp), jnp.float32),
                   jax.ShapeDtypeStruct((N, 2, Cp), jnp.float32)),
        grid=(N,),
        in_specs=[
            pl.BlockSpec((1, H, W, Cp), lambda n: (n, 0, 0, 0)),
            pl.BlockSpec((9 * Cp, Cp), lambda n: (0, 0)),
            pl.BlockSpec((1, Cp), lambda n: (0, 0)),
            pl.BlockSpec((1, Cp), lambda n: (0, 0)),
        ],
        out_specs=(
            pl.BlockSpec((1, H, W, Cp), lambda n: (n, 0, 0, 0)),
            pl.BlockSpec((1, 2, Cp), lambda n: (n, 0, 0)),
        ),
        scratch_shapes=[
            pltpu.VMEM((H + 2, W + 2, Cp), jnp.bfloat16),
            pltpu.VMEM((H * W, 9 * Cp), jnp.bfloat16),
        ],
        compiler_params=pltpu.CompilerParams(
            dimension_semantics=("parallel",),
            vmem_limit_bytes=vmem_limit),
    )(x, w, scale, shift)


def _bn_residual_relu(y, scale, shift, x):
    N, H, W, Cp = y.shape
    tile_bytes = 3 * 2 * (H * W * Cp * 4) + 4 * Cp * 4
    vmem_limit = int(min(max(2 * tile_bytes, 32 << 20), 64 << 20))
    return pl.pallas_call(
        _bn_residual_relu_kernel,
        out_shape=jax.ShapeDtypeStruct((N, H, W, Cp), jnp.float32),
        grid=(N,),
        in_specs=[
            pl.BlockSpec((1, H, W, Cp), lambda n: (n, 0, 0, 0)),
            pl.BlockSpec((1, Cp), lambda n: (0, 0)),
            pl.BlockSpec((1, Cp), lambda n: (0, 0)),
            pl.BlockSpec((1, H, W, Cp), lambda n: (n, 0, 0, 0)),
        ],
        out_specs=pl.BlockSpec((1, H, W, Cp), lambda n: (n, 0, 0, 0)),
        compiler_params=pltpu.CompilerParams(
            dimension_semantics=("parallel",),
            vmem_limit_bytes=vmem_limit),
    )(y, scale, shift, x)


def _bn_scale_shift(stats, gamma, beta, count):
    """Finish global BN (biased var) from per-image partial sums; O(C) glue."""
    s = jnp.sum(stats.astype(jnp.float32), axis=0)        # (2, Cp)
    mean = s[0] / count
    var = jnp.maximum(s[1] / count - mean * mean, 0.0)
    scale = gamma.reshape(-1) * jax.lax.rsqrt(var + EPS)
    shift = beta.reshape(-1) - mean * scale
    return scale.reshape(1, -1), shift.reshape(1, -1)


def basic_block(x_nchw, w1, w2, g1, b1, g2, b2):
    """x_nchw: (N, C, H, W); w1/w2: (Cout, Cin, 3, 3) PyTorch OIHW, no bias."""
    N, C, H, W = x_nchw.shape
    Cout = w1.shape[0]
    assert Cout == C, "stride=1 / downsample=None BasicBlock needs inplanes==planes"
    assert W % 8 == 0, "W must be a multiple of 8 (sublane) for this kernel"
    Cp = ((C + LANE - 1) // LANE) * LANE        # lane-dense channel padding

    # NCHW -> NHWC (channel = lane axis), zero-pad channels to Cp.
    x = jnp.transpose(x_nchw, (0, 2, 3, 1)).astype(jnp.float32)
    x = jnp.pad(x, ((0, 0), (0, 0), (0, 0), (0, Cp - C)))

    def prep_w(w):
        wk = jnp.transpose(w, (2, 3, 1, 0)).astype(jnp.float32)   # (3,3,Cin,Cout)
        wk = jnp.pad(wk, ((0, 0), (0, 0),
                          (0, Cp - w.shape[1]), (0, Cp - w.shape[0])))
        return wk.reshape(9 * Cp, Cp).astype(jnp.bfloat16)        # (9*Cp, Cp)

    def prep_v(v):
        return jnp.pad(v.astype(jnp.float32), (0, Cp - v.shape[0])).reshape(1, Cp)

    w1k, w2k = prep_w(w1), prep_w(w2)
    g1p, b1p, g2p, b2p = prep_v(g1), prep_v(b1), prep_v(g2), prep_v(b2)
    ones = jnp.ones((1, Cp), jnp.float32)
    zeros = jnp.zeros((1, Cp), jnp.float32)
    count = N * H * W

    # Pass 1: conv1 + partial BN1 statistics.
    out1_raw, stats1 = _conv_bn_stats(x, w1k, ones, zeros,
                                      apply_affine_relu=False)
    scale1, shift1 = _bn_scale_shift(stats1, g1p, b1p, count)

    # Pass 2: bn1-affine + relu + conv2 + partial BN2 statistics.
    out2_raw, stats2 = _conv_bn_stats(out1_raw, w2k, scale1, shift1,
                                      apply_affine_relu=True)
    scale2, shift2 = _bn_scale_shift(stats2, g2p, b2p, count)

    # Pass 3: bn2-affine + residual add + relu.
    out = _bn_residual_relu(out2_raw, scale2, shift2, x)

    # NHWC (padded channels) -> NCHW, drop channel padding.
    return jnp.transpose(out[..., :Cout], (0, 3, 1, 2))


# --------------------------------------------------------------------------
# Pure-JAX f32 reference of the PyTorch forward (training-mode BN)
# --------------------------------------------------------------------------
def reference(x_nchw, w1, w2, g1, b1, g2, b2):
    def conv(x, w):
        return jax.lax.conv_general_dilated(
            x, w, window_strides=(1, 1), padding=((1, 1), (1, 1)),
            dimension_numbers=("NCHW", "OIHW", "NCHW"),
            precision=jax.lax.Precision.HIGHEST)

    def bn(x, g, b):
        mean = jnp.mean(x, axis=(0, 2, 3), keepdims=True)
        var = jnp.mean((x - mean) ** 2, axis=(0, 2, 3), keepdims=True)
        return (x - mean) * jax.lax.rsqrt(var + EPS) * g.reshape(1, -1, 1, 1) \
               + b.reshape(1, -1, 1, 1)

    out = jnp.maximum(bn(conv(x_nchw, w1), g1, b1), 0.0)
    out = bn(conv(out, w2), g2, b2)
    return jnp.maximum(out + x_nchw, 0.0)


if __name__ == "__main__":
    key = jax.random.PRNGKey(0)
    k1, k2, k3, k4, k5, k6, k7 = jax.random.split(key, 7)

    N, C, H, W = 2, 4, 16, 16
    planes = C  # expansion=1, stride=1, downsample=None => inplanes == planes

    x = jax.random.normal(k1, (N, C, H, W), jnp.float32)
    fan = C * 3 * 3
    w1 = jax.random.normal(k2, (planes, C, 3, 3), jnp.float32) * (2.0 / fan) ** 0.5
    w2 = jax.random.normal(k3, (planes, planes, 3, 3), jnp.float32) * (2.0 / fan) ** 0.5
    g1 = 1.0 + 0.1 * jax.random.normal(k4, (planes,), jnp.float32)
    b1 = 0.1 * jax.random.normal(k5, (planes,), jnp.float32)
    g2 = 1.0 + 0.1 * jax.random.normal(k6, (planes,), jnp.float32)
    b2 = 0.1 * jax.random.normal(k7, (planes,), jnp.float32)

    run = jax.jit(basic_block)
    out = jax.block_until_ready(run(x, w1, w2, g1, b1, g2, b2))

    ref = reference(x, w1, w2, g1, b1, g2, b2)
    assert out.shape == (N, planes, H, W)
    err = float(jnp.max(jnp.abs(out - ref)))
    # bf16 MXU operands (f32 accumulation, f32 BN/residual) vs f32 reference:
    # widened tolerance per standard mixed-precision conv semantics.
    assert jnp.allclose(out, ref, atol=5e-2, rtol=5e-2), f"max abs err={err}"
    print("KERNEL_OK")
</pallas_src>

<mosaic_0001>
module attributes {stable_mosaic.version = 11 : i64} {
  func.func @_conv_bn_stats_kernel(%arg0: i32, %arg1: memref<1x16x16x128xf32, #tpu.memory_space<vmem>>, %arg2: memref<1152x128xbf16, #tpu.memory_space<vmem>>, %arg3: memref<1x128xf32, #tpu.memory_space<vmem>>, %arg4: memref<1x128xf32, #tpu.memory_space<vmem>>, %arg5: memref<1x16x16x128xf32, #tpu.memory_space<vmem>>, %arg6: memref<1x2x128xf32, #tpu.memory_space<vmem>>, %arg7: memref<18x18x128xbf16, #tpu.memory_space<vmem>>, %arg8: memref<256x1152xbf16, #tpu.memory_space<vmem>>) attributes {dimension_semantics = [#tpu.dimension_semantics<parallel>], iteration_bounds = array<i64: 2>, scalar_prefetch = 0 : i64, scratch_operands = 2 : i64, tpu.core_type = #tpu.core_type<tc>, window_params = [{transform_indices = @transform_0, window_bounds = array<i64: 1, 16, 16, 128>}, {pipeline_mode = #tpu.pipeline_mode<synchronous>, transform_indices = @transform_1, window_bounds = array<i64: 1152, 128>}, {pipeline_mode = #tpu.pipeline_mode<synchronous>, transform_indices = @transform_2, window_bounds = array<i64: 1, 128>}, {pipeline_mode = #tpu.pipeline_mode<synchronous>, transform_indices = @transform_3, window_bounds = array<i64: 1, 128>}, {transform_indices = @transform_4, window_bounds = array<i64: 1, 16, 16, 128>}, {transform_indices = @transform_5, window_bounds = array<i64: 1, 2, 128>}]} {
    %c0 = arith.constant 0 : index
    %c0_0 = arith.constant 0 : index
    %c0_1 = arith.constant 0 : index
    %c0_2 = arith.constant 0 : index
    %0 = vector.load %arg1[%c0, %c0_0, %c0_1, %c0_2] : memref<1x16x16x128xf32, #tpu.memory_space<vmem>>, vector<1x16x16x128xf32>
    %1 = vector.shape_cast %0 : vector<1x16x16x128xf32> to vector<16x16x128xf32>
    %2 = arith.truncf %1 : vector<16x16x128xf32> to vector<16x16x128xbf16>
    %cst = arith.constant 0.000000e+00 : bf16
    %3 = vector.broadcast %cst : bf16 to vector<1x18x128xbf16>
    %cst_3 = arith.constant 0.000000e+00 : bf16
    %4 = vector.broadcast %cst_3 : bf16 to vector<18x1x128xbf16>
    %c0_4 = arith.constant 0 : index
    %c0_5 = arith.constant 0 : index
    %c0_6 = arith.constant 0 : index
    %5 = vector.load %arg7[%c0_4, %c0_5, %c0_6] : memref<18x18x128xbf16, #tpu.memory_space<vmem>>, vector<1x18x128xbf16>
    tpu.vector_store %arg7[%c0_4, %c0_5, %c0_6], %3 {strides = array<i32>} : memref<18x18x128xbf16, #tpu.memory_space<vmem>>, vector<1x18x128xbf16>,
    %c17 = arith.constant 17 : index
    %c0_7 = arith.constant 0 : index
    %c0_8 = arith.constant 0 : index
    %6 = vector.load %arg7[%c17, %c0_7, %c0_8] : memref<18x18x128xbf16, #tpu.memory_space<vmem>>, vector<1x18x128xbf16>
    tpu.vector_store %arg7[%c17, %c0_7, %c0_8], %3 {strides = array<i32>} : memref<18x18x128xbf16, #tpu.memory_space<vmem>>, vector<1x18x128xbf16>,
    %c0_9 = arith.constant 0 : index
    %c0_10 = arith.constant 0 : index
    %c0_11 = arith.constant 0 : index
    %7 = vector.load %arg7[%c0_9, %c0_10, %c0_11] : memref<18x18x128xbf16, #tpu.memory_space<vmem>>, vector<18x1x128xbf16>
    tpu.vector_store %arg7[%c0_9, %c0_10, %c0_11], %4 {strides = array<i32>} : memref<18x18x128xbf16, #tpu.memory_space<vmem>>, vector<18x1x128xbf16>,
    %c0_12 = arith.constant 0 : index
    %c17_13 = arith.constant 17 : index
    %c0_14 = arith.constant 0 : index
    %8 = vector.load %arg7[%c0_12, %c17_13, %c0_14] : memref<18x18x128xbf16, #tpu.memory_space<vmem>>, vector<18x1x128xbf16>
    tpu.vector_store %arg7[%c0_12, %c17_13, %c0_14], %4 {strides = array<i32>} : memref<18x18x128xbf16, #tpu.memory_space<vmem>>, vector<18x1x128xbf16>,
    %c1 = arith.constant 1 : index
    %c1_15 = arith.constant 1 : index
    %c0_16 = arith.constant 0 : index
    %9 = vector.load %arg7[%c1, %c1_15, %c0_16] : memref<18x18x128xbf16, #tpu.memory_space<vmem>>, vector<16x16x128xbf16>
    tpu.vector_store %arg7[%c1, %c1_15, %c0_16], %2 {strides = array<i32>} : memref<18x18x128xbf16, #tpu.memory_space<vmem>>, vector<16x16x128xbf16>,
    %c0_17 = arith.constant 0 : index
    %c0_18 = arith.constant 0 : index
    %c0_19 = arith.constant 0 : index
    %10 = vector.load %arg7[%c0_17, %c0_18, %c0_19] : memref<18x18x128xbf16, #tpu.memory_space<vmem>>, vector<16x16x128xbf16>
    %11 = vector.shape_cast %10 : vector<16x16x128xbf16> to vector<256x128xbf16>
    %c0_20 = arith.constant 0 : index
    %c0_21 = arith.constant 0 : index
    %12 = vector.load %arg8[%c0_20, %c0_21] : memref<256x1152xbf16, #tpu.memory_space<vmem>>, vector<256x128xbf16>
    tpu.vector_store %arg8[%c0_20, %c0_21], %11 {strides = array<i32>} : memref<256x1152xbf16, #tpu.memory_space<vmem>>, vector<256x128xbf16>,
    %c0_22 = arith.constant 0 : index
    %c1_23 = arith.constant 1 : index
    %c0_24 = arith.constant 0 : index
    %13 = vector.load %arg7[%c0_22, %c1_23, %c0_24] : memref<18x18x128xbf16, #tpu.memory_space<vmem>>, vector<16x16x128xbf16>
    %14 = vector.shape_cast %13 : vector<16x16x128xbf16> to vector<256x128xbf16>
    %c0_25 = arith.constant 0 : index
    %c128 = arith.constant 128 : index
    %15 = vector.load %arg8[%c0_25, %c128] : memref<256x1152xbf16, #tpu.memory_space<vmem>>, vector<256x128xbf16>
    tpu.vector_store %arg8[%c0_25, %c128], %14 {strides = array<i32>} : memref<256x1152xbf16, #tpu.memory_space<vmem>>, vector<256x128xbf16>,
    %c0_26 = arith.constant 0 : index
    %c2 = arith.constant 2 : index
    %c0_27 = arith.constant 0 : index
    %16 = vector.load %arg7[%c0_26, %c2, %c0_27] : memref<18x18x128xbf16, #tpu.memory_space<vmem>>, vector<16x16x128xbf16>
    %17 = vector.shape_cast %16 : vector<16x16x128xbf16> to vector<256x128xbf16>
    %c0_28 = arith.constant 0 : index
    %c256 = arith.constant 256 : index
    %18 = vector.load %arg8[%c0_28, %c256] : memref<256x1152xbf16, #tpu.memory_space<vmem>>, vector<256x128xbf16>
    tpu.vector_store %arg8[%c0_28, %c256], %17 {strides = array<i32>} : memref<256x1152xbf16, #tpu.memory_space<vmem>>, vector<256x128xbf16>,
    %c1_29 = arith.constant 1 : index
    %c0_30 = arith.constant 0 : index
    %c0_31 = arith.constant 0 : index
    %19 = vector.load %arg7[%c1_29, %c0_30, %c0_31] : memref<18x18x128xbf16, #tpu.memory_space<vmem>>, vector<16x16x128xbf16>
    %20 = vector.shape_cast %19 : vector<16x16x128xbf16> to vector<256x128xbf16>
    %c0_32 = arith.constant 0 : index
    %c384 = arith.constant 384 : index
    %21 = vector.load %arg8[%c0_32, %c384] : memref<256x1152xbf16, #tpu.memory_space<vmem>>, vector<256x128xbf16>
    tpu.vector_store %arg8[%c0_32, %c384], %20 {strides = array<i32>} : memref<256x1152xbf16, #tpu.memory_space<vmem>>, vector<256x128xbf16>,
    %c1_33 = arith.constant 1 : index
    %c1_34 = arith.constant 1 : index
    %c0_35 = arith.constant 0 : index
    %22 = vector.load %arg7[%c1_33, %c1_34, %c0_35] : memref<18x18x128xbf16, #tpu.memory_space<vmem>>, vector<16x16x128xbf16>
    %23 = vector.shape_cast %22 : vector<16x16x128xbf16> to vector<256x128xbf16>
    %c0_36 = arith.constant 0 : index
    %c512 = arith.constant 512 : index
    %24 = vector.load %arg8[%c0_36, %c512] : memref<256x1152xbf16, #tpu.memory_space<vmem>>, vector<256x128xbf16>
    tpu.vector_store %arg8[%c0_36, %c512], %23 {strides = array<i32>} : memref<256x1152xbf16, #tpu.memory_space<vmem>>, vector<256x128xbf16>,
    %c1_37 = arith.constant 1 : index
    %c2_38 = arith.constant 2 : index
    %c0_39 = arith.constant 0 : index
    %25 = vector.load %arg7[%c1_37, %c2_38, %c0_39] : memref<18x18x128xbf16, #tpu.memory_space<vmem>>, vector<16x16x128xbf16>
    %26 = vector.shape_cast %25 : vector<16x16x128xbf16> to vector<256x128xbf16>
    %c0_40 = arith.constant 0 : index
    %c640 = arith.constant 640 : index
    %27 = vector.load %arg8[%c0_40, %c640] : memref<256x1152xbf16, #tpu.memory_space<vmem>>, vector<256x128xbf16>
    tpu.vector_store %arg8[%c0_40, %c640], %26 {strides = array<i32>} : memref<256x1152xbf16, #tpu.memory_space<vmem>>, vector<256x128xbf16>,
    %c2_41 = arith.constant 2 : index
    %c0_42 = arith.constant 0 : index
    %c0_43 = arith.constant 0 : index
    %28 = vector.load %arg7[%c2_41, %c0_42, %c0_43] : memref<18x18x128xbf16, #tpu.memory_space<vmem>>, vector<16x16x128xbf16>
    %29 = vector.shape_cast %28 : vector<16x16x128xbf16> to vector<256x128xbf16>
    %c0_44 = arith.constant 0 : index
    %c768 = arith.constant 768 : index
    %30 = vector.load %arg8[%c0_44, %c768] : memref<256x1152xbf16, #tpu.memory_space<vmem>>, vector<256x128xbf16>
    tpu.vector_store %arg8[%c0_44, %c768], %29 {strides = array<i32>} : memref<256x1152xbf16, #tpu.memory_space<vmem>>, vector<256x128xbf16>,
    %c2_45 = arith.constant 2 : index
    %c1_46 = arith.constant 1 : index
    %c0_47 = arith.constant 0 : index
    %31 = vector.load %arg7[%c2_45, %c1_46, %c0_47] : memref<18x18x128xbf16, #tpu.memory_space<vmem>>, vector<16x16x128xbf16>
    %32 = vector.shape_cast %31 : vector<16x16x128xbf16> to vector<256x128xbf16>
    %c0_48 = arith.constant 0 : index
    %c896 = arith.constant 896 : index
    %33 = vector.load %arg8[%c0_48, %c896] : memref<256x1152xbf16, #tpu.memory_space<vmem>>, vector<256x128xbf16>
    tpu.vector_store %arg8[%c0_48, %c896], %32 {strides = array<i32>} : memref<256x1152xbf16, #tpu.memory_space<vmem>>, vector<256x128xbf16>,
    %c2_49 = arith.constant 2 : index
    %c2_50 = arith.constant 2 : index
    %c0_51 = arith.constant 0 : index
    %34 = vector.load %arg7[%c2_49, %c2_50, %c0_51] : memref<18x18x128xbf16, #tpu.memory_space<vmem>>, vector<16x16x128xbf16>
    %35 = vector.shape_cast %34 : vector<16x16x128xbf16> to vector<256x128xbf16>
    %c0_52 = arith.constant 0 : index
    %c1024 = arith.constant 1024 : index
    %36 = vector.load %arg8[%c0_52, %c1024] : memref<256x1152xbf16, #tpu.memory_space<vmem>>, vector<256x128xbf16>
    tpu.vector_store %arg8[%c0_52, %c1024], %35 {strides = array<i32>} : memref<256x1152xbf16, #tpu.memory_space<vmem>>, vector<256x128xbf16>,
    %c0_53 = arith.constant 0 : index
    %c0_54 = arith.constant 0 : index
    %37 = vector.load %arg8[%c0_53, %c0_54] : memref<256x1152xbf16, #tpu.memory_space<vmem>>, vector<256x1152xbf16>
    %c0_55 = arith.constant 0 : index
    %c0_56 = arith.constant 0 : index
    %38 = vector.load %arg2[%c0_55, %c0_56] : memref<1152x128xbf16, #tpu.memory_space<vmem>>, vector<1152x128xbf16>
    %cst_57 = arith.constant dense<0.000000e+00> : vector<256x128xf32>
    %39 = tpu.matmul %37, %38, %cst_57 {dimension_numbers = #tpu.dot_dimension_numbers<[1], [0], [0], [1], [0, 0, 1, 1], [], []>} : vector<256x1152xbf16>, vector<1152x128xbf16>, vector<256x128xf32> -> vector<256x128xf32>
    %cst_58 = arith.constant dense<0.000000e+00> : vector<128xf32>
    %40 = vector.multi_reduction <add>, %39, %cst_58 [0] : vector<256x128xf32> to vector<128xf32>
    %41 = vector.shape_cast %40 : vector<128xf32> to vector<1x128xf32>
    %42 = vector.shape_cast %41 : vector<1x128xf32> to vector<1x1x128xf32>
    %c0_59 = arith.constant 0 : index
    %c0_60 = arith.constant 0 : index
    %c0_61 = arith.constant 0 : index
    %43 = vector.load %arg6[%c0_59, %c0_60, %c0_61] : memref<1x2x128xf32, #tpu.memory_space<vmem>>, vector<1x1x128xf32>
    tpu.vector_store %arg6[%c0_59, %c0_60, %c0_61], %42 {strides = array<i32>} : memref<1x2x128xf32, #tpu.memory_space<vmem>>, vector<1x1x128xf32>,
    %44 = arith.mulf %39, %39 : vector<256x128xf32>
    %cst_62 = arith.constant dense<0.000000e+00> : vector<128xf32>
    %45 = vector.multi_reduction <add>, %44, %cst_62 [0] : vector<256x128xf32> to vector<128xf32>
    %46 = vector.shape_cast %45 : vector<128xf32> to vector<1x128xf32>
    %47 = vector.shape_cast %46 : vector<1x128xf32> to vector<1x1x128xf32>
    %c0_63 = arith.constant 0 : index
    %c1_64 = arith.constant 1 : index
    %c0_65 = arith.constant 0 : index
    %48 = vector.load %arg6[%c0_63, %c1_64, %c0_65] : memref<1x2x128xf32, #tpu.memory_space<vmem>>, vector<1x1x128xf32>
    tpu.vector_store %arg6[%c0_63, %c1_64, %c0_65], %47 {strides = array<i32>} : memref<1x2x128xf32, #tpu.memory_space<vmem>>, vector<1x1x128xf32>,
    %49 = vector.shape_cast %39 : vector<256x128xf32> to vector<1x16x16x128xf32>
    %c0_66 = arith.constant 0 : index
    %c0_67 = arith.constant 0 : index
    %c0_68 = arith.constant 0 : index
    %c0_69 = arith.constant 0 : index
    %50 = vector.load %arg5[%c0_66, %c0_67, %c0_68, %c0_69] : memref<1x16x16x128xf32, #tpu.memory_space<vmem>>, vector<1x16x16x128xf32>
    tpu.vector_store %arg5[%c0_66, %c0_67, %c0_68, %c0_69], %49 {strides = array<i32>} : memref<1x16x16x128xf32, #tpu.memory_space<vmem>>, vector<1x16x16x128xf32>,
    return
  }
  func.func @transform_0(%arg0: i32) -> (i32, i32, i32, i32) {
    %c0_i32 = arith.constant 0 : i32
    %c0_i32_0 = arith.constant 0 : i32
    %c0_i32_1 = arith.constant 0 : i32
    %c0_i32_2 = arith.constant 0 : i32
    return %arg0, %c0_i32, %c0_i32_0, %c0_i32_1 : i32, i32, i32, i32
  }
  func.func @transform_1(%arg0: i32) -> (i32, i32) {
    %c0_i32 = arith.constant 0 : i32
    %c0_i32_0 = arith.constant 0 : i32
    %c0_i32_1 = arith.constant 0 : i32
    return %c0_i32, %c0_i32_0 : i32, i32
  }
  func.func @transform_2(%arg0: i32) -> (i32, i32) {
    %c0_i32 = arith.constant 0 : i32
    %c0_i32_0 = arith.constant 0 : i32
    %c0_i32_1 = arith.constant 0 : i32
    return %c0_i32, %c0_i32_0 : i32, i32
  }
  func.func @transform_3(%arg0: i32) -> (i32, i32) {
    %c0_i32 = arith.constant 0 : i32
    %c0_i32_0 = arith.constant 0 : i32
    %c0_i32_1 = arith.constant 0 : i32
    return %c0_i32, %c0_i32_0 : i32, i32
  }
  func.func @transform_4(%arg0: i32) -> (i32, i32, i32, i32) {
    %c0_i32 = arith.constant 0 : i32
    %c0_i32_0 = arith.constant 0 : i32
    %c0_i32_1 = arith.constant 0 : i32
    %c0_i32_2 = arith.constant 0 : i32
    return %arg0, %c0_i32, %c0_i32_0, %c0_i32_1 : i32, i32, i32, i32
  }
  func.func @transform_5(%arg0: i32) -> (i32, i32, i32) {
    %c0_i32 = arith.constant 0 : i32
    %c0_i32_0 = arith.constant 0 : i32
    %c0_i32_1 = arith.constant 0 : i32
    return %arg0, %c0_i32, %c0_i32_0 : i32, i32, i32
  }
}

module attributes {stable_mosaic.version = 11 : i64} {
  func.func @_bn_residual_relu_kernel(%arg0: i32, %arg1: memref<1x16x16x128xf32, #tpu.memory_space<vmem>>, %arg2: memref<1x128xf32, #tpu.memory_space<vmem>>, %arg3: memref<1x128xf32, #tpu.memory_space<vmem>>, %arg4: memref<1x16x16x128xf32, #tpu.memory_space<vmem>>, %arg5: memref<1x16x16x128xf32, #tpu.memory_space<vmem>>) attributes {dimension_semantics = [#tpu.dimension_semantics<parallel>], iteration_bounds = array<i64: 2>, scalar_prefetch = 0 : i64, scratch_operands = 0 : i64, tpu.core_type = #tpu.core_type<tc>, window_params = [{transform_indices = @transform_0, window_bounds = array<i64: 1, 16, 16, 128>}, {pipeline_mode = #tpu.pipeline_mode<synchronous>, transform_indices = @transform_1, window_bounds = array<i64: 1, 128>}, {pipeline_mode = #tpu.pipeline_mode<synchronous>, transform_indices = @transform_2, window_bounds = array<i64: 1, 128>}, {transform_indices = @transform_3, window_bounds = array<i64: 1, 16, 16, 128>}, {transform_indices = @transform_4, window_bounds = array<i64: 1, 16, 16, 128>}]} {
    %c0 = arith.constant 0 : index
    %c0_0 = arith.constant 0 : index
    %0 = vector.load %arg2[%c0, %c0_0] : memref<1x128xf32, #tpu.memory_space<vmem>>, vector<1x128xf32>
    %1 = vector.shape_cast %0 : vector<1x128xf32> to vector<1x1x1x128xf32>
    %c0_1 = arith.constant 0 : index
    %c0_2 = arith.constant 0 : index
    %2 = vector.load %arg3[%c0_1, %c0_2] : memref<1x128xf32, #tpu.memory_space<vmem>>, vector<1x128xf32>
    %3 = vector.shape_cast %2 : vector<1x128xf32> to vector<1x1x1x128xf32>
    %c0_3 = arith.constant 0 : index
    %c0_4 = arith.constant 0 : index
    %c0_5 = arith.constant 0 : index
    %c0_6 = arith.constant 0 : index
    %4 = vector.load %arg1[%c0_3, %c0_4, %c0_5, %c0_6] : memref<1x16x16x128xf32, #tpu.memory_space<vmem>>, vector<1x16x16x128xf32>
    %5 = vector.broadcast %1 : vector<1x1x1x128xf32> to vector<1x16x16x128xf32>
    %6 = arith.mulf %4, %5 : vector<1x16x16x128xf32>
    %7 = vector.broadcast %3 : vector<1x1x1x128xf32> to vector<1x16x16x128xf32>
    %8 = arith.addf %6, %7 : vector<1x16x16x128xf32>
    %c0_7 = arith.constant 0 : index
    %c0_8 = arith.constant 0 : index
    %c0_9 = arith.constant 0 : index
    %c0_10 = arith.constant 0 : index
    %9 = vector.load %arg4[%c0_7, %c0_8, %c0_9, %c0_10] : memref<1x16x16x128xf32, #tpu.memory_space<vmem>>, vector<1x16x16x128xf32>
    %10 = arith.addf %8, %9 : vector<1x16x16x128xf32>
    %cst = arith.constant 0.000000e+00 : f32
    %11 = vector.broadcast %cst : f32 to vector<1x16x16x128xf32>
    %12 = arith.maximumf %10, %11 : vector<1x16x16x128xf32>
    %c0_11 = arith.constant 0 : index
    %c0_12 = arith.constant 0 : index
    %c0_13 = arith.constant 0 : index
    %c0_14 = arith.constant 0 : index
    %13 = vector.load %arg5[%c0_11, %c0_12, %c0_13, %c0_14] : memref<1x16x16x128xf32, #tpu.memory_space<vmem>>, vector<1x16x16x128xf32>
    tpu.vector_store %arg5[%c0_11, %c0_12, %c0_13, %c0_14], %12 {strides = array<i32>} : memref<1x16x16x128xf32, #tpu.memory_space<vmem>>, vector<1x16x16x128xf32>,
    return
  }
  func.func @transform_0(%arg0: i32) -> (i32, i32, i32, i32) {
    %c0_i32 = arith.constant 0 : i32
    %c0_i32_0 = arith.constant 0 : i32
    %c0_i32_1 = arith.constant 0 : i32
    %c0_i32_2 = arith.constant 0 : i32
    return %arg0, %c0_i32, %c0_i32_0, %c0_i32_1 : i32, i32, i32, i32
  }
  func.func @transform_1(%arg0: i32) -> (i32, i32) {
    %c0_i32 = arith.constant 0 : i32
    %c0_i32_0 = arith.constant 0 : i32
    %c0_i32_1 = arith.constant 0 : i32
    return %c0_i32, %c0_i32_0 : i32, i32
  }
  func.func @transform_2(%arg0: i32) -> (i32, i32) {
    %c0_i32 = arith.constant 0 : i32
    %c0_i32_0 = arith.constant 0 : i32
    %c0_i32_1 = arith.constant 0 : i32
    return %c0_i32, %c0_i32_0 : i32, i32
  }
  func.func @transform_3(%arg0: i32) -> (i32, i32, i32, i32) {
    %c0_i32 = arith.constant 0 : i32
    %c0_i32_0 = arith.constant 0 : i32
    %c0_i32_1 = arith.constant 0 : i32
    %c0_i32_2 = arith.constant 0 : i32
    return %arg0, %c0_i32, %c0_i32_0, %c0_i32_1 : i32, i32, i32, i32
  }
  func.func @transform_4(%arg0: i32) -> (i32, i32, i32, i32) {
    %c0_i32 = arith.constant 0 : i32
    %c0_i32_0 = arith.constant 0 : i32
    %c0_i32_1 = arith.constant 0 : i32
    %c0_i32_2 = arith.constant 0 : i32
    return %arg0, %c0_i32, %c0_i32_0, %c0_i32_1 : i32, i32, i32, i32
  }
}

module attributes {stable_mosaic.version = 11 : i64} {
  func.func @_conv_bn_stats_kernel(%arg0: i32, %arg1: memref<1x16x16x128xf32, #tpu.memory_space<vmem>>, %arg2: memref<1152x128xbf16, #tpu.memory_space<vmem>>, %arg3: memref<1x128xf32, #tpu.memory_space<vmem>>, %arg4: memref<1x128xf32, #tpu.memory_space<vmem>>, %arg5: memref<1x16x16x128xf32, #tpu.memory_space<vmem>>, %arg6: memref<1x2x128xf32, #tpu.memory_space<vmem>>, %arg7: memref<18x18x128xbf16, #tpu.memory_space<vmem>>, %arg8: memref<256x1152xbf16, #tpu.memory_space<vmem>>) attributes {dimension_semantics = [#tpu.dimension_semantics<parallel>], iteration_bounds = array<i64: 2>, scalar_prefetch = 0 : i64, scratch_operands = 2 : i64, tpu.core_type = #tpu.core_type<tc>, window_params = [{transform_indices = @transform_0, window_bounds = array<i64: 1, 16, 16, 128>}, {pipeline_mode = #tpu.pipeline_mode<synchronous>, transform_indices = @transform_1, window_bounds = array<i64: 1152, 128>}, {pipeline_mode = #tpu.pipeline_mode<synchronous>, transform_indices = @transform_2, window_bounds = array<i64: 1, 128>}, {pipeline_mode = #tpu.pipeline_mode<synchronous>, transform_indices = @transform_3, window_bounds = array<i64: 1, 128>}, {transform_indices = @transform_4, window_bounds = array<i64: 1, 16, 16, 128>}, {transform_indices = @transform_5, window_bounds = array<i64: 1, 2, 128>}]} {
    %c0 = arith.constant 0 : index
    %c0_0 = arith.constant 0 : index
    %c0_1 = arith.constant 0 : index
    %c0_2 = arith.constant 0 : index
    %0 = vector.load %arg1[%c0, %c0_0, %c0_1, %c0_2] : memref<1x16x16x128xf32, #tpu.memory_space<vmem>>, vector<1x16x16x128xf32>
    %1 = vector.shape_cast %0 : vector<1x16x16x128xf32> to vector<16x16x128xf32>
    %c0_3 = arith.constant 0 : index
    %c0_4 = arith.constant 0 : index
    %2 = vector.load %arg3[%c0_3, %c0_4] : memref<1x128xf32, #tpu.memory_space<vmem>>, vector<1x128xf32>
    %3 = vector.shape_cast %2 : vector<1x128xf32> to vector<1x1x128xf32>
    %c0_5 = arith.constant 0 : index
    %c0_6 = arith.constant 0 : index
    %4 = vector.load %arg4[%c0_5, %c0_6] : memref<1x128xf32, #tpu.memory_space<vmem>>, vector<1x128xf32>
    %5 = vector.shape_cast %4 : vector<1x128xf32> to vector<1x1x128xf32>
    %6 = vector.broadcast %3 : vector<1x1x128xf32> to vector<16x16x128xf32>
    %7 = arith.mulf %1, %6 : vector<16x16x128xf32>
    %8 = vector.broadcast %5 : vector<1x1x128xf32> to vector<16x16x128xf32>
    %9 = arith.addf %7, %8 : vector<16x16x128xf32>
    %cst = arith.constant 0.000000e+00 : f32
    %10 = vector.broadcast %cst : f32 to vector<16x16x128xf32>
    %11 = arith.maximumf %9, %10 : vector<16x16x128xf32>
    %12 = arith.truncf %11 : vector<16x16x128xf32> to vector<16x16x128xbf16>
    %cst_7 = arith.constant 0.000000e+00 : bf16
    %13 = vector.broadcast %cst_7 : bf16 to vector<1x18x128xbf16>
    %cst_8 = arith.constant 0.000000e+00 : bf16
    %14 = vector.broadcast %cst_8 : bf16 to vector<18x1x128xbf16>
    %c0_9 = arith.constant 0 : index
    %c0_10 = arith.constant 0 : index
    %c0_11 = arith.constant 0 : index
    %15 = vector.load %arg7[%c0_9, %c0_10, %c0_11] : memref<18x18x128xbf16, #tpu.memory_space<vmem>>, vector<1x18x128xbf16>
    tpu.vector_store %arg7[%c0_9, %c0_10, %c0_11], %13 {strides = array<i32>} : memref<18x18x128xbf16, #tpu.memory_space<vmem>>, vector<1x18x128xbf16>,
    %c17 = arith.constant 17 : index
    %c0_12 = arith.constant 0 : index
    %c0_13 = arith.constant 0 : index
    %16 = vector.load %arg7[%c17, %c0_12, %c0_13] : memref<18x18x128xbf16, #tpu.memory_space<vmem>>, vector<1x18x128xbf16>
    tpu.vector_store %arg7[%c17, %c0_12, %c0_13], %13 {strides = array<i32>} : memref<18x18x128xbf16, #tpu.memory_space<vmem>>, vector<1x18x128xbf16>,
    %c0_14 = arith.constant 0 : index
    %c0_15 = arith.constant 0 : index
    %c0_16 = arith.constant 0 : index
    %17 = vector.load %arg7[%c0_14, %c0_15, %c0_16] : memref<18x18x128xbf16, #tpu.memory_space<vmem>>, vector<18x1x128xbf16>
    tpu.vector_store %arg7[%c0_14, %c0_15, %c0_16], %14 {strides = array<i32>} : memref<18x18x128xbf16, #tpu.memory_space<vmem>>, vector<18x1x128xbf16>,
    %c0_17 = arith.constant 0 : index
    %c17_18 = arith.constant 17 : index
    %c0_19 = arith.constant 0 : index
    %18 = vector.load %arg7[%c0_17, %c17_18, %c0_19] : memref<18x18x128xbf16, #tpu.memory_space<vmem>>, vector<18x1x128xbf16>
    tpu.vector_store %arg7[%c0_17, %c17_18, %c0_19], %14 {strides = array<i32>} : memref<18x18x128xbf16, #tpu.memory_space<vmem>>, vector<18x1x128xbf16>,
    %c1 = arith.constant 1 : index
    %c1_20 = arith.constant 1 : index
    %c0_21 = arith.constant 0 : index
    %19 = vector.load %arg7[%c1, %c1_20, %c0_21] : memref<18x18x128xbf16, #tpu.memory_space<vmem>>, vector<16x16x128xbf16>
    tpu.vector_store %arg7[%c1, %c1_20, %c0_21], %12 {strides = array<i32>} : memref<18x18x128xbf16, #tpu.memory_space<vmem>>, vector<16x16x128xbf16>,
    %c0_22 = arith.constant 0 : index
    %c0_23 = arith.constant 0 : index
    %c0_24 = arith.constant 0 : index
    %20 = vector.load %arg7[%c0_22, %c0_23, %c0_24] : memref<18x18x128xbf16, #tpu.memory_space<vmem>>, vector<16x16x128xbf16>
    %21 = vector.shape_cast %20 : vector<16x16x128xbf16> to vector<256x128xbf16>
    %c0_25 = arith.constant 0 : index
    %c0_26 = arith.constant 0 : index
    %22 = vector.load %arg8[%c0_25, %c0_26] : memref<256x1152xbf16, #tpu.memory_space<vmem>>, vector<256x128xbf16>
    tpu.vector_store %arg8[%c0_25, %c0_26], %21 {strides = array<i32>} : memref<256x1152xbf16, #tpu.memory_space<vmem>>, vector<256x128xbf16>,
    %c0_27 = arith.constant 0 : index
    %c1_28 = arith.constant 1 : index
    %c0_29 = arith.constant 0 : index
    %23 = vector.load %arg7[%c0_27, %c1_28, %c0_29] : memref<18x18x128xbf16, #tpu.memory_space<vmem>>, vector<16x16x128xbf16>
    %24 = vector.shape_cast %23 : vector<16x16x128xbf16> to vector<256x128xbf16>
    %c0_30 = arith.constant 0 : index
    %c128 = arith.constant 128 : index
    %25 = vector.load %arg8[%c0_30, %c128] : memref<256x1152xbf16, #tpu.memory_space<vmem>>, vector<256x128xbf16>
    tpu.vector_store %arg8[%c0_30, %c128], %24 {strides = array<i32>} : memref<256x1152xbf16, #tpu.memory_space<vmem>>, vector<256x128xbf16>,
    %c0_31 = arith.constant 0 : index
    %c2 = arith.constant 2 : index
    %c0_32 = arith.constant 0 : index
    %26 = vector.load %arg7[%c0_31, %c2, %c0_32] : memref<18x18x128xbf16, #tpu.memory_space<vmem>>, vector<16x16x128xbf16>
    %27 = vector.shape_cast %26 : vector<16x16x128xbf16> to vector<256x128xbf16>
    %c0_33 = arith.constant 0 : index
    %c256 = arith.constant 256 : index
    %28 = vector.load %arg8[%c0_33, %c256] : memref<256x1152xbf16, #tpu.memory_space<vmem>>, vector<256x128xbf16>
    tpu.vector_store %arg8[%c0_33, %c256], %27 {strides = array<i32>} : memref<256x1152xbf16, #tpu.memory_space<vmem>>, vector<256x128xbf16>,
    %c1_34 = arith.constant 1 : index
    %c0_35 = arith.constant 0 : index
    %c0_36 = arith.constant 0 : index
    %29 = vector.load %arg7[%c1_34, %c0_35, %c0_36] : memref<18x18x128xbf16, #tpu.memory_space<vmem>>, vector<16x16x128xbf16>
    %30 = vector.shape_cast %29 : vector<16x16x128xbf16> to vector<256x128xbf16>
    %c0_37 = arith.constant 0 : index
    %c384 = arith.constant 384 : index
    %31 = vector.load %arg8[%c0_37, %c384] : memref<256x1152xbf16, #tpu.memory_space<vmem>>, vector<256x128xbf16>
    tpu.vector_store %arg8[%c0_37, %c384], %30 {strides = array<i32>} : memref<256x1152xbf16, #tpu.memory_space<vmem>>, vector<256x128xbf16>,
    %c1_38 = arith.constant 1 : index
    %c1_39 = arith.constant 1 : index
    %c0_40 = arith.constant 0 : index
    %32 = vector.load %arg7[%c1_38, %c1_39, %c0_40] : memref<18x18x128xbf16, #tpu.memory_space<vmem>>, vector<16x16x128xbf16>
    %33 = vector.shape_cast %32 : vector<16x16x128xbf16> to vector<256x128xbf16>
    %c0_41 = arith.constant 0 : index
    %c512 = arith.constant 512 : index
    %34 = vector.load %arg8[%c0_41, %c512] : memref<256x1152xbf16, #tpu.memory_space<vmem>>, vector<256x128xbf16>
    tpu.vector_store %arg8[%c0_41, %c512], %33 {strides = array<i32>} : memref<256x1152xbf16, #tpu.memory_space<vmem>>, vector<256x128xbf16>,
    %c1_42 = arith.constant 1 : index
    %c2_43 = arith.constant 2 : index
    %c0_44 = arith.constant 0 : index
    %35 = vector.load %arg7[%c1_42, %c2_43, %c0_44] : memref<18x18x128xbf16, #tpu.memory_space<vmem>>, vector<16x16x128xbf16>
    %36 = vector.shape_cast %35 : vector<16x16x128xbf16> to vector<256x128xbf16>
    %c0_45 = arith.constant 0 : index
    %c640 = arith.constant 640 : index
    %37 = vector.load %arg8[%c0_45, %c640] : memref<256x1152xbf16, #tpu.memory_space<vmem>>, vector<256x128xbf16>
    tpu.vector_store %arg8[%c0_45, %c640], %36 {strides = array<i32>} : memref<256x1152xbf16, #tpu.memory_space<vmem>>, vector<256x128xbf16>,
    %c2_46 = arith.constant 2 : index
    %c0_47 = arith.constant 0 : index
    %c0_48 = arith.constant 0 : index
    %38 = vector.load %arg7[%c2_46, %c0_47, %c0_48] : memref<18x18x128xbf16, #tpu.memory_space<vmem>>, vector<16x16x128xbf16>
    %39 = vector.shape_cast %38 : vector<16x16x128xbf16> to vector<256x128xbf16>
    %c0_49 = arith.constant 0 : index
    %c768 = arith.constant 768 : index
    %40 = vector.load %arg8[%c0_49, %c768] : memref<256x1152xbf16, #tpu.memory_space<vmem>>, vector<256x128xbf16>
    tpu.vector_store %arg8[%c0_49, %c768], %39 {strides = array<i32>} : memref<256x1152xbf16, #tpu.memory_space<vmem>>, vector<256x128xbf16>,
    %c2_50 = arith.constant 2 : index
    %c1_51 = arith.constant 1 : index
    %c0_52 = arith.constant 0 : index
    %41 = vector.load %arg7[%c2_50, %c1_51, %c0_52] : memref<18x18x128xbf16, #tpu.memory_space<vmem>>, vector<16x16x128xbf16>
    %42 = vector.shape_cast %41 : vector<16x16x128xbf16> to vector<256x128xbf16>
    %c0_53 = arith.constant 0 : index
    %c896 = arith.constant 896 : index
    %43 = vector.load %arg8[%c0_53, %c896] : memref<256x1152xbf16, #tpu.memory_space<vmem>>, vector<256x128xbf16>
    tpu.vector_store %arg8[%c0_53, %c896], %42 {strides = array<i32>} : memref<256x1152xbf16, #tpu.memory_space<vmem>>, vector<256x128xbf16>,
    %c2_54 = arith.constant 2 : index
    %c2_55 = arith.constant 2 : index
    %c0_56 = arith.constant 0 : index
    %44 = vector.load %arg7[%c2_54, %c2_55, %c0_56] : memref<18x18x128xbf16, #tpu.memory_space<vmem>>, vector<16x16x128xbf16>
    %45 = vector.shape_cast %44 : vector<16x16x128xbf16> to vector<256x128xbf16>
    %c0_57 = arith.constant 0 : index
    %c1024 = arith.constant 1024 : index
    %46 = vector.load %arg8[%c0_57, %c1024] : memref<256x1152xbf16, #tpu.memory_space<vmem>>, vector<256x128xbf16>
    tpu.vector_store %arg8[%c0_57, %c1024], %45 {strides = array<i32>} : memref<256x1152xbf16, #tpu.memory_space<vmem>>, vector<256x128xbf16>,
    %c0_58 = arith.constant 0 : index
    %c0_59 = arith.constant 0 : index
    %47 = vector.load %arg8[%c0_58, %c0_59] : memref<256x1152xbf16, #tpu.memory_space<vmem>>, vector<256x1152xbf16>
    %c0_60 = arith.constant 0 : index
    %c0_61 = arith.constant 0 : index
    %48 = vector.load %arg2[%c0_60, %c0_61] : memref<1152x128xbf16, #tpu.memory_space<vmem>>, vector<1152x128xbf16>
    %cst_62 = arith.constant dense<0.000000e+00> : vector<256x128xf32>
    %49 = tpu.matmul %47, %48, %cst_62 {dimension_numbers = #tpu.dot_dimension_numbers<[1], [0], [0], [1], [0, 0, 1, 1], [], []>} : vector<256x1152xbf16>, vector<1152x128xbf16>, vector<256x128xf32> -> vector<256x128xf32>
    %cst_63 = arith.constant dense<0.000000e+00> : vector<128xf32>
    %50 = vector.multi_reduction <add>, %49, %cst_63 [0] : vector<256x128xf32> to vector<128xf32>
    %51 = vector.shape_cast %50 : vector<128xf32> to vector<1x128xf32>
    %52 = vector.shape_cast %51 : vector<1x128xf32> to vector<1x1x128xf32>
    %c0_64 = arith.constant 0 : index
    %c0_65 = arith.constant 0 : index
    %c0_66 = arith.constant 0 : index
    %53 = vector.load %arg6[%c0_64, %c0_65, %c0_66] : memref<1x2x128xf32, #tpu.memory_space<vmem>>, vector<1x1x128xf32>
    tpu.vector_store %arg6[%c0_64, %c0_65, %c0_66], %52 {strides = array<i32>} : memref<1x2x128xf32, #tpu.memory_space<vmem>>, vector<1x1x128xf32>,
    %54 = arith.mulf %49, %49 : vector<256x128xf32>
    %cst_67 = arith.constant dense<0.000000e+00> : vector<128xf32>
    %55 = vector.multi_reduction <add>, %54, %cst_67 [0] : vector<256x128xf32> to vector<128xf32>
    %56 = vector.shape_cast %55 : vector<128xf32> to vector<1x128xf32>
    %57 = vector.shape_cast %56 : vector<1x128xf32> to vector<1x1x128xf32>
    %c0_68 = arith.constant 0 : index
    %c1_69 = arith.constant 1 : index
    %c0_70 = arith.constant 0 : index
    %58 = vector.load %arg6[%c0_68, %c1_69, %c0_70] : memref<1x2x128xf32, #tpu.memory_space<vmem>>, vector<1x1x128xf32>
    tpu.vector_store %arg6[%c0_68, %c1_69, %c0_70], %57 {strides = array<i32>} : memref<1x2x128xf32, #tpu.memory_space<vmem>>, vector<1x1x128xf32>,
    %59 = vector.shape_cast %49 : vector<256x128xf32> to vector<1x16x16x128xf32>
    %c0_71 = arith.constant 0 : index
    %c0_72 = arith.constant 0 : index
    %c0_73 = arith.constant 0 : index
    %c0_74 = arith.constant 0 : index
    %60 = vector.load %arg5[%c0_71, %c0_72, %c0_73, %c0_74] : memref<1x16x16x128xf32, #tpu.memory_space<vmem>>, vector<1x16x16x128xf32>
    tpu.vector_store %arg5[%c0_71, %c0_72, %c0_73, %c0_74], %59 {strides = array<i32>} : memref<1x16x16x128xf32, #tpu.memory_space<vmem>>, vector<1x16x16x128xf32>,
    return
  }
  func.func @transform_0(%arg0: i32) -> (i32, i32, i32, i32) {
    %c0_i32 = arith.constant 0 : i32
    %c0_i32_0 = arith.constant 0 : i32
    %c0_i32_1 = arith.constant 0 : i32
    %c0_i32_2 = arith.constant 0 : i32
    return %arg0, %c0_i32, %c0_i32_0, %c0_i32_1 : i32, i32, i32, i32
  }
  func.func @transform_1(%arg0: i32) -> (i32, i32) {
    %c0_i32 = arith.constant 0 : i32
    %c0_i32_0 = arith.constant 0 : i32
    %c0_i32_1 = arith.constant 0 : i32
    return %c0_i32, %c0_i32_0 : i32, i32
  }
  func.func @transform_2(%arg0: i32) -> (i32, i32) {
    %c0_i32 = arith.constant 0 : i32
    %c0_i32_0 = arith.constant 0 : i32
    %c0_i32_1 = arith.constant 0 : i32
    return %c0_i32, %c0_i32_0 : i32, i32
  }
  func.func @transform_3(%arg0: i32) -> (i32, i32) {
    %c0_i32 = arith.constant 0 : i32
    %c0_i32_0 = arith.constant 0 : i32
    %c0_i32_1 = arith.constant 0 : i32
    return %c0_i32, %c0_i32_0 : i32, i32
  }
  func.func @transform_4(%arg0: i32) -> (i32, i32, i32, i32) {
    %c0_i32 = arith.constant 0 : i32
    %c0_i32_0 = arith.constant 0 : i32
    %c0_i32_1 = arith.constant 0 : i32
    %c0_i32_2 = arith.constant 0 : i32
    return %arg0, %c0_i32, %c0_i32_0, %c0_i32_1 : i32, i32, i32, i32
  }
  func.func @transform_5(%arg0: i32) -> (i32, i32, i32) {
    %c0_i32 = arith.constant 0 : i32
    %c0_i32_0 = arith.constant 0 : i32
    %c0_i32_1 = arith.constant 0 : i32
    return %arg0, %c0_i32, %c0_i32_0 : i32, i32, i32
  }
}

</mosaic_0001>

<llo_original>
// kernel: basic_block.5
$region0: #{basic_block.5}
  #allocation0 [shape = 'u32[]', space=smem, size = 0x4, offset = 0x4, fixed_abs, tag = 'smem constant byte address 0x4 - core index']
  #allocation1 [shape = 'u32[72,128]{1,0:T(1,128)}', space=vmem, size = 0x9000, scoped, tag = 'internal scratch']
  %s0 = inlined_call_operand.vmem [shape: f32[2,16,16,128], index: 0, kind: input, shape index: {}]
  %s1 = inlined_call_operand.vmem [shape: f32[1,128], index: 1, kind: input, shape index: {}]
  %s2 = inlined_call_operand.vmem [shape: f32[1,128], index: 2, kind: input, shape index: {}]
  %s3 = inlined_call_operand.vmem [shape: f32[2,16,16,128], index: 3, kind: input, shape index: {}]
  %s4 = inlined_call_operand.vmem [shape: f32[2,16,16,128], index: 4, kind: output, shape index: {}]
  %s5 = sld [smem:[#allocation0]]
  $region49: #{basic_block.5} parent=0
    _
  %s7 = ssub.s32 1, %s5
  %s8 = scalar_select 0, %s7, %s5
  loop: start=0, step=1, limit=4
  $region2: #{basic_block.5} parent=0 // loop_pre_header
    _
  $region3: #{basic_block.5} parent=0 // loop_header
    %s10 = sphi 0, %s14
    %p11 = scmp.ge.s32.totalorder %s10, 4
    %s20 = sphi 0, %s22
    %s23 = sphi 0, %s20
    %s24 = sphi 0, %s23
    %s40 = sphi 0, %s24
    %s44 = sphi 0, %s44
    %s46 = sphi 0, %s44
    %s47 = sphi 0, %s46
    %s61 = sphi 0, %s47
    %s65 = sphi 0, %s65
    %s67 = sphi 0, %s65
    %s68 = sphi 0, %s67
    %s82 = sphi 0, %s68
    %s88 = sphi 0, %s90
    %s91 = sphi 0, %s88
    %s92 = sphi 0, %s91
    %s108 = sphi 0, %s92
    %s114 = sphi 0, %s116
    %s117 = sphi 0, %s114
    %s118 = sphi 0, %s117
    %s134 = sphi 0, %s118
  $region4: #{basic_block.5} parent=0 // loop_header_branch
    %13 = sbr.rel (%p11) target = $region8
  $region5: #{basic_block.5} parent=0 // loop_body
    %s15 = ssub.s32 %s10, 1
    %s16 = ssub.s32 %s10, 2
    %s17 = sadd.s32 %s10, 1
    %s18 = ssub.s32 %s10, %s17
    %p19 = scmp.eq.s32.totalorder %s18, 0
    %s21 = sadd.s32 %s20, 1
    %s22 = scalar_select %p19, %s20, %s21
    %p25 = pneg %p19
    %p26 = scmp.eq.s32.totalorder %s10, 1
    %p27 = por %p25, %p26
    %p28 = scmp.ne.s32.totalorder %s20, %s23
    %p29 = scmp.eq.s32.totalorder %s10, 0
    %p30 = por %p28, %p29
    %p31 = scmp.ne.s32.totalorder %s20, %s23
    %p32 = scmp.eq.s32.totalorder %s15, 1
    %p33 = por %p31, %p32
    %p34 = scmp.ne.s32.totalorder %s23, %s24
    %p35 = scmp.eq.s32.totalorder %s15, 0
    %p36 = por %p34, %p35
    %p37 = scmp.ne.s32.totalorder %s23, %s24
    %p38 = scmp.eq.s32.totalorder %s16, 1
    %p39 = por %p37, %p38
    %p41 = scmp.ne.s32.totalorder %s24, %s40
    %p42 = scmp.eq.s32.totalorder %s16, 0
    %p43 = por %p41, %p42
    %s45 = sadd.s32 %s44, 1
    %p48 = scmp.eq.s32.totalorder %s10, 1
    %p49 = scmp.ne.s32.totalorder %s44, %s46
    %p50 = scmp.eq.s32.totalorder %s10, 0
    %p51 = por %p49, %p50
    %p52 = scmp.ne.s32.totalorder %s44, %s46
    %p53 = scmp.eq.s32.totalorder %s15, 1
    %p54 = por %p52, %p53
    %p55 = scmp.ne.s32.totalorder %s46, %s47
    %p56 = scmp.eq.s32.totalorder %s15, 0
    %p57 = por %p55, %p56
    %p58 = scmp.ne.s32.totalorder %s46, %s47
    %p59 = scmp.eq.s32.totalorder %s16, 1
    %p60 = por %p58, %p59
    %p62 = scmp.ne.s32.totalorder %s47, %s61
    %p63 = scmp.eq.s32.totalorder %s16, 0
    %p64 = por %p62, %p63
    %s66 = sadd.s32 %s65, 1
    %p69 = scmp.eq.s32.totalorder %s10, 1
    %p70 = scmp.ne.s32.totalorder %s65, %s67
    %p71 = scmp.eq.s32.totalorder %s10, 0
    %p72 = por %p70, %p71
    %p73 = scmp.ne.s32.totalorder %s65, %s67
    %p74 = scmp.eq.s32.totalorder %s15, 1
    %p75 = por %p73, %p74
    %p76 = scmp.ne.s32.totalorder %s67, %s68
    %p77 = scmp.eq.s32.totalorder %s15, 0
    %p78 = por %p76, %p77
    %p79 = scmp.ne.s32.totalorder %s67, %s68
    %p80 = scmp.eq.s32.totalorder %s16, 1
    %p81 = por %p79, %p80
    %p83 = scmp.ne.s32.totalorder %s68, %s82
    %p84 = scmp.eq.s32.totalorder %s16, 0
    %p85 = por %p83, %p84
    %s86 = ssub.s32 %s10, %s17
    %p87 = scmp.eq.s32.totalorder %s86, 0
    %s89 = sadd.s32 %s88, 1
    %s90 = scalar_select %p87, %s88, %s89
    %p93 = pneg %p87
    %p94 = scmp.eq.s32.totalorder %s10, 1
    %p95 = por %p93, %p94
    %p96 = scmp.ne.s32.totalorder %s88, %s91
    %p97 = scmp.eq.s32.totalorder %s10, 0
    %p98 = por %p96, %p97
    %p99 = scmp.ne.s32.totalorder %s88, %s91
    %p100 = scmp.eq.s32.totalorder %s15, 1
    %p101 = por %p99, %p100
    %p102 = scmp.ne.s32.totalorder %s91, %s92
    %p103 = scmp.eq.s32.totalorder %s15, 0
    %p104 = por %p102, %p103
    %p105 = scmp.ne.s32.totalorder %s91, %s92
    %p106 = scmp.eq.s32.totalorder %s16, 1
    %p107 = por %p105, %p106
    %p109 = scmp.ne.s32.totalorder %s92, %s108
    %p110 = scmp.eq.s32.totalorder %s16, 0
    %p111 = por %p109, %p110
    %s112 = ssub.s32 %s10, %s17
    %p113 = scmp.eq.s32.totalorder %s112, 0
    %s115 = sadd.s32 %s114, 1
    %s116 = scalar_select %p113, %s114, %s115
    %p119 = pneg %p113
    %p120 = scmp.eq.s32.totalorder %s10, 1
    %p121 = por %p119, %p120
    %p122 = scmp.ne.s32.totalorder %s114, %s117
    %p123 = scmp.eq.s32.totalorder %s10, 0
    %p124 = por %p122, %p123
    %p125 = scmp.ne.s32.totalorder %s114, %s117
    %p126 = scmp.eq.s32.totalorder %s15, 1
    %p127 = por %p125, %p126
    %p128 = scmp.ne.s32.totalorder %s117, %s118
    %p129 = scmp.eq.s32.totalorder %s15, 0
    %p130 = por %p128, %p129
    %p131 = scmp.ne.s32.totalorder %s117, %s118
    %p132 = scmp.eq.s32.totalorder %s16, 1
    %p133 = por %p131, %p132
    %p135 = scmp.ne.s32.totalorder %s118, %s134
    %p136 = scmp.eq.s32.totalorder %s16, 0
    %p137 = por %p135, %p136
    %p138 = scmp.le.s32.totalorder 1, %s10
    %p139 = scmp.lt.s32.totalorder %s10, 3
    %p140 = pnand %p138, %p139
    %p141 = pneg %p140
    // Predicated region
    $region9: #{basic_block.5} parent=5 // pred_check
      _
    $region10: #{basic_block.5} parent=5 // pred_check_branch
      %143 = sbr.rel (%p140) target = $region12
    $region11: #{basic_block.5} parent=5 // pred_region
      %s144 = ssub.s32 %s10, 1
      // Predicated region
      $region13: #{basic_block.5} parent=11 // pred_check
        %p145 = pneg %p57
      $region14: #{basic_block.5} parent=11 // pred_check_branch
        %147 = sbr.rel (%p145) target = $region16
      $region15: #{basic_block.5} parent=11 // pred_region
        _
      $region16: #{basic_block.5} parent=11 // pred_fallthru
        _
      // Predicated region
      $region17: #{basic_block.5} parent=11 // pred_check
        %p148 = pneg %p78
      $region18: #{basic_block.5} parent=11 // pred_check_branch
        %150 = sbr.rel (%p148) target = $region20
      $region19: #{basic_block.5} parent=11 // pred_region
        _
      $region20: #{basic_block.5} parent=11 // pred_fallthru
        _
    $region12: #{basic_block.5} parent=5 // pred_fallthru
      _
    %p151 = scmp.lt.s32.totalorder %s10, 2
    // Predicated region
    $region21: #{basic_block.5} parent=5 // pred_check
      %p152 = pneg %p151
    $region22: #{basic_block.5} parent=5 // pred_check_branch
      %154 = sbr.rel (%p152) target = $region24
    $region23: #{basic_block.5} parent=5 // pred_region
      // Predicated region
      $region25: #{basic_block.5} parent=23 // pred_check
        %p155 = pneg %p30
      $region26: #{basic_block.5} parent=23 // pred_check_branch
        %157 = sbr.rel (%p155) target = $region28
      $region27: #{basic_block.5} parent=23 // pred_region
        %p158 = scmp.lt.s32.totalorder %s10, 1
        %s159 = scalar_select %p158, %s10, 1
        %s160 = smul.addr %s159, 32
        %s161 = smul.addr %s160, 8
        %s162 = scalar_lea.vmem %s0, %s161
      $region28: #{basic_block.5} parent=23 // pred_fallthru
        _
      // Predicated region
      $region29: #{basic_block.5} parent=23 // pred_check
        %p163 = pneg %p98
      $region30: #{basic_block.5} parent=23 // pred_check_branch
        %165 = sbr.rel (%p163) target = $region32
      $region31: #{basic_block.5} parent=23 // pred_region
        %p166 = scmp.lt.s32.totalorder %s10, 1
        %s167 = scalar_select %p166, %s10, 1
        %s168 = smul.addr %s167, 32
        %s169 = smul.addr %s168, 8
        %s170 = scalar_lea.vmem %s3, %s169
      $region32: #{basic_block.5} parent=23 // pred_fallthru
        _
    $region24: #{basic_block.5} parent=5 // pred_fallthru
      _
    %p171 = scmp.le.s32.totalorder 1, %s10
    %p172 = scmp.lt.s32.totalorder %s10, 3
    %p173 = pnand %p171, %p172
    %p174 = pneg %p173
    // Predicated region
    $region33: #{basic_block.5} parent=5 // pred_check
      _
    $region34: #{basic_block.5} parent=5 // pred_check_branch
      %176 = sbr.rel (%p173) target = $region36
    $region35: #{basic_block.5} parent=5 // pred_region
      %s177 = ssub.s32 %s10, 1
      %p178 = scmp.lt.s32.totalorder %s15, 1
      %s179 = scalar_select %p178, %s15, 1
      %s180 = smul.addr %s179, 32
      %s181 = smul.addr %s180, 8
      %s182 = scalar_lea.vmem %s0, %s181
      %p183 = pneg %p36
      %p184 = pneg %p33
      %p185 = pneg %p57
      %p186 = pneg %p54
      %p187 = pneg %p78
      %p188 = pneg %p75
      %p189 = scmp.lt.s32.totalorder %s15, 1
      %s190 = scalar_select %p189, %s15, 1
      %s191 = smul.addr %s190, 32
      %s192 = smul.addr %s191, 8
      %s193 = scalar_lea.vmem %s3, %s192
      %p194 = pneg %p104
      %p195 = pneg %p101
      %p196 = pneg %p130
      %p197 = pneg %p127
      %p198 = scmp.lt.s32.totalorder %s15, 1
      %s199 = scalar_select %p198, %s15, 1
      %s200 = smul.addr %s199, 32
      %s201 = smul.addr %s200, 8
      %s202 = scalar_lea.vmem %s4, %s201
      %p203 = scmp.lt.s32.totalorder %s15, 1
      %s204 = scalar_select %p203, %s15, 1
      %s205 = smul.addr %s204, 32
      %s206 = smul.addr %s205, 8
      %s207 = scalar_lea.vmem %s0, %s206
      %p208 = scmp.lt.s32.totalorder %s15, 1
      %s209 = scalar_select %p208, %s15, 1
      %s210 = smul.addr %s209, 32
      %s211 = smul.addr %s210, 8
      %s212 = scalar_lea.vmem %s3, %s211
      %p213 = scmp.lt.s32.totalorder %s15, 1
      %s214 = scalar_select %p213, %s15, 1
      %s215 = smul.addr %s214, 32
      %s216 = smul.addr %s215, 8
      %s217 = scalar_lea.vmem %s4, %s216
      %v218 = vld [vmem:[%s1] sm:$0x1]
      %v219 = vld [vmem:[%s2] sm:$0x1]
      %v220 = vld [vmem:[%s207] sm:$0xff]
      %v221 = vld [vmem:[%s207 + $0x8] sm:$0xff]
      %v222 = vld [vmem:[%s207 + $0x10] sm:$0xff]
      %v223 = vld [vmem:[%s207 + $0x18] sm:$0xff]
      %v224 = vld [vmem:[%s207 + $0x20] sm:$0xff]
      %v225 = vld [vmem:[%s207 + $0x28] sm:$0xff]
      %v226 = vld [vmem:[%s207 + $0x30] sm:$0xff]
      %v227 = vld [vmem:[%s207 + $0x38] sm:$0xff]
      %v228 = vld [vmem:[%s207 + $0x40] sm:$0xff]
      %v229 = vld [vmem:[%s207 + $0x48] sm:$0xff]
      %v230 = vld [vmem:[%s207 + $0x50] sm:$0xff]
      %v231 = vld [vmem:[%s207 + $0x58] sm:$0xff]
      %v232 = vld [vmem:[%s207 + $0x60] sm:$0xff]
      %v233 = vld [vmem:[%s207 + $0x68] sm:$0xff]
      %v234 = vld [vmem:[%s207 + $0x70] sm:$0xff]
      %v235 = vld [vmem:[%s207 + $0x78] sm:$0xff]
      %v236 = vld [vmem:[%s207 + $0x80] sm:$0xff]
      %v237 = vld [vmem:[%s207 + $0x88] sm:$0xff]
      %v238 = vld [vmem:[%s207 + $0x90] sm:$0xff]
      %v239 = vld [vmem:[%s207 + $0x98] sm:$0xff]
      %v240 = vld [vmem:[%s207 + $0xa0] sm:$0xff]
      %v241 = vld [vmem:[%s207 + $0xa8] sm:$0xff]
      %v242 = vld [vmem:[%s207 + $0xb0] sm:$0xff]
      %v243 = vld [vmem:[%s207 + $0xb8] sm:$0xff]
      %v244 = vld [vmem:[%s207 + $0xc0] sm:$0xff]
      %v245 = vld [vmem:[%s207 + $0xc8] sm:$0xff]
      %v246 = vld [vmem:[%s207 + $0xd0] sm:$0xff]
      %v247 = vld [vmem:[%s207 + $0xd8] sm:$0xff]
      %v248 = vld [vmem:[%s207 + $0xe0] sm:$0xff]
      %v249 = vld [vmem:[%s207 + $0xe8] sm:$0xff]
      %v250 = vld [vmem:[%s207 + $0xf0] sm:$0xff]
      %v251 = vld [vmem:[%s207 + $0xf8] sm:$0xff]
      %v253 = vperm.slane %v218, 0
      %v255 = vmul.f32 %v220, %v253
      %v256 = vmul.f32 %v221, %v253
      %v257 = vmul.f32 %v222, %v253
      %v258 = vmul.f32 %v223, %v253
      %v259 = vmul.f32 %v224, %v253
      %v260 = vmul.f32 %v225, %v253
      %v261 = vmul.f32 %v226, %v253
      %v262 = vmul.f32 %v227, %v253
      %v263 = vmul.f32 %v228, %v253
      %v264 = vmul.f32 %v229, %v253
      %v265 = vmul.f32 %v230, %v253
      %v266 = vmul.f32 %v231, %v253
      %v267 = vmul.f32 %v232, %v253
      %v268 = vmul.f32 %v233, %v253
      %v269 = vmul.f32 %v234, %v253
      %v270 = vmul.f32 %v235, %v253
      %v271 = vmul.f32 %v236, %v253
      %v272 = vmul.f32 %v237, %v253
      %v273 = vmul.f32 %v238, %v253
      %v274 = vmul.f32 %v239, %v253
      %v275 = vmul.f32 %v240, %v253
      %v276 = vmul.f32 %v241, %v253
      %v277 = vmul.f32 %v242, %v253
      %v278 = vmul.f32 %v243, %v253
      %v279 = vmul.f32 %v244, %v253
      %v280 = vmul.f32 %v245, %v253
      %v281 = vmul.f32 %v246, %v253
      %v282 = vmul.f32 %v247, %v253
      %v283 = vmul.f32 %v248, %v253
      %v284 = vmul.f32 %v249, %v253
      %v285 = vmul.f32 %v250, %v253
      %v286 = vmul.f32 %v251, %v253
      %v288 = vperm.slane %v219, 0
      %v290 = vadd.f32 %v255, %v288
      %v291 = vadd.f32 %v256, %v288
      %v292 = vadd.f32 %v257, %v288
      %v293 = vadd.f32 %v258, %v288
      %v294 = vadd.f32 %v259, %v288
      %v295 = vadd.f32 %v260, %v288
      %v296 = vadd.f32 %v261, %v288
      %v297 = vadd.f32 %v262, %v288
      %v298 = vadd.f32 %v263, %v288
      %v299 = vadd.f32 %v264, %v288
      %v300 = vadd.f32 %v265, %v288
      %v301 = vadd.f32 %v266, %v288
      %v302 = vadd.f32 %v267, %v288
      %v303 = vadd.f32 %v268, %v288
      %v304 = vadd.f32 %v269, %v288
      %v305 = vadd.f32 %v270, %v288
      %v306 = vadd.f32 %v271, %v288
      %v307 = vadd.f32 %v272, %v288
      %v308 = vadd.f32 %v273, %v288
      %v309 = vadd.f32 %v274, %v288
      %v310 = vadd.f32 %v275, %v288
      %v311 = vadd.f32 %v276, %v288
      %v312 = vadd.f32 %v277, %v288
      %v313 = vadd.f32 %v278, %v288
      %v314 = vadd.f32 %v279, %v288
      %v315 = vadd.f32 %v280, %v288
      %v316 = vadd.f32 %v281, %v288
      %v317 = vadd.f32 %v282, %v288
      %v318 = vadd.f32 %v283, %v288
      %v319 = vadd.f32 %v284, %v288
      %v320 = vadd.f32 %v285, %v288
      %v321 = vadd.f32 %v286, %v288
      %v322 = vld [vmem:[%s212] sm:$0xff]
      %v323 = vld [vmem:[%s212 + $0x8] sm:$0xff]
      %v324 = vld [vmem:[%s212 + $0x10] sm:$0xff]
      %v325 = vld [vmem:[%s212 + $0x18] sm:$0xff]
      %v326 = vld [vmem:[%s212 + $0x20] sm:$0xff]
      %v327 = vld [vmem:[%s212 + $0x28] sm:$0xff]
      %v328 = vld [vmem:[%s212 + $0x30] sm:$0xff]
      %v329 = vld [vmem:[%s212 + $0x38] sm:$0xff]
      %v330 = vld [vmem:[%s212 + $0x40] sm:$0xff]
      %v331 = vld [vmem:[%s212 + $0x48] sm:$0xff]
      %v332 = vld [vmem:[%s212 + $0x50] sm:$0xff]
      %v333 = vld [vmem:[%s212 + $0x58] sm:$0xff]
      %v334 = vld [vmem:[%s212 + $0x60] sm:$0xff]
      %v335 = vld [vmem:[%s212 + $0x68] sm:$0xff]
      %v336 = vld [vmem:[%s212 + $0x70] sm:$0xff]
      %v337 = vld [vmem:[%s212 + $0x78] sm:$0xff]
      %v338 = vld [vmem:[%s212 + $0x80] sm:$0xff]
      %v339 = vld [vmem:[%s212 + $0x88] sm:$0xff]
      %v340 = vld [vmem:[%s212 + $0x90] sm:$0xff]
      %v341 = vld [vmem:[%s212 + $0x98] sm:$0xff]
      %v342 = vld [vmem:[%s212 + $0xa0] sm:$0xff]
      %v343 = vld [vmem:[%s212 + $0xa8] sm:$0xff]
      %v344 = vld [vmem:[%s212 + $0xb0] sm:$0xff]
      %v345 = vld [vmem:[%s212 + $0xb8] sm:$0xff]
      %v346 = vld [vmem:[%s212 + $0xc0] sm:$0xff]
      %v347 = vld [vmem:[%s212 + $0xc8] sm:$0xff]
      %v348 = vld [vmem:[%s212 + $0xd0] sm:$0xff]
      %v349 = vld [vmem:[%s212 + $0xd8] sm:$0xff]
      %v350 = vld [vmem:[%s212 + $0xe0] sm:$0xff]
      %v351 = vld [vmem:[%s212 + $0xe8] sm:$0xff]
      %v352 = vld [vmem:[%s212 + $0xf0] sm:$0xff]
      %v353 = vld [vmem:[%s212 + $0xf8] sm:$0xff]
      %v354 = vadd.f32 %v290, %v322
      %v355 = vadd.f32 %v291, %v323
      %v356 = vadd.f32 %v292, %v324
      %v357 = vadd.f32 %v293, %v325
      %v358 = vadd.f32 %v294, %v326
      %v359 = vadd.f32 %v295, %v327
      %v360 = vadd.f32 %v296, %v328
      %v361 = vadd.f32 %v297, %v329
      %v362 = vadd.f32 %v298, %v330
      %v363 = vadd.f32 %v299, %v331
      %v364 = vadd.f32 %v300, %v332
      %v365 = vadd.f32 %v301, %v333
      %v366 = vadd.f32 %v302, %v334
      %v367 = vadd.f32 %v303, %v335
      %v368 = vadd.f32 %v304, %v336
      %v369 = vadd.f32 %v305, %v337
      %v370 = vadd.f32 %v306, %v338
      %v371 = vadd.f32 %v307, %v339
      %v372 = vadd.f32 %v308, %v340
      %v373 = vadd.f32 %v309, %v341
      %v374 = vadd.f32 %v310, %v342
      %v375 = vadd.f32 %v311, %v343
      %v376 = vadd.f32 %v312, %v344
      %v377 = vadd.f32 %v313, %v345
      %v378 = vadd.f32 %v314, %v346
      %v379 = vadd.f32 %v315, %v347
      %v380 = vadd.f32 %v316, %v348
      %v381 = vadd.f32 %v317, %v349
      %v382 = vadd.f32 %v318, %v350
      %v383 = vadd.f32 %v319, %v351
      %v384 = vadd.f32 %v320, %v352
      %v385 = vadd.f32 %v321, %v353
      %v386 = vmax.f32 %v354, 0.0
      %v387 = vmax.f32 %v355, 0.0
      %v388 = vmax.f32 %v356, 0.0
      %v389 = vmax.f32 %v357, 0.0
      %v390 = vmax.f32 %v358, 0.0
      %v391 = vmax.f32 %v359, 0.0
      %v392 = vmax.f32 %v360, 0.0
      %v393 = vmax.f32 %v361, 0.0
      %v394 = vmax.f32 %v362, 0.0
      %v395 = vmax.f32 %v363, 0.0
      %v396 = vmax.f32 %v364, 0.0
      %v397 = vmax.f32 %v365, 0.0
      %v398 = vmax.f32 %v366, 0.0
      %v399 = vmax.f32 %v367, 0.0
      %v400 = vmax.f32 %v368, 0.0
      %v401 = vmax.f32 %v369, 0.0
      %v402 = vmax.f32 %v370, 0.0
      %v403 = vmax.f32 %v371, 0.0
      %v404 = vmax.f32 %v372, 0.0
      %v405 = vmax.f32 %v373, 0.0
      %v406 = vmax.f32 %v374, 0.0
      %v407 = vmax.f32 %v375, 0.0
      %v408 = vmax.f32 %v376, 0.0
      %v409 = vmax.f32 %v377, 0.0
      %v410 = vmax.f32 %v378, 0.0
      %v411 = vmax.f32 %v379, 0.0
      %v412 = vmax.f32 %v380, 0.0
      %v413 = vmax.f32 %v381, 0.0
      %v414 = vmax.f32 %v382, 0.0
      %v415 = vmax.f32 %v383, 0.0
      %v416 = vmax.f32 %v384, 0.0
      %v417 = vmax.f32 %v385, 0.0
      %418 = vst [vmem:[%s217] sm:$0xff] %v386
      %419 = vst [vmem:[%s217 + $0x8] sm:$0xff] %v387
      %420 = vst [vmem:[%s217 + $0x10] sm:$0xff] %v388
      %421 = vst [vmem:[%s217 + $0x18] sm:$0xff] %v389
      %422 = vst [vmem:[%s217 + $0x20] sm:$0xff] %v390
      %423 = vst [vmem:[%s217 + $0x28] sm:$0xff] %v391
      %424 = vst [vmem:[%s217 + $0x30] sm:$0xff] %v392
      %425 = vst [vmem:[%s217 + $0x38] sm:$0xff] %v393
      %426 = vst [vmem:[%s217 + $0x40] sm:$0xff] %v394
      %427 = vst [vmem:[%s217 + $0x48] sm:$0xff] %v395
      %428 = vst [vmem:[%s217 + $0x50] sm:$0xff] %v396
      %429 = vst [vmem:[%s217 + $0x58] sm:$0xff] %v397
      %430 = vst [vmem:[%s217 + $0x60] sm:$0xff] %v398
      %431 = vst [vmem:[%s217 + $0x68] sm:$0xff] %v399
      %432 = vst [vmem:[%s217 + $0x70] sm:$0xff] %v400
      %433 = vst [vmem:[%s217 + $0x78] sm:$0xff] %v401
      %434 = vst [vmem:[%s217 + $0x80] sm:$0xff] %v402
      %435 = vst [vmem:[%s217 + $0x88] sm:$0xff] %v403
      %436 = vst [vmem:[%s217 + $0x90] sm:$0xff] %v404
      %437 = vst [vmem:[%s217 + $0x98] sm:$0xff] %v405
      %438 = vst [vmem:[%s217 + $0xa0] sm:$0xff] %v406
      %439 = vst [vmem:[%s217 + $0xa8] sm:$0xff] %v407
      %440 = vst [vmem:[%s217 + $0xb0] sm:$0xff] %v408
      %441 = vst [vmem:[%s217 + $0xb8] sm:$0xff] %v409
      %442 = vst [vmem:[%s217 + $0xc0] sm:$0xff] %v410
      %443 = vst [vmem:[%s217 + $0xc8] sm:$0xff] %v411
      %444 = vst [vmem:[%s217 + $0xd0] sm:$0xff] %v412
      %445 = vst [vmem:[%s217 + $0xd8] sm:$0xff] %v413
      %446 = vst [vmem:[%s217 + $0xe0] sm:$0xff] %v414
      %447 = vst [vmem:[%s217 + $0xe8] sm:$0xff] %v415
      %448 = vst [vmem:[%s217 + $0xf0] sm:$0xff] %v416
      %449 = vst [vmem:[%s217 + $0xf8] sm:$0xff] %v417
      %p450 = scmp.lt.s32.totalorder %s15, 1
      %s451 = scalar_select %p450, %s15, 1
      %s452 = smul.addr %s451, 32
      %s453 = smul.addr %s452, 8
      %s454 = scalar_lea.vmem %s4, %s453
      // Predicated region
      $region37: #{basic_block.5} parent=35 // pred_check
        %p455 = pneg %p127
      $region38: #{basic_block.5} parent=35 // pred_check_branch
        %457 = sbr.rel (%p455) target = $region40
      $region39: #{basic_block.5} parent=35 // pred_region
        _
      $region40: #{basic_block.5} parent=35 // pred_fallthru
        _
    $region36: #{basic_block.5} parent=5 // pred_fallthru
      _
    %p458 = scmp.le.s32.totalorder 2, %s10
    // Predicated region
    $region41: #{basic_block.5} parent=5 // pred_check
      %p459 = pneg %p458
    $region42: #{basic_block.5} parent=5 // pred_check_branch
      %461 = sbr.rel (%p459) target = $region44
    $region43: #{basic_block.5} parent=5 // pred_region
      %s462 = ssub.s32 %s10, 2
      // Predicated region
      $region45: #{basic_block.5} parent=43 // pred_check
        %p463 = pneg %p133
      $region46: #{basic_block.5} parent=43 // pred_check_branch
        %465 = sbr.rel (%p463) target = $region48
      $region47: #{basic_block.5} parent=43 // pred_region
        %p466 = scmp.lt.s32.totalorder %s16, 1
        %s467 = scalar_select %p466, %s16, 1
        %s468 = smul.addr %s467, 32
        %s469 = smul.addr %s468, 8
        %s470 = scalar_lea.vmem %s4, %s469
      $region48: #{basic_block.5} parent=43 // pred_fallthru
        _
    $region44: #{basic_block.5} parent=5 // pred_fallthru
      _
  $region6: #{basic_block.5} parent=0 // loop_footer
    %s14 = sadd.s32 1, %s10
  $region7: #{basic_block.5} parent=0 // loop_footer_branch
    %9 = sbr.rel target = $region3
  $region8: #{basic_block.5} parent=0 // loop_exit
    _

// kernel: basic_block.3
$region0: #{basic_block.3}
  #allocation0 [shape = 'u32[]', space=smem, size = 0x4, offset = 0x4, fixed_abs, tag = 'smem constant byte address 0x4 - core index']
  #allocation1 [shape = 'u32[72,128]{1,0:T(1,128)}', space=vmem, size = 0x9000, scoped, tag = 'internal scratch']
  #allocation2 [shape = 'bf16[18,18,128]{2,1,0:T(8,128)(2,1)}', space=vmem, size = 0x1b000, scoped, tag = 'scratch operand']
  #allocation3 [shape = 'bf16[256,1152]{1,0:T(8,128)(2,1)}', space=vmem, size = 0x90000, scoped, tag = 'scratch operand']
  %s0 = inlined_call_operand.vmem [shape: f32[2,16,16,128], index: 0, kind: input, shape index: {}]
  %s1 = inlined_call_operand.vmem [shape: bf16[1152,128], index: 1, kind: input, shape index: {}]
  %s2 = inlined_call_operand.vmem [shape: f32[1,128], index: 2, kind: input, shape index: {}]
  %s3 = inlined_call_operand.vmem [shape: f32[1,128], index: 3, kind: input, shape index: {}]
  %s4 = inlined_call_operand.vmem [shape: f32[2,16,16,128], index: 4, kind: output, shape index: {0}]
  %s5 = inlined_call_operand.vmem [shape: f32[2,2,128], index: 5, kind: output, shape index: {1}]
  %6 = xla_tuple %s4, %s5
  %s7 = sld [smem:[#allocation0]]
  $region57: #{basic_block.3} parent=0
    _
  %s9 = ssub.s32 1, %s7
  %s10 = scalar_select 0, %s9, %s7
  loop: start=0, step=1, limit=4
  $region2: #{basic_block.3} parent=0 // loop_pre_header
    _
  $region3: #{basic_block.3} parent=0 // loop_header
    %s12 = sphi 0, %s16
    %p13 = scmp.ge.s32.totalorder %s12, 4
    %s22 = sphi 0, %s24
    %s25 = sphi 0, %s22
    %s26 = sphi 0, %s25
    %s42 = sphi 0, %s26
    %s46 = sphi 0, %s46
    %s48 = sphi 0, %s46
    %s49 = sphi 0, %s48
    %s63 = sphi 0, %s49
    %s67 = sphi 0, %s67
    %s69 = sphi 0, %s67
    %s70 = sphi 0, %s69
    %s84 = sphi 0, %s70
    %s88 = sphi 0, %s88
    %s90 = sphi 0, %s88
    %s91 = sphi 0, %s90
    %s105 = sphi 0, %s91
    %s111 = sphi 0, %s113
    %s114 = sphi 0, %s111
    %s115 = sphi 0, %s114
    %s131 = sphi 0, %s115
    %s137 = sphi 0, %s139
    %s140 = sphi 0, %s137
    %s141 = sphi 0, %s140
    %s157 = sphi 0, %s141
  $region4: #{basic_block.3} parent=0 // loop_header_branch
    %15 = sbr.rel (%p13) target = $region8
  $region5: #{basic_block.3} parent=0 // loop_body
    %s17 = ssub.s32 %s12, 1
    %s18 = ssub.s32 %s12, 2
    %s19 = sadd.s32 %s12, 1
    %s20 = ssub.s32 %s12, %s19
    %p21 = scmp.eq.s32.totalorder %s20, 0
    %s23 = sadd.s32 %s22, 1
    %s24 = scalar_select %p21, %s22, %s23
    %p27 = pneg %p21
    %p28 = scmp.eq.s32.totalorder %s12, 1
    %p29 = por %p27, %p28
    %p30 = scmp.ne.s32.totalorder %s22, %s25
    %p31 = scmp.eq.s32.totalorder %s12, 0
    %p32 = por %p30, %p31
    %p33 = scmp.ne.s32.totalorder %s22, %s25
    %p34 = scmp.eq.s32.totalorder %s17, 1
    %p35 = por %p33, %p34
    %p36 = scmp.ne.s32.totalorder %s25, %s26
    %p37 = scmp.eq.s32.totalorder %s17, 0
    %p38 = por %p36, %p37
    %p39 = scmp.ne.s32.totalorder %s25, %s26
    %p40 = scmp.eq.s32.totalorder %s18, 1
    %p41 = por %p39, %p40
    %p43 = scmp.ne.s32.totalorder %s26, %s42
    %p44 = scmp.eq.s32.totalorder %s18, 0
    %p45 = por %p43, %p44
    %s47 = sadd.s32 %s46, 1
    %p50 = scmp.eq.s32.totalorder %s12, 1
    %p51 = scmp.ne.s32.totalorder %s46, %s48
    %p52 = scmp.eq.s32.totalorder %s12, 0
    %p53 = por %p51, %p52
    %p54 = scmp.ne.s32.totalorder %s46, %s48
    %p55 = scmp.eq.s32.totalorder %s17, 1
    %p56 = por %p54, %p55
    %p57 = scmp.ne.s32.totalorder %s48, %s49
    %p58 = scmp.eq.s32.totalorder %s17, 0
    %p59 = por %p57, %p58
    %p60 = scmp.ne.s32.totalorder %s48, %s49
    %p61 = scmp.eq.s32.totalorder %s18, 1
    %p62 = por %p60, %p61
    %p64 = scmp.ne.s32.totalorder %s49, %s63
    %p65 = scmp.eq.s32.totalorder %s18, 0
    %p66 = por %p64, %p65
    %s68 = sadd.s32 %s67, 1
    %p71 = scmp.eq.s32.totalorder %s12, 1
    %p72 = scmp.ne.s32.totalorder %s67, %s69
    %p73 = scmp.eq.s32.totalorder %s12, 0
    %p74 = por %p72, %p73
    %p75 = scmp.ne.s32.totalorder %s67, %s69
    %p76 = scmp.eq.s32.totalorder %s17, 1
    %p77 = por %p75, %p76
    %p78 = scmp.ne.s32.totalorder %s69, %s70
    %p79 = scmp.eq.s32.totalorder %s17, 0
    %p80 = por %p78, %p79
    %p81 = scmp.ne.s32.totalorder %s69, %s70
    %p82 = scmp.eq.s32.totalorder %s18, 1
    %p83 = por %p81, %p82
    %p85 = scmp.ne.s32.totalorder %s70, %s84
    %p86 = scmp.eq.s32.totalorder %s18, 0
    %p87 = por %p85, %p86
    %s89 = sadd.s32 %s88, 1
    %p92 = scmp.eq.s32.totalorder %s12, 1
    %p93 = scmp.ne.s32.totalorder %s88, %s90
    %p94 = scmp.eq.s32.totalorder %s12, 0
    %p95 = por %p93, %p94
    %p96 = scmp.ne.s32.totalorder %s88, %s90
    %p97 = scmp.eq.s32.totalorder %s17, 1
    %p98 = por %p96, %p97
    %p99 = scmp.ne.s32.totalorder %s90, %s91
    %p100 = scmp.eq.s32.totalorder %s17, 0
    %p101 = por %p99, %p100
    %p102 = scmp.ne.s32.totalorder %s90, %s91
    %p103 = scmp.eq.s32.totalorder %s18, 1
    %p104 = por %p102, %p103
    %p106 = scmp.ne.s32.totalorder %s91, %s105
    %p107 = scmp.eq.s32.totalorder %s18, 0
    %p108 = por %p106, %p107
    %s109 = ssub.s32 %s12, %s19
    %p110 = scmp.eq.s32.totalorder %s109, 0
    %s112 = sadd.s32 %s111, 1
    %s113 = scalar_select %p110, %s111, %s112
    %p116 = pneg %p110
    %p117 = scmp.eq.s32.totalorder %s12, 1
    %p118 = por %p116, %p117
    %p119 = scmp.ne.s32.totalorder %s111, %s114
    %p120 = scmp.eq.s32.totalorder %s12, 0
    %p121 = por %p119, %p120
    %p122 = scmp.ne.s32.totalorder %s111, %s114
    %p123 = scmp.eq.s32.totalorder %s17, 1
    %p124 = por %p122, %p123
    %p125 = scmp.ne.s32.totalorder %s114, %s115
    %p126 = scmp.eq.s32.totalorder %s17, 0
    %p127 = por %p125, %p126
    %p128 = scmp.ne.s32.totalorder %s114, %s115
    %p129 = scmp.eq.s32.totalorder %s18, 1
    %p130 = por %p128, %p129
    %p132 = scmp.ne.s32.totalorder %s115, %s131
    %p133 = scmp.eq.s32.totalorder %s18, 0
    %p134 = por %p132, %p133
    %s135 = ssub.s32 %s12, %s19
    %p136 = scmp.eq.s32.totalorder %s135, 0
    %s138 = sadd.s32 %s137, 1
    %s139 = scalar_select %p136, %s137, %s138
    %p142 = pneg %p136
    %p143 = scmp.eq.s32.totalorder %s12, 1
    %p144 = por %p142, %p143
    %p145 = scmp.ne.s32.totalorder %s137, %s140
    %p146 = scmp.eq.s32.totalorder %s12, 0
    %p147 = por %p145, %p146
    %p148 = scmp.ne.s32.totalorder %s137, %s140
    %p149 = scmp.eq.s32.totalorder %s17, 1
    %p150 = por %p148, %p149
    %p151 = scmp.ne.s32.totalorder %s140, %s141
    %p152 = scmp.eq.s32.totalorder %s17, 0
    %p153 = por %p151, %p152
    %p154 = scmp.ne.s32.totalorder %s140, %s141
    %p155 = scmp.eq.s32.totalorder %s18, 1
    %p156 = por %p154, %p155
    %p158 = scmp.ne.s32.totalorder %s141, %s157
    %p159 = scmp.eq.s32.totalorder %s18, 0
    %p160 = por %p158, %p159
    %p161 = scmp.le.s32.totalorder 1, %s12
    %p162 = scmp.lt.s32.totalorder %s12, 3
    %p163 = pnand %p161, %p162
    %p164 = pneg %p163
    // Predicated region
    $region9: #{basic_block.3} parent=5 // pred_check
      _
    $region10: #{basic_block.3} parent=5 // pred_check_branch
      %166 = sbr.rel (%p163) target = $region12
    $region11: #{basic_block.3} parent=5 // pred_region
      %s167 = ssub.s32 %s12, 1
      // Predicated region
      $region13: #{basic_block.3} parent=11 // pred_check
        %p168 = pneg %p59
      $region14: #{basic_block.3} parent=11 // pred_check_branch
        %170 = sbr.rel (%p168) target = $region16
      $region15: #{basic_block.3} parent=11 // pred_region
        _
      $region16: #{basic_block.3} parent=11 // pred_fallthru
        _
      // Predicated region
      $region17: #{basic_block.3} parent=11 // pred_check
        %p171 = pneg %p80
      $region18: #{basic_block.3} parent=11 // pred_check_branch
        %173 = sbr.rel (%p171) target = $region20
      $region19: #{basic_block.3} parent=11 // pred_region
        _
      $region20: #{basic_block.3} parent=11 // pred_fallthru
        _
      // Predicated region
      $region21: #{basic_block.3} parent=11 // pred_check
        %p174 = pneg %p101
      $region22: #{basic_block.3} parent=11 // pred_check_branch
        %176 = sbr.rel (%p174) target = $region24
      $region23: #{basic_block.3} parent=11 // pred_region
        _
      $region24: #{basic_block.3} parent=11 // pred_fallthru
        _
    $region12: #{basic_block.3} parent=5 // pred_fallthru
      _
    %p177 = scmp.lt.s32.totalorder %s12, 2
    // Predicated region
    $region25: #{basic_block.3} parent=5 // pred_check
      %p178 = pneg %p177
    $region26: #{basic_block.3} parent=5 // pred_check_branch
      %180 = sbr.rel (%p178) target = $region28
    $region27: #{basic_block.3} parent=5 // pred_region
      // Predicated region
      $region29: #{basic_block.3} parent=27 // pred_check
        %p181 = pneg %p32
      $region30: #{basic_block.3} parent=27 // pred_check_branch
        %183 = sbr.rel (%p181) target = $region32
      $region31: #{basic_block.3} parent=27 // pred_region
        %p184 = scmp.lt.s32.totalorder %s12, 1
        %s185 = scalar_select %p184, %s12, 1
        %s186 = smul.addr %s185, 32
        %s187 = smul.addr %s186, 8
        %s188 = scalar_lea.vmem %s0, %s187
      $region32: #{basic_block.3} parent=27 // pred_fallthru
        _
    $region28: #{basic_block.3} parent=5 // pred_fallthru
      _
    %p189 = scmp.le.s32.totalorder 1, %s12
    %p190 = scmp.lt.s32.totalorder %s12, 3
    %p191 = pnand %p189, %p190
    %p192 = pneg %p191
    // Predicated region
    $region33: #{basic_block.3} parent=5 // pred_check
      _
    $region34: #{basic_block.3} parent=5 // pred_check_branch
      %194 = sbr.rel (%p191) target = $region36
    $region35: #{basic_block.3} parent=5 // pred_region
      %s195 = ssub.s32 %s12, 1
      %p196 = scmp.lt.s32.totalorder %s17, 1
      %s197 = scalar_select %p196, %s17, 1
      %s198 = smul.addr %s197, 32
      %s199 = smul.addr %s198, 8
      %s200 = scalar_lea.vmem %s0, %s199
      %p201 = pneg %p38
      %p202 = pneg %p35
      %p203 = pneg %p59
      %p204 = pneg %p56
      %p205 = pneg %p80
      %p206 = pneg %p77
      %p207 = pneg %p101
      %p208 = pneg %p98
      %p209 = pneg %p127
      %p210 = pneg %p124
      %p211 = scmp.lt.s32.totalorder %s17, 1
      %s212 = scalar_select %p211, %s17, 1
      %s213 = smul.addr %s212, 32
      %s214 = smul.addr %s213, 8
      %s215 = scalar_lea.vmem %s4, %s214
      %p216 = pneg %p153
      %p217 = pneg %p150
      %p218 = scmp.lt.s32.totalorder %s17, 1
      %s219 = scalar_select %p218, %s17, 1
      %s220 = smul.addr %s219, 2
      %s221 = scalar_lea.vmem %s5, %s220
      %p222 = scmp.lt.s32.totalorder %s17, 1
      %s223 = scalar_select %p222, %s17, 1
      %s224 = smul.addr %s223, 32
      %s225 = smul.addr %s224, 8
      %s226 = scalar_lea.vmem %s0, %s225
      %p227 = scmp.lt.s32.totalorder %s17, 1
      %s228 = scalar_select %p227, %s17, 1
      %s229 = smul.addr %s228, 32
      %s230 = smul.addr %s229, 8
      %s231 = scalar_lea.vmem %s4, %s230
      %p232 = scmp.lt.s32.totalorder %s17, 1
      %s233 = scalar_select %p232, %s17, 1
      %s234 = smul.addr %s233, 2
      %s235 = scalar_lea.vmem %s5, %s234
      %v237 = vld [vmem:[%s226] sm:$0xff]
      %v238 = vld [vmem:[%s226 + $0x8] sm:$0xff]
      %v239 = vld [vmem:[%s226 + $0x10] sm:$0xff]
      %v240 = vld [vmem:[%s226 + $0x18] sm:$0xff]
      %v241 = vld [vmem:[%s226 + $0x20] sm:$0xff]
      %v242 = vld [vmem:[%s226 + $0x28] sm:$0xff]
      %v243 = vld [vmem:[%s226 + $0x30] sm:$0xff]
      %v244 = vld [vmem:[%s226 + $0x38] sm:$0xff]
      %v245 = vld [vmem:[%s226 + $0x40] sm:$0xff]
      %v246 = vld [vmem:[%s226 + $0x48] sm:$0xff]
      %v247 = vld [vmem:[%s226 + $0x50] sm:$0xff]
      %v248 = vld [vmem:[%s226 + $0x58] sm:$0xff]
      %v249 = vld [vmem:[%s226 + $0x60] sm:$0xff]
      %v250 = vld [vmem:[%s226 + $0x68] sm:$0xff]
      %v251 = vld [vmem:[%s226 + $0x70] sm:$0xff]
      %v252 = vld [vmem:[%s226 + $0x78] sm:$0xff]
      %v253 = vld [vmem:[%s226 + $0x80] sm:$0xff]
      %v254 = vld [vmem:[%s226 + $0x88] sm:$0xff]
      %v255 = vld [vmem:[%s226 + $0x90] sm:$0xff]
      %v256 = vld [vmem:[%s226 + $0x98] sm:$0xff]
      %v257 = vld [vmem:[%s226 + $0xa0] sm:$0xff]
      %v258 = vld [vmem:[%s226 + $0xa8] sm:$0xff]
      %v259 = vld [vmem:[%s226 + $0xb0] sm:$0xff]
      %v260 = vld [vmem:[%s226 + $0xb8] sm:$0xff]
      %v261 = vld [vmem:[%s226 + $0xc0] sm:$0xff]
      %v262 = vld [vmem:[%s226 + $0xc8] sm:$0xff]
      %v263 = vld [vmem:[%s226 + $0xd0] sm:$0xff]
      %v264 = vld [vmem:[%s226 + $0xd8] sm:$0xff]
      %v265 = vld [vmem:[%s226 + $0xe0] sm:$0xff]
      %v266 = vld [vmem:[%s226 + $0xe8] sm:$0xff]
      %v267 = vld [vmem:[%s226 + $0xf0] sm:$0xff]
      %v268 = vld [vmem:[%s226 + $0xf8] sm:$0xff]
      %v269 = vpack.c.bf16 %v237, %v237
      %v270 = vpack.c.bf16 %v238, %v238
      %v271 = vpack.c.bf16 %v239, %v239
      %v272 = vpack.c.bf16 %v240, %v240
      %v273 = vpack.c.bf16 %v241, %v241
      %v274 = vpack.c.bf16 %v242, %v242
      %v275 = vpack.c.bf16 %v243, %v243
      %v276 = vpack.c.bf16 %v244, %v244
      %v277 = vpack.c.bf16 %v245, %v245
      %v278 = vpack.c.bf16 %v246, %v246
      %v279 = vpack.c.bf16 %v247, %v247
      %v280 = vpack.c.bf16 %v248, %v248
      %v281 = vpack.c.bf16 %v249, %v249
      %v282 = vpack.c.bf16 %v250, %v250
      %v283 = vpack.c.bf16 %v251, %v251
      %v284 = vpack.c.bf16 %v252, %v252
      %v285 = vpack.c.bf16 %v253, %v253
      %v286 = vpack.c.bf16 %v254, %v254
      %v287 = vpack.c.bf16 %v255, %v255
      %v288 = vpack.c.bf16 %v256, %v256
      %v289 = vpack.c.bf16 %v257, %v257
      %v290 = vpack.c.bf16 %v258, %v258
      %v291 = vpack.c.bf16 %v259, %v259
      %v292 = vpack.c.bf16 %v260, %v260
      %v293 = vpack.c.bf16 %v261, %v261
      %v294 = vpack.c.bf16 %v262, %v262
      %v295 = vpack.c.bf16 %v263, %v263
      %v296 = vpack.c.bf16 %v264, %v264
      %v297 = vpack.c.bf16 %v265, %v265
      %v298 = vpack.c.bf16 %v266, %v266
      %v299 = vpack.c.bf16 %v267, %v267
      %v300 = vpack.c.bf16 %v268, %v268
      %301 = vst [vmem:[#allocation2] sm:$0xf] 0
      %302 = vst [vmem:[#allocation2 + $0x4] sm:$0xf] 0
      %303 = vst [vmem:[#allocation2 + $0x8] sm:$0x1] 0
      %s304 = scalar_lea.vmem [#allocation2], 204
      %305 = vst [vmem:[%s304] sm:$0xf] 0
      %306 = vst [vmem:[%s304 + $0x4] sm:$0xf] 0
      %307 = vst [vmem:[%s304 + $0x8] sm:$0x1] 0
      %vm308 = vcmask 1040384
      %vm309 = vsmask.f32 256
      %vm310 = vmand %vm308, %vm309
      %v311 = vld [vmem:[#allocation2] sm:$0x1]
      %v312 = vsel %vm310, 0, %v311
      %313 = vst [vmem:[#allocation2] sm:$0x1] %v312
      %v314 = vld [vmem:[#allocation2 + $0xc] sm:$0x1]
      %v315 = vsel %vm310, 0, %v314
      %316 = vst [vmem:[#allocation2 + $0xc] sm:$0x1] %v315
      %v317 = vld [vmem:[#allocation2 + $0x18] sm:$0x1]
      %v318 = vsel %vm310, 0, %v317
      %319 = vst [vmem:[#allocation2 + $0x18] sm:$0x1] %v318
      %v320 = vld [vmem:[#allocation2 + $0x24] sm:$0x1]
      %v321 = vsel %vm310, 0, %v320
      %322 = vst [vmem:[#allocation2 + $0x24] sm:$0x1] %v321
      %v323 = vld [vmem:[#allocation2 + $0x30] sm:$0x1]
      %v324 = vsel %vm310, 0, %v323
      %325 = vst [vmem:[#allocation2 + $0x30] sm:$0x1] %v324
      %v326 = vld [vmem:[#allocation2 + $0x3c] sm:$0x1]
      %v327 = vsel %vm310, 0, %v326
      %328 = vst [vmem:[#allocation2 + $0x3c] sm:$0x1] %v327
      %v329 = vld [vmem:[#allocation2 + $0x48] sm:$0x1]
      %v330 = vsel %vm310, 0, %v329
      %331 = vst [vmem:[#allocation2 + $0x48] sm:$0x1] %v330
      %v332 = vld [vmem:[#allocation2 + $0x54] sm:$0x1]
      %v333 = vsel %vm310, 0, %v332
      %334 = vst [vmem:[#allocation2 + $0x54] sm:$0x1] %v333
      %v335 = vld [vmem:[#allocation2 + $0x60] sm:$0x1]
      %v336 = vsel %vm310, 0, %v335
      %337 = vst [vmem:[#allocation2 + $0x60] sm:$0x1] %v336
      %v338 = vld [vmem:[#allocation2 + $0x6c] sm:$0x1]
      %v339 = vsel %vm310, 0, %v338
      %340 = vst [vmem:[#allocation2 + $0x6c] sm:$0x1] %v339
      %v341 = vld [vmem:[#allocation2 + $0x78] sm:$0x1]
      %v342 = vsel %vm310, 0, %v341
      %343 = vst [vmem:[#allocation2 + $0x78] sm:$0x1] %v342
      %v344 = vld [vmem:[#allocation2 + $0x84] sm:$0x1]
      %v345 = vsel %vm310, 0, %v344
      %346 = vst [vmem:[#allocation2 + $0x84] sm:$0x1] %v345
      %v347 = vld [vmem:[#allocation2 + $0x90] sm:$0x1]
      %v348 = vsel %vm310, 0, %v347
      %349 = vst [vmem:[#allocation2 + $0x90] sm:$0x1] %v348
      %v350 = vld [vmem:[#allocation2 + $0x9c] sm:$0x1]
      %v351 = vsel %vm310, 0, %v350
      %352 = vst [vmem:[#allocation2 + $0x9c] sm:$0x1] %v351
      %v353 = vld [vmem:[#allocation2 + $0xa8] sm:$0x1]
      %v354 = vsel %vm310, 0, %v353
      %355 = vst [vmem:[#allocation2 + $0xa8] sm:$0x1] %v354
      %v356 = vld [vmem:[#allocation2 + $0xb4] sm:$0x1]
      %v357 = vsel %vm310, 0, %v356
      %358 = vst [vmem:[#allocation2 + $0xb4] sm:$0x1] %v357
      %v359 = vld [vmem:[#allocation2 + $0xc0] sm:$0x1]
      %v360 = vsel %vm310, 0, %v359
      %361 = vst [vmem:[#allocation2 + $0xc0] sm:$0x1] %v360
      %v362 = vld [vmem:[#allocation2 + $0xcc] sm:$0x1]
      %v363 = vsel %vm310, 0, %v362
      %364 = vst [vmem:[#allocation2 + $0xcc] sm:$0x1] %v363
      %vm365 = vsmask.f32 7938
      %vm366 = vmand %vm308, %vm365
      %v367 = vld [vmem:[#allocation2 + $0x8] sm:$0x1]
      %v368 = vsel %vm366, 0, %v367
      %369 = vst [vmem:[#allocation2 + $0x8] sm:$0x1] %v368
      %v370 = vld [vmem:[#allocation2 + $0x14] sm:$0x1]
      %v371 = vsel %vm366, 0, %v370
      %372 = vst [vmem:[#allocation2 + $0x14] sm:$0x1] %v371
      %v373 = vld [vmem:[#allocation2 + $0x20] sm:$0x1]
      %v374 = vsel %vm366, 0, %v373
      %375 = vst [vmem:[#allocation2 + $0x20] sm:$0x1] %v374
      %v376 = vld [vmem:[#allocation2 + $0x2c] sm:$0x1]
      %v377 = vsel %vm366, 0, %v376
      %378 = vst [vmem:[#allocation2 + $0x2c] sm:$0x1] %v377
      %v379 = vld [vmem:[#allocation2 + $0x38] sm:$0x1]
      %v380 = vsel %vm366, 0, %v379
      %381 = vst [vmem:[#allocation2 + $0x38] sm:$0x1] %v380
      %v382 = vld [vmem:[#allocation2 + $0x44] sm:$0x1]
      %v383 = vsel %vm366, 0, %v382
      %384 = vst [vmem:[#allocation2 + $0x44] sm:$0x1] %v383
      %v385 = vld [vmem:[#allocation2 + $0x50] sm:$0x1]
      %v386 = vsel %vm366, 0, %v385
      %387 = vst [vmem:[#allocation2 + $0x50] sm:$0x1] %v386
      %v388 = vld [vmem:[#allocation2 + $0x5c] sm:$0x1]
      %v389 = vsel %vm366, 0, %v388
      %390 = vst [vmem:[#allocation2 + $0x5c] sm:$0x1] %v389
      %v391 = vld [vmem:[#allocation2 + $0x68] sm:$0x1]
      %v392 = vsel %vm366, 0, %v391
      %393 = vst [vmem:[#allocation2 + $0x68] sm:$0x1] %v392
      %v394 = vld [vmem:[#allocation2 + $0x74] sm:$0x1]
      %v395 = vsel %vm366, 0, %v394
      %396 = vst [vmem:[#allocation2 + $0x74] sm:$0x1] %v395
      %v397 = vld [vmem:[#allocation2 + $0x80] sm:$0x1]
      %v398 = vsel %vm366, 0, %v397
      %399 = vst [vmem:[#allocation2 + $0x80] sm:$0x1] %v398
      %v400 = vld [vmem:[#allocation2 + $0x8c] sm:$0x1]
      %v401 = vsel %vm366, 0, %v400
      %402 = vst [vmem:[#allocation2 + $0x8c] sm:$0x1] %v401
      %v403 = vld [vmem:[#allocation2 + $0x98] sm:$0x1]
      %v404 = vsel %vm366, 0, %v403
      %405 = vst [vmem:[#allocation2 + $0x98] sm:$0x1] %v404
      %v406 = vld [vmem:[#allocation2 + $0xa4] sm:$0x1]
      %v407 = vsel %vm366, 0, %v406
      %408 = vst [vmem:[#allocation2 + $0xa4] sm:$0x1] %v407
      %v409 = vld [vmem:[#allocation2 + $0xb0] sm:$0x1]
      %v410 = vsel %vm366, 0, %v409
      %411 = vst [vmem:[#allocation2 + $0xb0] sm:$0x1] %v410
      %v412 = vld [vmem:[#allocation2 + $0xbc] sm:$0x1]
      %v413 = vsel %vm366, 0, %v412
      %414 = vst [vmem:[#allocation2 + $0xbc] sm:$0x1] %v413
      %v415 = vld [vmem:[#allocation2 + $0xc8] sm:$0x1]
      %v416 = vsel %vm366, 0, %v415
      %417 = vst [vmem:[#allocation2 + $0xc8] sm:$0x1] %v416
      %v418 = vld [vmem:[#allocation2 + $0xd4] sm:$0x1]
      %v419 = vsel %vm366, 0, %v418
      %420 = vst [vmem:[#allocation2 + $0xd4] sm:$0x1] %v419
      %vm421 = vsmask.f32 4368
      %vm422 = vmor %vm309, %vm421
      %v424 = vshrl.u32 %v269, 16
      %v426 = vrot.slane %v424, 7
      %v427 = vshll.u32 %v269, 16
      %v429 = vor.u32 %v426, %v427
      %v430 = vrot.slane %v426, 4
      %v432 = vshrl.u32 %v270, 16
      %v434 = vrot.slane %v432, 7
      %v435 = vshll.u32 %v270, 16
      %v437 = vor.u32 %v434, %v435
      %v438 = vsel %vm422, %v430, %v437
      %v439 = vrot.slane %v434, 4
      %v441 = vshrl.u32 %v271, 16
      %v443 = vrot.slane %v441, 7
      %v444 = vshll.u32 %v271, 16
      %v446 = vor.u32 %v443, %v444
      %v447 = vrot.slane %v443, 4
      %v449 = vshrl.u32 %v272, 16
      %v451 = vrot.slane %v449, 7
      %v452 = vshll.u32 %v272, 16
      %v454 = vor.u32 %v451, %v452
      %v455 = vsel %vm422, %v447, %v454
      %v456 = vrot.slane %v451, 4
      %v458 = vshrl.u32 %v273, 16
      %v460 = vrot.slane %v458, 7
      %v461 = vshll.u32 %v273, 16
      %v463 = vor.u32 %v460, %v461
      %v464 = vrot.slane %v460, 4
      %v466 = vshrl.u32 %v274, 16
      %v468 = vrot.slane %v466, 7
      %v469 = vshll.u32 %v274, 16
      %v471 = vor.u32 %v468, %v469
      %v472 = vsel %vm422, %v464, %v471
      %v473 = vrot.slane %v468, 4
      %v475 = vshrl.u32 %v275, 16
      %v477 = vrot.slane %v475, 7
      %v478 = vshll.u32 %v275, 16
      %v480 = vor.u32 %v477, %v478
      %v481 = vrot.slane %v477, 4
      %v483 = vshrl.u32 %v276, 16
      %v485 = vrot.slane %v483, 7
      %v486 = vshll.u32 %v276, 16
      %v488 = vor.u32 %v485, %v486
      %v489 = vsel %vm422, %v481, %v488
      %v490 = vrot.slane %v485, 4
      %v492 = vshrl.u32 %v277, 16
      %v494 = vrot.slane %v492, 7
      %v495 = vshll.u32 %v277, 16
      %v497 = vor.u32 %v494, %v495
      %v498 = vrot.slane %v494, 4
      %v500 = vshrl.u32 %v278, 16
      %v502 = vrot.slane %v500, 7
      %v503 = vshll.u32 %v278, 16
      %v505 = vor.u32 %v502, %v503
      %v506 = vsel %vm422, %v498, %v505
      %v507 = vrot.slane %v502, 4
      %v509 = vshrl.u32 %v279, 16
      %v511 = vrot.slane %v509, 7
      %v512 = vshll.u32 %v279, 16
      %v514 = vor.u32 %v511, %v512
      %v515 = vrot.slane %v511, 4
      %v517 = vshrl.u32 %v280, 16
      %v519 = vrot.slane %v517, 7
      %v520 = vshll.u32 %v280, 16
      %v522 = vor.u32 %v519, %v520
      %v523 = vsel %vm422, %v515, %v522
      %v524 = vrot.slane %v519, 4
      %v526 = vshrl.u32 %v281, 16
      %v528 = vrot.slane %v526, 7
      %v529 = vshll.u32 %v281, 16
      %v531 = vor.u32 %v528, %v529
      %v532 = vrot.slane %v528, 4
      %v534 = vshrl.u32 %v282, 16
      %v536 = vrot.slane %v534, 7
      %v537 = vshll.u32 %v282, 16
      %v539 = vor.u32 %v536, %v537
      %v540 = vsel %vm422, %v532, %v539
      %v541 = vrot.slane %v536, 4
      %v543 = vshrl.u32 %v283, 16
      %v545 = vrot.slane %v543, 7
      %v546 = vshll.u32 %v283, 16
      %v548 = vor.u32 %v545, %v546
      %v549 = vrot.slane %v545, 4
      %v551 = vshrl.u32 %v284, 16
      %v553 = vrot.slane %v551, 7
      %v554 = vshll.u32 %v284, 16
      %v556 = vor.u32 %v553, %v554
      %v557 = vsel %vm422, %v549, %v556
      %v558 = vrot.slane %v553, 4
      %v560 = vshrl.u32 %v285, 16
      %v562 = vrot.slane %v560, 7
      %v563 = vshll.u32 %v285, 16
      %v565 = vor.u32 %v562, %v563
      %v566 = vrot.slane %v562, 4
      %v568 = vshrl.u32 %v286, 16
      %v570 = vrot.slane %v568, 7
      %v571 = vshll.u32 %v286, 16
      %v573 = vor.u32 %v570, %v571
      %v574 = vsel %vm422, %v566, %v573
      %v575 = vrot.slane %v570, 4
      %v577 = vshrl.u32 %v287, 16
      %v579 = vrot.slane %v577, 7
      %v580 = vshll.u32 %v287, 16
      %v582 = vor.u32 %v579, %v580
      %v583 = vrot.slane %v579, 4
      %v585 = vshrl.u32 %v288, 16
      %v587 = vrot.slane %v585, 7
      %v588 = vshll.u32 %v288, 16
      %v590 = vor.u32 %v587, %v588
      %v591 = vsel %vm422, %v583, %v590
      %v592 = vrot.slane %v587, 4
      %v594 = vshrl.u32 %v289, 16
      %v596 = vrot.slane %v594, 7
      %v597 = vshll.u32 %v289, 16
      %v599 = vor.u32 %v596, %v597
      %v600 = vrot.slane %v596, 4
      %v602 = vshrl.u32 %v290, 16
      %v604 = vrot.slane %v602, 7
      %v605 = vshll.u32 %v290, 16
      %v607 = vor.u32 %v604, %v605
      %v608 = vsel %vm422, %v600, %v607
      %v609 = vrot.slane %v604, 4
      %v611 = vshrl.u32 %v291, 16
      %v613 = vrot.slane %v611, 7
      %v614 = vshll.u32 %v291, 16
      %v616 = vor.u32 %v613, %v614
      %v617 = vrot.slane %v613, 4
      %v619 = vshrl.u32 %v292, 16
      %v621 = vrot.slane %v619, 7
      %v622 = vshll.u32 %v292, 16
      %v624 = vor.u32 %v621, %v622
      %v625 = vsel %vm422, %v617, %v624
      %v626 = vrot.slane %v621, 4
      %v628 = vshrl.u32 %v293, 16
      %v630 = vrot.slane %v628, 7
      %v631 = vshll.u32 %v293, 16
      %v633 = vor.u32 %v630, %v631
      %v634 = vrot.slane %v630, 4
      %v636 = vshrl.u32 %v294, 16
      %v638 = vrot.slane %v636, 7
      %v639 = vshll.u32 %v294, 16
      %v641 = vor.u32 %v638, %v639
      %v642 = vsel %vm422, %v634, %v641
      %v643 = vrot.slane %v638, 4
      %v645 = vshrl.u32 %v295, 16
      %v647 = vrot.slane %v645, 7
      %v648 = vshll.u32 %v295, 16
      %v650 = vor.u32 %v647, %v648
      %v651 = vrot.slane %v647, 4
      %v653 = vshrl.u32 %v296, 16
      %v655 = vrot.slane %v653, 7
      %v656 = vshll.u32 %v296, 16
      %v658 = vor.u32 %v655, %v656
      %v659 = vsel %vm422, %v651, %v658
      %v660 = vrot.slane %v655, 4
      %v662 = vshrl.u32 %v297, 16
      %v664 = vrot.slane %v662, 7
      %v665 = vshll.u32 %v297, 16
      %v667 = vor.u32 %v664, %v665
      %v668 = vrot.slane %v664, 4
      %v670 = vshrl.u32 %v298, 16
      %v672 = vrot.slane %v670, 7
      %v673 = vshll.u32 %v298, 16
      %v675 = vor.u32 %v672, %v673
      %v676 = vsel %vm422, %v668, %v675
      %v677 = vrot.slane %v672, 4
      %v679 = vshrl.u32 %v299, 16
      %v681 = vrot.slane %v679, 7
      %v682 = vshll.u32 %v299, 16
      %v684 = vor.u32 %v681, %v682
      %v685 = vrot.slane %v681, 4
      %v687 = vshrl.u32 %v300, 16
      %v689 = vrot.slane %v687, 7
      %v690 = vshll.u32 %v300, 16
      %v692 = vor.u32 %v689, %v690
      %v693 = vsel %vm422, %v685, %v692
      %v694 = vrot.slane %v689, 4
      %s743 = scalar_lea.vmem [#allocation2], 12
      %vm744 = vcmask 1043456
      %vm745 = vmand %vm744, %vm365
      %v746 = vld [vmem:[%s743] sm:$0xf]
      %v747 = vsel %vm745, %v429, %v746
      %748 = vst [vmem:[%s743] sm:$0xf] %v747
      %749 = vst [vmem:[%s743 + $0x4] sm:$0xf] %v438
      %v750 = vld [vmem:[%s743 + $0x8] sm:$0x1]
      %v751 = vsel %vm310, %v439, %v750
      %752 = vst [vmem:[%s743 + $0x8] sm:$0x1] %v751
      %v753 = vld [vmem:[%s743 + $0xc] sm:$0xf]
      %v754 = vsel %vm745, %v446, %v753
      %755 = vst [vmem:[%s743 + $0xc] sm:$0xf] %v754
      %756 = vst [vmem:[%s743 + $0x10] sm:$0xf] %v455
      %v757 = vld [vmem:[%s743 + $0x14] sm:$0x1]
      %v758 = vsel %vm310, %v456, %v757
      %759 = vst [vmem:[%s743 + $0x14] sm:$0x1] %v758
      %v760 = vld [vmem:[%s743 + $0x18] sm:$0xf]
      %v761 = vsel %vm745, %v463, %v760
      %762 = vst [vmem:[%s743 + $0x18] sm:$0xf] %v761
      %763 = vst [vmem:[%s743 + $0x1c] sm:$0xf] %v472
      %v764 = vld [vmem:[%s743 + $0x20] sm:$0x1]
      %v765 = vsel %vm310, %v473, %v764
      %766 = vst [vmem:[%s743 + $0x20] sm:$0x1] %v765
      %v767 = vld [vmem:[%s743 + $0x24] sm:$0xf]
      %v768 = vsel %vm745, %v480, %v767
      %769 = vst [vmem:[%s743 + $0x24] sm:$0xf] %v768
      %770 = vst [vmem:[%s743 + $0x28] sm:$0xf] %v489
      %v771 = vld [vmem:[%s743 + $0x2c] sm:$0x1]
      %v772 = vsel %vm310, %v490, %v771
      %773 = vst [vmem:[%s743 + $0x2c] sm:$0x1] %v772
      %v774 = vld [vmem:[%s743 + $0x30] sm:$0xf]
      %v775 = vsel %vm745, %v497, %v774
      %776 = vst [vmem:[%s743 + $0x30] sm:$0xf] %v775
      %777 = vst [vmem:[%s743 + $0x34] sm:$0xf] %v506
      %v778 = vld [vmem:[%s743 + $0x38] sm:$0x1]
      %v779 = vsel %vm310, %v507, %v778
      %780 = vst [vmem:[%s743 + $0x38] sm:$0x1] %v779
      %v781 = vld [vmem:[%s743 + $0x3c] sm:$0xf]
      %v782 = vsel %vm745, %v514, %v781
      %783 = vst [vmem:[%s743 + $0x3c] sm:$0xf] %v782
      %784 = vst [vmem:[%s743 + $0x40] sm:$0xf] %v523
      %v785 = vld [vmem:[%s743 + $0x44] sm:$0x1]
      %v786 = vsel %vm310, %v524, %v785
      %787 = vst [vmem:[%s743 + $0x44] sm:$0x1] %v786
      %v788 = vld [vmem:[%s743 + $0x48] sm:$0xf]
      %v789 = vsel %vm745, %v531, %v788
      %790 = vst [vmem:[%s743 + $0x48] sm:$0xf] %v789
      %791 = vst [vmem:[%s743 + $0x4c] sm:$0xf] %v540
      %v792 = vld [vmem:[%s743 + $0x50] sm:$0x1]
      %v793 = vsel %vm310, %v541, %v792
      %794 = vst [vmem:[%s743 + $0x50] sm:$0x1] %v793
      %v795 = vld [vmem:[%s743 + $0x54] sm:$0xf]
      %v796 = vsel %vm745, %v548, %v795
      %797 = vst [vmem:[%s743 + $0x54] sm:$0xf] %v796
      %798 = vst [vmem:[%s743 + $0x58] sm:$0xf] %v557
      %v799 = vld [vmem:[%s743 + $0x5c] sm:$0x1]
      %v800 = vsel %vm310, %v558, %v799
      %801 = vst [vmem:[%s743 + $0x5c] sm:$0x1] %v800
      %v802 = vld [vmem:[%s743 + $0x60] sm:$0xf]
      %v803 = vsel %vm745, %v565, %v802
      %804 = vst [vmem:[%s743 + $0x60] sm:$0xf] %v803
      %805 = vst [vmem:[%s743 + $0x64] sm:$0xf] %v574
      %v806 = vld [vmem:[%s743 + $0x68] sm:$0x1]
      %v807 = vsel %vm310, %v575, %v806
      %808 = vst [vmem:[%s743 + $0x68] sm:$0x1] %v807
      %v809 = vld [vmem:[%s743 + $0x6c] sm:$0xf]
      %v810 = vsel %vm745, %v582, %v809
      %811 = vst [vmem:[%s743 + $0x6c] sm:$0xf] %v810
      %812 = vst [vmem:[%s743 + $0x70] sm:$0xf] %v591
      %v813 = vld [vmem:[%s743 + $0x74] sm:$0x1]
      %v814 = vsel %vm310, %v592, %v813
      %815 = vst [vmem:[%s743 + $0x74] sm:$0x1] %v814
      %v816 = vld [vmem:[%s743 + $0x78] sm:$0xf]
      %v817 = vsel %vm745, %v599, %v816
      %818 = vst [vmem:[%s743 + $0x78] sm:$0xf] %v817
      %819 = vst [vmem:[%s743 + $0x7c] sm:$0xf] %v608
      %v820 = vld [vmem:[%s743 + $0x80] sm:$0x1]
      %v821 = vsel %vm310, %v609, %v820
      %822 = vst [vmem:[%s743 + $0x80] sm:$0x1] %v821
      %v823 = vld [vmem:[%s743 + $0x84] sm:$0xf]
      %v824 = vsel %vm745, %v616, %v823
      %825 = vst [vmem:[%s743 + $0x84] sm:$0xf] %v824
      %826 = vst [vmem:[%s743 + $0x88] sm:$0xf] %v625
      %v827 = vld [vmem:[%s743 + $0x8c] sm:$0x1]
      %v828 = vsel %vm310, %v626, %v827
      %829 = vst [vmem:[%s743 + $0x8c] sm:$0x1] %v828
      %v830 = vld [vmem:[%s743 + $0x90] sm:$0xf]
      %v831 = vsel %vm745, %v633, %v830
      %832 = vst [vmem:[%s743 + $0x90] sm:$0xf] %v831
      %833 = vst [vmem:[%s743 + $0x94] sm:$0xf] %v642
      %v834 = vld [vmem:[%s743 + $0x98] sm:$0x1]
      %v835 = vsel %vm310, %v643, %v834
      %836 = vst [vmem:[%s743 + $0x98] sm:$0x1] %v835
      %v837 = vld [vmem:[%s743 + $0x9c] sm:$0xf]
      %v838 = vsel %vm745, %v650, %v837
      %839 = vst [vmem:[%s743 + $0x9c] sm:$0xf] %v838
      %840 = vst [vmem:[%s743 + $0xa0] sm:$0xf] %v659
      %v841 = vld [vmem:[%s743 + $0xa4] sm:$0x1]
      %v842 = vsel %vm310, %v660, %v841
      %843 = vst [vmem:[%s743 + $0xa4] sm:$0x1] %v842
      %v844 = vld [vmem:[%s743 + $0xa8] sm:$0xf]
      %v845 = vsel %vm745, %v667, %v844
      %846 = vst [vmem:[%s743 + $0xa8] sm:$0xf] %v845
      %847 = vst [vmem:[%s743 + $0xac] sm:$0xf] %v676
      %v848 = vld [vmem:[%s743 + $0xb0] sm:$0x1]
      %v849 = vsel %vm310, %v677, %v848
      %850 = vst [vmem:[%s743 + $0xb0] sm:$0x1] %v849
      %v851 = vld [vmem:[%s743 + $0xb4] sm:$0xf]
      %v852 = vsel %vm745, %v684, %v851
      %853 = vst [vmem:[%s743 + $0xb4] sm:$0xf] %v852
      %854 = vst [vmem:[%s743 + $0xb8] sm:$0xf] %v693
      %v855 = vld [vmem:[%s743 + $0xbc] sm:$0x1]
      %v856 = vsel %vm310, %v694, %v855
      %857 = vst [vmem:[%s743 + $0xbc] sm:$0x1] %v856
      %v858 = vld [vmem:[#allocation2] sm:$0xf]
      %v859 = vld [vmem:[#allocation2 + $0x4] sm:$0xf]
      %v860 = vld [vmem:[#allocation2 + $0xc] sm:$0xf]
      %v861 = vld [vmem:[#allocation2 + $0x10] sm:$0xf]
      %v862 = vld [vmem:[#allocation2 + $0x18] sm:$0xf]
      %v863 = vld [vmem:[#allocation2 + $0x1c] sm:$0xf]
      %v864 = vld [vmem:[#allocation2 + $0x24] sm:$0xf]
      %v865 = vld [vmem:[#allocation2 + $0x28] sm:$0xf]
      %v866 = vld [vmem:[#allocation2 + $0x30] sm:$0xf]
      %v867 = vld [vmem:[#allocation2 + $0x34] sm:$0xf]
      %v868 = vld [vmem:[#allocation2 + $0x3c] sm:$0xf]
      %v869 = vld [vmem:[#allocation2 + $0x40] sm:$0xf]
      %v870 = vld [vmem:[#allocation2 + $0x48] sm:$0xf]
      %v871 = vld [vmem:[#allocation2 + $0x4c] sm:$0xf]
      %v872 = vld [vmem:[#allocation2 + $0x54] sm:$0xf]
      %v873 = vld [vmem:[#allocation2 + $0x58] sm:$0xf]
      %v874 = vld [vmem:[#allocation2 + $0x60] sm:$0xf]
      %v875 = vld [vmem:[#allocation2 + $0x64] sm:$0xf]
      %v876 = vld [vmem:[#allocation2 + $0x6c] sm:$0xf]
      %v877 = vld [vmem:[#allocation2 + $0x70] sm:$0xf]
      %v878 = vld [vmem:[#allocation2 + $0x78] sm:$0xf]
      %v879 = vld [vmem:[#allocation2 + $0x7c] sm:$0xf]
      %v880 = vld [vmem:[#allocation2 + $0x84] sm:$0xf]
      %v881 = vld [vmem:[#allocation2 + $0x88] sm:$0xf]
      %v882 = vld [vmem:[#allocation2 + $0x90] sm:$0xf]
      %v883 = vld [vmem:[#allocation2 + $0x94] sm:$0xf]
      %v884 = vld [vmem:[#allocation2 + $0x9c] sm:$0xf]
      %v885 = vld [vmem:[#allocation2 + $0xa0] sm:$0xf]
      %v886 = vld [vmem:[#allocation2 + $0xa8] sm:$0xf]
      %v887 = vld [vmem:[#allocation2 + $0xac] sm:$0xf]
      %v888 = vld [vmem:[#allocation2 + $0xb4] sm:$0xf]
      %v889 = vld [vmem:[#allocation2 + $0xb8] sm:$0xf]
      %890 = vst [vmem:[#allocation3] sm:$0xf] %v858
      %891 = vst [vmem:[#allocation3 + $0x24] sm:$0xf] %v859
      %892 = vst [vmem:[#allocation3 + $0x48] sm:$0xf] %v860
      %893 = vst [vmem:[#allocation3 + $0x6c] sm:$0xf] %v861
      %894 = vst [vmem:[#allocation3 + $0x90] sm:$0xf] %v862
      %895 = vst [vmem:[#allocation3 + $0xb4] sm:$0xf] %v863
      %896 = vst [vmem:[#allocation3 + $0xd8] sm:$0xf] %v864
      %897 = vst [vmem:[#allocation3 + $0xfc] sm:$0xf] %v865
      %898 = vst [vmem:[#allocation3 + $0x120] sm:$0xf] %v866
      %899 = vst [vmem:[#allocation3 + $0x144] sm:$0xf] %v867
      %900 = vst [vmem:[#allocation3 + $0x168] sm:$0xf] %v868
      %901 = vst [vmem:[#allocation3 + $0x18c] sm:$0xf] %v869
      %902 = vst [vmem:[#allocation3 + $0x1b0] sm:$0xf] %v870
      %903 = vst [vmem:[#allocation3 + $0x1d4] sm:$0xf] %v871
      %904 = vst [vmem:[#allocation3 + $0x1f8] sm:$0xf] %v872
      %905 = vst [vmem:[#allocation3 + $0x21c] sm:$0xf] %v873
      %906 = vst [vmem:[#allocation3 + $0x240] sm:$0xf] %v874
      %907 = vst [vmem:[#allocation3 + $0x264] sm:$0xf] %v875
      %908 = vst [vmem:[#allocation3 + $0x288] sm:$0xf] %v876
      %909 = vst [vmem:[#allocation3 + $0x2ac] sm:$0xf] %v877
      %910 = vst [vmem:[#allocation3 + $0x2d0] sm:$0xf] %v878
      %911 = vst [vmem:[#allocation3 + $0x2f4] sm:$0xf] %v879
      %912 = vst [vmem:[#allocation3 + $0x318] sm:$0xf] %v880
      %913 = vst [vmem:[#allocation3 + $0x33c] sm:$0xf] %v881
      %914 = vst [vmem:[#allocation3 + $0x360] sm:$0xf] %v882
      %915 = vst [vmem:[#allocation3 + $0x384] sm:$0xf] %v883
      %916 = vst [vmem:[#allocation3 + $0x3a8] sm:$0xf] %v884
      %917 = vst [vmem:[#allocation3 + $0x3cc] sm:$0xf] %v885
      %918 = vst [vmem:[#allocation3 + $0x3f0] sm:$0xf] %v886
      %919 = vst [vmem:[#allocation3 + $0x414] sm:$0xf] %v887
      %920 = vst [vmem:[#allocation3 + $0x438] sm:$0xf] %v888
      %921 = vst [vmem:[#allocation3 + $0x45c] sm:$0xf] %v889
      %v922 = vld [vmem:[#allocation2] sm:$0xf]
      %v923 = vld [vmem:[#allocation2 + $0x4] sm:$0xf]
      %v924 = vld [vmem:[#allocation2 + $0x8] sm:$0x1]
      %v925 = vld [vmem:[#allocation2 + $0xc] sm:$0xf]
      %v926 = vld [vmem:[#allocation2 + $0x10] sm:$0xf]
      %v927 = vld [vmem:[#allocation2 + $0x14] sm:$0x1]
      %v928 = vld [vmem:[#allocation2 + $0x18] sm:$0xf]
      %v929 = vld [vmem:[#allocation2 + $0x1c] sm:$0xf]
      %v930 = vld [vmem:[#allocation2 + $0x20] sm:$0x1]
      %v931 = vld [vmem:[#allocation2 + $0x24] sm:$0xf]
      %v932 = vld [vmem:[#allocation2 + $0x28] sm:$0xf]
      %v933 = vld [vmem:[#allocation2 + $0x2c] sm:$0x1]
      %v934 = vld [vmem:[#allocation2 + $0x30] sm:$0xf]
      %v935 = vld [vmem:[#allocation2 + $0x34] sm:$0xf]
      %v936 = vld [vmem:[#allocation2 + $0x38] sm:$0x1]
      %v937 = vld [vmem:[#allocation2 + $0x3c] sm:$0xf]
      %v938 = vld [vmem:[#allocation2 + $0x40] sm:$0xf]
      %v939 = vld [vmem:[#allocation2 + $0x44] sm:$0x1]
      %v940 = vld [vmem:[#allocation2 + $0x48] sm:$0xf]
      %v941 = vld [vmem:[#allocation2 + $0x4c] sm:$0xf]
      %v942 = vld [vmem:[#allocation2 + $0x50] sm:$0x1]
      %v943 = vld [vmem:[#allocation2 + $0x54] sm:$0xf]
      %v944 = vld [vmem:[#allocation2 + $0x58] sm:$0xf]
      %v945 = vld [vmem:[#allocation2 + $0x5c] sm:$0x1]
      %v946 = vld [vmem:[#allocation2 + $0x60] sm:$0xf]
      %v947 = vld [vmem:[#allocation2 + $0x64] sm:$0xf]
      %v948 = vld [vmem:[#allocation2 + $0x68] sm:$0x1]
      %v949 = vld [vmem:[#allocation2 + $0x6c] sm:$0xf]
      %v950 = vld [vmem:[#allocation2 + $0x70] sm:$0xf]
      %v951 = vld [vmem:[#allocation2 + $0x74] sm:$0x1]
      %v952 = vld [vmem:[#allocation2 + $0x78] sm:$0xf]
      %v953 = vld [vmem:[#allocation2 + $0x7c] sm:$0xf]
      %v954 = vld [vmem:[#allocation2 + $0x80] sm:$0x1]
      %v955 = vld [vmem:[#allocation2 + $0x84] sm:$0xf]
      %v956 = vld [vmem:[#allocation2 + $0x88] sm:$0xf]
      %v957 = vld [vmem:[#allocation2 + $0x8c] sm:$0x1]
      %v958 = vld [vmem:[#allocation2 + $0x90] sm:$0xf]
      %v959 = vld [vmem:[#allocation2 + $0x94] sm:$0xf]
      %v960 = vld [vmem:[#allocation2 + $0x98] sm:$0x1]
      %v961 = vld [vmem:[#allocation2 + $0x9c] sm:$0xf]
      %v962 = vld [vmem:[#allocation2 + $0xa0] sm:$0xf]
      %v963 = vld [vmem:[#allocation2 + $0xa4] sm:$0x1]
      %v964 = vld [vmem:[#allocation2 + $0xa8] sm:$0xf]
      %v965 = vld [vmem:[#allocation2 + $0xac] sm:$0xf]
      %v966 = vld [vmem:[#allocation2 + $0xb0] sm:$0x1]
      %v967 = vld [vmem:[#allocation2 + $0xb4] sm:$0xf]
      %v968 = vld [vmem:[#allocation2 + $0xb8] sm:$0xf]
      %v969 = vld [vmem:[#allocation2 + $0xbc] sm:$0x1]
      %vm970 = vsmask.f32 3328
      %vm971 = vsmask.f32 7440
      %vm972 = vmor %vm970, %vm971
      %v974 = vshrl.u32 %v922, 16
      %v976 = vrot.slane %v974, 4
      %v977 = vshll.u32 %v922, 16
      %v979 = vrot.slane %v977, 5
      %v980 = vor.u32 %v976, %v979
      %v981 = vrot.slane %v980, 4
      %v983 = vshll.u32 %v923, 16
      %v985 = vrot.slane %v983, 5
      %v986 = vsel %vm972, %v981, %v985
      %v987 = vshrl.u32 %v923, 16
      %v989 = vrot.slane %v987, 4
      %v990 = vor.u32 %v989, %v985
      %v991 = vrot.slane %v990, 4
      %v993 = vshll.u32 %v924, 16
      %v995 = vrot.slane %v993, 5
      %v996 = vsel %vm972, %v991, %v995
      %v998 = vshrl.u32 %v925, 16
      %v1000 = vrot.slane %v998, 4
      %v1001 = vshll.u32 %v925, 16
      %v1003 = vrot.slane %v1001, 5
      %v1004 = vor.u32 %v1000, %v1003
      %v1005 = vrot.slane %v1004, 4
      %v1007 = vshll.u32 %v926, 16
      %v1009 = vrot.slane %v1007, 5
      %v1010 = vsel %vm972, %v1005, %v1009
      %v1011 = vshrl.u32 %v926, 16
      %v1013 = vrot.slane %v1011, 4
      %v1014 = vor.u32 %v1013, %v1009
      %v1015 = vrot.slane %v1014, 4
      %v1017 = vshll.u32 %v927, 16
      %v1019 = vrot.slane %v1017, 5
      %v1020 = vsel %vm972, %v1015, %v1019
      %v1022 = vshrl.u32 %v928, 16
      %v1024 = vrot.slane %v1022, 4
      %v1025 = vshll.u32 %v928, 16
      %v1027 = vrot.slane %v1025, 5
      %v1028 = vor.u32 %v1024, %v1027
      %v1029 = vrot.slane %v1028, 4
      %v1031 = vshll.u32 %v929, 16
      %v1033 = vrot.slane %v1031, 5
      %v1034 = vsel %vm972, %v1029, %v1033
      %v1035 = vshrl.u32 %v929, 16
      %v1037 = vrot.slane %v1035, 4
      %v1038 = vor.u32 %v1037, %v1033
      %v1039 = vrot.slane %v1038, 4
      %v1041 = vshll.u32 %v930, 16
      %v1043 = vrot.slane %v1041, 5
      %v1044 = vsel %vm972, %v1039, %v1043
      %v1046 = vshrl.u32 %v931, 16
      %v1048 = vrot.slane %v1046, 4
      %v1049 = vshll.u32 %v931, 16
      %v1051 = vrot.slane %v1049, 5
      %v1052 = vor.u32 %v1048, %v1051
      %v1053 = vrot.slane %v1052, 4
      %v1055 = vshll.u32 %v932, 16
      %v1057 = vrot.slane %v1055, 5
      %v1058 = vsel %vm972, %v1053, %v1057
      %v1059 = vshrl.u32 %v932, 16
      %v1061 = vrot.slane %v1059, 4
      %v1062 = vor.u32 %v1061, %v1057
      %v1063 = vrot.slane %v1062, 4
      %v1065 = vshll.u32 %v933, 16
      %v1067 = vrot.slane %v1065, 5
      %v1068 = vsel %vm972, %v1063, %v1067
      %v1070 = vshrl.u32 %v934, 16
      %v1072 = vrot.slane %v1070, 4
      %v1073 = vshll.u32 %v934, 16
      %v1075 = vrot.slane %v1073, 5
      %v1076 = vor.u32 %v1072, %v1075
      %v1077 = vrot.slane %v1076, 4
      %v1079 = vshll.u32 %v935, 16
      %v1081 = vrot.slane %v1079, 5
      %v1082 = vsel %vm972, %v1077, %v1081
      %v1083 = vshrl.u32 %v935, 16
      %v1085 = vrot.slane %v1083, 4
      %v1086 = vor.u32 %v1085, %v1081
      %v1087 = vrot.slane %v1086, 4
      %v1089 = vshll.u32 %v936, 16
      %v1091 = vrot.slane %v1089, 5
      %v1092 = vsel %vm972, %v1087, %v1091
      %v1094 = vshrl.u32 %v937, 16
      %v1096 = vrot.slane %v1094, 4
      %v1097 = vshll.u32 %v937, 16
      %v1099 = vrot.slane %v1097, 5
      %v1100 = vor.u32 %v1096, %v1099
      %v1101 = vrot.slane %v1100, 4
      %v1103 = vshll.u32 %v938, 16
      %v1105 = vrot.slane %v1103, 5
      %v1106 = vsel %vm972, %v1101, %v1105
      %v1107 = vshrl.u32 %v938, 16
      %v1109 = vrot.slane %v1107, 4
      %v1110 = vor.u32 %v1109, %v1105
      %v1111 = vrot.slane %v1110, 4
      %v1113 = vshll.u32 %v939, 16
      %v1115 = vrot.slane %v1113, 5
      %v1116 = vsel %vm972, %v1111, %v1115
      %v1118 = vshrl.u32 %v940, 16
      %v1120 = vrot.slane %v1118, 4
      %v1121 = vshll.u32 %v940, 16
      %v1123 = vrot.slane %v1121, 5
      %v1124 = vor.u32 %v1120, %v1123
      %v1125 = vrot.slane %v1124, 4
      %v1127 = vshll.u32 %v941, 16
      %v1129 = vrot.slane %v1127, 5
      %v1130 = vsel %vm972, %v1125, %v1129
      %v1131 = vshrl.u32 %v941, 16
      %v1133 = vrot.slane %v1131, 4
      %v1134 = vor.u32 %v1133, %v1129
      %v1135 = vrot.slane %v1134, 4
      %v1137 = vshll.u32 %v942, 16
      %v1139 = vrot.slane %v1137, 5
      %v1140 = vsel %vm972, %v1135, %v1139
      %v1142 = vshrl.u32 %v943, 16
      %v1144 = vrot.slane %v1142, 4
      %v1145 = vshll.u32 %v943, 16
      %v1147 = vrot.slane %v1145, 5
      %v1148 = vor.u32 %v1144, %v1147
      %v1149 = vrot.slane %v1148, 4
      %v1151 = vshll.u32 %v944, 16
      %v1153 = vrot.slane %v1151, 5
      %v1154 = vsel %vm972, %v1149, %v1153
      %v1155 = vshrl.u32 %v944, 16
      %v1157 = vrot.slane %v1155, 4
      %v1158 = vor.u32 %v1157, %v1153
      %v1159 = vrot.slane %v1158, 4
      %v1161 = vshll.u32 %v945, 16
      %v1163 = vrot.slane %v1161, 5
      %v1164 = vsel %vm972, %v1159, %v1163
      %v1166 = vshrl.u32 %v946, 16
      %v1168 = vrot.slane %v1166, 4
      %v1169 = vshll.u32 %v946, 16
      %v1171 = vrot.slane %v1169, 5
      %v1172 = vor.u32 %v1168, %v1171
      %v1173 = vrot.slane %v1172, 4
      %v1175 = vshll.u32 %v947, 16
      %v1177 = vrot.slane %v1175, 5
      %v1178 = vsel %vm972, %v1173, %v1177
      %v1179 = vshrl.u32 %v947, 16
      %v1181 = vrot.slane %v1179, 4
      %v1182 = vor.u32 %v1181, %v1177
      %v1183 = vrot.slane %v1182, 4
      %v1185 = vshll.u32 %v948, 16
      %v1187 = vrot.slane %v1185, 5
      %v1188 = vsel %vm972, %v1183, %v1187
      %v1190 = vshrl.u32 %v949, 16
      %v1192 = vrot.slane %v1190, 4
      %v1193 = vshll.u32 %v949, 16
      %v1195 = vrot.slane %v1193, 5
      %v1196 = vor.u32 %v1192, %v1195
      %v1197 = vrot.slane %v1196, 4
      %v1199 = vshll.u32 %v950, 16
      %v1201 = vrot.slane %v1199, 5
      %v1202 = vsel %vm972, %v1197, %v1201
      %v1203 = vshrl.u32 %v950, 16
      %v1205 = vrot.slane %v1203, 4
      %v1206 = vor.u32 %v1205, %v1201
      %v1207 = vrot.slane %v1206, 4
      %v1209 = vshll.u32 %v951, 16
      %v1211 = vrot.slane %v1209, 5
      %v1212 = vsel %vm972, %v1207, %v1211
      %v1214 = vshrl.u32 %v952, 16
      %v1216 = vrot.slane %v1214, 4
      %v1217 = vshll.u32 %v952, 16
      %v1219 = vrot.slane %v1217, 5
      %v1220 = vor.u32 %v1216, %v1219
      %v1221 = vrot.slane %v1220, 4
      %v1223 = vshll.u32 %v953, 16
      %v1225 = vrot.slane %v1223, 5
      %v1226 = vsel %vm972, %v1221, %v1225
      %v1227 = vshrl.u32 %v953, 16
      %v1229 = vrot.slane %v1227, 4
      %v1230 = vor.u32 %v1229, %v1225
      %v1231 = vrot.slane %v1230, 4
      %v1233 = vshll.u32 %v954, 16
      %v1235 = vrot.slane %v1233, 5
      %v1236 = vsel %vm972, %v1231, %v1235
      %v1238 = vshrl.u32 %v955, 16
      %v1240 = vrot.slane %v1238, 4
      %v1241 = vshll.u32 %v955, 16
      %v1243 = vrot.slane %v1241, 5
      %v1244 = vor.u32 %v1240, %v1243
      %v1245 = vrot.slane %v1244, 4
      %v1247 = vshll.u32 %v956, 16
      %v1249 = vrot.slane %v1247, 5
      %v1250 = vsel %vm972, %v1245, %v1249
      %v1251 = vshrl.u32 %v956, 16
      %v1253 = vrot.slane %v1251, 4
      %v1254 = vor.u32 %v1253, %v1249
      %v1255 = vrot.slane %v1254, 4
      %v1257 = vshll.u32 %v957, 16
      %v1259 = vrot.slane %v1257, 5
      %v1260 = vsel %vm972, %v1255, %v1259
      %v1262 = vshrl.u32 %v958, 16
      %v1264 = vrot.slane %v1262, 4
      %v1265 = vshll.u32 %v958, 16
      %v1267 = vrot.slane %v1265, 5
      %v1268 = vor.u32 %v1264, %v1267
      %v1269 = vrot.slane %v1268, 4
      %v1271 = vshll.u32 %v959, 16
      %v1273 = vrot.slane %v1271, 5
      %v1274 = vsel %vm972, %v1269, %v1273
      %v1275 = vshrl.u32 %v959, 16
      %v1277 = vrot.slane %v1275, 4
      %v1278 = vor.u32 %v1277, %v1273
      %v1279 = vrot.slane %v1278, 4
      %v1281 = vshll.u32 %v960, 16
      %v1283 = vrot.slane %v1281, 5
      %v1284 = vsel %vm972, %v1279, %v1283
      %v1286 = vshrl.u32 %v961, 16
      %v1288 = vrot.slane %v1286, 4
      %v1289 = vshll.u32 %v961, 16
      %v1291 = vrot.slane %v1289, 5
      %v1292 = vor.u32 %v1288, %v1291
      %v1293 = vrot.slane %v1292, 4
      %v1295 = vshll.u32 %v962, 16
      %v1297 = vrot.slane %v1295, 5
      %v1298 = vsel %vm972, %v1293, %v1297
      %v1299 = vshrl.u32 %v962, 16
      %v1301 = vrot.slane %v1299, 4
      %v1302 = vor.u32 %v1301, %v1297
      %v1303 = vrot.slane %v1302, 4
      %v1305 = vshll.u32 %v963, 16
      %v1307 = vrot.slane %v1305, 5
      %v1308 = vsel %vm972, %v1303, %v1307
      %v1310 = vshrl.u32 %v964, 16
      %v1312 = vrot.slane %v1310, 4
      %v1313 = vshll.u32 %v964, 16
      %v1315 = vrot.slane %v1313, 5
      %v1316 = vor.u32 %v1312, %v1315
      %v1317 = vrot.slane %v1316, 4
      %v1319 = vshll.u32 %v965, 16
      %v1321 = vrot.slane %v1319, 5
      %v1322 = vsel %vm972, %v1317, %v1321
      %v1323 = vshrl.u32 %v965, 16
      %v1325 = vrot.slane %v1323, 4
      %v1326 = vor.u32 %v1325, %v1321
      %v1327 = vrot.slane %v1326, 4
      %v1329 = vshll.u32 %v966, 16
      %v1331 = vrot.slane %v1329, 5
      %v1332 = vsel %vm972, %v1327, %v1331
      %v1334 = vshrl.u32 %v967, 16
      %v1336 = vrot.slane %v1334, 4
      %v1337 = vshll.u32 %v967, 16
      %v1339 = vrot.slane %v1337, 5
      %v1340 = vor.u32 %v1336, %v1339
      %v1341 = vrot.slane %v1340, 4
      %v1343 = vshll.u32 %v968, 16
      %v1345 = vrot.slane %v1343, 5
      %v1346 = vsel %vm972, %v1341, %v1345
      %v1347 = vshrl.u32 %v968, 16
      %v1349 = vrot.slane %v1347, 4
      %v1350 = vor.u32 %v1349, %v1345
      %v1351 = vrot.slane %v1350, 4
      %v1353 = vshll.u32 %v969, 16
      %v1355 = vrot.slane %v1353, 5
      %v1356 = vsel %vm972, %v1351, %v1355
      %1389 = vst [vmem:[#allocation3 + $0x4] sm:$0xf] %v986
      %1390 = vst [vmem:[#allocation3 + $0x28] sm:$0xf] %v996
      %1391 = vst [vmem:[#allocation3 + $0x4c] sm:$0xf] %v1010
      %1392 = vst [vmem:[#allocation3 + $0x70] sm:$0xf] %v1020
      %1393 = vst [vmem:[#allocation3 + $0x94] sm:$0xf] %v1034
      %1394 = vst [vmem:[#allocation3 + $0xb8] sm:$0xf] %v1044
      %1395 = vst [vmem:[#allocation3 + $0xdc] sm:$0xf] %v1058
      %1396 = vst [vmem:[#allocation3 + $0x100] sm:$0xf] %v1068
      %1397 = vst [vmem:[#allocation3 + $0x124] sm:$0xf] %v1082
      %1398 = vst [vmem:[#allocation3 + $0x148] sm:$0xf] %v1092
      %1399 = vst [vmem:[#allocation3 + $0x16c] sm:$0xf] %v1106
      %1400 = vst [vmem:[#allocation3 + $0x190] sm:$0xf] %v1116
      %1401 = vst [vmem:[#allocation3 + $0x1b4] sm:$0xf] %v1130
      %1402 = vst [vmem:[#allocation3 + $0x1d8] sm:$0xf] %v1140
      %1403 = vst [vmem:[#allocation3 + $0x1fc] sm:$0xf] %v1154
      %1404 = vst [vmem:[#allocation3 + $0x220] sm:$0xf] %v1164
      %1405 = vst [vmem:[#allocation3 + $0x244] sm:$0xf] %v1178
      %1406 = vst [vmem:[#allocation3 + $0x268] sm:$0xf] %v1188
      %1407 = vst [vmem:[#allocation3 + $0x28c] sm:$0xf] %v1202
      %1408 = vst [vmem:[#allocation3 + $0x2b0] sm:$0xf] %v1212
      %1409 = vst [vmem:[#allocation3 + $0x2d4] sm:$0xf] %v1226
      %1410 = vst [vmem:[#allocation3 + $0x2f8] sm:$0xf] %v1236
      %1411 = vst [vmem:[#allocation3 + $0x31c] sm:$0xf] %v1250
      %1412 = vst [vmem:[#allocation3 + $0x340] sm:$0xf] %v1260
      %1413 = vst [vmem:[#allocation3 + $0x364] sm:$0xf] %v1274
      %1414 = vst [vmem:[#allocation3 + $0x388] sm:$0xf] %v1284
      %1415 = vst [vmem:[#allocation3 + $0x3ac] sm:$0xf] %v1298
      %1416 = vst [vmem:[#allocation3 + $0x3d0] sm:$0xf] %v1308
      %1417 = vst [vmem:[#allocation3 + $0x3f4] sm:$0xf] %v1322
      %1418 = vst [vmem:[#allocation3 + $0x418] sm:$0xf] %v1332
      %1419 = vst [vmem:[#allocation3 + $0x43c] sm:$0xf] %v1346
      %1420 = vst [vmem:[#allocation3 + $0x460] sm:$0xf] %v1356
      %v1421 = vld [vmem:[#allocation2] sm:$0xe]
      %v1422 = vld [vmem:[#allocation2 + $0x4] sm:$0xf]
      %v1423 = vld [vmem:[#allocation2 + $0x8] sm:$0x1]
      %v1424 = vld [vmem:[#allocation2 + $0xc] sm:$0xe]
      %v1425 = vld [vmem:[#allocation2 + $0x10] sm:$0xf]
      %v1426 = vld [vmem:[#allocation2 + $0x14] sm:$0x1]
      %v1427 = vld [vmem:[#allocation2 + $0x18] sm:$0xe]
      %v1428 = vld [vmem:[#allocation2 + $0x1c] sm:$0xf]
      %v1429 = vld [vmem:[#allocation2 + $0x20] sm:$0x1]
      %v1430 = vld [vmem:[#allocation2 + $0x24] sm:$0xe]
      %v1431 = vld [vmem:[#allocation2 + $0x28] sm:$0xf]
      %v1432 = vld [vmem:[#allocation2 + $0x2c] sm:$0x1]
      %v1433 = vld [vmem:[#allocation2 + $0x30] sm:$0xe]
      %v1434 = vld [vmem:[#allocation2 + $0x34] sm:$0xf]
      %v1435 = vld [vmem:[#allocation2 + $0x38] sm:$0x1]
      %v1436 = vld [vmem:[#allocation2 + $0x3c] sm:$0xe]
      %v1437 = vld [vmem:[#allocation2 + $0x40] sm:$0xf]
      %v1438 = vld [vmem:[#allocation2 + $0x44] sm:$0x1]
      %v1439 = vld [vmem:[#allocation2 + $0x48] sm:$0xe]
      %v1440 = vld [vmem:[#allocation2 + $0x4c] sm:$0xf]
      %v1441 = vld [vmem:[#allocation2 + $0x50] sm:$0x1]
      %v1442 = vld [vmem:[#allocation2 + $0x54] sm:$0xe]
      %v1443 = vld [vmem:[#allocation2 + $0x58] sm:$0xf]
      %v1444 = vld [vmem:[#allocation2 + $0x5c] sm:$0x1]
      %v1445 = vld [vmem:[#allocation2 + $0x60] sm:$0xe]
      %v1446 = vld [vmem:[#allocation2 + $0x64] sm:$0xf]
      %v1447 = vld [vmem:[#allocation2 + $0x68] sm:$0x1]
      %v1448 = vld [vmem:[#allocation2 + $0x6c] sm:$0xe]
      %v1449 = vld [vmem:[#allocation2 + $0x70] sm:$0xf]
      %v1450 = vld [vmem:[#allocation2 + $0x74] sm:$0x1]
      %v1451 = vld [vmem:[#allocation2 + $0x78] sm:$0xe]
      %v1452 = vld [vmem:[#allocation2 + $0x7c] sm:$0xf]
      %v1453 = vld [vmem:[#allocation2 + $0x80] sm:$0x1]
      %v1454 = vld [vmem:[#allocation2 + $0x84] sm:$0xe]
      %v1455 = vld [vmem:[#allocation2 + $0x88] sm:$0xf]
      %v1456 = vld [vmem:[#allocation2 + $0x8c] sm:$0x1]
      %v1457 = vld [vmem:[#allocation2 + $0x90] sm:$0xe]
      %v1458 = vld [vmem:[#allocation2 + $0x94] sm:$0xf]
      %v1459 = vld [vmem:[#allocation2 + $0x98] sm:$0x1]
      %v1460 = vld [vmem:[#allocation2 + $0x9c] sm:$0xe]
      %v1461 = vld [vmem:[#allocation2 + $0xa0] sm:$0xf]
      %v1462 = vld [vmem:[#allocation2 + $0xa4] sm:$0x1]
      %v1463 = vld [vmem:[#allocation2 + $0xa8] sm:$0xe]
      %v1464 = vld [vmem:[#allocation2 + $0xac] sm:$0xf]
      %v1465 = vld [vmem:[#allocation2 + $0xb0] sm:$0x1]
      %v1466 = vld [vmem:[#allocation2 + $0xb4] sm:$0xe]
      %v1467 = vld [vmem:[#allocation2 + $0xb8] sm:$0xf]
      %v1468 = vld [vmem:[#allocation2 + $0xbc] sm:$0x1]
      %vm1517 = vcmask 1042432
      %vm1518 = vcmask 1046532
      %vm1519 = vmor %vm1517, %vm1518
      %v1520 = vrot.slane %v1421, 5
      %v1521 = vrot.slane %v1520, 4
      %v1522 = vrot.slane %v1422, 5
      %v1523 = vsel %vm1519, %v1521, %v1522
      %v1524 = vrot.slane %v1522, 4
      %v1525 = vrot.slane %v1423, 5
      %v1526 = vsel %vm1519, %v1524, %v1525
      %v1527 = vrot.slane %v1424, 5
      %v1528 = vrot.slane %v1527, 4
      %v1529 = vrot.slane %v1425, 5
      %v1530 = vsel %vm1519, %v1528, %v1529
      %v1531 = vrot.slane %v1529, 4
      %v1532 = vrot.slane %v1426, 5
      %v1533 = vsel %vm1519, %v1531, %v1532
      %v1534 = vrot.slane %v1427, 5
      %v1535 = vrot.slane %v1534, 4
      %v1536 = vrot.slane %v1428, 5
      %v1537 = vsel %vm1519, %v1535, %v1536
      %v1538 = vrot.slane %v1536, 4
      %v1539 = vrot.slane %v1429, 5
      %v1540 = vsel %vm1519, %v1538, %v1539
      %v1541 = vrot.slane %v1430, 5
      %v1542 = vrot.slane %v1541, 4
      %v1543 = vrot.slane %v1431, 5
      %v1544 = vsel %vm1519, %v1542, %v1543
      %v1545 = vrot.slane %v1543, 4
      %v1546 = vrot.slane %v1432, 5
      %v1547 = vsel %vm1519, %v1545, %v1546
      %v1548 = vrot.slane %v1433, 5
      %v1549 = vrot.slane %v1548, 4
      %v1550 = vrot.slane %v1434, 5
      %v1551 = vsel %vm1519, %v1549, %v1550
      %v1552 = vrot.slane %v1550, 4
      %v1553 = vrot.slane %v1435, 5
      %v1554 = vsel %vm1519, %v1552, %v1553
      %v1555 = vrot.slane %v1436, 5
      %v1556 = vrot.slane %v1555, 4
      %v1557 = vrot.slane %v1437, 5
      %v1558 = vsel %vm1519, %v1556, %v1557
      %v1559 = vrot.slane %v1557, 4
      %v1560 = vrot.slane %v1438, 5
      %v1561 = vsel %vm1519, %v1559, %v1560
      %v1562 = vrot.slane %v1439, 5
      %v1563 = vrot.slane %v1562, 4
      %v1564 = vrot.slane %v1440, 5
      %v1565 = vsel %vm1519, %v1563, %v1564
      %v1566 = vrot.slane %v1564, 4
      %v1567 = vrot.slane %v1441, 5
      %v1568 = vsel %vm1519, %v1566, %v1567
      %v1569 = vrot.slane %v1442, 5
      %v1570 = vrot.slane %v1569, 4
      %v1571 = vrot.slane %v1443, 5
      %v1572 = vsel %vm1519, %v1570, %v1571
      %v1573 = vrot.slane %v1571, 4
      %v1574 = vrot.slane %v1444, 5
      %v1575 = vsel %vm1519, %v1573, %v1574
      %v1576 = vrot.slane %v1445, 5
      %v1577 = vrot.slane %v1576, 4
      %v1578 = vrot.slane %v1446, 5
      %v1579 = vsel %vm1519, %v1577, %v1578
      %v1580 = vrot.slane %v1578, 4
      %v1581 = vrot.slane %v1447, 5
      %v1582 = vsel %vm1519, %v1580, %v1581
      %v1583 = vrot.slane %v1448, 5
      %v1584 = vrot.slane %v1583, 4
      %v1585 = vrot.slane %v1449, 5
      %v1586 = vsel %vm1519, %v1584, %v1585
      %v1587 = vrot.slane %v1585, 4
      %v1588 = vrot.slane %v1450, 5
      %v1589 = vsel %vm1519, %v1587, %v1588
      %v1590 = vrot.slane %v1451, 5
      %v1591 = vrot.slane %v1590, 4
      %v1592 = vrot.slane %v1452, 5
      %v1593 = vsel %vm1519, %v1591, %v1592
      %v1594 = vrot.slane %v1592, 4
      %v1595 = vrot.slane %v1453, 5
      %v1596 = vsel %vm1519, %v1594, %v1595
      %v1597 = vrot.slane %v1454, 5
      %v1598 = vrot.slane %v1597, 4
      %v1599 = vrot.slane %v1455, 5
      %v1600 = vsel %vm1519, %v1598, %v1599
      %v1601 = vrot.slane %v1599, 4
      %v1602 = vrot.slane %v1456, 5
      %v1603 = vsel %vm1519, %v1601, %v1602
      %v1604 = vrot.slane %v1457, 5
      %v1605 = vrot.slane %v1604, 4
      %v1606 = vrot.slane %v1458, 5
      %v1607 = vsel %vm1519, %v1605, %v1606
      %v1608 = vrot.slane %v1606, 4
      %v1609 = vrot.slane %v1459, 5
      %v1610 = vsel %vm1519, %v1608, %v1609
      %v1611 = vrot.slane %v1460, 5
      %v1612 = vrot.slane %v1611, 4
      %v1613 = vrot.slane %v1461, 5
      %v1614 = vsel %vm1519, %v1612, %v1613
      %v1615 = vrot.slane %v1613, 4
      %v1616 = vrot.slane %v1462, 5
      %v1617 = vsel %vm1519, %v1615, %v1616
      %v1618 = vrot.slane %v1463, 5
      %v1619 = vrot.slane %v1618, 4
      %v1620 = vrot.slane %v1464, 5
      %v1621 = vsel %vm1519, %v1619, %v1620
      %v1622 = vrot.slane %v1620, 4
      %v1623 = vrot.slane %v1465, 5
      %v1624 = vsel %vm1519, %v1622, %v1623
      %v1625 = vrot.slane %v1466, 5
      %v1626 = vrot.slane %v1625, 4
      %v1627 = vrot.slane %v1467, 5
      %v1628 = vsel %vm1519, %v1626, %v1627
      %v1629 = vrot.slane %v1627, 4
      %v1630 = vrot.slane %v1468, 5
      %v1631 = vsel %vm1519, %v1629, %v1630
      %1664 = vst [vmem:[#allocation3 + $0x8] sm:$0xf] %v1523
      %1665 = vst [vmem:[#allocation3 + $0x2c] sm:$0xf] %v1526
      %1666 = vst [vmem:[#allocation3 + $0x50] sm:$0xf] %v1530
      %1667 = vst [vmem:[#allocation3 + $0x74] sm:$0xf] %v1533
      %1668 = vst [vmem:[#allocation3 + $0x98] sm:$0xf] %v1537
      %1669 = vst [vmem:[#allocation3 + $0xbc] sm:$0xf] %v1540
      %1670 = vst [vmem:[#allocation3 + $0xe0] sm:$0xf] %v1544
      %1671 = vst [vmem:[#allocation3 + $0x104] sm:$0xf] %v1547
      %1672 = vst [vmem:[#allocation3 + $0x128] sm:$0xf] %v1551
      %1673 = vst [vmem:[#allocation3 + $0x14c] sm:$0xf] %v1554
      %1674 = vst [vmem:[#allocation3 + $0x170] sm:$0xf] %v1558
      %1675 = vst [vmem:[#allocation3 + $0x194] sm:$0xf] %v1561
      %1676 = vst [vmem:[#allocation3 + $0x1b8] sm:$0xf] %v1565
      %1677 = vst [vmem:[#allocation3 + $0x1dc] sm:$0xf] %v1568
      %1678 = vst [vmem:[#allocation3 + $0x200] sm:$0xf] %v1572
      %1679 = vst [vmem:[#allocation3 + $0x224] sm:$0xf] %v1575
      %1680 = vst [vmem:[#allocation3 + $0x248] sm:$0xf] %v1579
      %1681 = vst [vmem:[#allocation3 + $0x26c] sm:$0xf] %v1582
      %1682 = vst [vmem:[#allocation3 + $0x290] sm:$0xf] %v1586
      %1683 = vst [vmem:[#allocation3 + $0x2b4] sm:$0xf] %v1589
      %1684 = vst [vmem:[#allocation3 + $0x2d8] sm:$0xf] %v1593
      %1685 = vst [vmem:[#allocation3 + $0x2fc] sm:$0xf] %v1596
      %1686 = vst [vmem:[#allocation3 + $0x320] sm:$0xf] %v1600
      %1687 = vst [vmem:[#allocation3 + $0x344] sm:$0xf] %v1603
      %1688 = vst [vmem:[#allocation3 + $0x368] sm:$0xf] %v1607
      %1689 = vst [vmem:[#allocation3 + $0x38c] sm:$0xf] %v1610
      %1690 = vst [vmem:[#allocation3 + $0x3b0] sm:$0xf] %v1614
      %1691 = vst [vmem:[#allocation3 + $0x3d4] sm:$0xf] %v1617
      %1692 = vst [vmem:[#allocation3 + $0x3f8] sm:$0xf] %v1621
      %1693 = vst [vmem:[#allocation3 + $0x41c] sm:$0xf] %v1624
      %1694 = vst [vmem:[#allocation3 + $0x440] sm:$0xf] %v1628
      %1695 = vst [vmem:[#allocation3 + $0x464] sm:$0xf] %v1631
      %v1696 = vld [vmem:[%s743] sm:$0xf]
      %v1697 = vld [vmem:[%s743 + $0x4] sm:$0xf]
      %v1698 = vld [vmem:[%s743 + $0xc] sm:$0xf]
      %v1699 = vld [vmem:[%s743 + $0x10] sm:$0xf]
      %v1700 = vld [vmem:[%s743 + $0x18] sm:$0xf]
      %v1701 = vld [vmem:[%s743 + $0x1c] sm:$0xf]
      %v1702 = vld [vmem:[%s743 + $0x24] sm:$0xf]
      %v1703 = vld [vmem:[%s743 + $0x28] sm:$0xf]
      %v1704 = vld [vmem:[%s743 + $0x30] sm:$0xf]
      %v1705 = vld [vmem:[%s743 + $0x34] sm:$0xf]
      %v1706 = vld [vmem:[%s743 + $0x3c] sm:$0xf]
      %v1707 = vld [vmem:[%s743 + $0x40] sm:$0xf]
      %v1708 = vld [vmem:[%s743 + $0x48] sm:$0xf]
      %v1709 = vld [vmem:[%s743 + $0x4c] sm:$0xf]
      %v1710 = vld [vmem:[%s743 + $0x54] sm:$0xf]
      %v1711 = vld [vmem:[%s743 + $0x58] sm:$0xf]
      %v1712 = vld [vmem:[%s743 + $0x60] sm:$0xf]
      %v1713 = vld [vmem:[%s743 + $0x64] sm:$0xf]
      %v1714 = vld [vmem:[%s743 + $0x6c] sm:$0xf]
      %v1715 = vld [vmem:[%s743 + $0x70] sm:$0xf]
      %v1716 = vld [vmem:[%s743 + $0x78] sm:$0xf]
      %v1717 = vld [vmem:[%s743 + $0x7c] sm:$0xf]
      %v1718 = vld [vmem:[%s743 + $0x84] sm:$0xf]
      %v1719 = vld [vmem:[%s743 + $0x88] sm:$0xf]
      %v1720 = vld [vmem:[%s743 + $0x90] sm:$0xf]
      %v1721 = vld [vmem:[%s743 + $0x94] sm:$0xf]
      %v1722 = vld [vmem:[%s743 + $0x9c] sm:$0xf]
      %v1723 = vld [vmem:[%s743 + $0xa0] sm:$0xf]
      %v1724 = vld [vmem:[%s743 + $0xa8] sm:$0xf]
      %v1725 = vld [vmem:[%s743 + $0xac] sm:$0xf]
      %v1726 = vld [vmem:[%s743 + $0xb4] sm:$0xf]
      %v1727 = vld [vmem:[%s743 + $0xb8] sm:$0xf]
      %1728 = vst [vmem:[#allocation3 + $0xc] sm:$0xf] %v1696
      %1729 = vst [vmem:[#allocation3 + $0x30] sm:$0xf] %v1697
      %1730 = vst [vmem:[#allocation3 + $0x54] sm:$0xf] %v1698
      %1731 = vst [vmem:[#allocation3 + $0x78] sm:$0xf] %v1699
      %1732 = vst [vmem:[#allocation3 + $0x9c] sm:$0xf] %v1700
      %1733 = vst [vmem:[#allocation3 + $0xc0] sm:$0xf] %v1701
      %1734 = vst [vmem:[#allocation3 + $0xe4] sm:$0xf] %v1702
      %1735 = vst [vmem:[#allocation3 + $0x108] sm:$0xf] %v1703
      %1736 = vst [vmem:[#allocation3 + $0x12c] sm:$0xf] %v1704
      %1737 = vst [vmem:[#allocation3 + $0x150] sm:$0xf] %v1705
      %1738 = vst [vmem:[#allocation3 + $0x174] sm:$0xf] %v1706
      %1739 = vst [vmem:[#allocation3 + $0x198] sm:$0xf] %v1707
      %1740 = vst [vmem:[#allocation3 + $0x1bc] sm:$0xf] %v1708
      %1741 = vst [vmem:[#allocation3 + $0x1e0] sm:$0xf] %v1709
      %1742 = vst [vmem:[#allocation3 + $0x204] sm:$0xf] %v1710
      %1743 = vst [vmem:[#allocation3 + $0x228] sm:$0xf] %v1711
      %1744 = vst [vmem:[#allocation3 + $0x24c] sm:$0xf] %v1712
      %1745 = vst [vmem:[#allocation3 + $0x270] sm:$0xf] %v1713
      %1746 = vst [vmem:[#allocation3 + $0x294] sm:$0xf] %v1714
      %1747 = vst [vmem:[#allocation3 + $0x2b8] sm:$0xf] %v1715
      %1748 = vst [vmem:[#allocation3 + $0x2dc] sm:$0xf] %v1716
      %1749 = vst [vmem:[#allocation3 + $0x300] sm:$0xf] %v1717
      %1750 = vst [vmem:[#allocation3 + $0x324] sm:$0xf] %v1718
      %1751 = vst [vmem:[#allocation3 + $0x348] sm:$0xf] %v1719
      %1752 = vst [vmem:[#allocation3 + $0x36c] sm:$0xf] %v1720
      %1753 = vst [vmem:[#allocation3 + $0x390] sm:$0xf] %v1721
      %1754 = vst [vmem:[#allocation3 + $0x3b4] sm:$0xf] %v1722
      %1755 = vst [vmem:[#allocation3 + $0x3d8] sm:$0xf] %v1723
      %1756 = vst [vmem:[#allocation3 + $0x3fc] sm:$0xf] %v1724
      %1757 = vst [vmem:[#allocation3 + $0x420] sm:$0xf] %v1725
      %1758 = vst [vmem:[#allocation3 + $0x444] sm:$0xf] %v1726
      %1759 = vst [vmem:[#allocation3 + $0x468] sm:$0xf] %v1727
      %v1760 = vld [vmem:[%s743] sm:$0xf]
      %v1761 = vld [vmem:[%s743 + $0x4] sm:$0xf]
      %v1762 = vld [vmem:[%s743 + $0x8] sm:$0x1]
      %v1763 = vld [vmem:[%s743 + $0xc] sm:$0xf]
      %v1764 = vld [vmem:[%s743 + $0x10] sm:$0xf]
      %v1765 = vld [vmem:[%s743 + $0x14] sm:$0x1]
      %v1766 = vld [vmem:[%s743 + $0x18] sm:$0xf]
      %v1767 = vld [vmem:[%s743 + $0x1c] sm:$0xf]
      %v1768 = vld [vmem:[%s743 + $0x20] sm:$0x1]
      %v1769 = vld [vmem:[%s743 + $0x24] sm:$0xf]
      %v1770 = vld [vmem:[%s743 + $0x28] sm:$0xf]
      %v1771 = vld [vmem:[%s743 + $0x2c] sm:$0x1]
      %v1772 = vld [vmem:[%s743 + $0x30] sm:$0xf]
      %v1773 = vld [vmem:[%s743 + $0x34] sm:$0xf]
      %v1774 = vld [vmem:[%s743 + $0x38] sm:$0x1]
      %v1775 = vld [vmem:[%s743 + $0x3c] sm:$0xf]
      %v1776 = vld [vmem:[%s743 + $0x40] sm:$0xf]
      %v1777 = vld [vmem:[%s743 + $0x44] sm:$0x1]
      %v1778 = vld [vmem:[%s743 + $0x48] sm:$0xf]
      %v1779 = vld [vmem:[%s743 + $0x4c] sm:$0xf]
      %v1780 = vld [vmem:[%s743 + $0x50] sm:$0x1]
      %v1781 = vld [vmem:[%s743 + $0x54] sm:$0xf]
      %v1782 = vld [vmem:[%s743 + $0x58] sm:$0xf]
      %v1783 = vld [vmem:[%s743 + $0x5c] sm:$0x1]
      %v1784 = vld [vmem:[%s743 + $0x60] sm:$0xf]
      %v1785 = vld [vmem:[%s743 + $0x64] sm:$0xf]
      %v1786 = vld [vmem:[%s743 + $0x68] sm:$0x1]
      %v1787 = vld [vmem:[%s743 + $0x6c] sm:$0xf]
      %v1788 = vld [vmem:[%s743 + $0x70] sm:$0xf]
      %v1789 = vld [vmem:[%s743 + $0x74] sm:$0x1]
      %v1790 = vld [vmem:[%s743 + $0x78] sm:$0xf]
      %v1791 = vld [vmem:[%s743 + $0x7c] sm:$0xf]
      %v1792 = vld [vmem:[%s743 + $0x80] sm:$0x1]
      %v1793 = vld [vmem:[%s743 + $0x84] sm:$0xf]
      %v1794 = vld [vmem:[%s743 + $0x88] sm:$0xf]
      %v1795 = vld [vmem:[%s743 + $0x8c] sm:$0x1]
      %v1796 = vld [vmem:[%s743 + $0x90] sm:$0xf]
      %v1797 = vld [vmem:[%s743 + $0x94] sm:$0xf]
      %v1798 = vld [vmem:[%s743 + $0x98] sm:$0x1]
      %v1799 = vld [vmem:[%s743 + $0x9c] sm:$0xf]
      %v1800 = vld [vmem:[%s743 + $0xa0] sm:$0xf]
      %v1801 = vld [vmem:[%s743 + $0xa4] sm:$0x1]
      %v1802 = vld [vmem:[%s743 + $0xa8] sm:$0xf]
      %v1803 = vld [vmem:[%s743 + $0xac] sm:$0xf]
      %v1804 = vld [vmem:[%s743 + $0xb0] sm:$0x1]
      %v1805 = vld [vmem:[%s743 + $0xb4] sm:$0xf]
      %v1806 = vld [vmem:[%s743 + $0xb8] sm:$0xf]
      %v1807 = vld [vmem:[%s743 + $0xbc] sm:$0x1]
      %v1809 = vshrl.u32 %v1760, 16
      %v1811 = vrot.slane %v1809, 4
      %v1812 = vshll.u32 %v1760, 16
      %v1814 = vrot.slane %v1812, 5
      %v1815 = vor.u32 %v1811, %v1814
      %v1816 = vrot.slane %v1815, 4
      %v1818 = vshll.u32 %v1761, 16
      %v1820 = vrot.slane %v1818, 5
      %v1821 = vsel %vm972, %v1816, %v1820
      %v1822 = vshrl.u32 %v1761, 16
      %v1824 = vrot.slane %v1822, 4
      %v1825 = vor.u32 %v1824, %v1820
      %v1826 = vrot.slane %v1825, 4
      %v1828 = vshll.u32 %v1762, 16
      %v1830 = vrot.slane %v1828, 5
      %v1831 = vsel %vm972, %v1826, %v1830
      %v1833 = vshrl.u32 %v1763, 16
      %v1835 = vrot.slane %v1833, 4
      %v1836 = vshll.u32 %v1763, 16
      %v1838 = vrot.slane %v1836, 5
      %v1839 = vor.u32 %v1835, %v1838
      %v1840 = vrot.slane %v1839, 4
      %v1842 = vshll.u32 %v1764, 16
      %v1844 = vrot.slane %v1842, 5
      %v1845 = vsel %vm972, %v1840, %v1844
      %v1846 = vshrl.u32 %v1764, 16
      %v1848 = vrot.slane %v1846, 4
      %v1849 = vor.u32 %v1848, %v1844
      %v1850 = vrot.slane %v1849, 4
      %v1852 = vshll.u32 %v1765, 16
      %v1854 = vrot.slane %v1852, 5
      %v1855 = vsel %vm972, %v1850, %v1854
      %v1857 = vshrl.u32 %v1766, 16
      %v1859 = vrot.slane %v1857, 4
      %v1860 = vshll.u32 %v1766, 16
      %v1862 = vrot.slane %v1860, 5
      %v1863 = vor.u32 %v1859, %v1862
      %v1864 = vrot.slane %v1863, 4
      %v1866 = vshll.u32 %v1767, 16
      %v1868 = vrot.slane %v1866, 5
      %v1869 = vsel %vm972, %v1864, %v1868
      %v1870 = vshrl.u32 %v1767, 16
      %v1872 = vrot.slane %v1870, 4
      %v1873 = vor.u32 %v1872, %v1868
      %v1874 = vrot.slane %v1873, 4
      %v1876 = vshll.u32 %v1768, 16
      %v1878 = vrot.slane %v1876, 5
      %v1879 = vsel %vm972, %v1874, %v1878
      %v1881 = vshrl.u32 %v1769, 16
      %v1883 = vrot.slane %v1881, 4
      %v1884 = vshll.u32 %v1769, 16
      %v1886 = vrot.slane %v1884, 5
      %v1887 = vor.u32 %v1883, %v1886
      %v1888 = vrot.slane %v1887, 4
      %v1890 = vshll.u32 %v1770, 16
      %v1892 = vrot.slane %v1890, 5
      %v1893 = vsel %vm972, %v1888, %v1892
      %v1894 = vshrl.u32 %v1770, 16
      %v1896 = vrot.slane %v1894, 4
      %v1897 = vor.u32 %v1896, %v1892
      %v1898 = vrot.slane %v1897, 4
      %v1900 = vshll.u32 %v1771, 16
      %v1902 = vrot.slane %v1900, 5
      %v1903 = vsel %vm972, %v1898, %v1902
      %v1905 = vshrl.u32 %v1772, 16
      %v1907 = vrot.slane %v1905, 4
      %v1908 = vshll.u32 %v1772, 16
      %v1910 = vrot.slane %v1908, 5
      %v1911 = vor.u32 %v1907, %v1910
      %v1912 = vrot.slane %v1911, 4
      %v1914 = vshll.u32 %v1773, 16
      %v1916 = vrot.slane %v1914, 5
      %v1917 = vsel %vm972, %v1912, %v1916
      %v1918 = vshrl.u32 %v1773, 16
      %v1920 = vrot.slane %v1918, 4
      %v1921 = vor.u32 %v1920, %v1916
      %v1922 = vrot.slane %v1921, 4
      %v1924 = vshll.u32 %v1774, 16
      %v1926 = vrot.slane %v1924, 5
      %v1927 = vsel %vm972, %v1922, %v1926
      %v1929 = vshrl.u32 %v1775, 16
      %v1931 = vrot.slane %v1929, 4
      %v1932 = vshll.u32 %v1775, 16
      %v1934 = vrot.slane %v1932, 5
      %v1935 = vor.u32 %v1931, %v1934
      %v1936 = vrot.slane %v1935, 4
      %v1938 = vshll.u32 %v1776, 16
      %v1940 = vrot.slane %v1938, 5
      %v1941 = vsel %vm972, %v1936, %v1940
      %v1942 = vshrl.u32 %v1776, 16
      %v1944 = vrot.slane %v1942, 4
      %v1945 = vor.u32 %v1944, %v1940
      %v1946 = vrot.slane %v1945, 4
      %v1948 = vshll.u32 %v1777, 16
      %v1950 = vrot.slane %v1948, 5
      %v1951 = vsel %vm972, %v1946, %v1950
      %v1953 = vshrl.u32 %v1778, 16
      %v1955 = vrot.slane %v1953, 4
      %v1956 = vshll.u32 %v1778, 16
      %v1958 = vrot.slane %v1956, 5
      %v1959 = vor.u32 %v1955, %v1958
      %v1960 = vrot.slane %v1959, 4
      %v1962 = vshll.u32 %v1779, 16
      %v1964 = vrot.slane %v1962, 5
      %v1965 = vsel %vm972, %v1960, %v1964
      %v1966 = vshrl.u32 %v1779, 16
      %v1968 = vrot.slane %v1966, 4
      %v1969 = vor.u32 %v1968, %v1964
      %v1970 = vrot.slane %v1969, 4
      %v1972 = vshll.u32 %v1780, 16
      %v1974 = vrot.slane %v1972, 5
      %v1975 = vsel %vm972, %v1970, %v1974
      %v1977 = vshrl.u32 %v1781, 16
      %v1979 = vrot.slane %v1977, 4
      %v1980 = vshll.u32 %v1781, 16
      %v1982 = vrot.slane %v1980, 5
      %v1983 = vor.u32 %v1979, %v1982
      %v1984 = vrot.slane %v1983, 4
      %v1986 = vshll.u32 %v1782, 16
      %v1988 = vrot.slane %v1986, 5
      %v1989 = vsel %vm972, %v1984, %v1988
      %v1990 = vshrl.u32 %v1782, 16
      %v1992 = vrot.slane %v1990, 4
      %v1993 = vor.u32 %v1992, %v1988
      %v1994 = vrot.slane %v1993, 4
      %v1996 = vshll.u32 %v1783, 16
      %v1998 = vrot.slane %v1996, 5
      %v1999 = vsel %vm972, %v1994, %v1998
      %v2001 = vshrl.u32 %v1784, 16
      %v2003 = vrot.slane %v2001, 4
      %v2004 = vshll.u32 %v1784, 16
      %v2006 = vrot.slane %v2004, 5
      %v2007 = vor.u32 %v2003, %v2006
      %v2008 = vrot.slane %v2007, 4
      %v2010 = vshll.u32 %v1785, 16
      %v2012 = vrot.slane %v2010, 5
      %v2013 = vsel %vm972, %v2008, %v2012
      %v2014 = vshrl.u32 %v1785, 16
      %v2016 = vrot.slane %v2014, 4
      %v2017 = vor.u32 %v2016, %v2012
      %v2018 = vrot.slane %v2017, 4
      %v2020 = vshll.u32 %v1786, 16
      %v2022 = vrot.slane %v2020, 5
      %v2023 = vsel %vm972, %v2018, %v2022
      %v2025 = vshrl.u32 %v1787, 16
      %v2027 = vrot.slane %v2025, 4
      %v2028 = vshll.u32 %v1787, 16
      %v2030 = vrot.slane %v2028, 5
      %v2031 = vor.u32 %v2027, %v2030
      %v2032 = vrot.slane %v2031, 4
      %v2034 = vshll.u32 %v1788, 16
      %v2036 = vrot.slane %v2034, 5
      %v2037 = vsel %vm972, %v2032, %v2036
      %v2038 = vshrl.u32 %v1788, 16
      %v2040 = vrot.slane %v2038, 4
      %v2041 = vor.u32 %v2040, %v2036
      %v2042 = vrot.slane %v2041, 4
      %v2044 = vshll.u32 %v1789, 16
      %v2046 = vrot.slane %v2044, 5
      %v2047 = vsel %vm972, %v2042, %v2046
      %v2049 = vshrl.u32 %v1790, 16
      %v2051 = vrot.slane %v2049, 4
      %v2052 = vshll.u32 %v1790, 16
      %v2054 = vrot.slane %v2052, 5
      %v2055 = vor.u32 %v2051, %v2054
      %v2056 = vrot.slane %v2055, 4
      %v2058 = vshll.u32 %v1791, 16
      %v2060 = vrot.slane %v2058, 5
      %v2061 = vsel %vm972, %v2056, %v2060
      %v2062 = vshrl.u32 %v1791, 16
      %v2064 = vrot.slane %v2062, 4
      %v2065 = vor.u32 %v2064, %v2060
      %v2066 = vrot.slane %v2065, 4
      %v2068 = vshll.u32 %v1792, 16
      %v2070 = vrot.slane %v2068, 5
      %v2071 = vsel %vm972, %v2066, %v2070
      %v2073 = vshrl.u32 %v1793, 16
      %v2075 = vrot.slane %v2073, 4
      %v2076 = vshll.u32 %v1793, 16
      %v2078 = vrot.slane %v2076, 5
      %v2079 = vor.u32 %v2075, %v2078
      %v2080 = vrot.slane %v2079, 4
      %v2082 = vshll.u32 %v1794, 16
      %v2084 = vrot.slane %v2082, 5
      %v2085 = vsel %vm972, %v2080, %v2084
      %v2086 = vshrl.u32 %v1794, 16
      %v2088 = vrot.slane %v2086, 4
      %v2089 = vor.u32 %v2088, %v2084
      %v2090 = vrot.slane %v2089, 4
      %v2092 = vshll.u32 %v1795, 16
      %v2094 = vrot.slane %v2092, 5
      %v2095 = vsel %vm972, %v2090, %v2094
      %v2097 = vshrl.u32 %v1796, 16
      %v2099 = vrot.slane %v2097, 4
      %v2100 = vshll.u32 %v1796, 16
      %v2102 = vrot.slane %v2100, 5
      %v2103 = vor.u32 %v2099, %v2102
      %v2104 = vrot.slane %v2103, 4
      %v2106 = vshll.u32 %v1797, 16
      %v2108 = vrot.slane %v2106, 5
      %v2109 = vsel %vm972, %v2104, %v2108
      %v2110 = vshrl.u32 %v1797, 16
      %v2112 = vrot.slane %v2110, 4
      %v2113 = vor.u32 %v2112, %v2108
      %v2114 = vrot.slane %v2113, 4
      %v2116 = vshll.u32 %v1798, 16
      %v2118 = vrot.slane %v2116, 5
      %v2119 = vsel %vm972, %v2114, %v2118
      %v2121 = vshrl.u32 %v1799, 16
      %v2123 = vrot.slane %v2121, 4
      %v2124 = vshll.u32 %v1799, 16
      %v2126 = vrot.slane %v2124, 5
      %v2127 = vor.u32 %v2123, %v2126
      %v2128 = vrot.slane %v2127, 4
      %v2130 = vshll.u32 %v1800, 16
      %v2132 = vrot.slane %v2130, 5
      %v2133 = vsel %vm972, %v2128, %v2132
      %v2134 = vshrl.u32 %v1800, 16
      %v2136 = vrot.slane %v2134, 4
      %v2137 = vor.u32 %v2136, %v2132
      %v2138 = vrot.slane %v2137, 4
      %v2140 = vshll.u32 %v1801, 16
      %v2142 = vrot.slane %v2140, 5
      %v2143 = vsel %vm972, %v2138, %v2142
      %v2145 = vshrl.u32 %v1802, 16
      %v2147 = vrot.slane %v2145, 4
      %v2148 = vshll.u32 %v1802, 16
      %v2150 = vrot.slane %v2148, 5
      %v2151 = vor.u32 %v2147, %v2150
      %v2152 = vrot.slane %v2151, 4
      %v2154 = vshll.u32 %v1803, 16
      %v2156 = vrot.slane %v2154, 5
      %v2157 = vsel %vm972, %v2152, %v2156
      %v2158 = vshrl.u32 %v1803, 16
      %v2160 = vrot.slane %v2158, 4
      %v2161 = vor.u32 %v2160, %v2156
      %v2162 = vrot.slane %v2161, 4
      %v2164 = vshll.u32 %v1804, 16
      %v2166 = vrot.slane %v2164, 5
      %v2167 = vsel %vm972, %v2162, %v2166
      %v2169 = vshrl.u32 %v1805, 16
      %v2171 = vrot.slane %v2169, 4
      %v2172 = vshll.u32 %v1805, 16
      %v2174 = vrot.slane %v2172, 5
      %v2175 = vor.u32 %v2171, %v2174
      %v2176 = vrot.slane %v2175, 4
      %v2178 = vshll.u32 %v1806, 16
      %v2180 = vrot.slane %v2178, 5
      %v2181 = vsel %vm972, %v2176, %v2180
      %v2182 = vshrl.u32 %v1806, 16
      %v2184 = vrot.slane %v2182, 4
      %v2185 = vor.u32 %v2184, %v2180
      %v2186 = vrot.slane %v2185, 4
      %v2188 = vshll.u32 %v1807, 16
      %v2190 = vrot.slane %v2188, 5
      %v2191 = vsel %vm972, %v2186, %v2190
      %2224 = vst [vmem:[#allocation3 + $0x10] sm:$0xf] %v1821
      %2225 = vst [vmem:[#allocation3 + $0x34] sm:$0xf] %v1831
      %2226 = vst [vmem:[#allocation3 + $0x58] sm:$0xf] %v1845
      %2227 = vst [vmem:[#allocation3 + $0x7c] sm:$0xf] %v1855
      %2228 = vst [vmem:[#allocation3 + $0xa0] sm:$0xf] %v1869
      %2229 = vst [vmem:[#allocation3 + $0xc4] sm:$0xf] %v1879
      %2230 = vst [vmem:[#allocation3 + $0xe8] sm:$0xf] %v1893
      %2231 = vst [vmem:[#allocation3 + $0x10c] sm:$0xf] %v1903
      %2232 = vst [vmem:[#allocation3 + $0x130] sm:$0xf] %v1917
      %2233 = vst [vmem:[#allocation3 + $0x154] sm:$0xf] %v1927
      %2234 = vst [vmem:[#allocation3 + $0x178] sm:$0xf] %v1941
      %2235 = vst [vmem:[#allocation3 + $0x19c] sm:$0xf] %v1951
      %2236 = vst [vmem:[#allocation3 + $0x1c0] sm:$0xf] %v1965
      %2237 = vst [vmem:[#allocation3 + $0x1e4] sm:$0xf] %v1975
      %2238 = vst [vmem:[#allocation3 + $0x208] sm:$0xf] %v1989
      %2239 = vst [vmem:[#allocation3 + $0x22c] sm:$0xf] %v1999
      %2240 = vst [vmem:[#allocation3 + $0x250] sm:$0xf] %v2013
      %2241 = vst [vmem:[#allocation3 + $0x274] sm:$0xf] %v2023
      %2242 = vst [vmem:[#allocation3 + $0x298] sm:$0xf] %v2037
      %2243 = vst [vmem:[#allocation3 + $0x2bc] sm:$0xf] %v2047
      %2244 = vst [vmem:[#allocation3 + $0x2e0] sm:$0xf] %v2061
      %2245 = vst [vmem:[#allocation3 + $0x304] sm:$0xf] %v2071
      %2246 = vst [vmem:[#allocation3 + $0x328] sm:$0xf] %v2085
      %2247 = vst [vmem:[#allocation3 + $0x34c] sm:$0xf] %v2095
      %2248 = vst [vmem:[#allocation3 + $0x370] sm:$0xf] %v2109
      %2249 = vst [vmem:[#allocation3 + $0x394] sm:$0xf] %v2119
      %2250 = vst [vmem:[#allocation3 + $0x3b8] sm:$0xf] %v2133
      %2251 = vst [vmem:[#allocation3 + $0x3dc] sm:$0xf] %v2143
      %2252 = vst [vmem:[#allocation3 + $0x400] sm:$0xf] %v2157
      %2253 = vst [vmem:[#allocation3 + $0x424] sm:$0xf] %v2167
      %2254 = vst [vmem:[#allocation3 + $0x448] sm:$0xf] %v2181
      %2255 = vst [vmem:[#allocation3 + $0x46c] sm:$0xf] %v2191
      %v2256 = vld [vmem:[%s743] sm:$0xe]
      %v2257 = vld [vmem:[%s743 + $0x4] sm:$0xf]
      %v2258 = vld [vmem:[%s743 + $0x8] sm:$0x1]
      %v2259 = vld [vmem:[%s743 + $0xc] sm:$0xe]
      %v2260 = vld [vmem:[%s743 + $0x10] sm:$0xf]
      %v2261 = vld [vmem:[%s743 + $0x14] sm:$0x1]
      %v2262 = vld [vmem:[%s743 + $0x18] sm:$0xe]
      %v2263 = vld [vmem:[%s743 + $0x1c] sm:$0xf]
      %v2264 = vld [vmem:[%s743 + $0x20] sm:$0x1]
      %v2265 = vld [vmem:[%s743 + $0x24] sm:$0xe]
      %v2266 = vld [vmem:[%s743 + $0x28] sm:$0xf]
      %v2267 = vld [vmem:[%s743 + $0x2c] sm:$0x1]
      %v2268 = vld [vmem:[%s743 + $0x30] sm:$0xe]
      %v2269 = vld [vmem:[%s743 + $0x34] sm:$0xf]
      %v2270 = vld [vmem:[%s743 + $0x38] sm:$0x1]
      %v2271 = vld [vmem:[%s743 + $0x3c] sm:$0xe]
      %v2272 = vld [vmem:[%s743 + $0x40] sm:$0xf]
      %v2273 = vld [vmem:[%s743 + $0x44] sm:$0x1]
      %v2274 = vld [vmem:[%s743 + $0x48] sm:$0xe]
      %v2275 = vld [vmem:[%s743 + $0x4c] sm:$0xf]
      %v2276 = vld [vmem:[%s743 + $0x50] sm:$0x1]
      %v2277 = vld [vmem:[%s743 + $0x54] sm:$0xe]
      %v2278 = vld [vmem:[%s743 + $0x58] sm:$0xf]
      %v2279 = vld [vmem:[%s743 + $0x5c] sm:$0x1]
      %v2280 = vld [vmem:[%s743 + $0x60] sm:$0xe]
      %v2281 = vld [vmem:[%s743 + $0x64] sm:$0xf]
      %v2282 = vld [vmem:[%s743 + $0x68] sm:$0x1]
      %v2283 = vld [vmem:[%s743 + $0x6c] sm:$0xe]
      %v2284 = vld [vmem:[%s743 + $0x70] sm:$0xf]
      %v2285 = vld [vmem:[%s743 + $0x74] sm:$0x1]
      %v2286 = vld [vmem:[%s743 + $0x78] sm:$0xe]
      %v2287 = vld [vmem:[%s743 + $0x7c] sm:$0xf]
      %v2288 = vld [vmem:[%s743 + $0x80] sm:$0x1]
      %v2289 = vld [vmem:[%s743 + $0x84] sm:$0xe]
      %v2290 = vld [vmem:[%s743 + $0x88] sm:$0xf]
      %v2291 = vld [vmem:[%s743 + $0x8c] sm:$0x1]
      %v2292 = vld [vmem:[%s743 + $0x90] sm:$0xe]
      %v2293 = vld [vmem:[%s743 + $0x94] sm:$0xf]
      %v2294 = vld [vmem:[%s743 + $0x98] sm:$0x1]
      %v2295 = vld [vmem:[%s743 + $0x9c] sm:$0xe]
      %v2296 = vld [vmem:[%s743 + $0xa0] sm:$0xf]
      %v2297 = vld [vmem:[%s743 + $0xa4] sm:$0x1]
      %v2298 = vld [vmem:[%s743 + $0xa8] sm:$0xe]
      %v2299 = vld [vmem:[%s743 + $0xac] sm:$0xf]
      %v2300 = vld [vmem:[%s743 + $0xb0] sm:$0x1]
      %v2301 = vld [vmem:[%s743 + $0xb4] sm:$0xe]
      %v2302 = vld [vmem:[%s743 + $0xb8] sm:$0xf]
      %v2303 = vld [vmem:[%s743 + $0xbc] sm:$0x1]
      %v2352 = vrot.slane %v2256, 5
      %v2353 = vrot.slane %v2352, 4
      %v2354 = vrot.slane %v2257, 5
      %v2355 = vsel %vm1519, %v2353, %v2354
      %v2356 = vrot.slane %v2354, 4
      %v2357 = vrot.slane %v2258, 5
      %v2358 = vsel %vm1519, %v2356, %v2357
      %v2359 = vrot.slane %v2259, 5
      %v2360 = vrot.slane %v2359, 4
      %v2361 = vrot.slane %v2260, 5
      %v2362 = vsel %vm1519, %v2360, %v2361
      %v2363 = vrot.slane %v2361, 4
      %v2364 = vrot.slane %v2261, 5
      %v2365 = vsel %vm1519, %v2363, %v2364
      %v2366 = vrot.slane %v2262, 5
      %v2367 = vrot.slane %v2366, 4
      %v2368 = vrot.slane %v2263, 5
      %v2369 = vsel %vm1519, %v2367, %v2368
      %v2370 = vrot.slane %v2368, 4
      %v2371 = vrot.slane %v2264, 5
      %v2372 = vsel %vm1519, %v2370, %v2371
      %v2373 = vrot.slane %v2265, 5
      %v2374 = vrot.slane %v2373, 4
      %v2375 = vrot.slane %v2266, 5
      %v2376 = vsel %vm1519, %v2374, %v2375
      %v2377 = vrot.slane %v2375, 4
      %v2378 = vrot.slane %v2267, 5
      %v2379 = vsel %vm1519, %v2377, %v2378
      %v2380 = vrot.slane %v2268, 5
      %v2381 = vrot.slane %v2380, 4
      %v2382 = vrot.slane %v2269, 5
      %v2383 = vsel %vm1519, %v2381, %v2382
      %v2384 = vrot.slane %v2382, 4
      %v2385 = vrot.slane %v2270, 5
      %v2386 = vsel %vm1519, %v2384, %v2385
      %v2387 = vrot.slane %v2271, 5
      %v2388 = vrot.slane %v2387, 4
      %v2389 = vrot.slane %v2272, 5
      %v2390 = vsel %vm1519, %v2388, %v2389
      %v2391 = vrot.slane %v2389, 4
      %v2392 = vrot.slane %v2273, 5
      %v2393 = vsel %vm1519, %v2391, %v2392
      %v2394 = vrot.slane %v2274, 5
      %v2395 = vrot.slane %v2394, 4
      %v2396 = vrot.slane %v2275, 5
      %v2397 = vsel %vm1519, %v2395, %v2396
      %v2398 = vrot.slane %v2396, 4
      %v2399 = vrot.slane %v2276, 5
      %v2400 = vsel %vm1519, %v2398, %v2399
      %v2401 = vrot.slane %v2277, 5
      %v2402 = vrot.slane %v2401, 4
      %v2403 = vrot.slane %v2278, 5
      %v2404 = vsel %vm1519, %v2402, %v2403
      %v2405 = vrot.slane %v2403, 4
      %v2406 = vrot.slane %v2279, 5
      %v2407 = vsel %vm1519, %v2405, %v2406
      %v2408 = vrot.slane %v2280, 5
      %v2409 = vrot.slane %v2408, 4
      %v2410 = vrot.slane %v2281, 5
      %v2411 = vsel %vm1519, %v2409, %v2410
      %v2412 = vrot.slane %v2410, 4
      %v2413 = vrot.slane %v2282, 5
      %v2414 = vsel %vm1519, %v2412, %v2413
      %v2415 = vrot.slane %v2283, 5
      %v2416 = vrot.slane %v2415, 4
      %v2417 = vrot.slane %v2284, 5
      %v2418 = vsel %vm1519, %v2416, %v2417
      %v2419 = vrot.slane %v2417, 4
      %v2420 = vrot.slane %v2285, 5
      %v2421 = vsel %vm1519, %v2419, %v2420
      %v2422 = vrot.slane %v2286, 5
      %v2423 = vrot.slane %v2422, 4
      %v2424 = vrot.slane %v2287, 5
      %v2425 = vsel %vm1519, %v2423, %v2424
      %v2426 = vrot.slane %v2424, 4
      %v2427 = vrot.slane %v2288, 5
      %v2428 = vsel %vm1519, %v2426, %v2427
      %v2429 = vrot.slane %v2289, 5
      %v2430 = vrot.slane %v2429, 4
      %v2431 = vrot.slane %v2290, 5
      %v2432 = vsel %vm1519, %v2430, %v2431
      %v2433 = vrot.slane %v2431, 4
      %v2434 = vrot.slane %v2291, 5
      %v2435 = vsel %vm1519, %v2433, %v2434
      %v2436 = vrot.slane %v2292, 5
      %v2437 = vrot.slane %v2436, 4
      %v2438 = vrot.slane %v2293, 5
      %v2439 = vsel %vm1519, %v2437, %v2438
      %v2440 = vrot.slane %v2438, 4
      %v2441 = vrot.slane %v2294, 5
      %v2442 = vsel %vm1519, %v2440, %v2441
      %v2443 = vrot.slane %v2295, 5
      %v2444 = vrot.slane %v2443, 4
      %v2445 = vrot.slane %v2296, 5
      %v2446 = vsel %vm1519, %v2444, %v2445
      %v2447 = vrot.slane %v2445, 4
      %v2448 = vrot.slane %v2297, 5
      %v2449 = vsel %vm1519, %v2447, %v2448
      %v2450 = vrot.slane %v2298, 5
      %v2451 = vrot.slane %v2450, 4
      %v2452 = vrot.slane %v2299, 5
      %v2453 = vsel %vm1519, %v2451, %v2452
      %v2454 = vrot.slane %v2452, 4
      %v2455 = vrot.slane %v2300, 5
      %v2456 = vsel %vm1519, %v2454, %v2455
      %v2457 = vrot.slane %v2301, 5
      %v2458 = vrot.slane %v2457, 4
      %v2459 = vrot.slane %v2302, 5
      %v2460 = vsel %vm1519, %v2458, %v2459
      %v2461 = vrot.slane %v2459, 4
      %v2462 = vrot.slane %v2303, 5
      %v2463 = vsel %vm1519, %v2461, %v2462
      %2496 = vst [vmem:[#allocation3 + $0x14] sm:$0xf] %v2355
      %2497 = vst [vmem:[#allocation3 + $0x38] sm:$0xf] %v2358
      %2498 = vst [vmem:[#allocation3 + $0x5c] sm:$0xf] %v2362
      %2499 = vst [vmem:[#allocation3 + $0x80] sm:$0xf] %v2365
      %2500 = vst [vmem:[#allocation3 + $0xa4] sm:$0xf] %v2369
      %2501 = vst [vmem:[#allocation3 + $0xc8] sm:$0xf] %v2372
      %2502 = vst [vmem:[#allocation3 + $0xec] sm:$0xf] %v2376
      %2503 = vst [vmem:[#allocation3 + $0x110] sm:$0xf] %v2379
      %2504 = vst [vmem:[#allocation3 + $0x134] sm:$0xf] %v2383
      %2505 = vst [vmem:[#allocation3 + $0x158] sm:$0xf] %v2386
      %2506 = vst [vmem:[#allocation3 + $0x17c] sm:$0xf] %v2390
      %2507 = vst [vmem:[#allocation3 + $0x1a0] sm:$0xf] %v2393
      %2508 = vst [vmem:[#allocation3 + $0x1c4] sm:$0xf] %v2397
      %2509 = vst [vmem:[#allocation3 + $0x1e8] sm:$0xf] %v2400
      %2510 = vst [vmem:[#allocation3 + $0x20c] sm:$0xf] %v2404
      %2511 = vst [vmem:[#allocation3 + $0x230] sm:$0xf] %v2407
      %2512 = vst [vmem:[#allocation3 + $0x254] sm:$0xf] %v2411
      %2513 = vst [vmem:[#allocation3 + $0x278] sm:$0xf] %v2414
      %2514 = vst [vmem:[#allocation3 + $0x29c] sm:$0xf] %v2418
      %2515 = vst [vmem:[#allocation3 + $0x2c0] sm:$0xf] %v2421
      %2516 = vst [vmem:[#allocation3 + $0x2e4] sm:$0xf] %v2425
      %2517 = vst [vmem:[#allocation3 + $0x308] sm:$0xf] %v2428
      %2518 = vst [vmem:[#allocation3 + $0x32c] sm:$0xf] %v2432
      %2519 = vst [vmem:[#allocation3 + $0x350] sm:$0xf] %v2435
      %2520 = vst [vmem:[#allocation3 + $0x374] sm:$0xf] %v2439
      %2521 = vst [vmem:[#allocation3 + $0x398] sm:$0xf] %v2442
      %2522 = vst [vmem:[#allocation3 + $0x3bc] sm:$0xf] %v2446
      %2523 = vst [vmem:[#allocation3 + $0x3e0] sm:$0xf] %v2449
      %2524 = vst [vmem:[#allocation3 + $0x404] sm:$0xf] %v2453
      %2525 = vst [vmem:[#allocation3 + $0x428] sm:$0xf] %v2456
      %2526 = vst [vmem:[#allocation3 + $0x44c] sm:$0xf] %v2460
      %2527 = vst [vmem:[#allocation3 + $0x470] sm:$0xf] %v2463
      %s2528 = scalar_lea.vmem [#allocation2], 24
      %v2529 = vld [vmem:[%s2528] sm:$0xf]
      %v2530 = vld [vmem:[%s2528 + $0x4] sm:$0xf]
      %v2531 = vld [vmem:[%s2528 + $0xc] sm:$0xf]
      %v2532 = vld [vmem:[%s2528 + $0x10] sm:$0xf]
      %v2533 = vld [vmem:[%s2528 + $0x18] sm:$0xf]
      %v2534 = vld [vmem:[%s2528 + $0x1c] sm:$0xf]
      %v2535 = vld [vmem:[%s2528 + $0x24] sm:$0xf]
      %v2536 = vld [vmem:[%s2528 + $0x28] sm:$0xf]
      %v2537 = vld [vmem:[%s2528 + $0x30] sm:$0xf]
      %v2538 = vld [vmem:[%s2528 + $0x34] sm:$0xf]
      %v2539 = vld [vmem:[%s2528 + $0x3c] sm:$0xf]
      %v2540 = vld [vmem:[%s2528 + $0x40] sm:$0xf]
      %v2541 = vld [vmem:[%s2528 + $0x48] sm:$0xf]
      %v2542 = vld [vmem:[%s2528 + $0x4c] sm:$0xf]
      %v2543 = vld [vmem:[%s2528 + $0x54] sm:$0xf]
      %v2544 = vld [vmem:[%s2528 + $0x58] sm:$0xf]
      %v2545 = vld [vmem:[%s2528 + $0x60] sm:$0xf]
      %v2546 = vld [vmem:[%s2528 + $0x64] sm:$0xf]
      %v2547 = vld [vmem:[%s2528 + $0x6c] sm:$0xf]
      %v2548 = vld [vmem:[%s2528 + $0x70] sm:$0xf]
      %v2549 = vld [vmem:[%s2528 + $0x78] sm:$0xf]
      %v2550 = vld [vmem:[%s2528 + $0x7c] sm:$0xf]
      %v2551 = vld [vmem:[%s2528 + $0x84] sm:$0xf]
      %v2552 = vld [vmem:[%s2528 + $0x88] sm:$0xf]
      %v2553 = vld [vmem:[%s2528 + $0x90] sm:$0xf]
      %v2554 = vld [vmem:[%s2528 + $0x94] sm:$0xf]
      %v2555 = vld [vmem:[%s2528 + $0x9c] sm:$0xf]
      %v2556 = vld [vmem:[%s2528 + $0xa0] sm:$0xf]
      %v2557 = vld [vmem:[%s2528 + $0xa8] sm:$0xf]
      %v2558 = vld [vmem:[%s2528 + $0xac] sm:$0xf]
      %v2559 = vld [vmem:[%s2528 + $0xb4] sm:$0xf]
      %v2560 = vld [vmem:[%s2528 + $0xb8] sm:$0xf]
      %2561 = vst [vmem:[#allocation3 + $0x18] sm:$0xf] %v2529
      %2562 = vst [vmem:[#allocation3 + $0x3c] sm:$0xf] %v2530
      %2563 = vst [vmem:[#allocation3 + $0x60] sm:$0xf] %v2531
      %2564 = vst [vmem:[#allocation3 + $0x84] sm:$0xf] %v2532
      %2565 = vst [vmem:[#allocation3 + $0xa8] sm:$0xf] %v2533
      %2566 = vst [vmem:[#allocation3 + $0xcc] sm:$0xf] %v2534
      %2567 = vst [vmem:[#allocation3 + $0xf0] sm:$0xf] %v2535
      %2568 = vst [vmem:[#allocation3 + $0x114] sm:$0xf] %v2536
      %2569 = vst [vmem:[#allocation3 + $0x138] sm:$0xf] %v2537
      %2570 = vst [vmem:[#allocation3 + $0x15c] sm:$0xf] %v2538
      %2571 = vst [vmem:[#allocation3 + $0x180] sm:$0xf] %v2539
      %2572 = vst [vmem:[#allocation3 + $0x1a4] sm:$0xf] %v2540
      %2573 = vst [vmem:[#allocation3 + $0x1c8] sm:$0xf] %v2541
      %2574 = vst [vmem:[#allocation3 + $0x1ec] sm:$0xf] %v2542
      %2575 = vst [vmem:[#allocation3 + $0x210] sm:$0xf] %v2543
      %2576 = vst [vmem:[#allocation3 + $0x234] sm:$0xf] %v2544
      %2577 = vst [vmem:[#allocation3 + $0x258] sm:$0xf] %v2545
      %2578 = vst [vmem:[#allocation3 + $0x27c] sm:$0xf] %v2546
      %2579 = vst [vmem:[#allocation3 + $0x2a0] sm:$0xf] %v2547
      %2580 = vst [vmem:[#allocation3 + $0x2c4] sm:$0xf] %v2548
      %2581 = vst [vmem:[#allocation3 + $0x2e8] sm:$0xf] %v2549
      %2582 = vst [vmem:[#allocation3 + $0x30c] sm:$0xf] %v2550
      %2583 = vst [vmem:[#allocation3 + $0x330] sm:$0xf] %v2551
      %2584 = vst [vmem:[#allocation3 + $0x354] sm:$0xf] %v2552
      %2585 = vst [vmem:[#allocation3 + $0x378] sm:$0xf] %v2553
      %2586 = vst [vmem:[#allocation3 + $0x39c] sm:$0xf] %v2554
      %2587 = vst [vmem:[#allocation3 + $0x3c0] sm:$0xf] %v2555
      %2588 = vst [vmem:[#allocation3 + $0x3e4] sm:$0xf] %v2556
      %2589 = vst [vmem:[#allocation3 + $0x408] sm:$0xf] %v2557
      %2590 = vst [vmem:[#allocation3 + $0x42c] sm:$0xf] %v2558
      %2591 = vst [vmem:[#allocation3 + $0x450] sm:$0xf] %v2559
      %2592 = vst [vmem:[#allocation3 + $0x474] sm:$0xf] %v2560
      %v2593 = vld [vmem:[%s2528] sm:$0xf]
      %v2594 = vld [vmem:[%s2528 + $0x4] sm:$0xf]
      %v2595 = vld [vmem:[%s2528 + $0x8] sm:$0x1]
      %v2596 = vld [vmem:[%s2528 + $0xc] sm:$0xf]
      %v2597 = vld [vmem:[%s2528 + $0x10] sm:$0xf]
      %v2598 = vld [vmem:[%s2528 + $0x14] sm:$0x1]
      %v2599 = vld [vmem:[%s2528 + $0x18] sm:$0xf]
      %v2600 = vld [vmem:[%s2528 + $0x1c] sm:$0xf]
      %v2601 = vld [vmem:[%s2528 + $0x20] sm:$0x1]
      %v2602 = vld [vmem:[%s2528 + $0x24] sm:$0xf]
      %v2603 = vld [vmem:[%s2528 + $0x28] sm:$0xf]
      %v2604 = vld [vmem:[%s2528 + $0x2c] sm:$0x1]
      %v2605 = vld [vmem:[%s2528 + $0x30] sm:$0xf]
      %v2606 = vld [vmem:[%s2528 + $0x34] sm:$0xf]
      %v2607 = vld [vmem:[%s2528 + $0x38] sm:$0x1]
      %v2608 = vld [vmem:[%s2528 + $0x3c] sm:$0xf]
      %v2609 = vld [vmem:[%s2528 + $0x40] sm:$0xf]
      %v2610 = vld [vmem:[%s2528 + $0x44] sm:$0x1]
      %v2611 = vld [vmem:[%s2528 + $0x48] sm:$0xf]
      %v2612 = vld [vmem:[%s2528 + $0x4c] sm:$0xf]
      %v2613 = vld [vmem:[%s2528 + $0x50] sm:$0x1]
      %v2614 = vld [vmem:[%s2528 + $0x54] sm:$0xf]
      %v2615 = vld [vmem:[%s2528 + $0x58] sm:$0xf]
      %v2616 = vld [vmem:[%s2528 + $0x5c] sm:$0x1]
      %v2617 = vld [vmem:[%s2528 + $0x60] sm:$0xf]
      %v2618 = vld [vmem:[%s2528 + $0x64] sm:$0xf]
      %v2619 = vld [vmem:[%s2528 + $0x68] sm:$0x1]
      %v2620 = vld [vmem:[%s2528 + $0x6c] sm:$0xf]
      %v2621 = vld [vmem:[%s2528 + $0x70] sm:$0xf]
      %v2622 = vld [vmem:[%s2528 + $0x74] sm:$0x1]
      %v2623 = vld [vmem:[%s2528 + $0x78] sm:$0xf]
      %v2624 = vld [vmem:[%s2528 + $0x7c] sm:$0xf]
      %v2625 = vld [vmem:[%s2528 + $0x80] sm:$0x1]
      %v2626 = vld [vmem:[%s2528 + $0x84] sm:$0xf]
      %v2627 = vld [vmem:[%s2528 + $0x88] sm:$0xf]
      %v2628 = vld [vmem:[%s2528 + $0x8c] sm:$0x1]
      %v2629 = vld [vmem:[%s2528 + $0x90] sm:$0xf]
      %v2630 = vld [vmem:[%s2528 + $0x94] sm:$0xf]
      %v2631 = vld [vmem:[%s2528 + $0x98] sm:$0x1]
      %v2632 = vld [vmem:[%s2528 + $0x9c] sm:$0xf]
      %v2633 = vld [vmem:[%s2528 + $0xa0] sm:$0xf]
      %v2634 = vld [vmem:[%s2528 + $0xa4] sm:$0x1]
      %v2635 = vld [vmem:[%s2528 + $0xa8] sm:$0xf]
      %v2636 = vld [vmem:[%s2528 + $0xac] sm:$0xf]
      %v2637 = vld [vmem:[%s2528 + $0xb0] sm:$0x1]
      %v2638 = vld [vmem:[%s2528 + $0xb4] sm:$0xf]
      %v2639 = vld [vmem:[%s2528 + $0xb8] sm:$0xf]
      %v2640 = vld [vmem:[%s2528 + $0xbc] sm:$0x1]
      %v2642 = vshrl.u32 %v2593, 16
      %v2644 = vrot.slane %v2642, 4
      %v2645 = vshll.u32 %v2593, 16
      %v2647 = vrot.slane %v2645, 5
      %v2648 = vor.u32 %v2644, %v2647
      %v2649 = vrot.slane %v2648, 4
      %v2651 = vshll.u32 %v2594, 16
      %v2653 = vrot.slane %v2651, 5
      %v2654 = vsel %vm972, %v2649, %v2653
      %v2655 = vshrl.u32 %v2594, 16
      %v2657 = vrot.slane %v2655, 4
      %v2658 = vor.u32 %v2657, %v2653
      %v2659 = vrot.slane %v2658, 4
      %v2661 = vshll.u32 %v2595, 16
      %v2663 = vrot.slane %v2661, 5
      %v2664 = vsel %vm972, %v2659, %v2663
      %v2666 = vshrl.u32 %v2596, 16
      %v2668 = vrot.slane %v2666, 4
      %v2669 = vshll.u32 %v2596, 16
      %v2671 = vrot.slane %v2669, 5
      %v2672 = vor.u32 %v2668, %v2671
      %v2673 = vrot.slane %v2672, 4
      %v2675 = vshll.u32 %v2597, 16
      %v2677 = vrot.slane %v2675, 5
      %v2678 = vsel %vm972, %v2673, %v2677
      %v2679 = vshrl.u32 %v2597, 16
      %v2681 = vrot.slane %v2679, 4
      %v2682 = vor.u32 %v2681, %v2677
      %v2683 = vrot.slane %v2682, 4
      %v2685 = vshll.u32 %v2598, 16
      %v2687 = vrot.slane %v2685, 5
      %v2688 = vsel %vm972, %v2683, %v2687
      %v2690 = vshrl.u32 %v2599, 16
      %v2692 = vrot.slane %v2690, 4
      %v2693 = vshll.u32 %v2599, 16
      %v2695 = vrot.slane %v2693, 5
      %v2696 = vor.u32 %v2692, %v2695
      %v2697 = vrot.slane %v2696, 4
      %v2699 = vshll.u32 %v2600, 16
      %v2701 = vrot.slane %v2699, 5
      %v2702 = vsel %vm972, %v2697, %v2701
      %v2703 = vshrl.u32 %v2600, 16
      %v2705 = vrot.slane %v2703, 4
      %v2706 = vor.u32 %v2705, %v2701
      %v2707 = vrot.slane %v2706, 4
      %v2709 = vshll.u32 %v2601, 16
      %v2711 = vrot.slane %v2709, 5
      %v2712 = vsel %vm972, %v2707, %v2711
      %v2714 = vshrl.u32 %v2602, 16
      %v2716 = vrot.slane %v2714, 4
      %v2717 = vshll.u32 %v2602, 16
      %v2719 = vrot.slane %v2717, 5
      %v2720 = vor.u32 %v2716, %v2719
      %v2721 = vrot.slane %v2720, 4
      %v2723 = vshll.u32 %v2603, 16
      %v2725 = vrot.slane %v2723, 5
      %v2726 = vsel %vm972, %v2721, %v2725
      %v2727 = vshrl.u32 %v2603, 16
      %v2729 = vrot.slane %v2727, 4
      %v2730 = vor.u32 %v2729, %v2725
      %v2731 = vrot.slane %v2730, 4
      %v2733 = vshll.u32 %v2604, 16
      %v2735 = vrot.slane %v2733, 5
      %v2736 = vsel %vm972, %v2731, %v2735
      %v2738 = vshrl.u32 %v2605, 16
      %v2740 = vrot.slane %v2738, 4
      %v2741 = vshll.u32 %v2605, 16
      %v2743 = vrot.slane %v2741, 5
      %v2744 = vor.u32 %v2740, %v2743
      %v2745 = vrot.slane %v2744, 4
      %v2747 = vshll.u32 %v2606, 16
      %v2749 = vrot.slane %v2747, 5
      %v2750 = vsel %vm972, %v2745, %v2749
      %v2751 = vshrl.u32 %v2606, 16
      %v2753 = vrot.slane %v2751, 4
      %v2754 = vor.u32 %v2753, %v2749
      %v2755 = vrot.slane %v2754, 4
      %v2757 = vshll.u32 %v2607, 16
      %v2759 = vrot.slane %v2757, 5
      %v2760 = vsel %vm972, %v2755, %v2759
      %v2762 = vshrl.u32 %v2608, 16
      %v2764 = vrot.slane %v2762, 4
      %v2765 = vshll.u32 %v2608, 16
      %v2767 = vrot.slane %v2765, 5
      %v2768 = vor.u32 %v2764, %v2767
      %v2769 = vrot.slane %v2768, 4
      %v2771 = vshll.u32 %v2609, 16
      %v2773 = vrot.slane %v2771, 5
      %v2774 = vsel %vm972, %v2769, %v2773
      %v2775 = vshrl.u32 %v2609, 16
      %v2777 = vrot.slane %v2775, 4
      %v2778 = vor.u32 %v2777, %v2773
      %v2779 = vrot.slane %v2778, 4
      %v2781 = vshll.u32 %v2610, 16
      %v2783 = vrot.slane %v2781, 5
      %v2784 = vsel %vm972, %v2779, %v2783
      %v2786 = vshrl.u32 %v2611, 16
      %v2788 = vrot.slane %v2786, 4
      %v2789 = vshll.u32 %v2611, 16
      %v2791 = vrot.slane %v2789, 5
      %v2792 = vor.u32 %v2788, %v2791
      %v2793 = vrot.slane %v2792, 4
      %v2795 = vshll.u32 %v2612, 16
      %v2797 = vrot.slane %v2795, 5
      %v2798 = vsel %vm972, %v2793, %v2797
      %v2799 = vshrl.u32 %v2612, 16
      %v2801 = vrot.slane %v2799, 4
      %v2802 = vor.u32 %v2801, %v2797
      %v2803 = vrot.slane %v2802, 4
      %v2805 = vshll.u32 %v2613, 16
      %v2807 = vrot.slane %v2805, 5
      %v2808 = vsel %vm972, %v2803, %v2807
      %v2810 = vshrl.u32 %v2614, 16
      %v2812 = vrot.slane %v2810, 4
      %v2813 = vshll.u32 %v2614, 16
      %v2815 = vrot.slane %v2813, 5
      %v2816 = vor.u32 %v2812, %v2815
      %v2817 = vrot.slane %v2816, 4
      %v2819 = vshll.u32 %v2615, 16
      %v2821 = vrot.slane %v2819, 5
      %v2822 = vsel %vm972, %v2817, %v2821
      %v2823 = vshrl.u32 %v2615, 16
      %v2825 = vrot.slane %v2823, 4
      %v2826 = vor.u32 %v2825, %v2821
      %v2827 = vrot.slane %v2826, 4
      %v2829 = vshll.u32 %v2616, 16
      %v2831 = vrot.slane %v2829, 5
      %v2832 = vsel %vm972, %v2827, %v2831
      %v2834 = vshrl.u32 %v2617, 16
      %v2836 = vrot.slane %v2834, 4
      %v2837 = vshll.u32 %v2617, 16
      %v2839 = vrot.slane %v2837, 5
      %v2840 = vor.u32 %v2836, %v2839
      %v2841 = vrot.slane %v2840, 4
      %v2843 = vshll.u32 %v2618, 16
      %v2845 = vrot.slane %v2843, 5
      %v2846 = vsel %vm972, %v2841, %v2845
      %v2847 = vshrl.u32 %v2618, 16
      %v2849 = vrot.slane %v2847, 4
      %v2850 = vor.u32 %v2849, %v2845
      %v2851 = vrot.slane %v2850, 4
      %v2853 = vshll.u32 %v2619, 16
      %v2855 = vrot.slane %v2853, 5
      %v2856 = vsel %vm972, %v2851, %v2855
      %v2858 = vshrl.u32 %v2620, 16
      %v2860 = vrot.slane %v2858, 4
      %v2861 = vshll.u32 %v2620, 16
      %v2863 = vrot.slane %v2861, 5
      %v2864 = vor.u32 %v2860, %v2863
      %v2865 = vrot.slane %v2864, 4
      %v2867 = vshll.u32 %v2621, 16
      %v2869 = vrot.slane %v2867, 5
      %v2870 = vsel %vm972, %v2865, %v2869
      %v2871 = vshrl.u32 %v2621, 16
      %v2873 = vrot.slane %v2871, 4
      %v2874 = vor.u32 %v2873, %v2869
      %v2875 = vrot.slane %v2874, 4
      %v2877 = vshll.u32 %v2622, 16
      %v2879 = vrot.slane %v2877, 5
      %v2880 = vsel %vm972, %v2875, %v2879
      %v2882 = vshrl.u32 %v2623, 16
      %v2884 = vrot.slane %v2882, 4
      %v2885 = vshll.u32 %v2623, 16
      %v2887 = vrot.slane %v2885, 5
      %v2888 = vor.u32 %v2884, %v2887
      %v2889 = vrot.slane %v2888, 4
      %v2891 = vshll.u32 %v2624, 16
      %v2893 = vrot.slane %v2891, 5
      %v2894 = vsel %vm972, %v2889, %v2893
      %v2895 = vshrl.u32 %v2624, 16
      %v2897 = vrot.slane %v2895, 4
      %v2898 = vor.u32 %v2897, %v2893
      %v2899 = vrot.slane %v2898, 4
      %v2901 = vshll.u32 %v2625, 16
      %v2903 = vrot.slane %v2901, 5
      %v2904 = vsel %vm972, %v2899, %v2903
      %v2906 = vshrl.u32 %v2626, 16
      %v2908 = vrot.slane %v2906, 4
      %v2909 = vshll.u32 %v2626, 16
      %v2911 = vrot.slane %v2909, 5
      %v2912 = vor.u32 %v2908, %v2911
      %v2913 = vrot.slane %v2912, 4
      %v2915 = vshll.u32 %v2627, 16
      %v2917 = vrot.slane %v2915, 5
      %v2918 = vsel %vm972, %v2913, %v2917
      %v2919 = vshrl.u32 %v2627, 16
      %v2921 = vrot.slane %v2919, 4
      %v2922 = vor.u32 %v2921, %v2917
      %v2923 = vrot.slane %v2922, 4
      %v2925 = vshll.u32 %v2628, 16
      %v2927 = vrot.slane %v2925, 5
      %v2928 = vsel %vm972, %v2923, %v2927
      %v2930 = vshrl.u32 %v2629, 16
      %v2932 = vrot.slane %v2930, 4
      %v2933 = vshll.u32 %v2629, 16
      %v2935 = vrot.slane %v2933, 5
      %v2936 = vor.u32 %v2932, %v2935
      %v2937 = vrot.slane %v2936, 4
      %v2939 = vshll.u32 %v2630, 16
      %v2941 = vrot.slane %v2939, 5
      %v2942 = vsel %vm972, %v2937, %v2941
      %v2943 = vshrl.u32 %v2630, 16
      %v2945 = vrot.slane %v2943, 4
      %v2946 = vor.u32 %v2945, %v2941
      %v2947 = vrot.slane %v2946, 4
      %v2949 = vshll.u32 %v2631, 16
      %v2951 = vrot.slane %v2949, 5
      %v2952 = vsel %vm972, %v2947, %v2951
      %v2954 = vshrl.u32 %v2632, 16
      %v2956 = vrot.slane %v2954, 4
      %v2957 = vshll.u32 %v2632, 16
      %v2959 = vrot.slane %v2957, 5
      %v2960 = vor.u32 %v2956, %v2959
      %v2961 = vrot.slane %v2960, 4
      %v2963 = vshll.u32 %v2633, 16
      %v2965 = vrot.slane %v2963, 5
      %v2966 = vsel %vm972, %v2961, %v2965
      %v2967 = vshrl.u32 %v2633, 16
      %v2969 = vrot.slane %v2967, 4
      %v2970 = vor.u32 %v2969, %v2965
      %v2971 = vrot.slane %v2970, 4
      %v2973 = vshll.u32 %v2634, 16
      %v2975 = vrot.slane %v2973, 5
      %v2976 = vsel %vm972, %v2971, %v2975
      %v2978 = vshrl.u32 %v2635, 16
      %v2980 = vrot.slane %v2978, 4
      %v2981 = vshll.u32 %v2635, 16
      %v2983 = vrot.slane %v2981, 5
      %v2984 = vor.u32 %v2980, %v2983
      %v2985 = vrot.slane %v2984, 4
      %v2987 = vshll.u32 %v2636, 16
      %v2989 = vrot.slane %v2987, 5
      %v2990 = vsel %vm972, %v2985, %v2989
      %v2991 = vshrl.u32 %v2636, 16
      %v2993 = vrot.slane %v2991, 4
      %v2994 = vor.u32 %v2993, %v2989
      %v2995 = vrot.slane %v2994, 4
      %v2997 = vshll.u32 %v2637, 16
      %v2999 = vrot.slane %v2997, 5
      %v3000 = vsel %vm972, %v2995, %v2999
      %v3002 = vshrl.u32 %v2638, 16
      %v3004 = vrot.slane %v3002, 4
      %v3005 = vshll.u32 %v2638, 16
      %v3007 = vrot.slane %v3005, 5
      %v3008 = vor.u32 %v3004, %v3007
      %v3009 = vrot.slane %v3008, 4
      %v3011 = vshll.u32 %v2639, 16
      %v3013 = vrot.slane %v3011, 5
      %v3014 = vsel %vm972, %v3009, %v3013
      %v3015 = vshrl.u32 %v2639, 16
      %v3017 = vrot.slane %v3015, 4
      %v3018 = vor.u32 %v3017, %v3013
      %v3019 = vrot.slane %v3018, 4
      %v3021 = vshll.u32 %v2640, 16
      %v3023 = vrot.slane %v3021, 5
      %v3024 = vsel %vm972, %v3019, %v3023
      %3057 = vst [vmem:[#allocation3 + $0x1c] sm:$0xf] %v2654
      %3058 = vst [vmem:[#allocation3 + $0x40] sm:$0xf] %v2664
      %3059 = vst [vmem:[#allocation3 + $0x64] sm:$0xf] %v2678
      %3060 = vst [vmem:[#allocation3 + $0x88] sm:$0xf] %v2688
      %3061 = vst [vmem:[#allocation3 + $0xac] sm:$0xf] %v2702
      %3062 = vst [vmem:[#allocation3 + $0xd0] sm:$0xf] %v2712
      %3063 = vst [vmem:[#allocation3 + $0xf4] sm:$0xf] %v2726
      %3064 = vst [vmem:[#allocation3 + $0x118] sm:$0xf] %v2736
      %3065 = vst [vmem:[#allocation3 + $0x13c] sm:$0xf] %v2750
      %3066 = vst [vmem:[#allocation3 + $0x160] sm:$0xf] %v2760
      %3067 = vst [vmem:[#allocation3 + $0x184] sm:$0xf] %v2774
      %3068 = vst [vmem:[#allocation3 + $0x1a8] sm:$0xf] %v2784
      %3069 = vst [vmem:[#allocation3 + $0x1cc] sm:$0xf] %v2798
      %3070 = vst [vmem:[#allocation3 + $0x1f0] sm:$0xf] %v2808
      %3071 = vst [vmem:[#allocation3 + $0x214] sm:$0xf] %v2822
      %3072 = vst [vmem:[#allocation3 + $0x238] sm:$0xf] %v2832
      %3073 = vst [vmem:[#allocation3 + $0x25c] sm:$0xf] %v2846
      %3074 = vst [vmem:[#allocation3 + $0x280] sm:$0xf] %v2856
      %3075 = vst [vmem:[#allocation3 + $0x2a4] sm:$0xf] %v2870
      %3076 = vst [vmem:[#allocation3 + $0x2c8] sm:$0xf] %v2880
      %3077 = vst [vmem:[#allocation3 + $0x2ec] sm:$0xf] %v2894
      %3078 = vst [vmem:[#allocation3 + $0x310] sm:$0xf] %v2904
      %3079 = vst [vmem:[#allocation3 + $0x334] sm:$0xf] %v2918
      %3080 = vst [vmem:[#allocation3 + $0x358] sm:$0xf] %v2928
      %3081 = vst [vmem:[#allocation3 + $0x37c] sm:$0xf] %v2942
      %3082 = vst [vmem:[#allocation3 + $0x3a0] sm:$0xf] %v2952
      %3083 = vst [vmem:[#allocation3 + $0x3c4] sm:$0xf] %v2966
      %3084 = vst [vmem:[#allocation3 + $0x3e8] sm:$0xf] %v2976
      %3085 = vst [vmem:[#allocation3 + $0x40c] sm:$0xf] %v2990
      %3086 = vst [vmem:[#allocation3 + $0x430] sm:$0xf] %v3000
      %3087 = vst [vmem:[#allocation3 + $0x454] sm:$0xf] %v3014
      %3088 = vst [vmem:[#allocation3 + $0x478] sm:$0xf] %v3024
      %v3089 = vld [vmem:[%s2528] sm:$0xe]
      %v3090 = vld [vmem:[%s2528 + $0x4] sm:$0xf]
      %v3091 = vld [vmem:[%s2528 + $0x8] sm:$0x1]
      %v3092 = vld [vmem:[%s2528 + $0xc] sm:$0xe]
      %v3093 = vld [vmem:[%s2528 + $0x10] sm:$0xf]
      %v3094 = vld [vmem:[%s2528 + $0x14] sm:$0x1]
      %v3095 = vld [vmem:[%s2528 + $0x18] sm:$0xe]
      %v3096 = vld [vmem:[%s2528 + $0x1c] sm:$0xf]
      %v3097 = vld [vmem:[%s2528 + $0x20] sm:$0x1]
      %v3098 = vld [vmem:[%s2528 + $0x24] sm:$0xe]
      %v3099 = vld [vmem:[%s2528 + $0x28] sm:$0xf]
      %v3100 = vld [vmem:[%s2528 + $0x2c] sm:$0x1]
      %v3101 = vld [vmem:[%s2528 + $0x30] sm:$0xe]
      %v3102 = vld [vmem:[%s2528 + $0x34] sm:$0xf]
      %v3103 = vld [vmem:[%s2528 + $0x38] sm:$0x1]
      %v3104 = vld [vmem:[%s2528 + $0x3c] sm:$0xe]
      %v3105 = vld [vmem:[%s2528 + $0x40] sm:$0xf]
      %v3106 = vld [vmem:[%s2528 + $0x44] sm:$0x1]
      %v3107 = vld [vmem:[%s2528 + $0x48] sm:$0xe]
      %v3108 = vld [vmem:[%s2528 + $0x4c] sm:$0xf]
      %v3109 = vld [vmem:[%s2528 + $0x50] sm:$0x1]
      %v3110 = vld [vmem:[%s2528 + $0x54] sm:$0xe]
      %v3111 = vld [vmem:[%s2528 + $0x58] sm:$0xf]
      %v3112 = vld [vmem:[%s2528 + $0x5c] sm:$0x1]
      %v3113 = vld [vmem:[%s2528 + $0x60] sm:$0xe]
      %v3114 = vld [vmem:[%s2528 + $0x64] sm:$0xf]
      %v3115 = vld [vmem:[%s2528 + $0x68] sm:$0x1]
      %v3116 = vld [vmem:[%s2528 + $0x6c] sm:$0xe]
      %v3117 = vld [vmem:[%s2528 + $0x70] sm:$0xf]
      %v3118 = vld [vmem:[%s2528 + $0x74] sm:$0x1]
      %v3119 = vld [vmem:[%s2528 + $0x78] sm:$0xe]
      %v3120 = vld [vmem:[%s2528 + $0x7c] sm:$0xf]
      %v3121 = vld [vmem:[%s2528 + $0x80] sm:$0x1]
      %v3122 = vld [vmem:[%s2528 + $0x84] sm:$0xe]
      %v3123 = vld [vmem:[%s2528 + $0x88] sm:$0xf]
      %v3124 = vld [vmem:[%s2528 + $0x8c] sm:$0x1]
      %v3125 = vld [vmem:[%s2528 + $0x90] sm:$0xe]
      %v3126 = vld [vmem:[%s2528 + $0x94] sm:$0xf]
      %v3127 = vld [vmem:[%s2528 + $0x98] sm:$0x1]
      %v3128 = vld [vmem:[%s2528 + $0x9c] sm:$0xe]
      %v3129 = vld [vmem:[%s2528 + $0xa0] sm:$0xf]
      %v3130 = vld [vmem:[%s2528 + $0xa4] sm:$0x1]
      %v3131 = vld [vmem:[%s2528 + $0xa8] sm:$0xe]
      %v3132 = vld [vmem:[%s2528 + $0xac] sm:$0xf]
      %v3133 = vld [vmem:[%s2528 + $0xb0] sm:$0x1]
      %v3134 = vld [vmem:[%s2528 + $0xb4] sm:$0xe]
      %v3135 = vld [vmem:[%s2528 + $0xb8] sm:$0xf]
      %v3136 = vld [vmem:[%s2528 + $0xbc] sm:$0x1]
      %v3185 = vrot.slane %v3089, 5
      %v3186 = vrot.slane %v3185, 4
      %v3187 = vrot.slane %v3090, 5
      %v3188 = vsel %vm1519, %v3186, %v3187
      %v3189 = vrot.slane %v3187, 4
      %v3190 = vrot.slane %v3091, 5
      %v3191 = vsel %vm1519, %v3189, %v3190
      %v3192 = vrot.slane %v3092, 5
      %v3193 = vrot.slane %v3192, 4
      %v3194 = vrot.slane %v3093, 5
      %v3195 = vsel %vm1519, %v3193, %v3194
      %v3196 = vrot.slane %v3194, 4
      %v3197 = vrot.slane %v3094, 5
      %v3198 = vsel %vm1519, %v3196, %v3197
      %v3199 = vrot.slane %v3095, 5
      %v3200 = vrot.slane %v3199, 4
      %v3201 = vrot.slane %v3096, 5
      %v3202 = vsel %vm1519, %v3200, %v3201
      %v3203 = vrot.slane %v3201, 4
      %v3204 = vrot.slane %v3097, 5
      %v3205 = vsel %vm1519, %v3203, %v3204
      %v3206 = vrot.slane %v3098, 5
      %v3207 = vrot.slane %v3206, 4
      %v3208 = vrot.slane %v3099, 5
      %v3209 = vsel %vm1519, %v3207, %v3208
      %v3210 = vrot.slane %v3208, 4
      %v3211 = vrot.slane %v3100, 5
      %v3212 = vsel %vm1519, %v3210, %v3211
      %v3213 = vrot.slane %v3101, 5
      %v3214 = vrot.slane %v3213, 4
      %v3215 = vrot.slane %v3102, 5
      %v3216 = vsel %vm1519, %v3214, %v3215
      %v3217 = vrot.slane %v3215, 4
      %v3218 = vrot.slane %v3103, 5
      %v3219 = vsel %vm1519, %v3217, %v3218
      %v3220 = vrot.slane %v3104, 5
      %v3221 = vrot.slane %v3220, 4
      %v3222 = vrot.slane %v3105, 5
      %v3223 = vsel %vm1519, %v3221, %v3222
      %v3224 = vrot.slane %v3222, 4
      %v3225 = vrot.slane %v3106, 5
      %v3226 = vsel %vm1519, %v3224, %v3225
      %v3227 = vrot.slane %v3107, 5
      %v3228 = vrot.slane %v3227, 4
      %v3229 = vrot.slane %v3108, 5
      %v3230 = vsel %vm1519, %v3228, %v3229
      %v3231 = vrot.slane %v3229, 4
      %v3232 = vrot.slane %v3109, 5
      %v3233 = vsel %vm1519, %v3231, %v3232
      %v3234 = vrot.slane %v3110, 5
      %v3235 = vrot.slane %v3234, 4
      %v3236 = vrot.slane %v3111, 5
      %v3237 = vsel %vm1519, %v3235, %v3236
      %v3238 = vrot.slane %v3236, 4
      %v3239 = vrot.slane %v3112, 5
      %v3240 = vsel %vm1519, %v3238, %v3239
      %v3241 = vrot.slane %v3113, 5
      %v3242 = vrot.slane %v3241, 4
      %v3243 = vrot.slane %v3114, 5
      %v3244 = vsel %vm1519, %v3242, %v3243
      %v3245 = vrot.slane %v3243, 4
      %v3246 = vrot.slane %v3115, 5
      %v3247 = vsel %vm1519, %v3245, %v3246
      %v3248 = vrot.slane %v3116, 5
      %v3249 = vrot.slane %v3248, 4
      %v3250 = vrot.slane %v3117, 5
      %v3251 = vsel %vm1519, %v3249, %v3250
      %v3252 = vrot.slane %v3250, 4
      %v3253 = vrot.slane %v3118, 5
      %v3254 = vsel %vm1519, %v3252, %v3253
      %v3255 = vrot.slane %v3119, 5
      %v3256 = vrot.slane %v3255, 4
      %v3257 = vrot.slane %v3120, 5
      %v3258 = vsel %vm1519, %v3256, %v3257
      %v3259 = vrot.slane %v3257, 4
      %v3260 = vrot.slane %v3121, 5
      %v3261 = vsel %vm1519, %v3259, %v3260
      %v3262 = vrot.slane %v3122, 5
      %v3263 = vrot.slane %v3262, 4
      %v3264 = vrot.slane %v3123, 5
      %v3265 = vsel %vm1519, %v3263, %v3264
      %v3266 = vrot.slane %v3264, 4
      %v3267 = vrot.slane %v3124, 5
      %v3268 = vsel %vm1519, %v3266, %v3267
      %v3269 = vrot.slane %v3125, 5
      %v3270 = vrot.slane %v3269, 4
      %v3271 = vrot.slane %v3126, 5
      %v3272 = vsel %vm1519, %v3270, %v3271
      %v3273 = vrot.slane %v3271, 4
      %v3274 = vrot.slane %v3127, 5
      %v3275 = vsel %vm1519, %v3273, %v3274
      %v3276 = vrot.slane %v3128, 5
      %v3277 = vrot.slane %v3276, 4
      %v3278 = vrot.slane %v3129, 5
      %v3279 = vsel %vm1519, %v3277, %v3278
      %v3280 = vrot.slane %v3278, 4
      %v3281 = vrot.slane %v3130, 5
      %v3282 = vsel %vm1519, %v3280, %v3281
      %v3283 = vrot.slane %v3131, 5
      %v3284 = vrot.slane %v3283, 4
      %v3285 = vrot.slane %v3132, 5
      %v3286 = vsel %vm1519, %v3284, %v3285
      %v3287 = vrot.slane %v3285, 4
      %v3288 = vrot.slane %v3133, 5
      %v3289 = vsel %vm1519, %v3287, %v3288
      %v3290 = vrot.slane %v3134, 5
      %v3291 = vrot.slane %v3290, 4
      %v3292 = vrot.slane %v3135, 5
      %v3293 = vsel %vm1519, %v3291, %v3292
      %v3294 = vrot.slane %v3292, 4
      %v3295 = vrot.slane %v3136, 5
      %v3296 = vsel %vm1519, %v3294, %v3295
      %3329 = vst [vmem:[#allocation3 + $0x20] sm:$0xf] %v3188
      %3330 = vst [vmem:[#allocation3 + $0x44] sm:$0xf] %v3191
      %3331 = vst [vmem:[#allocation3 + $0x68] sm:$0xf] %v3195
      %3332 = vst [vmem:[#allocation3 + $0x8c] sm:$0xf] %v3198
      %3333 = vst [vmem:[#allocation3 + $0xb0] sm:$0xf] %v3202
      %3334 = vst [vmem:[#allocation3 + $0xd4] sm:$0xf] %v3205
      %3335 = vst [vmem:[#allocation3 + $0xf8] sm:$0xf] %v3209
      %3336 = vst [vmem:[#allocation3 + $0x11c] sm:$0xf] %v3212
      %3337 = vst [vmem:[#allocation3 + $0x140] sm:$0xf] %v3216
      %3338 = vst [vmem:[#allocation3 + $0x164] sm:$0xf] %v3219
      %3339 = vst [vmem:[#allocation3 + $0x188] sm:$0xf] %v3223
      %3340 = vst [vmem:[#allocation3 + $0x1ac] sm:$0xf] %v3226
      %3341 = vst [vmem:[#allocation3 + $0x1d0] sm:$0xf] %v3230
      %3342 = vst [vmem:[#allocation3 + $0x1f4] sm:$0xf] %v3233
      %3343 = vst [vmem:[#allocation3 + $0x218] sm:$0xf] %v3237
      %3344 = vst [vmem:[#allocation3 + $0x23c] sm:$0xf] %v3240
      %3345 = vst [vmem:[#allocation3 + $0x260] sm:$0xf] %v3244
      %3346 = vst [vmem:[#allocation3 + $0x284] sm:$0xf] %v3247
      %3347 = vst [vmem:[#allocation3 + $0x2a8] sm:$0xf] %v3251
      %3348 = vst [vmem:[#allocation3 + $0x2cc] sm:$0xf] %v3254
      %3349 = vst [vmem:[#allocation3 + $0x2f0] sm:$0xf] %v3258
      %3350 = vst [vmem:[#allocation3 + $0x314] sm:$0xf] %v3261
      %3351 = vst [vmem:[#allocation3 + $0x338] sm:$0xf] %v3265
      %3352 = vst [vmem:[#allocation3 + $0x35c] sm:$0xf] %v3268
      %3353 = vst [vmem:[#allocation3 + $0x380] sm:$0xf] %v3272
      %3354 = vst [vmem:[#allocation3 + $0x3a4] sm:$0xf] %v3275
      %3355 = vst [vmem:[#allocation3 + $0x3c8] sm:$0xf] %v3279
      %3356 = vst [vmem:[#allocation3 + $0x3ec] sm:$0xf] %v3282
      %3357 = vst [vmem:[#allocation3 + $0x410] sm:$0xf] %v3286
      %3358 = vst [vmem:[#allocation3 + $0x434] sm:$0xf] %v3289
      %3359 = vst [vmem:[#allocation3 + $0x458] sm:$0xf] %v3293
      %3360 = vst [vmem:[#allocation3 + $0x47c] sm:$0xf] %v3296
      %v3361 = vld [vmem:[#allocation3] sm:$0xff]
      %v3362 = vld [vmem:[#allocation3 + $0x8] sm:$0xff]
      %v3363 = vld [vmem:[#allocation3 + $0x10] sm:$0xff]
      %v3364 = vld [vmem:[#allocation3 + $0x18] sm:$0xff]
      %v3365 = vld [vmem:[#allocation3 + $0x20] sm:$0xf]
      %v3366 = vld [vmem:[#allocation3 + $0x24] sm:$0xff]
      %v3367 = vld [vmem:[#allocation3 + $0x2c] sm:$0xff]
      %v3368 = vld [vmem:[#allocation3 + $0x34] sm:$0xff]
      %v3369 = vld [vmem:[#allocation3 + $0x3c] sm:$0xff]
      %v3370 = vld [vmem:[#allocation3 + $0x44] sm:$0xf]
      %v3371 = vld [vmem:[#allocation3 + $0x48] sm:$0xff]
      %v3372 = vld [vmem:[#allocation3 + $0x50] sm:$0xff]
      %v3373 = vld [vmem:[#allocation3 + $0x58] sm:$0xff]
      %v3374 = vld [vmem:[#allocation3 + $0x60] sm:$0xff]
      %v3375 = vld [vmem:[#allocation3 + $0x68] sm:$0xf]
      %v3376 = vld [vmem:[#allocation3 + $0x6c] sm:$0xff]
      %v3377 = vld [vmem:[#allocation3 + $0x74] sm:$0xff]
      %v3378 = vld [vmem:[#allocation3 + $0x7c] sm:$0xff]
      %v3379 = vld [vmem:[#allocation3 + $0x84] sm:$0xff]
      %v3380 = vld [vmem:[#allocation3 + $0x8c] sm:$0xf]
      %v3381 = vld [vmem:[#allocation3 + $0x90] sm:$0xff]
      %v3382 = vld [vmem:[#allocation3 + $0x98] sm:$0xff]
      %v3383 = vld [vmem:[#allocation3 + $0xa0] sm:$0xff]
      %v3384 = vld [vmem:[#allocation3 + $0xa8] sm:$0xff]
      %v3385 = vld [vmem:[#allocation3 + $0xb0] sm:$0xf]
      %v3386 = vld [vmem:[#allocation3 + $0xb4] sm:$0xff]
      %v3387 = vld [vmem:[#allocation3 + $0xbc] sm:$0xff]
      %v3388 = vld [vmem:[#allocation3 + $0xc4] sm:$0xff]
      %v3389 = vld [vmem:[#allocation3 + $0xcc] sm:$0xff]
      %v3390 = vld [vmem:[#allocation3 + $0xd4] sm:$0xf]
      %v3391 = vld [vmem:[#allocation3 + $0xd8] sm:$0xff]
      %v3392 = vld [vmem:[#allocation3 + $0xe0] sm:$0xff]
      %v3393 = vld [vmem:[#allocation3 + $0xe8] sm:$0xff]
      %v3394 = vld [vmem:[#allocation3 + $0xf0] sm:$0xff]
      %v3395 = vld [vmem:[#allocation3 + $0xf8] sm:$0xf]
      %v3396 = vld [vmem:[#allocation3 + $0xfc] sm:$0xff]
      %v3397 = vld [vmem:[#allocation3 + $0x104] sm:$0xff]
      %v3398 = vld [vmem:[#allocation3 + $0x10c] sm:$0xff]
      %v3399 = vld [vmem:[#allocation3 + $0x114] sm:$0xff]
      %v3400 = vld [vmem:[#allocation3 + $0x11c] sm:$0xf]
      %v3401 = vld [vmem:[#allocation3 + $0x120] sm:$0xff]
      %v3402 = vld [vmem:[#allocation3 + $0x128] sm:$0xff]
      %v3403 = vld [vmem:[#allocation3 + $0x130] sm:$0xff]
      %v3404 = vld [vmem:[#allocation3 + $0x138] sm:$0xff]
      %v3405 = vld [vmem:[#allocation3 + $0x140] sm:$0xf]
      %v3406 = vld [vmem:[#allocation3 + $0x144] sm:$0xff]
      %v3407 = vld [vmem:[#allocation3 + $0x14c] sm:$0xff]
      %v3408 = vld [vmem:[#allocation3 + $0x154] sm:$0xff]
      %v3409 = vld [vmem:[#allocation3 + $0x15c] sm:$0xff]
      %v3410 = vld [vmem:[#allocation3 + $0x164] sm:$0xf]
      %v3411 = vld [vmem:[#allocation3 + $0x168] sm:$0xff]
      %v3412 = vld [vmem:[#allocation3 + $0x170] sm:$0xff]
      %v3413 = vld [vmem:[#allocation3 + $0x178] sm:$0xff]
      %v3414 = vld [vmem:[#allocation3 + $0x180] sm:$0xff]
      %v3415 = vld [vmem:[#allocation3 + $0x188] sm:$0xf]
      %v3416 = vld [vmem:[#allocation3 + $0x18c] sm:$0xff]
      %v3417 = vld [vmem:[#allocation3 + $0x194] sm:$0xff]
      %v3418 = vld [vmem:[#allocation3 + $0x19c] sm:$0xff]
      %v3419 = vld [vmem:[#allocation3 + $0x1a4] sm:$0xff]
      %v3420 = vld [vmem:[#allocation3 + $0x1ac] sm:$0xf]
      %v3421 = vld [vmem:[#allocation3 + $0x1b0] sm:$0xff]
      %v3422 = vld [vmem:[#allocation3 + $0x1b8] sm:$0xff]
      %v3423 = vld [vmem:[#allocation3 + $0x1c0] sm:$0xff]
      %v3424 = vld [vmem:[#allocation3 + $0x1c8] sm:$0xff]
      %v3425 = vld [vmem:[#allocation3 + $0x1d0] sm:$0xf]
      %v3426 = vld [vmem:[#allocation3 + $0x1d4] sm:$0xff]
      %v3427 = vld [vmem:[#allocation3 + $0x1dc] sm:$0xff]
      %v3428 = vld [vmem:[#allocation3 + $0x1e4] sm:$0xff]
      %v3429 = vld [vmem:[#allocation3 + $0x1ec] sm:$0xff]
      %v3430 = vld [vmem:[#allocation3 + $0x1f4] sm:$0xf]
      %v3431 = vld [vmem:[#allocation3 + $0x1f8] sm:$0xff]
      %v3432 = vld [vmem:[#allocation3 + $0x200] sm:$0xff]
      %v3433 = vld [vmem:[#allocation3 + $0x208] sm:$0xff]
      %v3434 = vld [vmem:[#allocation3 + $0x210] sm:$0xff]
      %v3435 = vld [vmem:[#allocation3 + $0x218] sm:$0xf]
      %v3436 = vld [vmem:[#allocation3 + $0x21c] sm:$0xff]
      %v3437 = vld [vmem:[#allocation3 + $0x224] sm:$0xff]
      %v3438 = vld [vmem:[#allocation3 + $0x22c] sm:$0xff]
      %v3439 = vld [vmem:[#allocation3 + $0x234] sm:$0xff]
      %v3440 = vld [vmem:[#allocation3 + $0x23c] sm:$0xf]
      %v3441 = vld [vmem:[#allocation3 + $0x240] sm:$0xff]
      %v3442 = vld [vmem:[#allocation3 + $0x248] sm:$0xff]
      %v3443 = vld [vmem:[#allocation3 + $0x250] sm:$0xff]
      %v3444 = vld [vmem:[#allocation3 + $0x258] sm:$0xff]
      %v3445 = vld [vmem:[#allocation3 + $0x260] sm:$0xf]
      %v3446 = vld [vmem:[#allocation3 + $0x264] sm:$0xff]
      %v3447 = vld [vmem:[#allocation3 + $0x26c] sm:$0xff]
      %v3448 = vld [vmem:[#allocation3 + $0x274] sm:$0xff]
      %v3449 = vld [vmem:[#allocation3 + $0x27c] sm:$0xff]
      %v3450 = vld [vmem:[#allocation3 + $0x284] sm:$0xf]
      %v3451 = vld [vmem:[#allocation3 + $0x288] sm:$0xff]
      %v3452 = vld [vmem:[#allocation3 + $0x290] sm:$0xff]
      %v3453 = vld [vmem:[#allocation3 + $0x298] sm:$0xff]
      %v3454 = vld [vmem:[#allocation3 + $0x2a0] sm:$0xff]
      %v3455 = vld [vmem:[#allocation3 + $0x2a8] sm:$0xf]
      %v3456 = vld [vmem:[#allocation3 + $0x2ac] sm:$0xff]
      %v3457 = vld [vmem:[#allocation3 + $0x2b4] sm:$0xff]
      %v3458 = vld [vmem:[#allocation3 + $0x2bc] sm:$0xff]
      %v3459 = vld [vmem:[#allocation3 + $0x2c4] sm:$0xff]
      %v3460 = vld [vmem:[#allocation3 + $0x2cc] sm:$0xf]
      %v3461 = vld [vmem:[#allocation3 + $0x2d0] sm:$0xff]
      %v3462 = vld [vmem:[#allocation3 + $0x2d8] sm:$0xff]
      %v3463 = vld [vmem:[#allocation3 + $0x2e0] sm:$0xff]
      %v3464 = vld [vmem:[#allocation3 + $0x2e8] sm:$0xff]
      %v3465 = vld [vmem:[#allocation3 + $0x2f0] sm:$0xf]
      %v3466 = vld [vmem:[#allocation3 + $0x2f4] sm:$0xff]
      %v3467 = vld [vmem:[#allocation3 + $0x2fc] sm:$0xff]
      %v3468 = vld [vmem:[#allocation3 + $0x304] sm:$0xff]
      %v3469 = vld [vmem:[#allocation3 + $0x30c] sm:$0xff]
      %v3470 = vld [vmem:[#allocation3 + $0x314] sm:$0xf]
      %v3471 = vld [vmem:[#allocation3 + $0x318] sm:$0xff]
      %v3472 = vld [vmem:[#allocation3 + $0x320] sm:$0xff]
      %v3473 = vld [vmem:[#allocation3 + $0x328] sm:$0xff]
      %v3474 = vld [vmem:[#allocation3 + $0x330] sm:$0xff]
      %v3475 = vld [vmem:[#allocation3 + $0x338] sm:$0xf]
      %v3476 = vld [vmem:[#allocation3 + $0x33c] sm:$0xff]
      %v3477 = vld [vmem:[#allocation3 + $0x344] sm:$0xff]
      %v3478 = vld [vmem:[#allocation3 + $0x34c] sm:$0xff]
      %v3479 = vld [vmem:[#allocation3 + $0x354] sm:$0xff]
      %v3480 = vld [vmem:[#allocation3 + $0x35c] sm:$0xf]
      %v3481 = vld [vmem:[#allocation3 + $0x360] sm:$0xff]
      %v3482 = vld [vmem:[#allocation3 + $0x368] sm:$0xff]
      %v3483 = vld [vmem:[#allocation3 + $0x370] sm:$0xff]
      %v3484 = vld [vmem:[#allocation3 + $0x378] sm:$0xff]
      %v3485 = vld [vmem:[#allocation3 + $0x380] sm:$0xf]
      %v3486 = vld [vmem:[#allocation3 + $0x384] sm:$0xff]
      %v3487 = vld [vmem:[#allocation3 + $0x38c] sm:$0xff]
      %v3488 = vld [vmem:[#allocation3 + $0x394] sm:$0xff]
      %v3489 = vld [vmem:[#allocation3 + $0x39c] sm:$0xff]
      %v3490 = vld [vmem:[#allocation3 + $0x3a4] sm:$0xf]
      %v3491 = vld [vmem:[#allocation3 + $0x3a8] sm:$0xff]
      %v3492 = vld [vmem:[#allocation3 + $0x3b0] sm:$0xff]
      %v3493 = vld [vmem:[#allocation3 + $0x3b8] sm:$0xff]
      %v3494 = vld [vmem:[#allocation3 + $0x3c0] sm:$0xff]
      %v3495 = vld [vmem:[#allocation3 + $0x3c8] sm:$0xf]
      %v3496 = vld [vmem:[#allocation3 + $0x3cc] sm:$0xff]
      %v3497 = vld [vmem:[#allocation3 + $0x3d4] sm:$0xff]
      %v3498 = vld [vmem:[#allocation3 + $0x3dc] sm:$0xff]
      %v3499 = vld [vmem:[#allocation3 + $0x3e4] sm:$0xff]
      %v3500 = vld [vmem:[#allocation3 + $0x3ec] sm:$0xf]
      %v3501 = vld [vmem:[#allocation3 + $0x3f0] sm:$0xff]
      %v3502 = vld [vmem:[#allocation3 + $0x3f8] sm:$0xff]
      %v3503 = vld [vmem:[#allocation3 + $0x400] sm:$0xff]
      %v3504 = vld [vmem:[#allocation3 + $0x408] sm:$0xff]
      %v3505 = vld [vmem:[#allocation3 + $0x410] sm:$0xf]
      %v3506 = vld [vmem:[#allocation3 + $0x414] sm:$0xff]
      %v3507 = vld [vmem:[#allocation3 + $0x41c] sm:$0xff]
      %v3508 = vld [vmem:[#allocation3 + $0x424] sm:$0xff]
      %v3509 = vld [vmem:[#allocation3 + $0x42c] sm:$0xff]
      %v3510 = vld [vmem:[#allocation3 + $0x434] sm:$0xf]
      %v3511 = vld [vmem:[#allocation3 + $0x438] sm:$0xff]
      %v3512 = vld [vmem:[#allocation3 + $0x440] sm:$0xff]
      %v3513 = vld [vmem:[#allocation3 + $0x448] sm:$0xff]
      %v3514 = vld [vmem:[#allocation3 + $0x450] sm:$0xff]
      %v3515 = vld [vmem:[#allocation3 + $0x458] sm:$0xf]
      %v3516 = vld [vmem:[#allocation3 + $0x45c] sm:$0xff]
      %v3517 = vld [vmem:[#allocation3 + $0x464] sm:$0xff]
      %v3518 = vld [vmem:[#allocation3 + $0x46c] sm:$0xff]
      %v3519 = vld [vmem:[#allocation3 + $0x474] sm:$0xff]
      %v3520 = vld [vmem:[#allocation3 + $0x47c] sm:$0xf]
      %v3521 = vld [vmem:[%s1] sm:$0xf]
      %v3522 = vld [vmem:[%s1 + $0x4] sm:$0xf]
      %v3523 = vld [vmem:[%s1 + $0x8] sm:$0xf]
      %v3524 = vld [vmem:[%s1 + $0xc] sm:$0xf]
      %v3525 = vld [vmem:[%s1 + $0x10] sm:$0xf]
      %v3526 = vld [vmem:[%s1 + $0x14] sm:$0xf]
      %v3527 = vld [vmem:[%s1 + $0x18] sm:$0xf]
      %v3528 = vld [vmem:[%s1 + $0x1c] sm:$0xf]
      %v3529 = vld [vmem:[%s1 + $0x20] sm:$0xf]
      %v3530 = vld [vmem:[%s1 + $0x24] sm:$0xf]
      %v3531 = vld [vmem:[%s1 + $0x28] sm:$0xf]
      %v3532 = vld [vmem:[%s1 + $0x2c] sm:$0xf]
      %v3533 = vld [vmem:[%s1 + $0x30] sm:$0xf]
      %v3534 = vld [vmem:[%s1 + $0x34] sm:$0xf]
      %v3535 = vld [vmem:[%s1 + $0x38] sm:$0xf]
      %v3536 = vld [vmem:[%s1 + $0x3c] sm:$0xf]
      %v3537 = vld [vmem:[%s1 + $0x40] sm:$0xf]
      %v3538 = vld [vmem:[%s1 + $0x44] sm:$0xf]
      %v3539 = vld [vmem:[%s1 + $0x48] sm:$0xf]
      %v3540 = vld [vmem:[%s1 + $0x4c] sm:$0xf]
      %v3541 = vld [vmem:[%s1 + $0x50] sm:$0xf]
      %v3542 = vld [vmem:[%s1 + $0x54] sm:$0xf]
      %v3543 = vld [vmem:[%s1 + $0x58] sm:$0xf]
      %v3544 = vld [vmem:[%s1 + $0x5c] sm:$0xf]
      %v3545 = vld [vmem:[%s1 + $0x60] sm:$0xf]
      %v3546 = vld [vmem:[%s1 + $0x64] sm:$0xf]
      %v3547 = vld [vmem:[%s1 + $0x68] sm:$0xf]
      %v3548 = vld [vmem:[%s1 + $0x6c] sm:$0xf]
      %v3549 = vld [vmem:[%s1 + $0x70] sm:$0xf]
      %v3550 = vld [vmem:[%s1 + $0x74] sm:$0xf]
      %v3551 = vld [vmem:[%s1 + $0x78] sm:$0xf]
      %v3552 = vld [vmem:[%s1 + $0x7c] sm:$0xf]
      %v3553 = vld [vmem:[%s1 + $0x80] sm:$0xf]
      %v3554 = vld [vmem:[%s1 + $0x84] sm:$0xf]
      %v3555 = vld [vmem:[%s1 + $0x88] sm:$0xf]
      %v3556 = vld [vmem:[%s1 + $0x8c] sm:$0xf]
      %v3557 = vld [vmem:[%s1 + $0x90] sm:$0xf]
      %v3558 = vld [vmem:[%s1 + $0x94] sm:$0xf]
      %v3559 = vld [vmem:[%s1 + $0x98] sm:$0xf]
      %v3560 = vld [vmem:[%s1 + $0x9c] sm:$0xf]
      %v3561 = vld [vmem:[%s1 + $0xa0] sm:$0xf]
      %v3562 = vld [vmem:[%s1 + $0xa4] sm:$0xf]
      %v3563 = vld [vmem:[%s1 + $0xa8] sm:$0xf]
      %v3564 = vld [vmem:[%s1 + $0xac] sm:$0xf]
      %v3565 = vld [vmem:[%s1 + $0xb0] sm:$0xf]
      %v3566 = vld [vmem:[%s1 + $0xb4] sm:$0xf]
      %v3567 = vld [vmem:[%s1 + $0xb8] sm:$0xf]
      %v3568 = vld [vmem:[%s1 + $0xbc] sm:$0xf]
      %v3569 = vld [vmem:[%s1 + $0xc0] sm:$0xf]
      %v3570 = vld [vmem:[%s1 + $0xc4] sm:$0xf]
      %v3571 = vld [vmem:[%s1 + $0xc8] sm:$0xf]
      %v3572 = vld [vmem:[%s1 + $0xcc] sm:$0xf]
      %v3573 = vld [vmem:[%s1 + $0xd0] sm:$0xf]
      %v3574 = vld [vmem:[%s1 + $0xd4] sm:$0xf]
      %v3575 = vld [vmem:[%s1 + $0xd8] sm:$0xf]
      %v3576 = vld [vmem:[%s1 + $0xdc] sm:$0xf]
      %v3577 = vld [vmem:[%s1 + $0xe0] sm:$0xf]
      %v3578 = vld [vmem:[%s1 + $0xe4] sm:$0xf]
      %v3579 = vld [vmem:[%s1 + $0xe8] sm:$0xf]
      %v3580 = vld [vmem:[%s1 + $0xec] sm:$0xf]
      %v3581 = vld [vmem:[%s1 + $0xf0] sm:$0xf]
      %v3582 = vld [vmem:[%s1 + $0xf4] sm:$0xf]
      %v3583 = vld [vmem:[%s1 + $0xf8] sm:$0xf]
      %v3584 = vld [vmem:[%s1 + $0xfc] sm:$0xf]
      %v3585 = vld [vmem:[%s1 + $0x100] sm:$0xf]
      %v3586 = vld [vmem:[%s1 + $0x104] sm:$0xf]
      %v3587 = vld [vmem:[%s1 + $0x108] sm:$0xf]
      %v3588 = vld [vmem:[%s1 + $0x10c] sm:$0xf]
      %v3589 = vld [vmem:[%s1 + $0x110] sm:$0xf]
      %v3590 = vld [vmem:[%s1 + $0x114] sm:$0xf]
      %v3591 = vld [vmem:[%s1 + $0x118] sm:$0xf]
      %v3592 = vld [vmem:[%s1 + $0x11c] sm:$0xf]
      %v3593 = vld [vmem:[%s1 + $0x120] sm:$0xf]
      %v3594 = vld [vmem:[%s1 + $0x124] sm:$0xf]
      %v3595 = vld [vmem:[%s1 + $0x128] sm:$0xf]
      %v3596 = vld [vmem:[%s1 + $0x12c] sm:$0xf]
      %v3597 = vld [vmem:[%s1 + $0x130] sm:$0xf]
      %v3598 = vld [vmem:[%s1 + $0x134] sm:$0xf]
      %v3599 = vld [vmem:[%s1 + $0x138] sm:$0xf]
      %v3600 = vld [vmem:[%s1 + $0x13c] sm:$0xf]
      %v3601 = vld [vmem:[%s1 + $0x140] sm:$0xf]
      %v3602 = vld [vmem:[%s1 + $0x144] sm:$0xf]
      %v3603 = vld [vmem:[%s1 + $0x148] sm:$0xf]
      %v3604 = vld [vmem:[%s1 + $0x14c] sm:$0xf]
      %v3605 = vld [vmem:[%s1 + $0x150] sm:$0xf]
      %v3606 = vld [vmem:[%s1 + $0x154] sm:$0xf]
      %v3607 = vld [vmem:[%s1 + $0x158] sm:$0xf]
      %v3608 = vld [vmem:[%s1 + $0x15c] sm:$0xf]
      %v3609 = vld [vmem:[%s1 + $0x160] sm:$0xf]
      %v3610 = vld [vmem:[%s1 + $0x164] sm:$0xf]
      %v3611 = vld [vmem:[%s1 + $0x168] sm:$0xf]
      %v3612 = vld [vmem:[%s1 + $0x16c] sm:$0xf]
      %v3613 = vld [vmem:[%s1 + $0x170] sm:$0xf]
      %v3614 = vld [vmem:[%s1 + $0x174] sm:$0xf]
      %v3615 = vld [vmem:[%s1 + $0x178] sm:$0xf]
      %v3616 = vld [vmem:[%s1 + $0x17c] sm:$0xf]
      %v3617 = vld [vmem:[%s1 + $0x180] sm:$0xf]
      %v3618 = vld [vmem:[%s1 + $0x184] sm:$0xf]
      %v3619 = vld [vmem:[%s1 + $0x188] sm:$0xf]
      %v3620 = vld [vmem:[%s1 + $0x18c] sm:$0xf]
      %v3621 = vld [vmem:[%s1 + $0x190] sm:$0xf]
      %v3622 = vld [vmem:[%s1 + $0x194] sm:$0xf]
      %v3623 = vld [vmem:[%s1 + $0x198] sm:$0xf]
      %v3624 = vld [vmem:[%s1 + $0x19c] sm:$0xf]
      %v3625 = vld [vmem:[%s1 + $0x1a0] sm:$0xf]
      %v3626 = vld [vmem:[%s1 + $0x1a4] sm:$0xf]
      %v3627 = vld [vmem:[%s1 + $0x1a8] sm:$0xf]
      %v3628 = vld [vmem:[%s1 + $0x1ac] sm:$0xf]
      %v3629 = vld [vmem:[%s1 + $0x1b0] sm:$0xf]
      %v3630 = vld [vmem:[%s1 + $0x1b4] sm:$0xf]
      %v3631 = vld [vmem:[%s1 + $0x1b8] sm:$0xf]
      %v3632 = vld [vmem:[%s1 + $0x1bc] sm:$0xf]
      %v3633 = vld [vmem:[%s1 + $0x1c0] sm:$0xf]
      %v3634 = vld [vmem:[%s1 + $0x1c4] sm:$0xf]
      %v3635 = vld [vmem:[%s1 + $0x1c8] sm:$0xf]
      %v3636 = vld [vmem:[%s1 + $0x1cc] sm:$0xf]
      %v3637 = vld [vmem:[%s1 + $0x1d0] sm:$0xf]
      %v3638 = vld [vmem:[%s1 + $0x1d4] sm:$0xf]
      %v3639 = vld [vmem:[%s1 + $0x1d8] sm:$0xf]
      %v3640 = vld [vmem:[%s1 + $0x1dc] sm:$0xf]
      %v3641 = vld [vmem:[%s1 + $0x1e0] sm:$0xf]
      %v3642 = vld [vmem:[%s1 + $0x1e4] sm:$0xf]
      %v3643 = vld [vmem:[%s1 + $0x1e8] sm:$0xf]
      %v3644 = vld [vmem:[%s1 + $0x1ec] sm:$0xf]
      %v3645 = vld [vmem:[%s1 + $0x1f0] sm:$0xf]
      %v3646 = vld [vmem:[%s1 + $0x1f4] sm:$0xf]
      %v3647 = vld [vmem:[%s1 + $0x1f8] sm:$0xf]
      %v3648 = vld [vmem:[%s1 + $0x1fc] sm:$0xf]
      %v3649 = vld [vmem:[%s1 + $0x200] sm:$0xf]
      %v3650 = vld [vmem:[%s1 + $0x204] sm:$0xf]
      %v3651 = vld [vmem:[%s1 + $0x208] sm:$0xf]
      %v3652 = vld [vmem:[%s1 + $0x20c] sm:$0xf]
      %v3653 = vld [vmem:[%s1 + $0x210] sm:$0xf]
      %v3654 = vld [vmem:[%s1 + $0x214] sm:$0xf]
      %v3655 = vld [vmem:[%s1 + $0x218] sm:$0xf]
      %v3656 = vld [vmem:[%s1 + $0x21c] sm:$0xf]
      %v3657 = vld [vmem:[%s1 + $0x220] sm:$0xf]
      %v3658 = vld [vmem:[%s1 + $0x224] sm:$0xf]
      %v3659 = vld [vmem:[%s1 + $0x228] sm:$0xf]
      %v3660 = vld [vmem:[%s1 + $0x22c] sm:$0xf]
      %v3661 = vld [vmem:[%s1 + $0x230] sm:$0xf]
      %v3662 = vld [vmem:[%s1 + $0x234] sm:$0xf]
      %v3663 = vld [vmem:[%s1 + $0x238] sm:$0xf]
      %v3664 = vld [vmem:[%s1 + $0x23c] sm:$0xf]
      %v3825 = vunpack.c.l.b16 %v3361
      %v3826 = vunpack.c.h.b16 %v3361
      %v3827 = vunpack.c.l.b16 %v3362
      %v3828 = vunpack.c.h.b16 %v3362
      %v3829 = vunpack.c.l.b16 %v3363
      %v3830 = vunpack.c.h.b16 %v3363
      %v3831 = vunpack.c.l.b16 %v3364
      %v3832 = vunpack.c.h.b16 %v3364
      %v3833 = vunpack.c.l.b16 %v3365
      %v3834 = vunpack.c.l.b16 %v3366
      %v3835 = vunpack.c.h.b16 %v3366
      %v3836 = vunpack.c.l.b16 %v3367
      %v3837 = vunpack.c.h.b16 %v3367
      %v3838 = vunpack.c.l.b16 %v3368
      %v3839 = vunpack.c.h.b16 %v3368
      %v3840 = vunpack.c.l.b16 %v3369
      %v3841 = vunpack.c.h.b16 %v3369
      %v3842 = vunpack.c.l.b16 %v3370
      %v3843 = vunpack.c.l.b16 %v3371
      %v3844 = vunpack.c.h.b16 %v3371
      %v3845 = vunpack.c.l.b16 %v3372
      %v3846 = vunpack.c.h.b16 %v3372
      %v3847 = vunpack.c.l.b16 %v3373
      %v3848 = vunpack.c.h.b16 %v3373
      %v3849 = vunpack.c.l.b16 %v3374
      %v3850 = vunpack.c.h.b16 %v3374
      %v3851 = vunpack.c.l.b16 %v3375
      %v3852 = vunpack.c.l.b16 %v3376
      %v3853 = vunpack.c.h.b16 %v3376
      %v3854 = vunpack.c.l.b16 %v3377
      %v3855 = vunpack.c.h.b16 %v3377
      %v3856 = vunpack.c.l.b16 %v3378
      %v3857 = vunpack.c.h.b16 %v3378
      %v3858 = vunpack.c.l.b16 %v3379
      %v3859 = vunpack.c.h.b16 %v3379
      %v3860 = vunpack.c.l.b16 %v3380
      %v3861 = vunpack.c.l.b16 %v3381
      %v3862 = vunpack.c.h.b16 %v3381
      %v3863 = vunpack.c.l.b16 %v3382
      %v3864 = vunpack.c.h.b16 %v3382
      %v3865 = vunpack.c.l.b16 %v3383
      %v3866 = vunpack.c.h.b16 %v3383
      %v3867 = vunpack.c.l.b16 %v3384
      %v3868 = vunpack.c.h.b16 %v3384
      %v3869 = vunpack.c.l.b16 %v3385
      %v3870 = vunpack.c.l.b16 %v3386
      %v3871 = vunpack.c.h.b16 %v3386
      %v3872 = vunpack.c.l.b16 %v3387
      %v3873 = vunpack.c.h.b16 %v3387
      %v3874 = vunpack.c.l.b16 %v3388
      %v3875 = vunpack.c.h.b16 %v3388
      %v3876 = vunpack.c.l.b16 %v3389
      %v3877 = vunpack.c.h.b16 %v3389
      %v3878 = vunpack.c.l.b16 %v3390
      %v3879 = vunpack.c.l.b16 %v3391
      %v3880 = vunpack.c.h.b16 %v3391
      %v3881 = vunpack.c.l.b16 %v3392
      %v3882 = vunpack.c.h.b16 %v3392
      %v3883 = vunpack.c.l.b16 %v3393
      %v3884 = vunpack.c.h.b16 %v3393
      %v3885 = vunpack.c.l.b16 %v3394
      %v3886 = vunpack.c.h.b16 %v3394
      %v3887 = vunpack.c.l.b16 %v3395
      %v3888 = vunpack.c.l.b16 %v3396
      %v3889 = vunpack.c.h.b16 %v3396
      %v3890 = vunpack.c.l.b16 %v3397
      %v3891 = vunpack.c.h.b16 %v3397
      %v3892 = vunpack.c.l.b16 %v3398
      %v3893 = vunpack.c.h.b16 %v3398
      %v3894 = vunpack.c.l.b16 %v3399
      %v3895 = vunpack.c.h.b16 %v3399
      %v3896 = vunpack.c.l.b16 %v3400
      %v3897 = vunpack.c.l.b16 %v3401
      %v3898 = vunpack.c.h.b16 %v3401
      %v3899 = vunpack.c.l.b16 %v3402
      %v3900 = vunpack.c.h.b16 %v3402
      %v3901 = vunpack.c.l.b16 %v3403
      %v3902 = vunpack.c.h.b16 %v3403
      %v3903 = vunpack.c.l.b16 %v3404
      %v3904 = vunpack.c.h.b16 %v3404
      %v3905 = vunpack.c.l.b16 %v3405
      %v3906 = vunpack.c.l.b16 %v3406
      %v3907 = vunpack.c.h.b16 %v3406
      %v3908 = vunpack.c.l.b16 %v3407
      %v3909 = vunpack.c.h.b16 %v3407
      %v3910 = vunpack.c.l.b16 %v3408
      %v3911 = vunpack.c.h.b16 %v3408
      %v3912 = vunpack.c.l.b16 %v3409
      %v3913 = vunpack.c.h.b16 %v3409
      %v3914 = vunpack.c.l.b16 %v3410
      %v3915 = vunpack.c.l.b16 %v3411
      %v3916 = vunpack.c.h.b16 %v3411
      %v3917 = vunpack.c.l.b16 %v3412
      %v3918 = vunpack.c.h.b16 %v3412
      %v3919 = vunpack.c.l.b16 %v3413
      %v3920 = vunpack.c.h.b16 %v3413
      %v3921 = vunpack.c.l.b16 %v3414
      %v3922 = vunpack.c.h.b16 %v3414
      %v3923 = vunpack.c.l.b16 %v3415
      %v3924 = vunpack.c.l.b16 %v3416
      %v3925 = vunpack.c.h.b16 %v3416
      %v3926 = vunpack.c.l.b16 %v3417
      %v3927 = vunpack.c.h.b16 %v3417
      %v3928 = vunpack.c.l.b16 %v3418
      %v3929 = vunpack.c.h.b16 %v3418
      %v3930 = vunpack.c.l.b16 %v3419
      %v3931 = vunpack.c.h.b16 %v3419
      %v3932 = vunpack.c.l.b16 %v3420
      %v3933 = vunpack.c.l.b16 %v3421
      %v3934 = vunpack.c.h.b16 %v3421
      %v3935 = vunpack.c.l.b16 %v3422
      %v3936 = vunpack.c.h.b16 %v3422
      %v3937 = vunpack.c.l.b16 %v3423
      %v3938 = vunpack.c.h.b16 %v3423
      %v3939 = vunpack.c.l.b16 %v3424
      %v3940 = vunpack.c.h.b16 %v3424
      %v3941 = vunpack.c.l.b16 %v3425
      %v3942 = vunpack.c.l.b16 %v3426
      %v3943 = vunpack.c.h.b16 %v3426
      %v3944 = vunpack.c.l.b16 %v3427
      %v3945 = vunpack.c.h.b16 %v3427
      %v3946 = vunpack.c.l.b16 %v3428
      %v3947 = vunpack.c.h.b16 %v3428
      %v3948 = vunpack.c.l.b16 %v3429
      %v3949 = vunpack.c.h.b16 %v3429
      %v3950 = vunpack.c.l.b16 %v3430
      %v3951 = vunpack.c.l.b16 %v3431
      %v3952 = vunpack.c.h.b16 %v3431
      %v3953 = vunpack.c.l.b16 %v3432
      %v3954 = vunpack.c.h.b16 %v3432
      %v3955 = vunpack.c.l.b16 %v3433
      %v3956 = vunpack.c.h.b16 %v3433
      %v3957 = vunpack.c.l.b16 %v3434
      %v3958 = vunpack.c.h.b16 %v3434
      %v3959 = vunpack.c.l.b16 %v3435
      %v3960 = vunpack.c.l.b16 %v3436
      %v3961 = vunpack.c.h.b16 %v3436
      %v3962 = vunpack.c.l.b16 %v3437
      %v3963 = vunpack.c.h.b16 %v3437
      %v3964 = vunpack.c.l.b16 %v3438
      %v3965 = vunpack.c.h.b16 %v3438
      %v3966 = vunpack.c.l.b16 %v3439
      %v3967 = vunpack.c.h.b16 %v3439
      %v3968 = vunpack.c.l.b16 %v3440
      %v3969 = vunpack.c.l.b16 %v3441
      %v3970 = vunpack.c.h.b16 %v3441
      %v3971 = vunpack.c.l.b16 %v3442
      %v3972 = vunpack.c.h.b16 %v3442
      %v3973 = vunpack.c.l.b16 %v3443
      %v3974 = vunpack.c.h.b16 %v3443
      %v3975 = vunpack.c.l.b16 %v3444
      %v3976 = vunpack.c.h.b16 %v3444
      %v3977 = vunpack.c.l.b16 %v3445
      %v3978 = vunpack.c.l.b16 %v3446
      %v3979 = vunpack.c.h.b16 %v3446
      %v3980 = vunpack.c.l.b16 %v3447
      %v3981 = vunpack.c.h.b16 %v3447
      %v3982 = vunpack.c.l.b16 %v3448
      %v3983 = vunpack.c.h.b16 %v3448
      %v3984 = vunpack.c.l.b16 %v3449
      %v3985 = vunpack.c.h.b16 %v3449
      %v3986 = vunpack.c.l.b16 %v3450
      %v3987 = vunpack.c.l.b16 %v3451
      %v3988 = vunpack.c.h.b16 %v3451
      %v3989 = vunpack.c.l.b16 %v3452
      %v3990 = vunpack.c.h.b16 %v3452
      %v3991 = vunpack.c.l.b16 %v3453
      %v3992 = vunpack.c.h.b16 %v3453
      %v3993 = vunpack.c.l.b16 %v3454
      %v3994 = vunpack.c.h.b16 %v3454
      %v3995 = vunpack.c.l.b16 %v3455
      %v3996 = vunpack.c.l.b16 %v3456
      %v3997 = vunpack.c.h.b16 %v3456
      %v3998 = vunpack.c.l.b16 %v3457
      %v3999 = vunpack.c.h.b16 %v3457
      %v4000 = vunpack.c.l.b16 %v3458
      %v4001 = vunpack.c.h.b16 %v3458
      %v4002 = vunpack.c.l.b16 %v3459
      %v4003 = vunpack.c.h.b16 %v3459
      %v4004 = vunpack.c.l.b16 %v3460
      %v4005 = vunpack.c.l.b16 %v3461
      %v4006 = vunpack.c.h.b16 %v3461
      %v4007 = vunpack.c.l.b16 %v3462
      %v4008 = vunpack.c.h.b16 %v3462
      %v4009 = vunpack.c.l.b16 %v3463
      %v4010 = vunpack.c.h.b16 %v3463
      %v4011 = vunpack.c.l.b16 %v3464
      %v4012 = vunpack.c.h.b16 %v3464
      %v4013 = vunpack.c.l.b16 %v3465
      %v4014 = vunpack.c.l.b16 %v3466
      %v4015 = vunpack.c.h.b16 %v3466
      %v4016 = vunpack.c.l.b16 %v3467
      %v4017 = vunpack.c.h.b16 %v3467
      %v4018 = vunpack.c.l.b16 %v3468
      %v4019 = vunpack.c.h.b16 %v3468
      %v4020 = vunpack.c.l.b16 %v3469
      %v4021 = vunpack.c.h.b16 %v3469
      %v4022 = vunpack.c.l.b16 %v3470
      %v4023 = vunpack.c.l.b16 %v3471
      %v4024 = vunpack.c.h.b16 %v3471
      %v4025 = vunpack.c.l.b16 %v3472
      %v4026 = vunpack.c.h.b16 %v3472
      %v4027 = vunpack.c.l.b16 %v3473
      %v4028 = vunpack.c.h.b16 %v3473
      %v4029 = vunpack.c.l.b16 %v3474
      %v4030 = vunpack.c.h.b16 %v3474
      %v4031 = vunpack.c.l.b16 %v3475
      %v4032 = vunpack.c.l.b16 %v3476
      %v4033 = vunpack.c.h.b16 %v3476
      %v4034 = vunpack.c.l.b16 %v3477
      %v4035 = vunpack.c.h.b16 %v3477
      %v4036 = vunpack.c.l.b16 %v3478
      %v4037 = vunpack.c.h.b16 %v3478
      %v4038 = vunpack.c.l.b16 %v3479
      %v4039 = vunpack.c.h.b16 %v3479
      %v4040 = vunpack.c.l.b16 %v3480
      %v4041 = vunpack.c.l.b16 %v3481
      %v4042 = vunpack.c.h.b16 %v3481
      %v4043 = vunpack.c.l.b16 %v3482
      %v4044 = vunpack.c.h.b16 %v3482
      %v4045 = vunpack.c.l.b16 %v3483
      %v4046 = vunpack.c.h.b16 %v3483
      %v4047 = vunpack.c.l.b16 %v3484
      %v4048 = vunpack.c.h.b16 %v3484
      %v4049 = vunpack.c.l.b16 %v3485
      %v4050 = vunpack.c.l.b16 %v3486
      %v4051 = vunpack.c.h.b16 %v3486
      %v4052 = vunpack.c.l.b16 %v3487
      %v4053 = vunpack.c.h.b16 %v3487
      %v4054 = vunpack.c.l.b16 %v3488
      %v4055 = vunpack.c.h.b16 %v3488
      %v4056 = vunpack.c.l.b16 %v3489
      %v4057 = vunpack.c.h.b16 %v3489
      %v4058 = vunpack.c.l.b16 %v3490
      %v4059 = vunpack.c.l.b16 %v3491
      %v4060 = vunpack.c.h.b16 %v3491
      %v4061 = vunpack.c.l.b16 %v3492
      %v4062 = vunpack.c.h.b16 %v3492
      %v4063 = vunpack.c.l.b16 %v3493
      %v4064 = vunpack.c.h.b16 %v3493
      %v4065 = vunpack.c.l.b16 %v3494
      %v4066 = vunpack.c.h.b16 %v3494
      %v4067 = vunpack.c.l.b16 %v3495
      %v4068 = vunpack.c.l.b16 %v3496
      %v4069 = vunpack.c.h.b16 %v3496
      %v4070 = vunpack.c.l.b16 %v3497
      %v4071 = vunpack.c.h.b16 %v3497
      %v4072 = vunpack.c.l.b16 %v3498
      %v4073 = vunpack.c.h.b16 %v3498
      %v4074 = vunpack.c.l.b16 %v3499
      %v4075 = vunpack.c.h.b16 %v3499
      %v4076 = vunpack.c.l.b16 %v3500
      %v4077 = vunpack.c.l.b16 %v3501
      %v4078 = vunpack.c.h.b16 %v3501
      %v4079 = vunpack.c.l.b16 %v3502
      %v4080 = vunpack.c.h.b16 %v3502
      %v4081 = vunpack.c.l.b16 %v3503
      %v4082 = vunpack.c.h.b16 %v3503
      %v4083 = vunpack.c.l.b16 %v3504
      %v4084 = vunpack.c.h.b16 %v3504
      %v4085 = vunpack.c.l.b16 %v3505
      %v4086 = vunpack.c.l.b16 %v3506
      %v4087 = vunpack.c.h.b16 %v3506
      %v4088 = vunpack.c.l.b16 %v3507
      %v4089 = vunpack.c.h.b16 %v3507
      %v4090 = vunpack.c.l.b16 %v3508
      %v4091 = vunpack.c.h.b16 %v3508
      %v4092 = vunpack.c.l.b16 %v3509
      %v4093 = vunpack.c.h.b16 %v3509
      %v4094 = vunpack.c.l.b16 %v3510
      %v4095 = vunpack.c.l.b16 %v3511
      %v4096 = vunpack.c.h.b16 %v3511
      %v4097 = vunpack.c.l.b16 %v3512
      %v4098 = vunpack.c.h.b16 %v3512
      %v4099 = vunpack.c.l.b16 %v3513
      %v4100 = vunpack.c.h.b16 %v3513
      %v4101 = vunpack.c.l.b16 %v3514
      %v4102 = vunpack.c.h.b16 %v3514
      %v4103 = vunpack.c.l.b16 %v3515
      %v4104 = vunpack.c.l.b16 %v3516
      %v4105 = vunpack.c.h.b16 %v3516
      %v4106 = vunpack.c.l.b16 %v3517
      %v4107 = vunpack.c.h.b16 %v3517
      %v4108 = vunpack.c.l.b16 %v3518
      %v4109 = vunpack.c.h.b16 %v3518
      %v4110 = vunpack.c.l.b16 %v3519
      %v4111 = vunpack.c.h.b16 %v3519
      %v4112 = vunpack.c.l.b16 %v3520
      %v4113 = vpack.c.b16 %v3834, %v3825
      %v4114 = vpack.c.b16 %v3835, %v3826
      %v4115 = vpack.c.b16 %v3836, %v3827
      %v4116 = vpack.c.b16 %v3837, %v3828
      %v4117 = vpack.c.b16 %v3838, %v3829
      %v4118 = vpack.c.b16 %v3839, %v3830
      %v4119 = vpack.c.b16 %v3840, %v3831
      %v4120 = vpack.c.b16 %v3841, %v3832
      %v4121 = vpack.c.b16 %v3842, %v3833
      %v4122 = vpack.c.b16 %v3852, %v3843
      %v4123 = vpack.c.b16 %v3853, %v3844
      %v4124 = vpack.c.b16 %v3854, %v3845
      %v4125 = vpack.c.b16 %v3855, %v3846
      %v4126 = vpack.c.b16 %v3856, %v3847
      %v4127 = vpack.c.b16 %v3857, %v3848
      %v4128 = vpack.c.b16 %v3858, %v3849
      %v4129 = vpack.c.b16 %v3859, %v3850
      %v4130 = vpack.c.b16 %v3860, %v3851
      %v4131 = vpack.c.b16 %v3870, %v3861
      %v4132 = vpack.c.b16 %v3871, %v3862
      %v4133 = vpack.c.b16 %v3872, %v3863
      %v4134 = vpack.c.b16 %v3873, %v3864
      %v4135 = vpack.c.b16 %v3874, %v3865
      %v4136 = vpack.c.b16 %v3875, %v3866
      %v4137 = vpack.c.b16 %v3876, %v3867
      %v4138 = vpack.c.b16 %v3877, %v3868
      %v4139 = vpack.c.b16 %v3878, %v3869
      %v4140 = vpack.c.b16 %v3888, %v3879
      %v4141 = vpack.c.b16 %v3889, %v3880
      %v4142 = vpack.c.b16 %v3890, %v3881
      %v4143 = vpack.c.b16 %v3891, %v3882
      %v4144 = vpack.c.b16 %v3892, %v3883
      %v4145 = vpack.c.b16 %v3893, %v3884
      %v4146 = vpack.c.b16 %v3894, %v3885
      %v4147 = vpack.c.b16 %v3895, %v3886
      %v4148 = vpack.c.b16 %v3896, %v3887
      %v4149 = vpack.c.b16 %v3906, %v3897
      %v4150 = vpack.c.b16 %v3907, %v3898
      %v4151 = vpack.c.b16 %v3908, %v3899
      %v4152 = vpack.c.b16 %v3909, %v3900
      %v4153 = vpack.c.b16 %v3910, %v3901
      %v4154 = vpack.c.b16 %v3911, %v3902
      %v4155 = vpack.c.b16 %v3912, %v3903
      %v4156 = vpack.c.b16 %v3913, %v3904
      %v4157 = vpack.c.b16 %v3914, %v3905
      %v4158 = vpack.c.b16 %v3924, %v3915
      %v4159 = vpack.c.b16 %v3925, %v3916
      %v4160 = vpack.c.b16 %v3926, %v3917
      %v4161 = vpack.c.b16 %v3927, %v3918
      %v4162 = vpack.c.b16 %v3928, %v3919
      %v4163 = vpack.c.b16 %v3929, %v3920
      %v4164 = vpack.c.b16 %v3930, %v3921
      %v4165 = vpack.c.b16 %v3931, %v3922
      %v4166 = vpack.c.b16 %v3932, %v3923
      %v4167 = vpack.c.b16 %v3942, %v3933
      %v4168 = vpack.c.b16 %v3943, %v3934
      %v4169 = vpack.c.b16 %v3944, %v3935
      %v4170 = vpack.c.b16 %v3945, %v3936
      %v4171 = vpack.c.b16 %v3946, %v3937
      %v4172 = vpack.c.b16 %v3947, %v3938
      %v4173 = vpack.c.b16 %v3948, %v3939
      %v4174 = vpack.c.b16 %v3949, %v3940
      %v4175 = vpack.c.b16 %v3950, %v3941
      %v4176 = vpack.c.b16 %v3960, %v3951
      %v4177 = vpack.c.b16 %v3961, %v3952
      %v4178 = vpack.c.b16 %v3962, %v3953
      %v4179 = vpack.c.b16 %v3963, %v3954
      %v4180 = vpack.c.b16 %v3964, %v3955
      %v4181 = vpack.c.b16 %v3965, %v3956
      %v4182 = vpack.c.b16 %v3966, %v3957
      %v4183 = vpack.c.b16 %v3967, %v3958
      %v4184 = vpack.c.b16 %v3968, %v3959
      %v4185 = vpack.c.b16 %v3978, %v3969
      %v4186 = vpack.c.b16 %v3979, %v3970
      %v4187 = vpack.c.b16 %v3980, %v3971
      %v4188 = vpack.c.b16 %v3981, %v3972
      %v4189 = vpack.c.b16 %v3982, %v3973
      %v4190 = vpack.c.b16 %v3983, %v3974
      %v4191 = vpack.c.b16 %v3984, %v3975
      %v4192 = vpack.c.b16 %v3985, %v3976
      %v4193 = vpack.c.b16 %v3986, %v3977
      %v4194 = vpack.c.b16 %v3996, %v3987
      %v4195 = vpack.c.b16 %v3997, %v3988
      %v4196 = vpack.c.b16 %v3998, %v3989
      %v4197 = vpack.c.b16 %v3999, %v3990
      %v4198 = vpack.c.b16 %v4000, %v3991
      %v4199 = vpack.c.b16 %v4001, %v3992
      %v4200 = vpack.c.b16 %v4002, %v3993
      %v4201 = vpack.c.b16 %v4003, %v3994
      %v4202 = vpack.c.b16 %v4004, %v3995
      %v4203 = vpack.c.b16 %v4014, %v4005
      %v4204 = vpack.c.b16 %v4015, %v4006
      %v4205 = vpack.c.b16 %v4016, %v4007
      %v4206 = vpack.c.b16 %v4017, %v4008
      %v4207 = vpack.c.b16 %v4018, %v4009
      %v4208 = vpack.c.b16 %v4019, %v4010
      %v4209 = vpack.c.b16 %v4020, %v4011
      %v4210 = vpack.c.b16 %v4021, %v4012
      %v4211 = vpack.c.b16 %v4022, %v4013
      %v4212 = vpack.c.b16 %v4032, %v4023
      %v4213 = vpack.c.b16 %v4033, %v4024
      %v4214 = vpack.c.b16 %v4034, %v4025
      %v4215 = vpack.c.b16 %v4035, %v4026
      %v4216 = vpack.c.b16 %v4036, %v4027
      %v4217 = vpack.c.b16 %v4037, %v4028
      %v4218 = vpack.c.b16 %v4038, %v4029
      %v4219 = vpack.c.b16 %v4039, %v4030
      %v4220 = vpack.c.b16 %v4040, %v4031
      %v4221 = vpack.c.b16 %v4050, %v4041
      %v4222 = vpack.c.b16 %v4051, %v4042
      %v4223 = vpack.c.b16 %v4052, %v4043
      %v4224 = vpack.c.b16 %v4053, %v4044
      %v4225 = vpack.c.b16 %v4054, %v4045
      %v4226 = vpack.c.b16 %v4055, %v4046
      %v4227 = vpack.c.b16 %v4056, %v4047
      %v4228 = vpack.c.b16 %v4057, %v4048
      %v4229 = vpack.c.b16 %v4058, %v4049
      %v4230 = vpack.c.b16 %v4068, %v4059
      %v4231 = vpack.c.b16 %v4069, %v4060
      %v4232 = vpack.c.b16 %v4070, %v4061
      %v4233 = vpack.c.b16 %v4071, %v4062
      %v4234 = vpack.c.b16 %v4072, %v4063
      %v4235 = vpack.c.b16 %v4073, %v4064
      %v4236 = vpack.c.b16 %v4074, %v4065
      %v4237 = vpack.c.b16 %v4075, %v4066
      %v4238 = vpack.c.b16 %v4076, %v4067
      %v4239 = vpack.c.b16 %v4086, %v4077
      %v4240 = vpack.c.b16 %v4087, %v4078
      %v4241 = vpack.c.b16 %v4088, %v4079
      %v4242 = vpack.c.b16 %v4089, %v4080
      %v4243 = vpack.c.b16 %v4090, %v4081
      %v4244 = vpack.c.b16 %v4091, %v4082
      %v4245 = vpack.c.b16 %v4092, %v4083
      %v4246 = vpack.c.b16 %v4093, %v4084
      %v4247 = vpack.c.b16 %v4094, %v4085
      %v4248 = vpack.c.b16 %v4104, %v4095
      %v4249 = vpack.c.b16 %v4105, %v4096
      %v4250 = vpack.c.b16 %v4106, %v4097
      %v4251 = vpack.c.b16 %v4107, %v4098
      %v4252 = vpack.c.b16 %v4108, %v4099
      %v4253 = vpack.c.b16 %v4109, %v4100
      %v4254 = vpack.c.b16 %v4110, %v4101
      %v4255 = vpack.c.b16 %v4111, %v4102
      %v4256 = vpack.c.b16 %v4112, %v4103
      %v4545 = vunpack.c.l.b16 %v3521
      %v4546 = vunpack.c.l.b16 %v3522
      %v4547 = vunpack.c.l.b16 %v3523
      %v4548 = vunpack.c.l.b16 %v3524
      %v4549 = vunpack.c.l.b16 %v3525
      %v4550 = vunpack.c.l.b16 %v3526
      %v4551 = vunpack.c.l.b16 %v3527
      %v4552 = vunpack.c.l.b16 %v3528
      %v4553 = vunpack.c.l.b16 %v3529
      %v4554 = vunpack.c.l.b16 %v3530
      %v4555 = vunpack.c.l.b16 %v3531
      %v4556 = vunpack.c.l.b16 %v3532
      %v4557 = vunpack.c.l.b16 %v3533
      %v4558 = vunpack.c.l.b16 %v3534
      %v4559 = vunpack.c.l.b16 %v3535
      %v4560 = vunpack.c.l.b16 %v3536
      %v4561 = vunpack.c.l.b16 %v3537
      %v4562 = vunpack.c.l.b16 %v3538
      %v4563 = vunpack.c.l.b16 %v3539
      %v4564 = vunpack.c.l.b16 %v3540
      %v4565 = vunpack.c.l.b16 %v3541
      %v4566 = vunpack.c.l.b16 %v3542
      %v4567 = vunpack.c.l.b16 %v3543
      %v4568 = vunpack.c.l.b16 %v3544
      %v4569 = vunpack.c.l.b16 %v3545
      %v4570 = vunpack.c.l.b16 %v3546
      %v4571 = vunpack.c.l.b16 %v3547
      %v4572 = vunpack.c.l.b16 %v3548
      %v4573 = vunpack.c.l.b16 %v3549
      %v4574 = vunpack.c.l.b16 %v3550
      %v4575 = vunpack.c.l.b16 %v3551
      %v4576 = vunpack.c.l.b16 %v3552
      %v4577 = vunpack.c.l.b16 %v3553
      %v4578 = vunpack.c.l.b16 %v3554
      %v4579 = vunpack.c.l.b16 %v3555
      %v4580 = vunpack.c.l.b16 %v3556
      %v4581 = vunpack.c.l.b16 %v3557
      %v4582 = vunpack.c.l.b16 %v3558
      %v4583 = vunpack.c.l.b16 %v3559
      %v4584 = vunpack.c.l.b16 %v3560
      %v4585 = vunpack.c.l.b16 %v3561
      %v4586 = vunpack.c.l.b16 %v3562
      %v4587 = vunpack.c.l.b16 %v3563
      %v4588 = vunpack.c.l.b16 %v3564
      %v4589 = vunpack.c.l.b16 %v3565
      %v4590 = vunpack.c.l.b16 %v3566
      %v4591 = vunpack.c.l.b16 %v3567
      %v4592 = vunpack.c.l.b16 %v3568
      %v4593 = vunpack.c.l.b16 %v3569
      %v4594 = vunpack.c.l.b16 %v3570
      %v4595 = vunpack.c.l.b16 %v3571
      %v4596 = vunpack.c.l.b16 %v3572
      %v4597 = vunpack.c.l.b16 %v3573
      %v4598 = vunpack.c.l.b16 %v3574
      %v4599 = vunpack.c.l.b16 %v3575
      %v4600 = vunpack.c.l.b16 %v3576
      %v4601 = vunpack.c.l.b16 %v3577
      %v4602 = vunpack.c.l.b16 %v3578
      %v4603 = vunpack.c.l.b16 %v3579
      %v4604 = vunpack.c.l.b16 %v3580
      %v4605 = vunpack.c.l.b16 %v3581
      %v4606 = vunpack.c.l.b16 %v3582
      %v4607 = vunpack.c.l.b16 %v3583
      %v4608 = vunpack.c.l.b16 %v3584
      %v4609 = vunpack.c.l.b16 %v3585
      %v4610 = vunpack.c.l.b16 %v3586
      %v4611 = vunpack.c.l.b16 %v3587
      %v4612 = vunpack.c.l.b16 %v3588
      %v4613 = vunpack.c.l.b16 %v3589
      %v4614 = vunpack.c.l.b16 %v3590
      %v4615 = vunpack.c.l.b16 %v3591
      %v4616 = vunpack.c.l.b16 %v3592
      %v4617 = vunpack.c.l.b16 %v3593
      %v4618 = vunpack.c.l.b16 %v3594
      %v4619 = vunpack.c.l.b16 %v3595
      %v4620 = vunpack.c.l.b16 %v3596
      %v4621 = vunpack.c.l.b16 %v3597
      %v4622 = vunpack.c.l.b16 %v3598
      %v4623 = vunpack.c.l.b16 %v3599
      %v4624 = vunpack.c.l.b16 %v3600
      %v4625 = vunpack.c.l.b16 %v3601
      %v4626 = vunpack.c.l.b16 %v3602
      %v4627 = vunpack.c.l.b16 %v3603
      %v4628 = vunpack.c.l.b16 %v3604
      %v4629 = vunpack.c.l.b16 %v3605
      %v4630 = vunpack.c.l.b16 %v3606
      %v4631 = vunpack.c.l.b16 %v3607
      %v4632 = vunpack.c.l.b16 %v3608
      %v4633 = vunpack.c.l.b16 %v3609
      %v4634 = vunpack.c.l.b16 %v3610
      %v4635 = vunpack.c.l.b16 %v3611
      %v4636 = vunpack.c.l.b16 %v3612
      %v4637 = vunpack.c.l.b16 %v3613
      %v4638 = vunpack.c.l.b16 %v3614
      %v4639 = vunpack.c.l.b16 %v3615
      %v4640 = vunpack.c.l.b16 %v3616
      %v4641 = vunpack.c.l.b16 %v3617
      %v4642 = vunpack.c.l.b16 %v3618
      %v4643 = vunpack.c.l.b16 %v3619
      %v4644 = vunpack.c.l.b16 %v3620
      %v4645 = vunpack.c.l.b16 %v3621
      %v4646 = vunpack.c.l.b16 %v3622
      %v4647 = vunpack.c.l.b16 %v3623
      %v4648 = vunpack.c.l.b16 %v3624
      %v4649 = vunpack.c.l.b16 %v3625
      %v4650 = vunpack.c.l.b16 %v3626
      %v4651 = vunpack.c.l.b16 %v3627
      %v4652 = vunpack.c.l.b16 %v3628
      %v4653 = vunpack.c.l.b16 %v3629
      %v4654 = vunpack.c.l.b16 %v3630
      %v4655 = vunpack.c.l.b16 %v3631
      %v4656 = vunpack.c.l.b16 %v3632
      %v4657 = vunpack.c.l.b16 %v3633
      %v4658 = vunpack.c.l.b16 %v3634
      %v4659 = vunpack.c.l.b16 %v3635
      %v4660 = vunpack.c.l.b16 %v3636
      %v4661 = vunpack.c.l.b16 %v3637
      %v4662 = vunpack.c.l.b16 %v3638
      %v4663 = vunpack.c.l.b16 %v3639
      %v4664 = vunpack.c.l.b16 %v3640
      %v4665 = vunpack.c.l.b16 %v3641
      %v4666 = vunpack.c.l.b16 %v3642
      %v4667 = vunpack.c.l.b16 %v3643
      %v4668 = vunpack.c.l.b16 %v3644
      %v4669 = vunpack.c.l.b16 %v3645
      %v4670 = vunpack.c.l.b16 %v3646
      %v4671 = vunpack.c.l.b16 %v3647
      %v4672 = vunpack.c.l.b16 %v3648
      %v4673 = vunpack.c.l.b16 %v3649
      %v4674 = vunpack.c.l.b16 %v3650
      %v4675 = vunpack.c.l.b16 %v3651
      %v4676 = vunpack.c.l.b16 %v3652
      %v4677 = vunpack.c.l.b16 %v3653
      %v4678 = vunpack.c.l.b16 %v3654
      %v4679 = vunpack.c.l.b16 %v3655
      %v4680 = vunpack.c.l.b16 %v3656
      %v4681 = vunpack.c.l.b16 %v3657
      %v4682 = vunpack.c.l.b16 %v3658
      %v4683 = vunpack.c.l.b16 %v3659
      %v4684 = vunpack.c.l.b16 %v3660
      %v4685 = vunpack.c.l.b16 %v3661
      %v4686 = vunpack.c.l.b16 %v3662
      %v4687 = vunpack.c.l.b16 %v3663
      %v4688 = vunpack.c.l.b16 %v3664
      %v4689 = vpack.c.b16 %v4546, %v4545
      %v4690 = vpack.c.b16 %v4548, %v4547
      %v4691 = vpack.c.b16 %v4550, %v4549
      %v4692 = vpack.c.b16 %v4552, %v4551
      %v4693 = vpack.c.b16 %v4554, %v4553
      %v4694 = vpack.c.b16 %v4556, %v4555
      %v4695 = vpack.c.b16 %v4558, %v4557
      %v4696 = vpack.c.b16 %v4560, %v4559
      %v4697 = vpack.c.b16 %v4562, %v4561
      %v4698 = vpack.c.b16 %v4564, %v4563
      %v4699 = vpack.c.b16 %v4566, %v4565
      %v4700 = vpack.c.b16 %v4568, %v4567
      %v4701 = vpack.c.b16 %v4570, %v4569
      %v4702 = vpack.c.b16 %v4572, %v4571
      %v4703 = vpack.c.b16 %v4574, %v4573
      %v4704 = vpack.c.b16 %v4576, %v4575
      %v4705 = vpack.c.b16 %v4578, %v4577
      %v4706 = vpack.c.b16 %v4580, %v4579
      %v4707 = vpack.c.b16 %v4582, %v4581
      %v4708 = vpack.c.b16 %v4584, %v4583
      %v4709 = vpack.c.b16 %v4586, %v4585
      %v4710 = vpack.c.b16 %v4588, %v4587
      %v4711 = vpack.c.b16 %v4590, %v4589
      %v4712 = vpack.c.b16 %v4592, %v4591
      %v4713 = vpack.c.b16 %v4594, %v4593
      %v4714 = vpack.c.b16 %v4596, %v4595
      %v4715 = vpack.c.b16 %v4598, %v4597
      %v4716 = vpack.c.b16 %v4600, %v4599
      %v4717 = vpack.c.b16 %v4602, %v4601
      %v4718 = vpack.c.b16 %v4604, %v4603
      %v4719 = vpack.c.b16 %v4606, %v4605
      %v4720 = vpack.c.b16 %v4608, %v4607
      %v4721 = vpack.c.b16 %v4610, %v4609
      %v4722 = vpack.c.b16 %v4612, %v4611
      %v4723 = vpack.c.b16 %v4614, %v4613
      %v4724 = vpack.c.b16 %v4616, %v4615
      %v4725 = vpack.c.b16 %v4618, %v4617
      %v4726 = vpack.c.b16 %v4620, %v4619
      %v4727 = vpack.c.b16 %v4622, %v4621
      %v4728 = vpack.c.b16 %v4624, %v4623
      %v4729 = vpack.c.b16 %v4626, %v4625
      %v4730 = vpack.c.b16 %v4628, %v4627
      %v4731 = vpack.c.b16 %v4630, %v4629
      %v4732 = vpack.c.b16 %v4632, %v4631
      %v4733 = vpack.c.b16 %v4634, %v4633
      %v4734 = vpack.c.b16 %v4636, %v4635
      %v4735 = vpack.c.b16 %v4638, %v4637
      %v4736 = vpack.c.b16 %v4640, %v4639
      %v4737 = vpack.c.b16 %v4642, %v4641
      %v4738 = vpack.c.b16 %v4644, %v4643
      %v4739 = vpack.c.b16 %v4646, %v4645
      %v4740 = vpack.c.b16 %v4648, %v4647
      %v4741 = vpack.c.b16 %v4650, %v4649
      %v4742 = vpack.c.b16 %v4652, %v4651
      %v4743 = vpack.c.b16 %v4654, %v4653
      %v4744 = vpack.c.b16 %v4656, %v4655
      %v4745 = vpack.c.b16 %v4658, %v4657
      %v4746 = vpack.c.b16 %v4660, %v4659
      %v4747 = vpack.c.b16 %v4662, %v4661
      %v4748 = vpack.c.b16 %v4664, %v4663
      %v4749 = vpack.c.b16 %v4666, %v4665
      %v4750 = vpack.c.b16 %v4668, %v4667
      %v4751 = vpack.c.b16 %v4670, %v4669
      %v4752 = vpack.c.b16 %v4672, %v4671
      %v4753 = vpack.c.b16 %v4674, %v4673
      %v4754 = vpack.c.b16 %v4676, %v4675
      %v4755 = vpack.c.b16 %v4678, %v4677
      %v4756 = vpack.c.b16 %v4680, %v4679
      %v4757 = vpack.c.b16 %v4682, %v4681
      %v4758 = vpack.c.b16 %v4684, %v4683
      %v4759 = vpack.c.b16 %v4686, %v4685
      %v4760 = vpack.c.b16 %v4688, %v4687
      %4833 = vmatpush.bf16.msra.mxu0 %v4696
      %4834 = vmatpush.bf16.msra.mxu0 %v4695
      %4835 = vmatpush.bf16.msra.mxu0 %v4694
      %4836 = vmatpush.bf16.msra.mxu0 %v4693
      %4837 = vmatpush.bf16.msra.mxu0 %v4692
      %4838 = vmatpush.bf16.msra.mxu0 %v4691
      %4839 = vmatpush.bf16.msra.mxu0 %v4690
      %4840 = vmatpush.bf16.msra.mxu0 %v4689
      %4841 = vmatmul.bf16.gmra.mxu0 %v4113
      %v4842 = vpop.f32.mrf.mxu0
      %v4843 = vadd.f32 0.0, %v4842
      %v4844 = vpop.f32.mrf.mxu0
      %v4845 = vadd.f32 0.0, %v4844
      %4846 = vmatmul.bf16.gmra.mxu0 %v4122
      %v4847 = vpop.f32.mrf.mxu0
      %v4848 = vadd.f32 0.0, %v4847
      %v4849 = vpop.f32.mrf.mxu0
      %v4850 = vadd.f32 0.0, %v4849
      %4851 = vmatmul.bf16.gmra.mxu0 %v4131
      %v4852 = vpop.f32.mrf.mxu0
      %v4853 = vadd.f32 0.0, %v4852
      %v4854 = vpop.f32.mrf.mxu0
      %v4855 = vadd.f32 0.0, %v4854
      %4856 = vmatmul.bf16.gmra.mxu0 %v4140
      %v4857 = vpop.f32.mrf.mxu0
      %v4858 = vadd.f32 0.0, %v4857
      %v4859 = vpop.f32.mrf.mxu0
      %v4860 = vadd.f32 0.0, %v4859
      %4861 = vmatmul.bf16.gmra.mxu0 %v4149
      %v4862 = vpop.f32.mrf.mxu0
      %v4863 = vadd.f32 0.0, %v4862
      %v4864 = vpop.f32.mrf.mxu0
      %v4865 = vadd.f32 0.0, %v4864
      %4866 = vmatmul.bf16.gmra.mxu0 %v4158
      %v4867 = vpop.f32.mrf.mxu0
      %v4868 = vadd.f32 0.0, %v4867
      %v4869 = vpop.f32.mrf.mxu0
      %v4870 = vadd.f32 0.0, %v4869
      %4871 = vmatmul.bf16.gmra.mxu0 %v4167
      %v4872 = vpop.f32.mrf.mxu0
      %v4873 = vadd.f32 0.0, %v4872
      %v4874 = vpop.f32.mrf.mxu0
      %v4875 = vadd.f32 0.0, %v4874
      %4876 = vmatmul.bf16.gmra.mxu0 %v4176
      %v4877 = vpop.f32.mrf.mxu0
      %v4878 = vadd.f32 0.0, %v4877
      %v4879 = vpop.f32.mrf.mxu0
      %v4880 = vadd.f32 0.0, %v4879
      %4881 = vmatmul.bf16.gmra.mxu0 %v4185
      %v4882 = vpop.f32.mrf.mxu0
      %v4883 = vadd.f32 0.0, %v4882
      %v4884 = vpop.f32.mrf.mxu0
      %v4885 = vadd.f32 0.0, %v4884
      %4886 = vmatmul.bf16.gmra.mxu0 %v4194
      %v4887 = vpop.f32.mrf.mxu0
      %v4888 = vadd.f32 0.0, %v4887
      %v4889 = vpop.f32.mrf.mxu0
      %v4890 = vadd.f32 0.0, %v4889
      %4891 = vmatmul.bf16.gmra.mxu0 %v4203
      %v4892 = vpop.f32.mrf.mxu0
      %v4893 = vadd.f32 0.0, %v4892
      %v4894 = vpop.f32.mrf.mxu0
      %v4895 = vadd.f32 0.0, %v4894
      %4896 = vmatmul.bf16.gmra.mxu0 %v4212
      %v4897 = vpop.f32.mrf.mxu0
      %v4898 = vadd.f32 0.0, %v4897
      %v4899 = vpop.f32.mrf.mxu0
      %v4900 = vadd.f32 0.0, %v4899
      %4901 = vmatmul.bf16.gmra.mxu0 %v4221
      %v4902 = vpop.f32.mrf.mxu0
      %v4903 = vadd.f32 0.0, %v4902
      %v4904 = vpop.f32.mrf.mxu0
      %v4905 = vadd.f32 0.0, %v4904
      %4906 = vmatmul.bf16.gmra.mxu0 %v4230
      %v4907 = vpop.f32.mrf.mxu0
      %v4908 = vadd.f32 0.0, %v4907
      %v4909 = vpop.f32.mrf.mxu0
      %v4910 = vadd.f32 0.0, %v4909
      %4911 = vmatmul.bf16.gmra.mxu0 %v4239
      %v4912 = vpop.f32.mrf.mxu0
      %v4913 = vadd.f32 0.0, %v4912
      %v4914 = vpop.f32.mrf.mxu0
      %v4915 = vadd.f32 0.0, %v4914
      %4916 = vmatmul.bf16.gmra.mxu0 %v4248
      %v4917 = vpop.f32.mrf.mxu0
      %v4918 = vadd.f32 0.0, %v4917
      %v4919 = vpop.f32.mrf.mxu0
      %v4920 = vadd.f32 0.0, %v4919
      %4921 = vdwg.mxu0
      %4922 = vmatpush.bf16.msra.mxu0 %v4704
      %4923 = vmatpush.bf16.msra.mxu0 %v4703
      %4924 = vmatpush.bf16.msra.mxu0 %v4702
      %4925 = vmatpush.bf16.msra.mxu0 %v4701
      %4926 = vmatpush.bf16.msra.mxu0 %v4700
      %4927 = vmatpush.bf16.msra.mxu0 %v4699
      %4928 = vmatpush.bf16.msra.mxu0 %v4698
      %4929 = vmatpush.bf16.msra.mxu0 %v4697
      %4930 = vmatmul.bf16.gmra.mxu0 %v4114
      %v4931 = vpop.f32.mrf.mxu0
      %v4932 = vadd.f32 %v4843, %v4931
      %v4933 = vpop.f32.mrf.mxu0
      %v4934 = vadd.f32 %v4845, %v4933
      %4935 = vmatmul.bf16.gmra.mxu0 %v4123
      %v4936 = vpop.f32.mrf.mxu0
      %v4937 = vadd.f32 %v4848, %v4936
      %v4938 = vpop.f32.mrf.mxu0
      %v4939 = vadd.f32 %v4850, %v4938
      %4940 = vmatmul.bf16.gmra.mxu0 %v4132
      %v4941 = vpop.f32.mrf.mxu0
      %v4942 = vadd.f32 %v4853, %v4941
      %v4943 = vpop.f32.mrf.mxu0
      %v4944 = vadd.f32 %v4855, %v4943
      %4945 = vmatmul.bf16.gmra.mxu0 %v4141
      %v4946 = vpop.f32.mrf.mxu0
      %v4947 = vadd.f32 %v4858, %v4946
      %v4948 = vpop.f32.mrf.mxu0
      %v4949 = vadd.f32 %v4860, %v4948
      %4950 = vmatmul.bf16.gmra.mxu0 %v4150
      %v4951 = vpop.f32.mrf.mxu0
      %v4952 = vadd.f32 %v4863, %v4951
      %v4953 = vpop.f32.mrf.mxu0
      %v4954 = vadd.f32 %v4865, %v4953
      %4955 = vmatmul.bf16.gmra.mxu0 %v4159
      %v4956 = vpop.f32.mrf.mxu0
      %v4957 = vadd.f32 %v4868, %v4956
      %v4958 = vpop.f32.mrf.mxu0
      %v4959 = vadd.f32 %v4870, %v4958
      %4960 = vmatmul.bf16.gmra.mxu0 %v4168
      %v4961 = vpop.f32.mrf.mxu0
      %v4962 = vadd.f32 %v4873, %v4961
      %v4963 = vpop.f32.mrf.mxu0
      %v4964 = vadd.f32 %v4875, %v4963
      %4965 = vmatmul.bf16.gmra.mxu0 %v4177
      %v4966 = vpop.f32.mrf.mxu0
      %v4967 = vadd.f32 %v4878, %v4966
      %v4968 = vpop.f32.mrf.mxu0
      %v4969 = vadd.f32 %v4880, %v4968
      %4970 = vmatmul.bf16.gmra.mxu0 %v4186
      %v4971 = vpop.f32.mrf.mxu0
      %v4972 = vadd.f32 %v4883, %v4971
      %v4973 = vpop.f32.mrf.mxu0
      %v4974 = vadd.f32 %v4885, %v4973
      %4975 = vmatmul.bf16.gmra.mxu0 %v4195
      %v4976 = vpop.f32.mrf.mxu0
      %v4977 = vadd.f32 %v4888, %v4976
      %v4978 = vpop.f32.mrf.mxu0
      %v4979 = vadd.f32 %v4890, %v4978
      %4980 = vmatmul.bf16.gmra.mxu0 %v4204
      %v4981 = vpop.f32.mrf.mxu0
      %v4982 = vadd.f32 %v4893, %v4981
      %v4983 = vpop.f32.mrf.mxu0
      %v4984 = vadd.f32 %v4895, %v4983
      %4985 = vmatmul.bf16.gmra.mxu0 %v4213
      %v4986 = vpop.f32.mrf.mxu0
      %v4987 = vadd.f32 %v4898, %v4986
      %v4988 = vpop.f32.mrf.mxu0
      %v4989 = vadd.f32 %v4900, %v4988
      %4990 = vmatmul.bf16.gmra.mxu0 %v4222
      %v4991 = vpop.f32.mrf.mxu0
      %v4992 = vadd.f32 %v4903, %v4991
      %v4993 = vpop.f32.mrf.mxu0
      %v4994 = vadd.f32 %v4905, %v4993
      %4995 = vmatmul.bf16.gmra.mxu0 %v4231
      %v4996 = vpop.f32.mrf.mxu0
      %v4997 = vadd.f32 %v4908, %v4996
      %v4998 = vpop.f32.mrf.mxu0
      %v4999 = vadd.f32 %v4910, %v4998
      %5000 = vmatmul.bf16.gmra.mxu0 %v4240
      %v5001 = vpop.f32.mrf.mxu0
      %v5002 = vadd.f32 %v4913, %v5001
      %v5003 = vpop.f32.mrf.mxu0
      %v5004 = vadd.f32 %v4915, %v5003
      %5005 = vmatmul.bf16.gmra.mxu0 %v4249
      %v5006 = vpop.f32.mrf.mxu0
      %v5007 = vadd.f32 %v4918, %v5006
      %v5008 = vpop.f32.mrf.mxu0
      %v5009 = vadd.f32 %v4920, %v5008
      %5010 = vdwg.mxu0
      %5011 = vmatpush.bf16.msra.mxu0 %v4712
      %5012 = vmatpush.bf16.msra.mxu0 %v4711
      %5013 = vmatpush.bf16.msra.mxu0 %v4710
      %5014 = vmatpush.bf16.msra.mxu0 %v4709
      %5015 = vmatpush.bf16.msra.mxu0 %v4708
      %5016 = vmatpush.bf16.msra.mxu0 %v4707
      %5017 = vmatpush.bf16.msra.mxu0 %v4706
      %5018 = vmatpush.bf16.msra.mxu0 %v4705
      %5019 = vmatmul.bf16.gmra.mxu0 %v4115
      %v5020 = vpop.f32.mrf.mxu0
      %v5021 = vadd.f32 %v4932, %v5020
      %v5022 = vpop.f32.mrf.mxu0
      %v5023 = vadd.f32 %v4934, %v5022
      %5024 = vmatmul.bf16.gmra.mxu0 %v4124
      %v5025 = vpop.f32.mrf.mxu0
      %v5026 = vadd.f32 %v4937, %v5025
      %v5027 = vpop.f32.mrf.mxu0
      %v5028 = vadd.f32 %v4939, %v5027
      %5029 = vmatmul.bf16.gmra.mxu0 %v4133
      %v5030 = vpop.f32.mrf.mxu0
      %v5031 = vadd.f32 %v4942, %v5030
      %v5032 = vpop.f32.mrf.mxu0
      %v5033 = vadd.f32 %v4944, %v5032
      %5034 = vmatmul.bf16.gmra.mxu0 %v4142
      %v5035 = vpop.f32.mrf.mxu0
      %v5036 = vadd.f32 %v4947, %v5035
      %v5037 = vpop.f32.mrf.mxu0
      %v5038 = vadd.f32 %v4949, %v5037
      %5039 = vmatmul.bf16.gmra.mxu0 %v4151
      %v5040 = vpop.f32.mrf.mxu0
      %v5041 = vadd.f32 %v4952, %v5040
      %v5042 = vpop.f32.mrf.mxu0
      %v5043 = vadd.f32 %v4954, %v5042
      %5044 = vmatmul.bf16.gmra.mxu0 %v4160
      %v5045 = vpop.f32.mrf.mxu0
      %v5046 = vadd.f32 %v4957, %v5045
      %v5047 = vpop.f32.mrf.mxu0
      %v5048 = vadd.f32 %v4959, %v5047
      %5049 = vmatmul.bf16.gmra.mxu0 %v4169
      %v5050 = vpop.f32.mrf.mxu0
      %v5051 = vadd.f32 %v4962, %v5050
      %v5052 = vpop.f32.mrf.mxu0
      %v5053 = vadd.f32 %v4964, %v5052
      %5054 = vmatmul.bf16.gmra.mxu0 %v4178
      %v5055 = vpop.f32.mrf.mxu0
      %v5056 = vadd.f32 %v4967, %v5055
      %v5057 = vpop.f32.mrf.mxu0
      %v5058 = vadd.f32 %v4969, %v5057
      %5059 = vmatmul.bf16.gmra.mxu0 %v4187
      %v5060 = vpop.f32.mrf.mxu0
      %v5061 = vadd.f32 %v4972, %v5060
      %v5062 = vpop.f32.mrf.mxu0
      %v5063 = vadd.f32 %v4974, %v5062
      %5064 = vmatmul.bf16.gmra.mxu0 %v4196
      %v5065 = vpop.f32.mrf.mxu0
      %v5066 = vadd.f32 %v4977, %v5065
      %v5067 = vpop.f32.mrf.mxu0
      %v5068 = vadd.f32 %v4979, %v5067
      %5069 = vmatmul.bf16.gmra.mxu0 %v4205
      %v5070 = vpop.f32.mrf.mxu0
      %v5071 = vadd.f32 %v4982, %v5070
      %v5072 = vpop.f32.mrf.mxu0
      %v5073 = vadd.f32 %v4984, %v5072
      %5074 = vmatmul.bf16.gmra.mxu0 %v4214
      %v5075 = vpop.f32.mrf.mxu0
      %v5076 = vadd.f32 %v4987, %v5075
      %v5077 = vpop.f32.mrf.mxu0
      %v5078 = vadd.f32 %v4989, %v5077
      %5079 = vmatmul.bf16.gmra.mxu0 %v4223
      %v5080 = vpop.f32.mrf.mxu0
      %v5081 = vadd.f32 %v4992, %v5080
      %v5082 = vpop.f32.mrf.mxu0
      %v5083 = vadd.f32 %v4994, %v5082
      %5084 = vmatmul.bf16.gmra.mxu0 %v4232
      %v5085 = vpop.f32.mrf.mxu0
      %v5086 = vadd.f32 %v4997, %v5085
      %v5087 = vpop.f32.mrf.mxu0
      %v5088 = vadd.f32 %v4999, %v5087
      %5089 = vmatmul.bf16.gmra.mxu0 %v4241
      %v5090 = vpop.f32.mrf.mxu0
      %v5091 = vadd.f32 %v5002, %v5090
      %v5092 = vpop.f32.mrf.mxu0
      %v5093 = vadd.f32 %v5004, %v5092
      %5094 = vmatmul.bf16.gmra.mxu0 %v4250
      %v5095 = vpop.f32.mrf.mxu0
      %v5096 = vadd.f32 %v5007, %v5095
      %v5097 = vpop.f32.mrf.mxu0
      %v5098 = vadd.f32 %v5009, %v5097
      %5099 = vdwg.mxu0
      %5100 = vmatpush.bf16.msra.mxu0 %v4720
      %5101 = vmatpush.bf16.msra.mxu0 %v4719
      %5102 = vmatpush.bf16.msra.mxu0 %v4718
      %5103 = vmatpush.bf16.msra.mxu0 %v4717
      %5104 = vmatpush.bf16.msra.mxu0 %v4716
      %5105 = vmatpush.bf16.msra.mxu0 %v4715
      %5106 = vmatpush.bf16.msra.mxu0 %v4714
      %5107 = vmatpush.bf16.msra.mxu0 %v4713
      %5108 = vmatmul.bf16.gmra.mxu0 %v4116
      %v5109 = vpop.f32.mrf.mxu0
      %v5110 = vadd.f32 %v5021, %v5109
      %v5111 = vpop.f32.mrf.mxu0
      %v5112 = vadd.f32 %v5023, %v5111
      %5113 = vmatmul.bf16.gmra.mxu0 %v4125
      %v5114 = vpop.f32.mrf.mxu0
      %v5115 = vadd.f32 %v5026, %v5114
      %v5116 = vpop.f32.mrf.mxu0
      %v5117 = vadd.f32 %v5028, %v5116
      %5118 = vmatmul.bf16.gmra.mxu0 %v4134
      %v5119 = vpop.f32.mrf.mxu0
      %v5120 = vadd.f32 %v5031, %v5119
      %v5121 = vpop.f32.mrf.mxu0
      %v5122 = vadd.f32 %v5033, %v5121
      %5123 = vmatmul.bf16.gmra.mxu0 %v4143
      %v5124 = vpop.f32.mrf.mxu0
      %v5125 = vadd.f32 %v5036, %v5124
      %v5126 = vpop.f32.mrf.mxu0
      %v5127 = vadd.f32 %v5038, %v5126
      %5128 = vmatmul.bf16.gmra.mxu0 %v4152
      %v5129 = vpop.f32.mrf.mxu0
      %v5130 = vadd.f32 %v5041, %v5129
      %v5131 = vpop.f32.mrf.mxu0
      %v5132 = vadd.f32 %v5043, %v5131
      %5133 = vmatmul.bf16.gmra.mxu0 %v4161
      %v5134 = vpop.f32.mrf.mxu0
      %v5135 = vadd.f32 %v5046, %v5134
      %v5136 = vpop.f32.mrf.mxu0
      %v5137 = vadd.f32 %v5048, %v5136
      %5138 = vmatmul.bf16.gmra.mxu0 %v4170
      %v5139 = vpop.f32.mrf.mxu0
      %v5140 = vadd.f32 %v5051, %v5139
      %v5141 = vpop.f32.mrf.mxu0
      %v5142 = vadd.f32 %v5053, %v5141
      %5143 = vmatmul.bf16.gmra.mxu0 %v4179
      %v5144 = vpop.f32.mrf.mxu0
      %v5145 = vadd.f32 %v5056, %v5144
      %v5146 = vpop.f32.mrf.mxu0
      %v5147 = vadd.f32 %v5058, %v5146
      %5148 = vmatmul.bf16.gmra.mxu0 %v4188
      %v5149 = vpop.f32.mrf.mxu0
      %v5150 = vadd.f32 %v5061, %v5149
      %v5151 = vpop.f32.mrf.mxu0
      %v5152 = vadd.f32 %v5063, %v5151
      %5153 = vmatmul.bf16.gmra.mxu0 %v4197
      %v5154 = vpop.f32.mrf.mxu0
      %v5155 = vadd.f32 %v5066, %v5154
      %v5156 = vpop.f32.mrf.mxu0
      %v5157 = vadd.f32 %v5068, %v5156
      %5158 = vmatmul.bf16.gmra.mxu0 %v4206
      %v5159 = vpop.f32.mrf.mxu0
      %v5160 = vadd.f32 %v5071, %v5159
      %v5161 = vpop.f32.mrf.mxu0
      %v5162 = vadd.f32 %v5073, %v5161
      %5163 = vmatmul.bf16.gmra.mxu0 %v4215
      %v5164 = vpop.f32.mrf.mxu0
      %v5165 = vadd.f32 %v5076, %v5164
      %v5166 = vpop.f32.mrf.mxu0
      %v5167 = vadd.f32 %v5078, %v5166
      %5168 = vmatmul.bf16.gmra.mxu0 %v4224
      %v5169 = vpop.f32.mrf.mxu0
      %v5170 = vadd.f32 %v5081, %v5169
      %v5171 = vpop.f32.mrf.mxu0
      %v5172 = vadd.f32 %v5083, %v5171
      %5173 = vmatmul.bf16.gmra.mxu0 %v4233
      %v5174 = vpop.f32.mrf.mxu0
      %v5175 = vadd.f32 %v5086, %v5174
      %v5176 = vpop.f32.mrf.mxu0
      %v5177 = vadd.f32 %v5088, %v5176
      %5178 = vmatmul.bf16.gmra.mxu0 %v4242
      %v5179 = vpop.f32.mrf.mxu0
      %v5180 = vadd.f32 %v5091, %v5179
      %v5181 = vpop.f32.mrf.mxu0
      %v5182 = vadd.f32 %v5093, %v5181
      %5183 = vmatmul.bf16.gmra.mxu0 %v4251
      %v5184 = vpop.f32.mrf.mxu0
      %v5185 = vadd.f32 %v5096, %v5184
      %v5186 = vpop.f32.mrf.mxu0
      %v5187 = vadd.f32 %v5098, %v5186
      %5188 = vdwg.mxu0
      %5189 = vmatpush.bf16.msra.mxu0 %v4728
      %5190 = vmatpush.bf16.msra.mxu0 %v4727
      %5191 = vmatpush.bf16.msra.mxu0 %v4726
      %5192 = vmatpush.bf16.msra.mxu0 %v4725
      %5193 = vmatpush.bf16.msra.mxu0 %v4724
      %5194 = vmatpush.bf16.msra.mxu0 %v4723
      %5195 = vmatpush.bf16.msra.mxu0 %v4722
      %5196 = vmatpush.bf16.msra.mxu0 %v4721
      %5197 = vmatmul.bf16.gmra.mxu0 %v4117
      %v5198 = vpop.f32.mrf.mxu0
      %v5199 = vadd.f32 %v5110, %v5198
      %v5200 = vpop.f32.mrf.mxu0
      %v5201 = vadd.f32 %v5112, %v5200
      %5202 = vmatmul.bf16.gmra.mxu0 %v4126
      %v5203 = vpop.f32.mrf.mxu0
      %v5204 = vadd.f32 %v5115, %v5203
      %v5205 = vpop.f32.mrf.mxu0
      %v5206 = vadd.f32 %v5117, %v5205
      %5207 = vmatmul.bf16.gmra.mxu0 %v4135
      %v5208 = vpop.f32.mrf.mxu0
      %v5209 = vadd.f32 %v5120, %v5208
      %v5210 = vpop.f32.mrf.mxu0
      %v5211 = vadd.f32 %v5122, %v5210
      %5212 = vmatmul.bf16.gmra.mxu0 %v4144
      %v5213 = vpop.f32.mrf.mxu0
      %v5214 = vadd.f32 %v5125, %v5213
      %v5215 = vpop.f32.mrf.mxu0
      %v5216 = vadd.f32 %v5127, %v5215
      %5217 = vmatmul.bf16.gmra.mxu0 %v4153
      %v5218 = vpop.f32.mrf.mxu0
      %v5219 = vadd.f32 %v5130, %v5218
      %v5220 = vpop.f32.mrf.mxu0
      %v5221 = vadd.f32 %v5132, %v5220
      %5222 = vmatmul.bf16.gmra.mxu0 %v4162
      %v5223 = vpop.f32.mrf.mxu0
      %v5224 = vadd.f32 %v5135, %v5223
      %v5225 = vpop.f32.mrf.mxu0
      %v5226 = vadd.f32 %v5137, %v5225
      %5227 = vmatmul.bf16.gmra.mxu0 %v4171
      %v5228 = vpop.f32.mrf.mxu0
      %v5229 = vadd.f32 %v5140, %v5228
      %v5230 = vpop.f32.mrf.mxu0
      %v5231 = vadd.f32 %v5142, %v5230
      %5232 = vmatmul.bf16.gmra.mxu0 %v4180
      %v5233 = vpop.f32.mrf.mxu0
      %v5234 = vadd.f32 %v5145, %v5233
      %v5235 = vpop.f32.mrf.mxu0
      %v5236 = vadd.f32 %v5147, %v5235
      %5237 = vmatmul.bf16.gmra.mxu0 %v4189
      %v5238 = vpop.f32.mrf.mxu0
      %v5239 = vadd.f32 %v5150, %v5238
      %v5240 = vpop.f32.mrf.mxu0
      %v5241 = vadd.f32 %v5152, %v5240
      %5242 = vmatmul.bf16.gmra.mxu0 %v4198
      %v5243 = vpop.f32.mrf.mxu0
      %v5244 = vadd.f32 %v5155, %v5243
      %v5245 = vpop.f32.mrf.mxu0
      %v5246 = vadd.f32 %v5157, %v5245
      %5247 = vmatmul.bf16.gmra.mxu0 %v4207
      %v5248 = vpop.f32.mrf.mxu0
      %v5249 = vadd.f32 %v5160, %v5248
      %v5250 = vpop.f32.mrf.mxu0
      %v5251 = vadd.f32 %v5162, %v5250
      %5252 = vmatmul.bf16.gmra.mxu0 %v4216
      %v5253 = vpop.f32.mrf.mxu0
      %v5254 = vadd.f32 %v5165, %v5253
      %v5255 = vpop.f32.mrf.mxu0
      %v5256 = vadd.f32 %v5167, %v5255
      %5257 = vmatmul.bf16.gmra.mxu0 %v4225
      %v5258 = vpop.f32.mrf.mxu0
      %v5259 = vadd.f32 %v5170, %v5258
      %v5260 = vpop.f32.mrf.mxu0
      %v5261 = vadd.f32 %v5172, %v5260
      %5262 = vmatmul.bf16.gmra.mxu0 %v4234
      %v5263 = vpop.f32.mrf.mxu0
      %v5264 = vadd.f32 %v5175, %v5263
      %v5265 = vpop.f32.mrf.mxu0
      %v5266 = vadd.f32 %v5177, %v5265
      %5267 = vmatmul.bf16.gmra.mxu0 %v4243
      %v5268 = vpop.f32.mrf.mxu0
      %v5269 = vadd.f32 %v5180, %v5268
      %v5270 = vpop.f32.mrf.mxu0
      %v5271 = vadd.f32 %v5182, %v5270
      %5272 = vmatmul.bf16.gmra.mxu0 %v4252
      %v5273 = vpop.f32.mrf.mxu0
      %v5274 = vadd.f32 %v5185, %v5273
      %v5275 = vpop.f32.mrf.mxu0
      %v5276 = vadd.f32 %v5187, %v5275
      %5277 = vdwg.mxu0
      %5278 = vmatpush.bf16.msra.mxu0 %v4736
      %5279 = vmatpush.bf16.msra.mxu0 %v4735
      %5280 = vmatpush.bf16.msra.mxu0 %v4734
      %5281 = vmatpush.bf16.msra.mxu0 %v4733
      %5282 = vmatpush.bf16.msra.mxu0 %v4732
      %5283 = vmatpush.bf16.msra.mxu0 %v4731
      %5284 = vmatpush.bf16.msra.mxu0 %v4730
      %5285 = vmatpush.bf16.msra.mxu0 %v4729
      %5286 = vmatmul.bf16.gmra.mxu0 %v4118
      %v5287 = vpop.f32.mrf.mxu0
      %v5288 = vadd.f32 %v5199, %v5287
      %v5289 = vpop.f32.mrf.mxu0
      %v5290 = vadd.f32 %v5201, %v5289
      %5291 = vmatmul.bf16.gmra.mxu0 %v4127
      %v5292 = vpop.f32.mrf.mxu0
      %v5293 = vadd.f32 %v5204, %v5292
      %v5294 = vpop.f32.mrf.mxu0
      %v5295 = vadd.f32 %v5206, %v5294
      %5296 = vmatmul.bf16.gmra.mxu0 %v4136
      %v5297 = vpop.f32.mrf.mxu0
      %v5298 = vadd.f32 %v5209, %v5297
      %v5299 = vpop.f32.mrf.mxu0
      %v5300 = vadd.f32 %v5211, %v5299
      %5301 = vmatmul.bf16.gmra.mxu0 %v4145
      %v5302 = vpop.f32.mrf.mxu0
      %v5303 = vadd.f32 %v5214, %v5302
      %v5304 = vpop.f32.mrf.mxu0
      %v5305 = vadd.f32 %v5216, %v5304
      %5306 = vmatmul.bf16.gmra.mxu0 %v4154
      %v5307 = vpop.f32.mrf.mxu0
      %v5308 = vadd.f32 %v5219, %v5307
      %v5309 = vpop.f32.mrf.mxu0
      %v5310 = vadd.f32 %v5221, %v5309
      %5311 = vmatmul.bf16.gmra.mxu0 %v4163
      %v5312 = vpop.f32.mrf.mxu0
      %v5313 = vadd.f32 %v5224, %v5312
      %v5314 = vpop.f32.mrf.mxu0
      %v5315 = vadd.f32 %v5226, %v5314
      %5316 = vmatmul.bf16.gmra.mxu0 %v4172
      %v5317 = vpop.f32.mrf.mxu0
      %v5318 = vadd.f32 %v5229, %v5317
      %v5319 = vpop.f32.mrf.mxu0
      %v5320 = vadd.f32 %v5231, %v5319
      %5321 = vmatmul.bf16.gmra.mxu0 %v4181
      %v5322 = vpop.f32.mrf.mxu0
      %v5323 = vadd.f32 %v5234, %v5322
      %v5324 = vpop.f32.mrf.mxu0
      %v5325 = vadd.f32 %v5236, %v5324
      %5326 = vmatmul.bf16.gmra.mxu0 %v4190
      %v5327 = vpop.f32.mrf.mxu0
      %v5328 = vadd.f32 %v5239, %v5327
      %v5329 = vpop.f32.mrf.mxu0
      %v5330 = vadd.f32 %v5241, %v5329
      %5331 = vmatmul.bf16.gmra.mxu0 %v4199
      %v5332 = vpop.f32.mrf.mxu0
      %v5333 = vadd.f32 %v5244, %v5332
      %v5334 = vpop.f32.mrf.mxu0
      %v5335 = vadd.f32 %v5246, %v5334
      %5336 = vmatmul.bf16.gmra.mxu0 %v4208
      %v5337 = vpop.f32.mrf.mxu0
      %v5338 = vadd.f32 %v5249, %v5337
      %v5339 = vpop.f32.mrf.mxu0
      %v5340 = vadd.f32 %v5251, %v5339
      %5341 = vmatmul.bf16.gmra.mxu0 %v4217
      %v5342 = vpop.f32.mrf.mxu0
      %v5343 = vadd.f32 %v5254, %v5342
      %v5344 = vpop.f32.mrf.mxu0
      %v5345 = vadd.f32 %v5256, %v5344
      %5346 = vmatmul.bf16.gmra.mxu0 %v4226
      %v5347 = vpop.f32.mrf.mxu0
      %v5348 = vadd.f32 %v5259, %v5347
      %v5349 = vpop.f32.mrf.mxu0
      %v5350 = vadd.f32 %v5261, %v5349
      %5351 = vmatmul.bf16.gmra.mxu0 %v4235
      %v5352 = vpop.f32.mrf.mxu0
      %v5353 = vadd.f32 %v5264, %v5352
      %v5354 = vpop.f32.mrf.mxu0
      %v5355 = vadd.f32 %v5266, %v5354
      %5356 = vmatmul.bf16.gmra.mxu0 %v4244
      %v5357 = vpop.f32.mrf.mxu0
      %v5358 = vadd.f32 %v5269, %v5357
      %v5359 = vpop.f32.mrf.mxu0
      %v5360 = vadd.f32 %v5271, %v5359
      %5361 = vmatmul.bf16.gmra.mxu0 %v4253
      %v5362 = vpop.f32.mrf.mxu0
      %v5363 = vadd.f32 %v5274, %v5362
      %v5364 = vpop.f32.mrf.mxu0
      %v5365 = vadd.f32 %v5276, %v5364
      %5366 = vdwg.mxu0
      %5367 = vmatpush.bf16.msra.mxu0 %v4744
      %5368 = vmatpush.bf16.msra.mxu0 %v4743
      %5369 = vmatpush.bf16.msra.mxu0 %v4742
      %5370 = vmatpush.bf16.msra.mxu0 %v4741
      %5371 = vmatpush.bf16.msra.mxu0 %v4740
      %5372 = vmatpush.bf16.msra.mxu0 %v4739
      %5373 = vmatpush.bf16.msra.mxu0 %v4738
      %5374 = vmatpush.bf16.msra.mxu0 %v4737
      %5375 = vmatmul.bf16.gmra.mxu0 %v4119
      %v5376 = vpop.f32.mrf.mxu0
      %v5377 = vadd.f32 %v5288, %v5376
      %v5378 = vpop.f32.mrf.mxu0
      %v5379 = vadd.f32 %v5290, %v5378
      %5380 = vmatmul.bf16.gmra.mxu0 %v4128
      %v5381 = vpop.f32.mrf.mxu0
      %v5382 = vadd.f32 %v5293, %v5381
      %v5383 = vpop.f32.mrf.mxu0
      %v5384 = vadd.f32 %v5295, %v5383
      %5385 = vmatmul.bf16.gmra.mxu0 %v4137
      %v5386 = vpop.f32.mrf.mxu0
      %v5387 = vadd.f32 %v5298, %v5386
      %v5388 = vpop.f32.mrf.mxu0
      %v5389 = vadd.f32 %v5300, %v5388
      %5390 = vmatmul.bf16.gmra.mxu0 %v4146
      %v5391 = vpop.f32.mrf.mxu0
      %v5392 = vadd.f32 %v5303, %v5391
      %v5393 = vpop.f32.mrf.mxu0
      %v5394 = vadd.f32 %v5305, %v5393
      %5395 = vmatmul.bf16.gmra.mxu0 %v4155
      %v5396 = vpop.f32.mrf.mxu0
      %v5397 = vadd.f32 %v5308, %v5396
      %v5398 = vpop.f32.mrf.mxu0
      %v5399 = vadd.f32 %v5310, %v5398
      %5400 = vmatmul.bf16.gmra.mxu0 %v4164
      %v5401 = vpop.f32.mrf.mxu0
      %v5402 = vadd.f32 %v5313, %v5401
      %v5403 = vpop.f32.mrf.mxu0
      %v5404 = vadd.f32 %v5315, %v5403
      %5405 = vmatmul.bf16.gmra.mxu0 %v4173
      %v5406 = vpop.f32.mrf.mxu0
      %v5407 = vadd.f32 %v5318, %v5406
      %v5408 = vpop.f32.mrf.mxu0
      %v5409 = vadd.f32 %v5320, %v5408
      %5410 = vmatmul.bf16.gmra.mxu0 %v4182
      %v5411 = vpop.f32.mrf.mxu0
      %v5412 = vadd.f32 %v5323, %v5411
      %v5413 = vpop.f32.mrf.mxu0
      %v5414 = vadd.f32 %v5325, %v5413
      %5415 = vmatmul.bf16.gmra.mxu0 %v4191
      %v5416 = vpop.f32.mrf.mxu0
      %v5417 = vadd.f32 %v5328, %v5416
      %v5418 = vpop.f32.mrf.mxu0
      %v5419 = vadd.f32 %v5330, %v5418
      %5420 = vmatmul.bf16.gmra.mxu0 %v4200
      %v5421 = vpop.f32.mrf.mxu0
      %v5422 = vadd.f32 %v5333, %v5421
      %v5423 = vpop.f32.mrf.mxu0
      %v5424 = vadd.f32 %v5335, %v5423
      %5425 = vmatmul.bf16.gmra.mxu0 %v4209
      %v5426 = vpop.f32.mrf.mxu0
      %v5427 = vadd.f32 %v5338, %v5426
      %v5428 = vpop.f32.mrf.mxu0
      %v5429 = vadd.f32 %v5340, %v5428
      %5430 = vmatmul.bf16.gmra.mxu0 %v4218
      %v5431 = vpop.f32.mrf.mxu0
      %v5432 = vadd.f32 %v5343, %v5431
      %v5433 = vpop.f32.mrf.mxu0
      %v5434 = vadd.f32 %v5345, %v5433
      %5435 = vmatmul.bf16.gmra.mxu0 %v4227
      %v5436 = vpop.f32.mrf.mxu0
      %v5437 = vadd.f32 %v5348, %v5436
      %v5438 = vpop.f32.mrf.mxu0
      %v5439 = vadd.f32 %v5350, %v5438
      %5440 = vmatmul.bf16.gmra.mxu0 %v4236
      %v5441 = vpop.f32.mrf.mxu0
      %v5442 = vadd.f32 %v5353, %v5441
      %v5443 = vpop.f32.mrf.mxu0
      %v5444 = vadd.f32 %v5355, %v5443
      %5445 = vmatmul.bf16.gmra.mxu0 %v4245
      %v5446 = vpop.f32.mrf.mxu0
      %v5447 = vadd.f32 %v5358, %v5446
      %v5448 = vpop.f32.mrf.mxu0
      %v5449 = vadd.f32 %v5360, %v5448
      %5450 = vmatmul.bf16.gmra.mxu0 %v4254
      %v5451 = vpop.f32.mrf.mxu0
      %v5452 = vadd.f32 %v5363, %v5451
      %v5453 = vpop.f32.mrf.mxu0
      %v5454 = vadd.f32 %v5365, %v5453
      %5455 = vdwg.mxu0
      %5456 = vmatpush.bf16.msra.mxu0 %v4752
      %5457 = vmatpush.bf16.msra.mxu0 %v4751
      %5458 = vmatpush.bf16.msra.mxu0 %v4750
      %5459 = vmatpush.bf16.msra.mxu0 %v4749
      %5460 = vmatpush.bf16.msra.mxu0 %v4748
      %5461 = vmatpush.bf16.msra.mxu0 %v4747
      %5462 = vmatpush.bf16.msra.mxu0 %v4746
      %5463 = vmatpush.bf16.msra.mxu0 %v4745
      %5464 = vmatmul.bf16.gmra.mxu0 %v4120
      %v5465 = vpop.f32.mrf.mxu0
      %v5466 = vadd.f32 %v5377, %v5465
      %v5467 = vpop.f32.mrf.mxu0
      %v5468 = vadd.f32 %v5379, %v5467
      %5469 = vmatmul.bf16.gmra.mxu0 %v4129
      %v5470 = vpop.f32.mrf.mxu0
      %v5471 = vadd.f32 %v5382, %v5470
      %v5472 = vpop.f32.mrf.mxu0
      %v5473 = vadd.f32 %v5384, %v5472
      %5474 = vmatmul.bf16.gmra.mxu0 %v4138
      %v5475 = vpop.f32.mrf.mxu0
      %v5476 = vadd.f32 %v5387, %v5475
      %v5477 = vpop.f32.mrf.mxu0
      %v5478 = vadd.f32 %v5389, %v5477
      %5479 = vmatmul.bf16.gmra.mxu0 %v4147
      %v5480 = vpop.f32.mrf.mxu0
      %v5481 = vadd.f32 %v5392, %v5480
      %v5482 = vpop.f32.mrf.mxu0
      %v5483 = vadd.f32 %v5394, %v5482
      %5484 = vmatmul.bf16.gmra.mxu0 %v4156
      %v5485 = vpop.f32.mrf.mxu0
      %v5486 = vadd.f32 %v5397, %v5485
      %v5487 = vpop.f32.mrf.mxu0
      %v5488 = vadd.f32 %v5399, %v5487
      %5489 = vmatmul.bf16.gmra.mxu0 %v4165
      %v5490 = vpop.f32.mrf.mxu0
      %v5491 = vadd.f32 %v5402, %v5490
      %v5492 = vpop.f32.mrf.mxu0
      %v5493 = vadd.f32 %v5404, %v5492
      %5494 = vmatmul.bf16.gmra.mxu0 %v4174
      %v5495 = vpop.f32.mrf.mxu0
      %v5496 = vadd.f32 %v5407, %v5495
      %v5497 = vpop.f32.mrf.mxu0
      %v5498 = vadd.f32 %v5409, %v5497
      %5499 = vmatmul.bf16.gmra.mxu0 %v4183
      %v5500 = vpop.f32.mrf.mxu0
      %v5501 = vadd.f32 %v5412, %v5500
      %v5502 = vpop.f32.mrf.mxu0
      %v5503 = vadd.f32 %v5414, %v5502
      %5504 = vmatmul.bf16.gmra.mxu0 %v4192
      %v5505 = vpop.f32.mrf.mxu0
      %v5506 = vadd.f32 %v5417, %v5505
      %v5507 = vpop.f32.mrf.mxu0
      %v5508 = vadd.f32 %v5419, %v5507
      %5509 = vmatmul.bf16.gmra.mxu0 %v4201
      %v5510 = vpop.f32.mrf.mxu0
      %v5511 = vadd.f32 %v5422, %v5510
      %v5512 = vpop.f32.mrf.mxu0
      %v5513 = vadd.f32 %v5424, %v5512
      %5514 = vmatmul.bf16.gmra.mxu0 %v4210
      %v5515 = vpop.f32.mrf.mxu0
      %v5516 = vadd.f32 %v5427, %v5515
      %v5517 = vpop.f32.mrf.mxu0
      %v5518 = vadd.f32 %v5429, %v5517
      %5519 = vmatmul.bf16.gmra.mxu0 %v4219
      %v5520 = vpop.f32.mrf.mxu0
      %v5521 = vadd.f32 %v5432, %v5520
      %v5522 = vpop.f32.mrf.mxu0
      %v5523 = vadd.f32 %v5434, %v5522
      %5524 = vmatmul.bf16.gmra.mxu0 %v4228
      %v5525 = vpop.f32.mrf.mxu0
      %v5526 = vadd.f32 %v5437, %v5525
      %v5527 = vpop.f32.mrf.mxu0
      %v5528 = vadd.f32 %v5439, %v5527
      %5529 = vmatmul.bf16.gmra.mxu0 %v4237
      %v5530 = vpop.f32.mrf.mxu0
      %v5531 = vadd.f32 %v5442, %v5530
      %v5532 = vpop.f32.mrf.mxu0
      %v5533 = vadd.f32 %v5444, %v5532
      %5534 = vmatmul.bf16.gmra.mxu0 %v4246
      %v5535 = vpop.f32.mrf.mxu0
      %v5536 = vadd.f32 %v5447, %v5535
      %v5537 = vpop.f32.mrf.mxu0
      %v5538 = vadd.f32 %v5449, %v5537
      %5539 = vmatmul.bf16.gmra.mxu0 %v4255
      %v5540 = vpop.f32.mrf.mxu0
      %v5541 = vadd.f32 %v5452, %v5540
      %v5542 = vpop.f32.mrf.mxu0
      %v5543 = vadd.f32 %v5454, %v5542
      %5544 = vdwg.mxu0
      %5545 = vmatpush.bf16.msra.mxu0 %v4760
      %5546 = vmatpush.bf16.msra.mxu0 %v4759
      %5547 = vmatpush.bf16.msra.mxu0 %v4758
      %5548 = vmatpush.bf16.msra.mxu0 %v4757
      %5549 = vmatpush.bf16.msra.mxu0 %v4756
      %5550 = vmatpush.bf16.msra.mxu0 %v4755
      %5551 = vmatpush.bf16.msra.mxu0 %v4754
      %5552 = vmatpush.bf16.msra.mxu0 %v4753
      %5553 = vmatmul.bf16.gmra.mxu0 %v4121
      %v5554 = vpop.f32.mrf.mxu0
      %v5555 = vadd.f32 %v5466, %v5554
      %v5556 = vpop.f32.mrf.mxu0
      %v5557 = vadd.f32 %v5468, %v5556
      %5558 = vmatmul.bf16.gmra.mxu0 %v4130
      %v5559 = vpop.f32.mrf.mxu0
      %v5560 = vadd.f32 %v5471, %v5559
      %v5561 = vpop.f32.mrf.mxu0
      %v5562 = vadd.f32 %v5473, %v5561
      %5563 = vmatmul.bf16.gmra.mxu0 %v4139
      %v5564 = vpop.f32.mrf.mxu0
      %v5565 = vadd.f32 %v5476, %v5564
      %v5566 = vpop.f32.mrf.mxu0
      %v5567 = vadd.f32 %v5478, %v5566
      %5568 = vmatmul.bf16.gmra.mxu0 %v4148
      %v5569 = vpop.f32.mrf.mxu0
      %v5570 = vadd.f32 %v5481, %v5569
      %v5571 = vpop.f32.mrf.mxu0
      %v5572 = vadd.f32 %v5483, %v5571
      %5573 = vmatmul.bf16.gmra.mxu0 %v4157
      %v5574 = vpop.f32.mrf.mxu0
      %v5575 = vadd.f32 %v5486, %v5574
      %v5576 = vpop.f32.mrf.mxu0
      %v5577 = vadd.f32 %v5488, %v5576
      %5578 = vmatmul.bf16.gmra.mxu0 %v4166
      %v5579 = vpop.f32.mrf.mxu0
      %v5580 = vadd.f32 %v5491, %v5579
      %v5581 = vpop.f32.mrf.mxu0
      %v5582 = vadd.f32 %v5493, %v5581
      %5583 = vmatmul.bf16.gmra.mxu0 %v4175
      %v5584 = vpop.f32.mrf.mxu0
      %v5585 = vadd.f32 %v5496, %v5584
      %v5586 = vpop.f32.mrf.mxu0
      %v5587 = vadd.f32 %v5498, %v5586
      %5588 = vmatmul.bf16.gmra.mxu0 %v4184
      %v5589 = vpop.f32.mrf.mxu0
      %v5590 = vadd.f32 %v5501, %v5589
      %v5591 = vpop.f32.mrf.mxu0
      %v5592 = vadd.f32 %v5503, %v5591
      %5593 = vmatmul.bf16.gmra.mxu0 %v4193
      %v5594 = vpop.f32.mrf.mxu0
      %v5595 = vadd.f32 %v5506, %v5594
      %v5596 = vpop.f32.mrf.mxu0
      %v5597 = vadd.f32 %v5508, %v5596
      %5598 = vmatmul.bf16.gmra.mxu0 %v4202
      %v5599 = vpop.f32.mrf.mxu0
      %v5600 = vadd.f32 %v5511, %v5599
      %v5601 = vpop.f32.mrf.mxu0
      %v5602 = vadd.f32 %v5513, %v5601
      %5603 = vmatmul.bf16.gmra.mxu0 %v4211
      %v5604 = vpop.f32.mrf.mxu0
      %v5605 = vadd.f32 %v5516, %v5604
      %v5606 = vpop.f32.mrf.mxu0
      %v5607 = vadd.f32 %v5518, %v5606
      %5608 = vmatmul.bf16.gmra.mxu0 %v4220
      %v5609 = vpop.f32.mrf.mxu0
      %v5610 = vadd.f32 %v5521, %v5609
      %v5611 = vpop.f32.mrf.mxu0
      %v5612 = vadd.f32 %v5523, %v5611
      %5613 = vmatmul.bf16.gmra.mxu0 %v4229
      %v5614 = vpop.f32.mrf.mxu0
      %v5615 = vadd.f32 %v5526, %v5614
      %v5616 = vpop.f32.mrf.mxu0
      %v5617 = vadd.f32 %v5528, %v5616
      %5618 = vmatmul.bf16.gmra.mxu0 %v4238
      %v5619 = vpop.f32.mrf.mxu0
      %v5620 = vadd.f32 %v5531, %v5619
      %v5621 = vpop.f32.mrf.mxu0
      %v5622 = vadd.f32 %v5533, %v5621
      %5623 = vmatmul.bf16.gmra.mxu0 %v4247
      %v5624 = vpop.f32.mrf.mxu0
      %v5625 = vadd.f32 %v5536, %v5624
      %v5626 = vpop.f32.mrf.mxu0
      %v5627 = vadd.f32 %v5538, %v5626
      %5628 = vmatmul.bf16.gmra.mxu0 %v4256
      %v5629 = vpop.f32.mrf.mxu0
      %v5630 = vadd.f32 %v5541, %v5629
      %v5631 = vpop.f32.mrf.mxu0
      %v5632 = vadd.f32 %v5543, %v5631
      %5633 = vdwg.mxu0
      %v5634 = vadd.f32 %v5555, %v5557
      %v5635 = vadd.f32 %v5634, %v5560
      %v5636 = vadd.f32 %v5635, %v5562
      %v5637 = vadd.f32 %v5636, %v5565
      %v5638 = vadd.f32 %v5637, %v5567
      %v5639 = vadd.f32 %v5638, %v5570
      %v5640 = vadd.f32 %v5639, %v5572
      %v5641 = vadd.f32 %v5640, %v5575
      %v5642 = vadd.f32 %v5641, %v5577
      %v5643 = vadd.f32 %v5642, %v5580
      %v5644 = vadd.f32 %v5643, %v5582
      %v5645 = vadd.f32 %v5644, %v5585
      %v5646 = vadd.f32 %v5645, %v5587
      %v5647 = vadd.f32 %v5646, %v5590
      %v5648 = vadd.f32 %v5647, %v5592
      %v5649 = vadd.f32 %v5648, %v5595
      %v5650 = vadd.f32 %v5649, %v5597
      %v5651 = vadd.f32 %v5650, %v5600
      %v5652 = vadd.f32 %v5651, %v5602
      %v5653 = vadd.f32 %v5652, %v5605
      %v5654 = vadd.f32 %v5653, %v5607
      %v5655 = vadd.f32 %v5654, %v5610
      %v5656 = vadd.f32 %v5655, %v5612
      %v5657 = vadd.f32 %v5656, %v5615
      %v5658 = vadd.f32 %v5657, %v5617
      %v5659 = vadd.f32 %v5658, %v5620
      %v5660 = vadd.f32 %v5659, %v5622
      %v5661 = vadd.f32 %v5660, %v5625
      %v5662 = vadd.f32 %v5661, %v5627
      %v5663 = vadd.f32 %v5662, %v5630
      %v5664 = vadd.f32 %v5663, %v5632
      %v5665 = vrot.slane %v5664, 4
      %v5666 = vadd.f32 %v5664, %v5665
      %v5667 = vrot.slane %v5666, 2
      %v5668 = vadd.f32 %v5666, %v5667
      %v5669 = vrot.slane %v5668, 1
      %v5670 = vadd.f32 %v5668, %v5669
      %5671 = vst [vmem:[%s235] sm:$0x1] %v5670
      %v5672 = vmul.f32 %v5555, %v5555
      %v5673 = vmul.f32 %v5557, %v5557
      %v5674 = vmul.f32 %v5560, %v5560
      %v5675 = vmul.f32 %v5562, %v5562
      %v5676 = vmul.f32 %v5565, %v5565
      %v5677 = vmul.f32 %v5567, %v5567
      %v5678 = vmul.f32 %v5570, %v5570
      %v5679 = vmul.f32 %v5572, %v5572
      %v5680 = vmul.f32 %v5575, %v5575
      %v5681 = vmul.f32 %v5577, %v5577
      %v5682 = vmul.f32 %v5580, %v5580
      %v5683 = vmul.f32 %v5582, %v5582
      %v5684 = vmul.f32 %v5585, %v5585
      %v5685 = vmul.f32 %v5587, %v5587
      %v5686 = vmul.f32 %v5590, %v5590
      %v5687 = vmul.f32 %v5592, %v5592
      %v5688 = vmul.f32 %v5595, %v5595
      %v5689 = vmul.f32 %v5597, %v5597
      %v5690 = vmul.f32 %v5600, %v5600
      %v5691 = vmul.f32 %v5602, %v5602
      %v5692 = vmul.f32 %v5605, %v5605
      %v5693 = vmul.f32 %v5607, %v5607
      %v5694 = vmul.f32 %v5610, %v5610
      %v5695 = vmul.f32 %v5612, %v5612
      %v5696 = vmul.f32 %v5615, %v5615
      %v5697 = vmul.f32 %v5617, %v5617
      %v5698 = vmul.f32 %v5620, %v5620
      %v5699 = vmul.f32 %v5622, %v5622
      %v5700 = vmul.f32 %v5625, %v5625
      %v5701 = vmul.f32 %v5627, %v5627
      %v5702 = vmul.f32 %v5630, %v5630
      %v5703 = vmul.f32 %v5632, %v5632
      %v5704 = vadd.f32 %v5672, %v5673
      %v5705 = vadd.f32 %v5704, %v5674
      %v5706 = vadd.f32 %v5705, %v5675
      %v5707 = vadd.f32 %v5706, %v5676
      %v5708 = vadd.f32 %v5707, %v5677
      %v5709 = vadd.f32 %v5708, %v5678
      %v5710 = vadd.f32 %v5709, %v5679
      %v5711 = vadd.f32 %v5710, %v5680
      %v5712 = vadd.f32 %v5711, %v5681
      %v5713 = vadd.f32 %v5712, %v5682
      %v5714 = vadd.f32 %v5713, %v5683
      %v5715 = vadd.f32 %v5714, %v5684
      %v5716 = vadd.f32 %v5715, %v5685
      %v5717 = vadd.f32 %v5716, %v5686
      %v5718 = vadd.f32 %v5717, %v5687
      %v5719 = vadd.f32 %v5718, %v5688
      %v5720 = vadd.f32 %v5719, %v5689
      %v5721 = vadd.f32 %v5720, %v5690
      %v5722 = vadd.f32 %v5721, %v5691
      %v5723 = vadd.f32 %v5722, %v5692
      %v5724 = vadd.f32 %v5723, %v5693
      %v5725 = vadd.f32 %v5724, %v5694
      %v5726 = vadd.f32 %v5725, %v5695
      %v5727 = vadd.f32 %v5726, %v5696
      %v5728 = vadd.f32 %v5727, %v5697
      %v5729 = vadd.f32 %v5728, %v5698
      %v5730 = vadd.f32 %v5729, %v5699
      %v5731 = vadd.f32 %v5730, %v5700
      %v5732 = vadd.f32 %v5731, %v5701
      %v5733 = vadd.f32 %v5732, %v5702
      %v5734 = vadd.f32 %v5733, %v5703
      %v5735 = vrot.slane %v5734, 4
      %v5736 = vadd.f32 %v5734, %v5735
      %v5737 = vrot.slane %v5736, 2
      %v5738 = vadd.f32 %v5736, %v5737
      %v5739 = vrot.slane %v5738, 1
      %v5740 = vadd.f32 %v5738, %v5739
      %5741 = vst [vmem:[%s235 + $0x1] sm:$0x1] %v5740
      %5742 = vst [vmem:[%s231] sm:$0xff] %v5555
      %5743 = vst [vmem:[%s231 + $0x8] sm:$0xff] %v5557
      %5744 = vst [vmem:[%s231 + $0x10] sm:$0xff] %v5560
      %5745 = vst [vmem:[%s231 + $0x18] sm:$0xff] %v5562
      %5746 = vst [vmem:[%s231 + $0x20] sm:$0xff] %v5565
      %5747 = vst [vmem:[%s231 + $0x28] sm:$0xff] %v5567
      %5748 = vst [vmem:[%s231 + $0x30] sm:$0xff] %v5570
      %5749 = vst [vmem:[%s231 + $0x38] sm:$0xff] %v5572
      %5750 = vst [vmem:[%s231 + $0x40] sm:$0xff] %v5575
      %5751 = vst [vmem:[%s231 + $0x48] sm:$0xff] %v5577
      %5752 = vst [vmem:[%s231 + $0x50] sm:$0xff] %v5580
      %5753 = vst [vmem:[%s231 + $0x58] sm:$0xff] %v5582
      %5754 = vst [vmem:[%s231 + $0x60] sm:$0xff] %v5585
      %5755 = vst [vmem:[%s231 + $0x68] sm:$0xff] %v5587
      %5756 = vst [vmem:[%s231 + $0x70] sm:$0xff] %v5590
      %5757 = vst [vmem:[%s231 + $0x78] sm:$0xff] %v5592
      %5758 = vst [vmem:[%s231 + $0x80] sm:$0xff] %v5595
      %5759 = vst [vmem:[%s231 + $0x88] sm:$0xff] %v5597
      %5760 = vst [vmem:[%s231 + $0x90] sm:$0xff] %v5600
      %5761 = vst [vmem:[%s231 + $0x98] sm:$0xff] %v5602
      %5762 = vst [vmem:[%s231 + $0xa0] sm:$0xff] %v5605
      %5763 = vst [vmem:[%s231 + $0xa8] sm:$0xff] %v5607
      %5764 = vst [vmem:[%s231 + $0xb0] sm:$0xff] %v5610
      %5765 = vst [vmem:[%s231 + $0xb8] sm:$0xff] %v5612
      %5766 = vst [vmem:[%s231 + $0xc0] sm:$0xff] %v5615
      %5767 = vst [vmem:[%s231 + $0xc8] sm:$0xff] %v5617
      %5768 = vst [vmem:[%s231 + $0xd0] sm:$0xff] %v5620
      %5769 = vst [vmem:[%s231 + $0xd8] sm:$0xff] %v5622
      %5770 = vst [vmem:[%s231 + $0xe0] sm:$0xff] %v5625
      %5771 = vst [vmem:[%s231 + $0xe8] sm:$0xff] %v5627
      %5772 = vst [vmem:[%s231 + $0xf0] sm:$0xff] %v5630
      %5773 = vst [vmem:[%s231 + $0xf8] sm:$0xff] %v5632
      %p5774 = scmp.lt.s32.totalorder %s17, 1
      %s5775 = scalar_select %p5774, %s17, 1
      %s5776 = smul.addr %s5775, 32
      %s5777 = smul.addr %s5776, 8
      %s5778 = scalar_lea.vmem %s4, %s5777
      %p5779 = scmp.lt.s32.totalorder %s17, 1
      %s5780 = scalar_select %p5779, %s17, 1
      %s5781 = smul.addr %s5780, 2
      %s5782 = scalar_lea.vmem %s5, %s5781
      // Predicated region
      $region37: #{basic_block.3} parent=35 // pred_check
        %p5783 = pneg %p124
      $region38: #{basic_block.3} parent=35 // pred_check_branch
        %5785 = sbr.rel (%p5783) target = $region40
      $region39: #{basic_block.3} parent=35 // pred_region
        _
      $region40: #{basic_block.3} parent=35 // pred_fallthru
        _
      // Predicated region
      $region41: #{basic_block.3} parent=35 // pred_check
        %p5786 = pneg %p150
      $region42: #{basic_block.3} parent=35 // pred_check_branch
        %5788 = sbr.rel (%p5786) target = $region44
      $region43: #{basic_block.3} parent=35 // pred_region
        _
      $region44: #{basic_block.3} parent=35 // pred_fallthru
        _
    $region36: #{basic_block.3} parent=5 // pred_fallthru
      _
    %p5789 = scmp.le.s32.totalorder 2, %s12
    // Predicated region
    $region45: #{basic_block.3} parent=5 // pred_check
      %p5790 = pneg %p5789
    $region46: #{basic_block.3} parent=5 // pred_check_branch
      %5792 = sbr.rel (%p5790) target = $region48
    $region47: #{basic_block.3} parent=5 // pred_region
      %s5793 = ssub.s32 %s12, 2
      // Predicated region
      $region49: #{basic_block.3} parent=47 // pred_check
        %p5794 = pneg %p130
      $region50: #{basic_block.3} parent=47 // pred_check_branch
        %5796 = sbr.rel (%p5794) target = $region52
      $region51: #{basic_block.3} parent=47 // pred_region
        %p5797 = scmp.lt.s32.totalorder %s18, 1
        %s5798 = scalar_select %p5797, %s18, 1
        %s5799 = smul.addr %s5798, 32
        %s5800 = smul.addr %s5799, 8
        %s5801 = scalar_lea.vmem %s4, %s5800
      $region52: #{basic_block.3} parent=47 // pred_fallthru
        _
      // Predicated region
      $region53: #{basic_block.3} parent=47 // pred_check
        %p5802 = pneg %p156
      $region54: #{basic_block.3} parent=47 // pred_check_branch
        %5804 = sbr.rel (%p5802) target = $region56
      $region55: #{basic_block.3} parent=47 // pred_region
        %p5805 = scmp.lt.s32.totalorder %s18, 1
        %s5806 = scalar_select %p5805, %s18, 1
        %s5807 = smul.addr %s5806, 2
        %s5808 = scalar_lea.vmem %s5, %s5807
      $region56: #{basic_block.3} parent=47 // pred_fallthru
        _
    $region48: #{basic_block.3} parent=5 // pred_fallthru
      _
  $region6: #{basic_block.3} parent=0 // loop_footer
    %s16 = sadd.s32 1, %s12
  $region7: #{basic_block.3} parent=0 // loop_footer_branch
    %11 = sbr.rel target = $region3
  $region8: #{basic_block.3} parent=0 // loop_exit
    _

// kernel: basic_block.4
$region0: #{basic_block.4}
  #allocation0 [shape = 'u32[]', space=smem, size = 0x4, offset = 0x4, fixed_abs, tag = 'smem constant byte address 0x4 - core index']
  #allocation1 [shape = 'u32[72,128]{1,0:T(1,128)}', space=vmem, size = 0x9000, scoped, tag = 'internal scratch']
  #allocation2 [shape = 'bf16[18,18,128]{2,1,0:T(8,128)(2,1)}', space=vmem, size = 0x1b000, scoped, tag = 'scratch operand']
  #allocation3 [shape = 'bf16[256,1152]{1,0:T(8,128)(2,1)}', space=vmem, size = 0x90000, scoped, tag = 'scratch operand']
  %s0 = inlined_call_operand.vmem [shape: f32[2,16,16,128], index: 0, kind: input, shape index: {}]
  %s1 = inlined_call_operand.vmem [shape: bf16[1152,128], index: 1, kind: input, shape index: {}]
  %s2 = inlined_call_operand.vmem [shape: f32[1,128], index: 2, kind: input, shape index: {}]
  %s3 = inlined_call_operand.vmem [shape: f32[1,128], index: 3, kind: input, shape index: {}]
  %s4 = inlined_call_operand.vmem [shape: f32[2,16,16,128], index: 4, kind: output, shape index: {0}]
  %s5 = inlined_call_operand.vmem [shape: f32[2,2,128], index: 5, kind: output, shape index: {1}]
  %6 = xla_tuple %s4, %s5
  %s7 = sld [smem:[#allocation0]]
  $region57: #{basic_block.4} parent=0
    _
  %s9 = ssub.s32 1, %s7
  %s10 = scalar_select 0, %s9, %s7
  loop: start=0, step=1, limit=4
  $region2: #{basic_block.4} parent=0 // loop_pre_header
    _
  $region3: #{basic_block.4} parent=0 // loop_header
    %s12 = sphi 0, %s16
    %p13 = scmp.ge.s32.totalorder %s12, 4
    %s22 = sphi 0, %s24
    %s25 = sphi 0, %s22
    %s26 = sphi 0, %s25
    %s42 = sphi 0, %s26
    %s46 = sphi 0, %s46
    %s48 = sphi 0, %s46
    %s49 = sphi 0, %s48
    %s63 = sphi 0, %s49
    %s67 = sphi 0, %s67
    %s69 = sphi 0, %s67
    %s70 = sphi 0, %s69
    %s84 = sphi 0, %s70
    %s88 = sphi 0, %s88
    %s90 = sphi 0, %s88
    %s91 = sphi 0, %s90
    %s105 = sphi 0, %s91
    %s111 = sphi 0, %s113
    %s114 = sphi 0, %s111
    %s115 = sphi 0, %s114
    %s131 = sphi 0, %s115
    %s137 = sphi 0, %s139
    %s140 = sphi 0, %s137
    %s141 = sphi 0, %s140
    %s157 = sphi 0, %s141
  $region4: #{basic_block.4} parent=0 // loop_header_branch
    %15 = sbr.rel (%p13) target = $region8
  $region5: #{basic_block.4} parent=0 // loop_body
    %s17 = ssub.s32 %s12, 1
    %s18 = ssub.s32 %s12, 2
    %s19 = sadd.s32 %s12, 1
    %s20 = ssub.s32 %s12, %s19
    %p21 = scmp.eq.s32.totalorder %s20, 0
    %s23 = sadd.s32 %s22, 1
    %s24 = scalar_select %p21, %s22, %s23
    %p27 = pneg %p21
    %p28 = scmp.eq.s32.totalorder %s12, 1
    %p29 = por %p27, %p28
    %p30 = scmp.ne.s32.totalorder %s22, %s25
    %p31 = scmp.eq.s32.totalorder %s12, 0
    %p32 = por %p30, %p31
    %p33 = scmp.ne.s32.totalorder %s22, %s25
    %p34 = scmp.eq.s32.totalorder %s17, 1
    %p35 = por %p33, %p34
    %p36 = scmp.ne.s32.totalorder %s25, %s26
    %p37 = scmp.eq.s32.totalorder %s17, 0
    %p38 = por %p36, %p37
    %p39 = scmp.ne.s32.totalorder %s25, %s26
    %p40 = scmp.eq.s32.totalorder %s18, 1
    %p41 = por %p39, %p40
    %p43 = scmp.ne.s32.totalorder %s26, %s42
    %p44 = scmp.eq.s32.totalorder %s18, 0
    %p45 = por %p43, %p44
    %s47 = sadd.s32 %s46, 1
    %p50 = scmp.eq.s32.totalorder %s12, 1
    %p51 = scmp.ne.s32.totalorder %s46, %s48
    %p52 = scmp.eq.s32.totalorder %s12, 0
    %p53 = por %p51, %p52
    %p54 = scmp.ne.s32.totalorder %s46, %s48
    %p55 = scmp.eq.s32.totalorder %s17, 1
    %p56 = por %p54, %p55
    %p57 = scmp.ne.s32.totalorder %s48, %s49
    %p58 = scmp.eq.s32.totalorder %s17, 0
    %p59 = por %p57, %p58
    %p60 = scmp.ne.s32.totalorder %s48, %s49
    %p61 = scmp.eq.s32.totalorder %s18, 1
    %p62 = por %p60, %p61
    %p64 = scmp.ne.s32.totalorder %s49, %s63
    %p65 = scmp.eq.s32.totalorder %s18, 0
    %p66 = por %p64, %p65
    %s68 = sadd.s32 %s67, 1
    %p71 = scmp.eq.s32.totalorder %s12, 1
    %p72 = scmp.ne.s32.totalorder %s67, %s69
    %p73 = scmp.eq.s32.totalorder %s12, 0
    %p74 = por %p72, %p73
    %p75 = scmp.ne.s32.totalorder %s67, %s69
    %p76 = scmp.eq.s32.totalorder %s17, 1
    %p77 = por %p75, %p76
    %p78 = scmp.ne.s32.totalorder %s69, %s70
    %p79 = scmp.eq.s32.totalorder %s17, 0
    %p80 = por %p78, %p79
    %p81 = scmp.ne.s32.totalorder %s69, %s70
    %p82 = scmp.eq.s32.totalorder %s18, 1
    %p83 = por %p81, %p82
    %p85 = scmp.ne.s32.totalorder %s70, %s84
    %p86 = scmp.eq.s32.totalorder %s18, 0
    %p87 = por %p85, %p86
    %s89 = sadd.s32 %s88, 1
    %p92 = scmp.eq.s32.totalorder %s12, 1
    %p93 = scmp.ne.s32.totalorder %s88, %s90
    %p94 = scmp.eq.s32.totalorder %s12, 0
    %p95 = por %p93, %p94
    %p96 = scmp.ne.s32.totalorder %s88, %s90
    %p97 = scmp.eq.s32.totalorder %s17, 1
    %p98 = por %p96, %p97
    %p99 = scmp.ne.s32.totalorder %s90, %s91
    %p100 = scmp.eq.s32.totalorder %s17, 0
    %p101 = por %p99, %p100
    %p102 = scmp.ne.s32.totalorder %s90, %s91
    %p103 = scmp.eq.s32.totalorder %s18, 1
    %p104 = por %p102, %p103
    %p106 = scmp.ne.s32.totalorder %s91, %s105
    %p107 = scmp.eq.s32.totalorder %s18, 0
    %p108 = por %p106, %p107
    %s109 = ssub.s32 %s12, %s19
    %p110 = scmp.eq.s32.totalorder %s109, 0
    %s112 = sadd.s32 %s111, 1
    %s113 = scalar_select %p110, %s111, %s112
    %p116 = pneg %p110
    %p117 = scmp.eq.s32.totalorder %s12, 1
    %p118 = por %p116, %p117
    %p119 = scmp.ne.s32.totalorder %s111, %s114
    %p120 = scmp.eq.s32.totalorder %s12, 0
    %p121 = por %p119, %p120
    %p122 = scmp.ne.s32.totalorder %s111, %s114
    %p123 = scmp.eq.s32.totalorder %s17, 1
    %p124 = por %p122, %p123
    %p125 = scmp.ne.s32.totalorder %s114, %s115
    %p126 = scmp.eq.s32.totalorder %s17, 0
    %p127 = por %p125, %p126
    %p128 = scmp.ne.s32.totalorder %s114, %s115
    %p129 = scmp.eq.s32.totalorder %s18, 1
    %p130 = por %p128, %p129
    %p132 = scmp.ne.s32.totalorder %s115, %s131
    %p133 = scmp.eq.s32.totalorder %s18, 0
    %p134 = por %p132, %p133
    %s135 = ssub.s32 %s12, %s19
    %p136 = scmp.eq.s32.totalorder %s135, 0
    %s138 = sadd.s32 %s137, 1
    %s139 = scalar_select %p136, %s137, %s138
    %p142 = pneg %p136
    %p143 = scmp.eq.s32.totalorder %s12, 1
    %p144 = por %p142, %p143
    %p145 = scmp.ne.s32.totalorder %s137, %s140
    %p146 = scmp.eq.s32.totalorder %s12, 0
    %p147 = por %p145, %p146
    %p148 = scmp.ne.s32.totalorder %s137, %s140
    %p149 = scmp.eq.s32.totalorder %s17, 1
    %p150 = por %p148, %p149
    %p151 = scmp.ne.s32.totalorder %s140, %s141
    %p152 = scmp.eq.s32.totalorder %s17, 0
    %p153 = por %p151, %p152
    %p154 = scmp.ne.s32.totalorder %s140, %s141
    %p155 = scmp.eq.s32.totalorder %s18, 1
    %p156 = por %p154, %p155
    %p158 = scmp.ne.s32.totalorder %s141, %s157
    %p159 = scmp.eq.s32.totalorder %s18, 0
    %p160 = por %p158, %p159
    %p161 = scmp.le.s32.totalorder 1, %s12
    %p162 = scmp.lt.s32.totalorder %s12, 3
    %p163 = pnand %p161, %p162
    %p164 = pneg %p163
    // Predicated region
    $region9: #{basic_block.4} parent=5 // pred_check
      _
    $region10: #{basic_block.4} parent=5 // pred_check_branch
      %166 = sbr.rel (%p163) target = $region12
    $region11: #{basic_block.4} parent=5 // pred_region
      %s167 = ssub.s32 %s12, 1
      // Predicated region
      $region13: #{basic_block.4} parent=11 // pred_check
        %p168 = pneg %p59
      $region14: #{basic_block.4} parent=11 // pred_check_branch
        %170 = sbr.rel (%p168) target = $region16
      $region15: #{basic_block.4} parent=11 // pred_region
        _
      $region16: #{basic_block.4} parent=11 // pred_fallthru
        _
      // Predicated region
      $region17: #{basic_block.4} parent=11 // pred_check
        %p171 = pneg %p80
      $region18: #{basic_block.4} parent=11 // pred_check_branch
        %173 = sbr.rel (%p171) target = $region20
      $region19: #{basic_block.4} parent=11 // pred_region
        _
      $region20: #{basic_block.4} parent=11 // pred_fallthru
        _
      // Predicated region
      $region21: #{basic_block.4} parent=11 // pred_check
        %p174 = pneg %p101
      $region22: #{basic_block.4} parent=11 // pred_check_branch
        %176 = sbr.rel (%p174) target = $region24
      $region23: #{basic_block.4} parent=11 // pred_region
        _
      $region24: #{basic_block.4} parent=11 // pred_fallthru
        _
    $region12: #{basic_block.4} parent=5 // pred_fallthru
      _
    %p177 = scmp.lt.s32.totalorder %s12, 2
    // Predicated region
    $region25: #{basic_block.4} parent=5 // pred_check
      %p178 = pneg %p177
    $region26: #{basic_block.4} parent=5 // pred_check_branch
      %180 = sbr.rel (%p178) target = $region28
    $region27: #{basic_block.4} parent=5 // pred_region
      // Predicated region
      $region29: #{basic_block.4} parent=27 // pred_check
        %p181 = pneg %p32
      $region30: #{basic_block.4} parent=27 // pred_check_branch
        %183 = sbr.rel (%p181) target = $region32
      $region31: #{basic_block.4} parent=27 // pred_region
        %p184 = scmp.lt.s32.totalorder %s12, 1
        %s185 = scalar_select %p184, %s12, 1
        %s186 = smul.addr %s185, 32
        %s187 = smul.addr %s186, 8
        %s188 = scalar_lea.vmem %s0, %s187
      $region32: #{basic_block.4} parent=27 // pred_fallthru
        _
    $region28: #{basic_block.4} parent=5 // pred_fallthru
      _
    %p189 = scmp.le.s32.totalorder 1, %s12
    %p190 = scmp.lt.s32.totalorder %s12, 3
    %p191 = pnand %p189, %p190
    %p192 = pneg %p191
    // Predicated region
    $region33: #{basic_block.4} parent=5 // pred_check
      _
    $region34: #{basic_block.4} parent=5 // pred_check_branch
      %194 = sbr.rel (%p191) target = $region36
    $region35: #{basic_block.4} parent=5 // pred_region
      %s195 = ssub.s32 %s12, 1
      %p196 = scmp.lt.s32.totalorder %s17, 1
      %s197 = scalar_select %p196, %s17, 1
      %s198 = smul.addr %s197, 32
      %s199 = smul.addr %s198, 8
      %s200 = scalar_lea.vmem %s0, %s199
      %p201 = pneg %p38
      %p202 = pneg %p35
      %p203 = pneg %p59
      %p204 = pneg %p56
      %p205 = pneg %p80
      %p206 = pneg %p77
      %p207 = pneg %p101
      %p208 = pneg %p98
      %p209 = pneg %p127
      %p210 = pneg %p124
      %p211 = scmp.lt.s32.totalorder %s17, 1
      %s212 = scalar_select %p211, %s17, 1
      %s213 = smul.addr %s212, 32
      %s214 = smul.addr %s213, 8
      %s215 = scalar_lea.vmem %s4, %s214
      %p216 = pneg %p153
      %p217 = pneg %p150
      %p218 = scmp.lt.s32.totalorder %s17, 1
      %s219 = scalar_select %p218, %s17, 1
      %s220 = smul.addr %s219, 2
      %s221 = scalar_lea.vmem %s5, %s220
      %p222 = scmp.lt.s32.totalorder %s17, 1
      %s223 = scalar_select %p222, %s17, 1
      %s224 = smul.addr %s223, 32
      %s225 = smul.addr %s224, 8
      %s226 = scalar_lea.vmem %s0, %s225
      %p227 = scmp.lt.s32.totalorder %s17, 1
      %s228 = scalar_select %p227, %s17, 1
      %s229 = smul.addr %s228, 32
      %s230 = smul.addr %s229, 8
      %s231 = scalar_lea.vmem %s4, %s230
      %p232 = scmp.lt.s32.totalorder %s17, 1
      %s233 = scalar_select %p232, %s17, 1
      %s234 = smul.addr %s233, 2
      %s235 = scalar_lea.vmem %s5, %s234
      %v237 = vld [vmem:[%s226] sm:$0xff]
      %v238 = vld [vmem:[%s226 + $0x8] sm:$0xff]
      %v239 = vld [vmem:[%s226 + $0x10] sm:$0xff]
      %v240 = vld [vmem:[%s226 + $0x18] sm:$0xff]
      %v241 = vld [vmem:[%s226 + $0x20] sm:$0xff]
      %v242 = vld [vmem:[%s226 + $0x28] sm:$0xff]
      %v243 = vld [vmem:[%s226 + $0x30] sm:$0xff]
      %v244 = vld [vmem:[%s226 + $0x38] sm:$0xff]
      %v245 = vld [vmem:[%s226 + $0x40] sm:$0xff]
      %v246 = vld [vmem:[%s226 + $0x48] sm:$0xff]
      %v247 = vld [vmem:[%s226 + $0x50] sm:$0xff]
      %v248 = vld [vmem:[%s226 + $0x58] sm:$0xff]
      %v249 = vld [vmem:[%s226 + $0x60] sm:$0xff]
      %v250 = vld [vmem:[%s226 + $0x68] sm:$0xff]
      %v251 = vld [vmem:[%s226 + $0x70] sm:$0xff]
      %v252 = vld [vmem:[%s226 + $0x78] sm:$0xff]
      %v253 = vld [vmem:[%s226 + $0x80] sm:$0xff]
      %v254 = vld [vmem:[%s226 + $0x88] sm:$0xff]
      %v255 = vld [vmem:[%s226 + $0x90] sm:$0xff]
      %v256 = vld [vmem:[%s226 + $0x98] sm:$0xff]
      %v257 = vld [vmem:[%s226 + $0xa0] sm:$0xff]
      %v258 = vld [vmem:[%s226 + $0xa8] sm:$0xff]
      %v259 = vld [vmem:[%s226 + $0xb0] sm:$0xff]
      %v260 = vld [vmem:[%s226 + $0xb8] sm:$0xff]
      %v261 = vld [vmem:[%s226 + $0xc0] sm:$0xff]
      %v262 = vld [vmem:[%s226 + $0xc8] sm:$0xff]
      %v263 = vld [vmem:[%s226 + $0xd0] sm:$0xff]
      %v264 = vld [vmem:[%s226 + $0xd8] sm:$0xff]
      %v265 = vld [vmem:[%s226 + $0xe0] sm:$0xff]
      %v266 = vld [vmem:[%s226 + $0xe8] sm:$0xff]
      %v267 = vld [vmem:[%s226 + $0xf0] sm:$0xff]
      %v268 = vld [vmem:[%s226 + $0xf8] sm:$0xff]
      %v269 = vld [vmem:[%s2] sm:$0x1]
      %v270 = vld [vmem:[%s3] sm:$0x1]
      %v272 = vperm.slane %v269, 0
      %v274 = vmul.f32 %v237, %v272
      %v275 = vmul.f32 %v238, %v272
      %v276 = vmul.f32 %v239, %v272
      %v277 = vmul.f32 %v240, %v272
      %v278 = vmul.f32 %v241, %v272
      %v279 = vmul.f32 %v242, %v272
      %v280 = vmul.f32 %v243, %v272
      %v281 = vmul.f32 %v244, %v272
      %v282 = vmul.f32 %v245, %v272
      %v283 = vmul.f32 %v246, %v272
      %v284 = vmul.f32 %v247, %v272
      %v285 = vmul.f32 %v248, %v272
      %v286 = vmul.f32 %v249, %v272
      %v287 = vmul.f32 %v250, %v272
      %v288 = vmul.f32 %v251, %v272
      %v289 = vmul.f32 %v252, %v272
      %v290 = vmul.f32 %v253, %v272
      %v291 = vmul.f32 %v254, %v272
      %v292 = vmul.f32 %v255, %v272
      %v293 = vmul.f32 %v256, %v272
      %v294 = vmul.f32 %v257, %v272
      %v295 = vmul.f32 %v258, %v272
      %v296 = vmul.f32 %v259, %v272
      %v297 = vmul.f32 %v260, %v272
      %v298 = vmul.f32 %v261, %v272
      %v299 = vmul.f32 %v262, %v272
      %v300 = vmul.f32 %v263, %v272
      %v301 = vmul.f32 %v264, %v272
      %v302 = vmul.f32 %v265, %v272
      %v303 = vmul.f32 %v266, %v272
      %v304 = vmul.f32 %v267, %v272
      %v305 = vmul.f32 %v268, %v272
      %v307 = vperm.slane %v270, 0
      %v309 = vadd.f32 %v274, %v307
      %v310 = vadd.f32 %v275, %v307
      %v311 = vadd.f32 %v276, %v307
      %v312 = vadd.f32 %v277, %v307
      %v313 = vadd.f32 %v278, %v307
      %v314 = vadd.f32 %v279, %v307
      %v315 = vadd.f32 %v280, %v307
      %v316 = vadd.f32 %v281, %v307
      %v317 = vadd.f32 %v282, %v307
      %v318 = vadd.f32 %v283, %v307
      %v319 = vadd.f32 %v284, %v307
      %v320 = vadd.f32 %v285, %v307
      %v321 = vadd.f32 %v286, %v307
      %v322 = vadd.f32 %v287, %v307
      %v323 = vadd.f32 %v288, %v307
      %v324 = vadd.f32 %v289, %v307
      %v325 = vadd.f32 %v290, %v307
      %v326 = vadd.f32 %v291, %v307
      %v327 = vadd.f32 %v292, %v307
      %v328 = vadd.f32 %v293, %v307
      %v329 = vadd.f32 %v294, %v307
      %v330 = vadd.f32 %v295, %v307
      %v331 = vadd.f32 %v296, %v307
      %v332 = vadd.f32 %v297, %v307
      %v333 = vadd.f32 %v298, %v307
      %v334 = vadd.f32 %v299, %v307
      %v335 = vadd.f32 %v300, %v307
      %v336 = vadd.f32 %v301, %v307
      %v337 = vadd.f32 %v302, %v307
      %v338 = vadd.f32 %v303, %v307
      %v339 = vadd.f32 %v304, %v307
      %v340 = vadd.f32 %v305, %v307
      %v341 = vmax.f32 %v309, 0.0
      %v342 = vmax.f32 %v310, 0.0
      %v343 = vmax.f32 %v311, 0.0
      %v344 = vmax.f32 %v312, 0.0
      %v345 = vmax.f32 %v313, 0.0
      %v346 = vmax.f32 %v314, 0.0
      %v347 = vmax.f32 %v315, 0.0
      %v348 = vmax.f32 %v316, 0.0
      %v349 = vmax.f32 %v317, 0.0
      %v350 = vmax.f32 %v318, 0.0
      %v351 = vmax.f32 %v319, 0.0
      %v352 = vmax.f32 %v320, 0.0
      %v353 = vmax.f32 %v321, 0.0
      %v354 = vmax.f32 %v322, 0.0
      %v355 = vmax.f32 %v323, 0.0
      %v356 = vmax.f32 %v324, 0.0
      %v357 = vmax.f32 %v325, 0.0
      %v358 = vmax.f32 %v326, 0.0
      %v359 = vmax.f32 %v327, 0.0
      %v360 = vmax.f32 %v328, 0.0
      %v361 = vmax.f32 %v329, 0.0
      %v362 = vmax.f32 %v330, 0.0
      %v363 = vmax.f32 %v331, 0.0
      %v364 = vmax.f32 %v332, 0.0
      %v365 = vmax.f32 %v333, 0.0
      %v366 = vmax.f32 %v334, 0.0
      %v367 = vmax.f32 %v335, 0.0
      %v368 = vmax.f32 %v336, 0.0
      %v369 = vmax.f32 %v337, 0.0
      %v370 = vmax.f32 %v338, 0.0
      %v371 = vmax.f32 %v339, 0.0
      %v372 = vmax.f32 %v340, 0.0
      %v373 = vpack.c.bf16 %v341, %v341
      %v374 = vpack.c.bf16 %v342, %v342
      %v375 = vpack.c.bf16 %v343, %v343
      %v376 = vpack.c.bf16 %v344, %v344
      %v377 = vpack.c.bf16 %v345, %v345
      %v378 = vpack.c.bf16 %v346, %v346
      %v379 = vpack.c.bf16 %v347, %v347
      %v380 = vpack.c.bf16 %v348, %v348
      %v381 = vpack.c.bf16 %v349, %v349
      %v382 = vpack.c.bf16 %v350, %v350
      %v383 = vpack.c.bf16 %v351, %v351
      %v384 = vpack.c.bf16 %v352, %v352
      %v385 = vpack.c.bf16 %v353, %v353
      %v386 = vpack.c.bf16 %v354, %v354
      %v387 = vpack.c.bf16 %v355, %v355
      %v388 = vpack.c.bf16 %v356, %v356
      %v389 = vpack.c.bf16 %v357, %v357
      %v390 = vpack.c.bf16 %v358, %v358
      %v391 = vpack.c.bf16 %v359, %v359
      %v392 = vpack.c.bf16 %v360, %v360
      %v393 = vpack.c.bf16 %v361, %v361
      %v394 = vpack.c.bf16 %v362, %v362
      %v395 = vpack.c.bf16 %v363, %v363
      %v396 = vpack.c.bf16 %v364, %v364
      %v397 = vpack.c.bf16 %v365, %v365
      %v398 = vpack.c.bf16 %v366, %v366
      %v399 = vpack.c.bf16 %v367, %v367
      %v400 = vpack.c.bf16 %v368, %v368
      %v401 = vpack.c.bf16 %v369, %v369
      %v402 = vpack.c.bf16 %v370, %v370
      %v403 = vpack.c.bf16 %v371, %v371
      %v404 = vpack.c.bf16 %v372, %v372
      %405 = vst [vmem:[#allocation2] sm:$0xf] 0
      %406 = vst [vmem:[#allocation2 + $0x4] sm:$0xf] 0
      %407 = vst [vmem:[#allocation2 + $0x8] sm:$0x1] 0
      %s408 = scalar_lea.vmem [#allocation2], 204
      %409 = vst [vmem:[%s408] sm:$0xf] 0
      %410 = vst [vmem:[%s408 + $0x4] sm:$0xf] 0
      %411 = vst [vmem:[%s408 + $0x8] sm:$0x1] 0
      %vm412 = vcmask 1040384
      %vm413 = vsmask.f32 256
      %vm414 = vmand %vm412, %vm413
      %v415 = vld [vmem:[#allocation2] sm:$0x1]
      %v416 = vsel %vm414, 0, %v415
      %417 = vst [vmem:[#allocation2] sm:$0x1] %v416
      %v418 = vld [vmem:[#allocation2 + $0xc] sm:$0x1]
      %v419 = vsel %vm414, 0, %v418
      %420 = vst [vmem:[#allocation2 + $0xc] sm:$0x1] %v419
      %v421 = vld [vmem:[#allocation2 + $0x18] sm:$0x1]
      %v422 = vsel %vm414, 0, %v421
      %423 = vst [vmem:[#allocation2 + $0x18] sm:$0x1] %v422
      %v424 = vld [vmem:[#allocation2 + $0x24] sm:$0x1]
      %v425 = vsel %vm414, 0, %v424
      %426 = vst [vmem:[#allocation2 + $0x24] sm:$0x1] %v425
      %v427 = vld [vmem:[#allocation2 + $0x30] sm:$0x1]
      %v428 = vsel %vm414, 0, %v427
      %429 = vst [vmem:[#allocation2 + $0x30] sm:$0x1] %v428
      %v430 = vld [vmem:[#allocation2 + $0x3c] sm:$0x1]
      %v431 = vsel %vm414, 0, %v430
      %432 = vst [vmem:[#allocation2 + $0x3c] sm:$0x1] %v431
      %v433 = vld [vmem:[#allocation2 + $0x48] sm:$0x1]
      %v434 = vsel %vm414, 0, %v433
      %435 = vst [vmem:[#allocation2 + $0x48] sm:$0x1] %v434
      %v436 = vld [vmem:[#allocation2 + $0x54] sm:$0x1]
      %v437 = vsel %vm414, 0, %v436
      %438 = vst [vmem:[#allocation2 + $0x54] sm:$0x1] %v437
      %v439 = vld [vmem:[#allocation2 + $0x60] sm:$0x1]
      %v440 = vsel %vm414, 0, %v439
      %441 = vst [vmem:[#allocation2 + $0x60] sm:$0x1] %v440
      %v442 = vld [vmem:[#allocation2 + $0x6c] sm:$0x1]
      %v443 = vsel %vm414, 0, %v442
      %444 = vst [vmem:[#allocation2 + $0x6c] sm:$0x1] %v443
      %v445 = vld [vmem:[#allocation2 + $0x78] sm:$0x1]
      %v446 = vsel %vm414, 0, %v445
      %447 = vst [vmem:[#allocation2 + $0x78] sm:$0x1] %v446
      %v448 = vld [vmem:[#allocation2 + $0x84] sm:$0x1]
      %v449 = vsel %vm414, 0, %v448
      %450 = vst [vmem:[#allocation2 + $0x84] sm:$0x1] %v449
      %v451 = vld [vmem:[#allocation2 + $0x90] sm:$0x1]
      %v452 = vsel %vm414, 0, %v451
      %453 = vst [vmem:[#allocation2 + $0x90] sm:$0x1] %v452
      %v454 = vld [vmem:[#allocation2 + $0x9c] sm:$0x1]
      %v455 = vsel %vm414, 0, %v454
      %456 = vst [vmem:[#allocation2 + $0x9c] sm:$0x1] %v455
      %v457 = vld [vmem:[#allocation2 + $0xa8] sm:$0x1]
      %v458 = vsel %vm414, 0, %v457
      %459 = vst [vmem:[#allocation2 + $0xa8] sm:$0x1] %v458
      %v460 = vld [vmem:[#allocation2 + $0xb4] sm:$0x1]
      %v461 = vsel %vm414, 0, %v460
      %462 = vst [vmem:[#allocation2 + $0xb4] sm:$0x1] %v461
      %v463 = vld [vmem:[#allocation2 + $0xc0] sm:$0x1]
      %v464 = vsel %vm414, 0, %v463
      %465 = vst [vmem:[#allocation2 + $0xc0] sm:$0x1] %v464
      %v466 = vld [vmem:[#allocation2 + $0xcc] sm:$0x1]
      %v467 = vsel %vm414, 0, %v466
      %468 = vst [vmem:[#allocation2 + $0xcc] sm:$0x1] %v467
      %vm469 = vsmask.f32 7938
      %vm470 = vmand %vm412, %vm469
      %v471 = vld [vmem:[#allocation2 + $0x8] sm:$0x1]
      %v472 = vsel %vm470, 0, %v471
      %473 = vst [vmem:[#allocation2 + $0x8] sm:$0x1] %v472
      %v474 = vld [vmem:[#allocation2 + $0x14] sm:$0x1]
      %v475 = vsel %vm470, 0, %v474
      %476 = vst [vmem:[#allocation2 + $0x14] sm:$0x1] %v475
      %v477 = vld [vmem:[#allocation2 + $0x20] sm:$0x1]
      %v478 = vsel %vm470, 0, %v477
      %479 = vst [vmem:[#allocation2 + $0x20] sm:$0x1] %v478
      %v480 = vld [vmem:[#allocation2 + $0x2c] sm:$0x1]
      %v481 = vsel %vm470, 0, %v480
      %482 = vst [vmem:[#allocation2 + $0x2c] sm:$0x1] %v481
      %v483 = vld [vmem:[#allocation2 + $0x38] sm:$0x1]
      %v484 = vsel %vm470, 0, %v483
      %485 = vst [vmem:[#allocation2 + $0x38] sm:$0x1] %v484
      %v486 = vld [vmem:[#allocation2 + $0x44] sm:$0x1]
      %v487 = vsel %vm470, 0, %v486
      %488 = vst [vmem:[#allocation2 + $0x44] sm:$0x1] %v487
      %v489 = vld [vmem:[#allocation2 + $0x50] sm:$0x1]
      %v490 = vsel %vm470, 0, %v489
      %491 = vst [vmem:[#allocation2 + $0x50] sm:$0x1] %v490
      %v492 = vld [vmem:[#allocation2 + $0x5c] sm:$0x1]
      %v493 = vsel %vm470, 0, %v492
      %494 = vst [vmem:[#allocation2 + $0x5c] sm:$0x1] %v493
      %v495 = vld [vmem:[#allocation2 + $0x68] sm:$0x1]
      %v496 = vsel %vm470, 0, %v495
      %497 = vst [vmem:[#allocation2 + $0x68] sm:$0x1] %v496
      %v498 = vld [vmem:[#allocation2 + $0x74] sm:$0x1]
      %v499 = vsel %vm470, 0, %v498
      %500 = vst [vmem:[#allocation2 + $0x74] sm:$0x1] %v499
      %v501 = vld [vmem:[#allocation2 + $0x80] sm:$0x1]
      %v502 = vsel %vm470, 0, %v501
      %503 = vst [vmem:[#allocation2 + $0x80] sm:$0x1] %v502
      %v504 = vld [vmem:[#allocation2 + $0x8c] sm:$0x1]
      %v505 = vsel %vm470, 0, %v504
      %506 = vst [vmem:[#allocation2 + $0x8c] sm:$0x1] %v505
      %v507 = vld [vmem:[#allocation2 + $0x98] sm:$0x1]
      %v508 = vsel %vm470, 0, %v507
      %509 = vst [vmem:[#allocation2 + $0x98] sm:$0x1] %v508
      %v510 = vld [vmem:[#allocation2 + $0xa4] sm:$0x1]
      %v511 = vsel %vm470, 0, %v510
      %512 = vst [vmem:[#allocation2 + $0xa4] sm:$0x1] %v511
      %v513 = vld [vmem:[#allocation2 + $0xb0] sm:$0x1]
      %v514 = vsel %vm470, 0, %v513
      %515 = vst [vmem:[#allocation2 + $0xb0] sm:$0x1] %v514
      %v516 = vld [vmem:[#allocation2 + $0xbc] sm:$0x1]
      %v517 = vsel %vm470, 0, %v516
      %518 = vst [vmem:[#allocation2 + $0xbc] sm:$0x1] %v517
      %v519 = vld [vmem:[#allocation2 + $0xc8] sm:$0x1]
      %v520 = vsel %vm470, 0, %v519
      %521 = vst [vmem:[#allocation2 + $0xc8] sm:$0x1] %v520
      %v522 = vld [vmem:[#allocation2 + $0xd4] sm:$0x1]
      %v523 = vsel %vm470, 0, %v522
      %524 = vst [vmem:[#allocation2 + $0xd4] sm:$0x1] %v523
      %vm525 = vsmask.f32 4368
      %vm526 = vmor %vm413, %vm525
      %v528 = vshrl.u32 %v373, 16
      %v530 = vrot.slane %v528, 7
      %v531 = vshll.u32 %v373, 16
      %v533 = vor.u32 %v530, %v531
      %v534 = vrot.slane %v530, 4
      %v536 = vshrl.u32 %v374, 16
      %v538 = vrot.slane %v536, 7
      %v539 = vshll.u32 %v374, 16
      %v541 = vor.u32 %v538, %v539
      %v542 = vsel %vm526, %v534, %v541
      %v543 = vrot.slane %v538, 4
      %v545 = vshrl.u32 %v375, 16
      %v547 = vrot.slane %v545, 7
      %v548 = vshll.u32 %v375, 16
      %v550 = vor.u32 %v547, %v548
      %v551 = vrot.slane %v547, 4
      %v553 = vshrl.u32 %v376, 16
      %v555 = vrot.slane %v553, 7
      %v556 = vshll.u32 %v376, 16
      %v558 = vor.u32 %v555, %v556
      %v559 = vsel %vm526, %v551, %v558
      %v560 = vrot.slane %v555, 4
      %v562 = vshrl.u32 %v377, 16
      %v564 = vrot.slane %v562, 7
      %v565 = vshll.u32 %v377, 16
      %v567 = vor.u32 %v564, %v565
      %v568 = vrot.slane %v564, 4
      %v570 = vshrl.u32 %v378, 16
      %v572 = vrot.slane %v570, 7
      %v573 = vshll.u32 %v378, 16
      %v575 = vor.u32 %v572, %v573
      %v576 = vsel %vm526, %v568, %v575
      %v577 = vrot.slane %v572, 4
      %v579 = vshrl.u32 %v379, 16
      %v581 = vrot.slane %v579, 7
      %v582 = vshll.u32 %v379, 16
      %v584 = vor.u32 %v581, %v582
      %v585 = vrot.slane %v581, 4
      %v587 = vshrl.u32 %v380, 16
      %v589 = vrot.slane %v587, 7
      %v590 = vshll.u32 %v380, 16
      %v592 = vor.u32 %v589, %v590
      %v593 = vsel %vm526, %v585, %v592
      %v594 = vrot.slane %v589, 4
      %v596 = vshrl.u32 %v381, 16
      %v598 = vrot.slane %v596, 7
      %v599 = vshll.u32 %v381, 16
      %v601 = vor.u32 %v598, %v599
      %v602 = vrot.slane %v598, 4
      %v604 = vshrl.u32 %v382, 16
      %v606 = vrot.slane %v604, 7
      %v607 = vshll.u32 %v382, 16
      %v609 = vor.u32 %v606, %v607
      %v610 = vsel %vm526, %v602, %v609
      %v611 = vrot.slane %v606, 4
      %v613 = vshrl.u32 %v383, 16
      %v615 = vrot.slane %v613, 7
      %v616 = vshll.u32 %v383, 16
      %v618 = vor.u32 %v615, %v616
      %v619 = vrot.slane %v615, 4
      %v621 = vshrl.u32 %v384, 16
      %v623 = vrot.slane %v621, 7
      %v624 = vshll.u32 %v384, 16
      %v626 = vor.u32 %v623, %v624
      %v627 = vsel %vm526, %v619, %v626
      %v628 = vrot.slane %v623, 4
      %v630 = vshrl.u32 %v385, 16
      %v632 = vrot.slane %v630, 7
      %v633 = vshll.u32 %v385, 16
      %v635 = vor.u32 %v632, %v633
      %v636 = vrot.slane %v632, 4
      %v638 = vshrl.u32 %v386, 16
      %v640 = vrot.slane %v638, 7
      %v641 = vshll.u32 %v386, 16
      %v643 = vor.u32 %v640, %v641
      %v644 = vsel %vm526, %v636, %v643
      %v645 = vrot.slane %v640, 4
      %v647 = vshrl.u32 %v387, 16
      %v649 = vrot.slane %v647, 7
      %v650 = vshll.u32 %v387, 16
      %v652 = vor.u32 %v649, %v650
      %v653 = vrot.slane %v649, 4
      %v655 = vshrl.u32 %v388, 16
      %v657 = vrot.slane %v655, 7
      %v658 = vshll.u32 %v388, 16
      %v660 = vor.u32 %v657, %v658
      %v661 = vsel %vm526, %v653, %v660
      %v662 = vrot.slane %v657, 4
      %v664 = vshrl.u32 %v389, 16
      %v666 = vrot.slane %v664, 7
      %v667 = vshll.u32 %v389, 16
      %v669 = vor.u32 %v666, %v667
      %v670 = vrot.slane %v666, 4
      %v672 = vshrl.u32 %v390, 16
      %v674 = vrot.slane %v672, 7
      %v675 = vshll.u32 %v390, 16
      %v677 = vor.u32 %v674, %v675
      %v678 = vsel %vm526, %v670, %v677
      %v679 = vrot.slane %v674, 4
      %v681 = vshrl.u32 %v391, 16
      %v683 = vrot.slane %v681, 7
      %v684 = vshll.u32 %v391, 16
      %v686 = vor.u32 %v683, %v684
      %v687 = vrot.slane %v683, 4
      %v689 = vshrl.u32 %v392, 16
      %v691 = vrot.slane %v689, 7
      %v692 = vshll.u32 %v392, 16
      %v694 = vor.u32 %v691, %v692
      %v695 = vsel %vm526, %v687, %v694
      %v696 = vrot.slane %v691, 4
      %v698 = vshrl.u32 %v393, 16
      %v700 = vrot.slane %v698, 7
      %v701 = vshll.u32 %v393, 16
      %v703 = vor.u32 %v700, %v701
      %v704 = vrot.slane %v700, 4
      %v706 = vshrl.u32 %v394, 16
      %v708 = vrot.slane %v706, 7
      %v709 = vshll.u32 %v394, 16
      %v711 = vor.u32 %v708, %v709
      %v712 = vsel %vm526, %v704, %v711
      %v713 = vrot.slane %v708, 4
      %v715 = vshrl.u32 %v395, 16
      %v717 = vrot.slane %v715, 7
      %v718 = vshll.u32 %v395, 16
      %v720 = vor.u32 %v717, %v718
      %v721 = vrot.slane %v717, 4
      %v723 = vshrl.u32 %v396, 16
      %v725 = vrot.slane %v723, 7
      %v726 = vshll.u32 %v396, 16
      %v728 = vor.u32 %v725, %v726
      %v729 = vsel %vm526, %v721, %v728
      %v730 = vrot.slane %v725, 4
      %v732 = vshrl.u32 %v397, 16
      %v734 = vrot.slane %v732, 7
      %v735 = vshll.u32 %v397, 16
      %v737 = vor.u32 %v734, %v735
      %v738 = vrot.slane %v734, 4
      %v740 = vshrl.u32 %v398, 16
      %v742 = vrot.slane %v740, 7
      %v743 = vshll.u32 %v398, 16
      %v745 = vor.u32 %v742, %v743
      %v746 = vsel %vm526, %v738, %v745
      %v747 = vrot.slane %v742, 4
      %v749 = vshrl.u32 %v399, 16
      %v751 = vrot.slane %v749, 7
      %v752 = vshll.u32 %v399, 16
      %v754 = vor.u32 %v751, %v752
      %v755 = vrot.slane %v751, 4
      %v757 = vshrl.u32 %v400, 16
      %v759 = vrot.slane %v757, 7
      %v760 = vshll.u32 %v400, 16
      %v762 = vor.u32 %v759, %v760
      %v763 = vsel %vm526, %v755, %v762
      %v764 = vrot.slane %v759, 4
      %v766 = vshrl.u32 %v401, 16
      %v768 = vrot.slane %v766, 7
      %v769 = vshll.u32 %v401, 16
      %v771 = vor.u32 %v768, %v769
      %v772 = vrot.slane %v768, 4
      %v774 = vshrl.u32 %v402, 16
      %v776 = vrot.slane %v774, 7
      %v777 = vshll.u32 %v402, 16
      %v779 = vor.u32 %v776, %v777
      %v780 = vsel %vm526, %v772, %v779
      %v781 = vrot.slane %v776, 4
      %v783 = vshrl.u32 %v403, 16
      %v785 = vrot.slane %v783, 7
      %v786 = vshll.u32 %v403, 16
      %v788 = vor.u32 %v785, %v786
      %v789 = vrot.slane %v785, 4
      %v791 = vshrl.u32 %v404, 16
      %v793 = vrot.slane %v791, 7
      %v794 = vshll.u32 %v404, 16
      %v796 = vor.u32 %v793, %v794
      %v797 = vsel %vm526, %v789, %v796
      %v798 = vrot.slane %v793, 4
      %s847 = scalar_lea.vmem [#allocation2], 12
      %vm848 = vcmask 1043456
      %vm849 = vmand %vm848, %vm469
      %v850 = vld [vmem:[%s847] sm:$0xf]
      %v851 = vsel %vm849, %v533, %v850
      %852 = vst [vmem:[%s847] sm:$0xf] %v851
      %853 = vst [vmem:[%s847 + $0x4] sm:$0xf] %v542
      %v854 = vld [vmem:[%s847 + $0x8] sm:$0x1]
      %v855 = vsel %vm414, %v543, %v854
      %856 = vst [vmem:[%s847 + $0x8] sm:$0x1] %v855
      %v857 = vld [vmem:[%s847 + $0xc] sm:$0xf]
      %v858 = vsel %vm849, %v550, %v857
      %859 = vst [vmem:[%s847 + $0xc] sm:$0xf] %v858
      %860 = vst [vmem:[%s847 + $0x10] sm:$0xf] %v559
      %v861 = vld [vmem:[%s847 + $0x14] sm:$0x1]
      %v862 = vsel %vm414, %v560, %v861
      %863 = vst [vmem:[%s847 + $0x14] sm:$0x1] %v862
      %v864 = vld [vmem:[%s847 + $0x18] sm:$0xf]
      %v865 = vsel %vm849, %v567, %v864
      %866 = vst [vmem:[%s847 + $0x18] sm:$0xf] %v865
      %867 = vst [vmem:[%s847 + $0x1c] sm:$0xf] %v576
      %v868 = vld [vmem:[%s847 + $0x20] sm:$0x1]
      %v869 = vsel %vm414, %v577, %v868
      %870 = vst [vmem:[%s847 + $0x20] sm:$0x1] %v869
      %v871 = vld [vmem:[%s847 + $0x24] sm:$0xf]
      %v872 = vsel %vm849, %v584, %v871
      %873 = vst [vmem:[%s847 + $0x24] sm:$0xf] %v872
      %874 = vst [vmem:[%s847 + $0x28] sm:$0xf] %v593
      %v875 = vld [vmem:[%s847 + $0x2c] sm:$0x1]
      %v876 = vsel %vm414, %v594, %v875
      %877 = vst [vmem:[%s847 + $0x2c] sm:$0x1] %v876
      %v878 = vld [vmem:[%s847 + $0x30] sm:$0xf]
      %v879 = vsel %vm849, %v601, %v878
      %880 = vst [vmem:[%s847 + $0x30] sm:$0xf] %v879
      %881 = vst [vmem:[%s847 + $0x34] sm:$0xf] %v610
      %v882 = vld [vmem:[%s847 + $0x38] sm:$0x1]
      %v883 = vsel %vm414, %v611, %v882
      %884 = vst [vmem:[%s847 + $0x38] sm:$0x1] %v883
      %v885 = vld [vmem:[%s847 + $0x3c] sm:$0xf]
      %v886 = vsel %vm849, %v618, %v885
      %887 = vst [vmem:[%s847 + $0x3c] sm:$0xf] %v886
      %888 = vst [vmem:[%s847 + $0x40] sm:$0xf] %v627
      %v889 = vld [vmem:[%s847 + $0x44] sm:$0x1]
      %v890 = vsel %vm414, %v628, %v889
      %891 = vst [vmem:[%s847 + $0x44] sm:$0x1] %v890
      %v892 = vld [vmem:[%s847 + $0x48] sm:$0xf]
      %v893 = vsel %vm849, %v635, %v892
      %894 = vst [vmem:[%s847 + $0x48] sm:$0xf] %v893
      %895 = vst [vmem:[%s847 + $0x4c] sm:$0xf] %v644
      %v896 = vld [vmem:[%s847 + $0x50] sm:$0x1]
      %v897 = vsel %vm414, %v645, %v896
      %898 = vst [vmem:[%s847 + $0x50] sm:$0x1] %v897
      %v899 = vld [vmem:[%s847 + $0x54] sm:$0xf]
      %v900 = vsel %vm849, %v652, %v899
      %901 = vst [vmem:[%s847 + $0x54] sm:$0xf] %v900
      %902 = vst [vmem:[%s847 + $0x58] sm:$0xf] %v661
      %v903 = vld [vmem:[%s847 + $0x5c] sm:$0x1]
      %v904 = vsel %vm414, %v662, %v903
      %905 = vst [vmem:[%s847 + $0x5c] sm:$0x1] %v904
      %v906 = vld [vmem:[%s847 + $0x60] sm:$0xf]
      %v907 = vsel %vm849, %v669, %v906
      %908 = vst [vmem:[%s847 + $0x60] sm:$0xf] %v907
      %909 = vst [vmem:[%s847 + $0x64] sm:$0xf] %v678
      %v910 = vld [vmem:[%s847 + $0x68] sm:$0x1]
      %v911 = vsel %vm414, %v679, %v910
      %912 = vst [vmem:[%s847 + $0x68] sm:$0x1] %v911
      %v913 = vld [vmem:[%s847 + $0x6c] sm:$0xf]
      %v914 = vsel %vm849, %v686, %v913
      %915 = vst [vmem:[%s847 + $0x6c] sm:$0xf] %v914
      %916 = vst [vmem:[%s847 + $0x70] sm:$0xf] %v695
      %v917 = vld [vmem:[%s847 + $0x74] sm:$0x1]
      %v918 = vsel %vm414, %v696, %v917
      %919 = vst [vmem:[%s847 + $0x74] sm:$0x1] %v918
      %v920 = vld [vmem:[%s847 + $0x78] sm:$0xf]
      %v921 = vsel %vm849, %v703, %v920
      %922 = vst [vmem:[%s847 + $0x78] sm:$0xf] %v921
      %923 = vst [vmem:[%s847 + $0x7c] sm:$0xf] %v712
      %v924 = vld [vmem:[%s847 + $0x80] sm:$0x1]
      %v925 = vsel %vm414, %v713, %v924
      %926 = vst [vmem:[%s847 + $0x80] sm:$0x1] %v925
      %v927 = vld [vmem:[%s847 + $0x84] sm:$0xf]
      %v928 = vsel %vm849, %v720, %v927
      %929 = vst [vmem:[%s847 + $0x84] sm:$0xf] %v928
      %930 = vst [vmem:[%s847 + $0x88] sm:$0xf] %v729
      %v931 = vld [vmem:[%s847 + $0x8c] sm:$0x1]
      %v932 = vsel %vm414, %v730, %v931
      %933 = vst [vmem:[%s847 + $0x8c] sm:$0x1] %v932
      %v934 = vld [vmem:[%s847 + $0x90] sm:$0xf]
      %v935 = vsel %vm849, %v737, %v934
      %936 = vst [vmem:[%s847 + $0x90] sm:$0xf] %v935
      %937 = vst [vmem:[%s847 + $0x94] sm:$0xf] %v746
      %v938 = vld [vmem:[%s847 + $0x98] sm:$0x1]
      %v939 = vsel %vm414, %v747, %v938
      %940 = vst [vmem:[%s847 + $0x98] sm:$0x1] %v939
      %v941 = vld [vmem:[%s847 + $0x9c] sm:$0xf]
      %v942 = vsel %vm849, %v754, %v941
      %943 = vst [vmem:[%s847 + $0x9c] sm:$0xf] %v942
      %944 = vst [vmem:[%s847 + $0xa0] sm:$0xf] %v763
      %v945 = vld [vmem:[%s847 + $0xa4] sm:$0x1]
      %v946 = vsel %vm414, %v764, %v945
      %947 = vst [vmem:[%s847 + $0xa4] sm:$0x1] %v946
      %v948 = vld [vmem:[%s847 + $0xa8] sm:$0xf]
      %v949 = vsel %vm849, %v771, %v948
      %950 = vst [vmem:[%s847 + $0xa8] sm:$0xf] %v949
      %951 = vst [vmem:[%s847 + $0xac] sm:$0xf] %v780
      %v952 = vld [vmem:[%s847 + $0xb0] sm:$0x1]
      %v953 = vsel %vm414, %v781, %v952
      %954 = vst [vmem:[%s847 + $0xb0] sm:$0x1] %v953
      %v955 = vld [vmem:[%s847 + $0xb4] sm:$0xf]
      %v956 = vsel %vm849, %v788, %v955
      %957 = vst [vmem:[%s847 + $0xb4] sm:$0xf] %v956
      %958 = vst [vmem:[%s847 + $0xb8] sm:$0xf] %v797
      %v959 = vld [vmem:[%s847 + $0xbc] sm:$0x1]
      %v960 = vsel %vm414, %v798, %v959
      %961 = vst [vmem:[%s847 + $0xbc] sm:$0x1] %v960
      %v962 = vld [vmem:[#allocation2] sm:$0xf]
      %v963 = vld [vmem:[#allocation2 + $0x4] sm:$0xf]
      %v964 = vld [vmem:[#allocation2 + $0xc] sm:$0xf]
      %v965 = vld [vmem:[#allocation2 + $0x10] sm:$0xf]
      %v966 = vld [vmem:[#allocation2 + $0x18] sm:$0xf]
      %v967 = vld [vmem:[#allocation2 + $0x1c] sm:$0xf]
      %v968 = vld [vmem:[#allocation2 + $0x24] sm:$0xf]
      %v969 = vld [vmem:[#allocation2 + $0x28] sm:$0xf]
      %v970 = vld [vmem:[#allocation2 + $0x30] sm:$0xf]
      %v971 = vld [vmem:[#allocation2 + $0x34] sm:$0xf]
      %v972 = vld [vmem:[#allocation2 + $0x3c] sm:$0xf]
      %v973 = vld [vmem:[#allocation2 + $0x40] sm:$0xf]
      %v974 = vld [vmem:[#allocation2 + $0x48] sm:$0xf]
      %v975 = vld [vmem:[#allocation2 + $0x4c] sm:$0xf]
      %v976 = vld [vmem:[#allocation2 + $0x54] sm:$0xf]
      %v977 = vld [vmem:[#allocation2 + $0x58] sm:$0xf]
      %v978 = vld [vmem:[#allocation2 + $0x60] sm:$0xf]
      %v979 = vld [vmem:[#allocation2 + $0x64] sm:$0xf]
      %v980 = vld [vmem:[#allocation2 + $0x6c] sm:$0xf]
      %v981 = vld [vmem:[#allocation2 + $0x70] sm:$0xf]
      %v982 = vld [vmem:[#allocation2 + $0x78] sm:$0xf]
      %v983 = vld [vmem:[#allocation2 + $0x7c] sm:$0xf]
      %v984 = vld [vmem:[#allocation2 + $0x84] sm:$0xf]
      %v985 = vld [vmem:[#allocation2 + $0x88] sm:$0xf]
      %v986 = vld [vmem:[#allocation2 + $0x90] sm:$0xf]
      %v987 = vld [vmem:[#allocation2 + $0x94] sm:$0xf]
      %v988 = vld [vmem:[#allocation2 + $0x9c] sm:$0xf]
      %v989 = vld [vmem:[#allocation2 + $0xa0] sm:$0xf]
      %v990 = vld [vmem:[#allocation2 + $0xa8] sm:$0xf]
      %v991 = vld [vmem:[#allocation2 + $0xac] sm:$0xf]
      %v992 = vld [vmem:[#allocation2 + $0xb4] sm:$0xf]
      %v993 = vld [vmem:[#allocation2 + $0xb8] sm:$0xf]
      %994 = vst [vmem:[#allocation3] sm:$0xf] %v962
      %995 = vst [vmem:[#allocation3 + $0x24] sm:$0xf] %v963
      %996 = vst [vmem:[#allocation3 + $0x48] sm:$0xf] %v964
      %997 = vst [vmem:[#allocation3 + $0x6c] sm:$0xf] %v965
      %998 = vst [vmem:[#allocation3 + $0x90] sm:$0xf] %v966
      %999 = vst [vmem:[#allocation3 + $0xb4] sm:$0xf] %v967
      %1000 = vst [vmem:[#allocation3 + $0xd8] sm:$0xf] %v968
      %1001 = vst [vmem:[#allocation3 + $0xfc] sm:$0xf] %v969
      %1002 = vst [vmem:[#allocation3 + $0x120] sm:$0xf] %v970
      %1003 = vst [vmem:[#allocation3 + $0x144] sm:$0xf] %v971
      %1004 = vst [vmem:[#allocation3 + $0x168] sm:$0xf] %v972
      %1005 = vst [vmem:[#allocation3 + $0x18c] sm:$0xf] %v973
      %1006 = vst [vmem:[#allocation3 + $0x1b0] sm:$0xf] %v974
      %1007 = vst [vmem:[#allocation3 + $0x1d4] sm:$0xf] %v975
      %1008 = vst [vmem:[#allocation3 + $0x1f8] sm:$0xf] %v976
      %1009 = vst [vmem:[#allocation3 + $0x21c] sm:$0xf] %v977
      %1010 = vst [vmem:[#allocation3 + $0x240] sm:$0xf] %v978
      %1011 = vst [vmem:[#allocation3 + $0x264] sm:$0xf] %v979
      %1012 = vst [vmem:[#allocation3 + $0x288] sm:$0xf] %v980
      %1013 = vst [vmem:[#allocation3 + $0x2ac] sm:$0xf] %v981
      %1014 = vst [vmem:[#allocation3 + $0x2d0] sm:$0xf] %v982
      %1015 = vst [vmem:[#allocation3 + $0x2f4] sm:$0xf] %v983
      %1016 = vst [vmem:[#allocation3 + $0x318] sm:$0xf] %v984
      %1017 = vst [vmem:[#allocation3 + $0x33c] sm:$0xf] %v985
      %1018 = vst [vmem:[#allocation3 + $0x360] sm:$0xf] %v986
      %1019 = vst [vmem:[#allocation3 + $0x384] sm:$0xf] %v987
      %1020 = vst [vmem:[#allocation3 + $0x3a8] sm:$0xf] %v988
      %1021 = vst [vmem:[#allocation3 + $0x3cc] sm:$0xf] %v989
      %1022 = vst [vmem:[#allocation3 + $0x3f0] sm:$0xf] %v990
      %1023 = vst [vmem:[#allocation3 + $0x414] sm:$0xf] %v991
      %1024 = vst [vmem:[#allocation3 + $0x438] sm:$0xf] %v992
      %1025 = vst [vmem:[#allocation3 + $0x45c] sm:$0xf] %v993
      %v1026 = vld [vmem:[#allocation2] sm:$0xf]
      %v1027 = vld [vmem:[#allocation2 + $0x4] sm:$0xf]
      %v1028 = vld [vmem:[#allocation2 + $0x8] sm:$0x1]
      %v1029 = vld [vmem:[#allocation2 + $0xc] sm:$0xf]
      %v1030 = vld [vmem:[#allocation2 + $0x10] sm:$0xf]
      %v1031 = vld [vmem:[#allocation2 + $0x14] sm:$0x1]
      %v1032 = vld [vmem:[#allocation2 + $0x18] sm:$0xf]
      %v1033 = vld [vmem:[#allocation2 + $0x1c] sm:$0xf]
      %v1034 = vld [vmem:[#allocation2 + $0x20] sm:$0x1]
      %v1035 = vld [vmem:[#allocation2 + $0x24] sm:$0xf]
      %v1036 = vld [vmem:[#allocation2 + $0x28] sm:$0xf]
      %v1037 = vld [vmem:[#allocation2 + $0x2c] sm:$0x1]
      %v1038 = vld [vmem:[#allocation2 + $0x30] sm:$0xf]
      %v1039 = vld [vmem:[#allocation2 + $0x34] sm:$0xf]
      %v1040 = vld [vmem:[#allocation2 + $0x38] sm:$0x1]
      %v1041 = vld [vmem:[#allocation2 + $0x3c] sm:$0xf]
      %v1042 = vld [vmem:[#allocation2 + $0x40] sm:$0xf]
      %v1043 = vld [vmem:[#allocation2 + $0x44] sm:$0x1]
      %v1044 = vld [vmem:[#allocation2 + $0x48] sm:$0xf]
      %v1045 = vld [vmem:[#allocation2 + $0x4c] sm:$0xf]
      %v1046 = vld [vmem:[#allocation2 + $0x50] sm:$0x1]
      %v1047 = vld [vmem:[#allocation2 + $0x54] sm:$0xf]
      %v1048 = vld [vmem:[#allocation2 + $0x58] sm:$0xf]
      %v1049 = vld [vmem:[#allocation2 + $0x5c] sm:$0x1]
      %v1050 = vld [vmem:[#allocation2 + $0x60] sm:$0xf]
      %v1051 = vld [vmem:[#allocation2 + $0x64] sm:$0xf]
      %v1052 = vld [vmem:[#allocation2 + $0x68] sm:$0x1]
      %v1053 = vld [vmem:[#allocation2 + $0x6c] sm:$0xf]
      %v1054 = vld [vmem:[#allocation2 + $0x70] sm:$0xf]
      %v1055 = vld [vmem:[#allocation2 + $0x74] sm:$0x1]
      %v1056 = vld [vmem:[#allocation2 + $0x78] sm:$0xf]
      %v1057 = vld [vmem:[#allocation2 + $0x7c] sm:$0xf]
      %v1058 = vld [vmem:[#allocation2 + $0x80] sm:$0x1]
      %v1059 = vld [vmem:[#allocation2 + $0x84] sm:$0xf]
      %v1060 = vld [vmem:[#allocation2 + $0x88] sm:$0xf]
      %v1061 = vld [vmem:[#allocation2 + $0x8c] sm:$0x1]
      %v1062 = vld [vmem:[#allocation2 + $0x90] sm:$0xf]
      %v1063 = vld [vmem:[#allocation2 + $0x94] sm:$0xf]
      %v1064 = vld [vmem:[#allocation2 + $0x98] sm:$0x1]
      %v1065 = vld [vmem:[#allocation2 + $0x9c] sm:$0xf]
      %v1066 = vld [vmem:[#allocation2 + $0xa0] sm:$0xf]
      %v1067 = vld [vmem:[#allocation2 + $0xa4] sm:$0x1]
      %v1068 = vld [vmem:[#allocation2 + $0xa8] sm:$0xf]
      %v1069 = vld [vmem:[#allocation2 + $0xac] sm:$0xf]
      %v1070 = vld [vmem:[#allocation2 + $0xb0] sm:$0x1]
      %v1071 = vld [vmem:[#allocation2 + $0xb4] sm:$0xf]
      %v1072 = vld [vmem:[#allocation2 + $0xb8] sm:$0xf]
      %v1073 = vld [vmem:[#allocation2 + $0xbc] sm:$0x1]
      %vm1074 = vsmask.f32 3328
      %vm1075 = vsmask.f32 7440
      %vm1076 = vmor %vm1074, %vm1075
      %v1078 = vshrl.u32 %v1026, 16
      %v1080 = vrot.slane %v1078, 4
      %v1081 = vshll.u32 %v1026, 16
      %v1083 = vrot.slane %v1081, 5
      %v1084 = vor.u32 %v1080, %v1083
      %v1085 = vrot.slane %v1084, 4
      %v1087 = vshll.u32 %v1027, 16
      %v1089 = vrot.slane %v1087, 5
      %v1090 = vsel %vm1076, %v1085, %v1089
      %v1091 = vshrl.u32 %v1027, 16
      %v1093 = vrot.slane %v1091, 4
      %v1094 = vor.u32 %v1093, %v1089
      %v1095 = vrot.slane %v1094, 4
      %v1097 = vshll.u32 %v1028, 16
      %v1099 = vrot.slane %v1097, 5
      %v1100 = vsel %vm1076, %v1095, %v1099
      %v1102 = vshrl.u32 %v1029, 16
      %v1104 = vrot.slane %v1102, 4
      %v1105 = vshll.u32 %v1029, 16
      %v1107 = vrot.slane %v1105, 5
      %v1108 = vor.u32 %v1104, %v1107
      %v1109 = vrot.slane %v1108, 4
      %v1111 = vshll.u32 %v1030, 16
      %v1113 = vrot.slane %v1111, 5
      %v1114 = vsel %vm1076, %v1109, %v1113
      %v1115 = vshrl.u32 %v1030, 16
      %v1117 = vrot.slane %v1115, 4
      %v1118 = vor.u32 %v1117, %v1113
      %v1119 = vrot.slane %v1118, 4
      %v1121 = vshll.u32 %v1031, 16
      %v1123 = vrot.slane %v1121, 5
      %v1124 = vsel %vm1076, %v1119, %v1123
      %v1126 = vshrl.u32 %v1032, 16
      %v1128 = vrot.slane %v1126, 4
      %v1129 = vshll.u32 %v1032, 16
      %v1131 = vrot.slane %v1129, 5
      %v1132 = vor.u32 %v1128, %v1131
      %v1133 = vrot.slane %v1132, 4
      %v1135 = vshll.u32 %v1033, 16
      %v1137 = vrot.slane %v1135, 5
      %v1138 = vsel %vm1076, %v1133, %v1137
      %v1139 = vshrl.u32 %v1033, 16
      %v1141 = vrot.slane %v1139, 4
      %v1142 = vor.u32 %v1141, %v1137
      %v1143 = vrot.slane %v1142, 4
      %v1145 = vshll.u32 %v1034, 16
      %v1147 = vrot.slane %v1145, 5
      %v1148 = vsel %vm1076, %v1143, %v1147
      %v1150 = vshrl.u32 %v1035, 16
      %v1152 = vrot.slane %v1150, 4
      %v1153 = vshll.u32 %v1035, 16
      %v1155 = vrot.slane %v1153, 5
      %v1156 = vor.u32 %v1152, %v1155
      %v1157 = vrot.slane %v1156, 4
      %v1159 = vshll.u32 %v1036, 16
      %v1161 = vrot.slane %v1159, 5
      %v1162 = vsel %vm1076, %v1157, %v1161
      %v1163 = vshrl.u32 %v1036, 16
      %v1165 = vrot.slane %v1163, 4
      %v1166 = vor.u32 %v1165, %v1161
      %v1167 = vrot.slane %v1166, 4
      %v1169 = vshll.u32 %v1037, 16
      %v1171 = vrot.slane %v1169, 5
      %v1172 = vsel %vm1076, %v1167, %v1171
      %v1174 = vshrl.u32 %v1038, 16
      %v1176 = vrot.slane %v1174, 4
      %v1177 = vshll.u32 %v1038, 16
      %v1179 = vrot.slane %v1177, 5
      %v1180 = vor.u32 %v1176, %v1179
      %v1181 = vrot.slane %v1180, 4
      %v1183 = vshll.u32 %v1039, 16
      %v1185 = vrot.slane %v1183, 5
      %v1186 = vsel %vm1076, %v1181, %v1185
      %v1187 = vshrl.u32 %v1039, 16
      %v1189 = vrot.slane %v1187, 4
      %v1190 = vor.u32 %v1189, %v1185
      %v1191 = vrot.slane %v1190, 4
      %v1193 = vshll.u32 %v1040, 16
      %v1195 = vrot.slane %v1193, 5
      %v1196 = vsel %vm1076, %v1191, %v1195
      %v1198 = vshrl.u32 %v1041, 16
      %v1200 = vrot.slane %v1198, 4
      %v1201 = vshll.u32 %v1041, 16
      %v1203 = vrot.slane %v1201, 5
      %v1204 = vor.u32 %v1200, %v1203
      %v1205 = vrot.slane %v1204, 4
      %v1207 = vshll.u32 %v1042, 16
      %v1209 = vrot.slane %v1207, 5
      %v1210 = vsel %vm1076, %v1205, %v1209
      %v1211 = vshrl.u32 %v1042, 16
      %v1213 = vrot.slane %v1211, 4
      %v1214 = vor.u32 %v1213, %v1209
      %v1215 = vrot.slane %v1214, 4
      %v1217 = vshll.u32 %v1043, 16
      %v1219 = vrot.slane %v1217, 5
      %v1220 = vsel %vm1076, %v1215, %v1219
      %v1222 = vshrl.u32 %v1044, 16
      %v1224 = vrot.slane %v1222, 4
      %v1225 = vshll.u32 %v1044, 16
      %v1227 = vrot.slane %v1225, 5
      %v1228 = vor.u32 %v1224, %v1227
      %v1229 = vrot.slane %v1228, 4
      %v1231 = vshll.u32 %v1045, 16
      %v1233 = vrot.slane %v1231, 5
      %v1234 = vsel %vm1076, %v1229, %v1233
      %v1235 = vshrl.u32 %v1045, 16
      %v1237 = vrot.slane %v1235, 4
      %v1238 = vor.u32 %v1237, %v1233
      %v1239 = vrot.slane %v1238, 4
      %v1241 = vshll.u32 %v1046, 16
      %v1243 = vrot.slane %v1241, 5
      %v1244 = vsel %vm1076, %v1239, %v1243
      %v1246 = vshrl.u32 %v1047, 16
      %v1248 = vrot.slane %v1246, 4
      %v1249 = vshll.u32 %v1047, 16
      %v1251 = vrot.slane %v1249, 5
      %v1252 = vor.u32 %v1248, %v1251
      %v1253 = vrot.slane %v1252, 4
      %v1255 = vshll.u32 %v1048, 16
      %v1257 = vrot.slane %v1255, 5
      %v1258 = vsel %vm1076, %v1253, %v1257
      %v1259 = vshrl.u32 %v1048, 16
      %v1261 = vrot.slane %v1259, 4
      %v1262 = vor.u32 %v1261, %v1257
      %v1263 = vrot.slane %v1262, 4
      %v1265 = vshll.u32 %v1049, 16
      %v1267 = vrot.slane %v1265, 5
      %v1268 = vsel %vm1076, %v1263, %v1267
      %v1270 = vshrl.u32 %v1050, 16
      %v1272 = vrot.slane %v1270, 4
      %v1273 = vshll.u32 %v1050, 16
      %v1275 = vrot.slane %v1273, 5
      %v1276 = vor.u32 %v1272, %v1275
      %v1277 = vrot.slane %v1276, 4
      %v1279 = vshll.u32 %v1051, 16
      %v1281 = vrot.slane %v1279, 5
      %v1282 = vsel %vm1076, %v1277, %v1281
      %v1283 = vshrl.u32 %v1051, 16
      %v1285 = vrot.slane %v1283, 4
      %v1286 = vor.u32 %v1285, %v1281
      %v1287 = vrot.slane %v1286, 4
      %v1289 = vshll.u32 %v1052, 16
      %v1291 = vrot.slane %v1289, 5
      %v1292 = vsel %vm1076, %v1287, %v1291
      %v1294 = vshrl.u32 %v1053, 16
      %v1296 = vrot.slane %v1294, 4
      %v1297 = vshll.u32 %v1053, 16
      %v1299 = vrot.slane %v1297, 5
      %v1300 = vor.u32 %v1296, %v1299
      %v1301 = vrot.slane %v1300, 4
      %v1303 = vshll.u32 %v1054, 16
      %v1305 = vrot.slane %v1303, 5
      %v1306 = vsel %vm1076, %v1301, %v1305
      %v1307 = vshrl.u32 %v1054, 16
      %v1309 = vrot.slane %v1307, 4
      %v1310 = vor.u32 %v1309, %v1305
      %v1311 = vrot.slane %v1310, 4
      %v1313 = vshll.u32 %v1055, 16
      %v1315 = vrot.slane %v1313, 5
      %v1316 = vsel %vm1076, %v1311, %v1315
      %v1318 = vshrl.u32 %v1056, 16
      %v1320 = vrot.slane %v1318, 4
      %v1321 = vshll.u32 %v1056, 16
      %v1323 = vrot.slane %v1321, 5
      %v1324 = vor.u32 %v1320, %v1323
      %v1325 = vrot.slane %v1324, 4
      %v1327 = vshll.u32 %v1057, 16
      %v1329 = vrot.slane %v1327, 5
      %v1330 = vsel %vm1076, %v1325, %v1329
      %v1331 = vshrl.u32 %v1057, 16
      %v1333 = vrot.slane %v1331, 4
      %v1334 = vor.u32 %v1333, %v1329
      %v1335 = vrot.slane %v1334, 4
      %v1337 = vshll.u32 %v1058, 16
      %v1339 = vrot.slane %v1337, 5
      %v1340 = vsel %vm1076, %v1335, %v1339
      %v1342 = vshrl.u32 %v1059, 16
      %v1344 = vrot.slane %v1342, 4
      %v1345 = vshll.u32 %v1059, 16
      %v1347 = vrot.slane %v1345, 5
      %v1348 = vor.u32 %v1344, %v1347
      %v1349 = vrot.slane %v1348, 4
      %v1351 = vshll.u32 %v1060, 16
      %v1353 = vrot.slane %v1351, 5
      %v1354 = vsel %vm1076, %v1349, %v1353
      %v1355 = vshrl.u32 %v1060, 16
      %v1357 = vrot.slane %v1355, 4
      %v1358 = vor.u32 %v1357, %v1353
      %v1359 = vrot.slane %v1358, 4
      %v1361 = vshll.u32 %v1061, 16
      %v1363 = vrot.slane %v1361, 5
      %v1364 = vsel %vm1076, %v1359, %v1363
      %v1366 = vshrl.u32 %v1062, 16
      %v1368 = vrot.slane %v1366, 4
      %v1369 = vshll.u32 %v1062, 16
      %v1371 = vrot.slane %v1369, 5
      %v1372 = vor.u32 %v1368, %v1371
      %v1373 = vrot.slane %v1372, 4
      %v1375 = vshll.u32 %v1063, 16
      %v1377 = vrot.slane %v1375, 5
      %v1378 = vsel %vm1076, %v1373, %v1377
      %v1379 = vshrl.u32 %v1063, 16
      %v1381 = vrot.slane %v1379, 4
      %v1382 = vor.u32 %v1381, %v1377
      %v1383 = vrot.slane %v1382, 4
      %v1385 = vshll.u32 %v1064, 16
      %v1387 = vrot.slane %v1385, 5
      %v1388 = vsel %vm1076, %v1383, %v1387
      %v1390 = vshrl.u32 %v1065, 16
      %v1392 = vrot.slane %v1390, 4
      %v1393 = vshll.u32 %v1065, 16
      %v1395 = vrot.slane %v1393, 5
      %v1396 = vor.u32 %v1392, %v1395
      %v1397 = vrot.slane %v1396, 4
      %v1399 = vshll.u32 %v1066, 16
      %v1401 = vrot.slane %v1399, 5
      %v1402 = vsel %vm1076, %v1397, %v1401
      %v1403 = vshrl.u32 %v1066, 16
      %v1405 = vrot.slane %v1403, 4
      %v1406 = vor.u32 %v1405, %v1401
      %v1407 = vrot.slane %v1406, 4
      %v1409 = vshll.u32 %v1067, 16
      %v1411 = vrot.slane %v1409, 5
      %v1412 = vsel %vm1076, %v1407, %v1411
      %v1414 = vshrl.u32 %v1068, 16
      %v1416 = vrot.slane %v1414, 4
      %v1417 = vshll.u32 %v1068, 16
      %v1419 = vrot.slane %v1417, 5
      %v1420 = vor.u32 %v1416, %v1419
      %v1421 = vrot.slane %v1420, 4
      %v1423 = vshll.u32 %v1069, 16
      %v1425 = vrot.slane %v1423, 5
      %v1426 = vsel %vm1076, %v1421, %v1425
      %v1427 = vshrl.u32 %v1069, 16
      %v1429 = vrot.slane %v1427, 4
      %v1430 = vor.u32 %v1429, %v1425
      %v1431 = vrot.slane %v1430, 4
      %v1433 = vshll.u32 %v1070, 16
      %v1435 = vrot.slane %v1433, 5
      %v1436 = vsel %vm1076, %v1431, %v1435
      %v1438 = vshrl.u32 %v1071, 16
      %v1440 = vrot.slane %v1438, 4
      %v1441 = vshll.u32 %v1071, 16
      %v1443 = vrot.slane %v1441, 5
      %v1444 = vor.u32 %v1440, %v1443
      %v1445 = vrot.slane %v1444, 4
      %v1447 = vshll.u32 %v1072, 16
      %v1449 = vrot.slane %v1447, 5
      %v1450 = vsel %vm1076, %v1445, %v1449
      %v1451 = vshrl.u32 %v1072, 16
      %v1453 = vrot.slane %v1451, 4
      %v1454 = vor.u32 %v1453, %v1449
      %v1455 = vrot.slane %v1454, 4
      %v1457 = vshll.u32 %v1073, 16
      %v1459 = vrot.slane %v1457, 5
      %v1460 = vsel %vm1076, %v1455, %v1459
      %1493 = vst [vmem:[#allocation3 + $0x4] sm:$0xf] %v1090
      %1494 = vst [vmem:[#allocation3 + $0x28] sm:$0xf] %v1100
      %1495 = vst [vmem:[#allocation3 + $0x4c] sm:$0xf] %v1114
      %1496 = vst [vmem:[#allocation3 + $0x70] sm:$0xf] %v1124
      %1497 = vst [vmem:[#allocation3 + $0x94] sm:$0xf] %v1138
      %1498 = vst [vmem:[#allocation3 + $0xb8] sm:$0xf] %v1148
      %1499 = vst [vmem:[#allocation3 + $0xdc] sm:$0xf] %v1162
      %1500 = vst [vmem:[#allocation3 + $0x100] sm:$0xf] %v1172
      %1501 = vst [vmem:[#allocation3 + $0x124] sm:$0xf] %v1186
      %1502 = vst [vmem:[#allocation3 + $0x148] sm:$0xf] %v1196
      %1503 = vst [vmem:[#allocation3 + $0x16c] sm:$0xf] %v1210
      %1504 = vst [vmem:[#allocation3 + $0x190] sm:$0xf] %v1220
      %1505 = vst [vmem:[#allocation3 + $0x1b4] sm:$0xf] %v1234
      %1506 = vst [vmem:[#allocation3 + $0x1d8] sm:$0xf] %v1244
      %1507 = vst [vmem:[#allocation3 + $0x1fc] sm:$0xf] %v1258
      %1508 = vst [vmem:[#allocation3 + $0x220] sm:$0xf] %v1268
      %1509 = vst [vmem:[#allocation3 + $0x244] sm:$0xf] %v1282
      %1510 = vst [vmem:[#allocation3 + $0x268] sm:$0xf] %v1292
      %1511 = vst [vmem:[#allocation3 + $0x28c] sm:$0xf] %v1306
      %1512 = vst [vmem:[#allocation3 + $0x2b0] sm:$0xf] %v1316
      %1513 = vst [vmem:[#allocation3 + $0x2d4] sm:$0xf] %v1330
      %1514 = vst [vmem:[#allocation3 + $0x2f8] sm:$0xf] %v1340
      %1515 = vst [vmem:[#allocation3 + $0x31c] sm:$0xf] %v1354
      %1516 = vst [vmem:[#allocation3 + $0x340] sm:$0xf] %v1364
      %1517 = vst [vmem:[#allocation3 + $0x364] sm:$0xf] %v1378
      %1518 = vst [vmem:[#allocation3 + $0x388] sm:$0xf] %v1388
      %1519 = vst [vmem:[#allocation3 + $0x3ac] sm:$0xf] %v1402
      %1520 = vst [vmem:[#allocation3 + $0x3d0] sm:$0xf] %v1412
      %1521 = vst [vmem:[#allocation3 + $0x3f4] sm:$0xf] %v1426
      %1522 = vst [vmem:[#allocation3 + $0x418] sm:$0xf] %v1436
      %1523 = vst [vmem:[#allocation3 + $0x43c] sm:$0xf] %v1450
      %1524 = vst [vmem:[#allocation3 + $0x460] sm:$0xf] %v1460
      %v1525 = vld [vmem:[#allocation2] sm:$0xe]
      %v1526 = vld [vmem:[#allocation2 + $0x4] sm:$0xf]
      %v1527 = vld [vmem:[#allocation2 + $0x8] sm:$0x1]
      %v1528 = vld [vmem:[#allocation2 + $0xc] sm:$0xe]
      %v1529 = vld [vmem:[#allocation2 + $0x10] sm:$0xf]
      %v1530 = vld [vmem:[#allocation2 + $0x14] sm:$0x1]
      %v1531 = vld [vmem:[#allocation2 + $0x18] sm:$0xe]
      %v1532 = vld [vmem:[#allocation2 + $0x1c] sm:$0xf]
      %v1533 = vld [vmem:[#allocation2 + $0x20] sm:$0x1]
      %v1534 = vld [vmem:[#allocation2 + $0x24] sm:$0xe]
      %v1535 = vld [vmem:[#allocation2 + $0x28] sm:$0xf]
      %v1536 = vld [vmem:[#allocation2 + $0x2c] sm:$0x1]
      %v1537 = vld [vmem:[#allocation2 + $0x30] sm:$0xe]
      %v1538 = vld [vmem:[#allocation2 + $0x34] sm:$0xf]
      %v1539 = vld [vmem:[#allocation2 + $0x38] sm:$0x1]
      %v1540 = vld [vmem:[#allocation2 + $0x3c] sm:$0xe]
      %v1541 = vld [vmem:[#allocation2 + $0x40] sm:$0xf]
      %v1542 = vld [vmem:[#allocation2 + $0x44] sm:$0x1]
      %v1543 = vld [vmem:[#allocation2 + $0x48] sm:$0xe]
      %v1544 = vld [vmem:[#allocation2 + $0x4c] sm:$0xf]
      %v1545 = vld [vmem:[#allocation2 + $0x50] sm:$0x1]
      %v1546 = vld [vmem:[#allocation2 + $0x54] sm:$0xe]
      %v1547 = vld [vmem:[#allocation2 + $0x58] sm:$0xf]
      %v1548 = vld [vmem:[#allocation2 + $0x5c] sm:$0x1]
      %v1549 = vld [vmem:[#allocation2 + $0x60] sm:$0xe]
      %v1550 = vld [vmem:[#allocation2 + $0x64] sm:$0xf]
      %v1551 = vld [vmem:[#allocation2 + $0x68] sm:$0x1]
      %v1552 = vld [vmem:[#allocation2 + $0x6c] sm:$0xe]
      %v1553 = vld [vmem:[#allocation2 + $0x70] sm:$0xf]
      %v1554 = vld [vmem:[#allocation2 + $0x74] sm:$0x1]
      %v1555 = vld [vmem:[#allocation2 + $0x78] sm:$0xe]
      %v1556 = vld [vmem:[#allocation2 + $0x7c] sm:$0xf]
      %v1557 = vld [vmem:[#allocation2 + $0x80] sm:$0x1]
      %v1558 = vld [vmem:[#allocation2 + $0x84] sm:$0xe]
      %v1559 = vld [vmem:[#allocation2 + $0x88] sm:$0xf]
      %v1560 = vld [vmem:[#allocation2 + $0x8c] sm:$0x1]
      %v1561 = vld [vmem:[#allocation2 + $0x90] sm:$0xe]
      %v1562 = vld [vmem:[#allocation2 + $0x94] sm:$0xf]
      %v1563 = vld [vmem:[#allocation2 + $0x98] sm:$0x1]
      %v1564 = vld [vmem:[#allocation2 + $0x9c] sm:$0xe]
      %v1565 = vld [vmem:[#allocation2 + $0xa0] sm:$0xf]
      %v1566 = vld [vmem:[#allocation2 + $0xa4] sm:$0x1]
      %v1567 = vld [vmem:[#allocation2 + $0xa8] sm:$0xe]
      %v1568 = vld [vmem:[#allocation2 + $0xac] sm:$0xf]
      %v1569 = vld [vmem:[#allocation2 + $0xb0] sm:$0x1]
      %v1570 = vld [vmem:[#allocation2 + $0xb4] sm:$0xe]
      %v1571 = vld [vmem:[#allocation2 + $0xb8] sm:$0xf]
      %v1572 = vld [vmem:[#allocation2 + $0xbc] sm:$0x1]
      %vm1621 = vcmask 1042432
      %vm1622 = vcmask 1046532
      %vm1623 = vmor %vm1621, %vm1622
      %v1624 = vrot.slane %v1525, 5
      %v1625 = vrot.slane %v1624, 4
      %v1626 = vrot.slane %v1526, 5
      %v1627 = vsel %vm1623, %v1625, %v1626
      %v1628 = vrot.slane %v1626, 4
      %v1629 = vrot.slane %v1527, 5
      %v1630 = vsel %vm1623, %v1628, %v1629
      %v1631 = vrot.slane %v1528, 5
      %v1632 = vrot.slane %v1631, 4
      %v1633 = vrot.slane %v1529, 5
      %v1634 = vsel %vm1623, %v1632, %v1633
      %v1635 = vrot.slane %v1633, 4
      %v1636 = vrot.slane %v1530, 5
      %v1637 = vsel %vm1623, %v1635, %v1636
      %v1638 = vrot.slane %v1531, 5
      %v1639 = vrot.slane %v1638, 4
      %v1640 = vrot.slane %v1532, 5
      %v1641 = vsel %vm1623, %v1639, %v1640
      %v1642 = vrot.slane %v1640, 4
      %v1643 = vrot.slane %v1533, 5
      %v1644 = vsel %vm1623, %v1642, %v1643
      %v1645 = vrot.slane %v1534, 5
      %v1646 = vrot.slane %v1645, 4
      %v1647 = vrot.slane %v1535, 5
      %v1648 = vsel %vm1623, %v1646, %v1647
      %v1649 = vrot.slane %v1647, 4
      %v1650 = vrot.slane %v1536, 5
      %v1651 = vsel %vm1623, %v1649, %v1650
      %v1652 = vrot.slane %v1537, 5
      %v1653 = vrot.slane %v1652, 4
      %v1654 = vrot.slane %v1538, 5
      %v1655 = vsel %vm1623, %v1653, %v1654
      %v1656 = vrot.slane %v1654, 4
      %v1657 = vrot.slane %v1539, 5
      %v1658 = vsel %vm1623, %v1656, %v1657
      %v1659 = vrot.slane %v1540, 5
      %v1660 = vrot.slane %v1659, 4
      %v1661 = vrot.slane %v1541, 5
      %v1662 = vsel %vm1623, %v1660, %v1661
      %v1663 = vrot.slane %v1661, 4
      %v1664 = vrot.slane %v1542, 5
      %v1665 = vsel %vm1623, %v1663, %v1664
      %v1666 = vrot.slane %v1543, 5
      %v1667 = vrot.slane %v1666, 4
      %v1668 = vrot.slane %v1544, 5
      %v1669 = vsel %vm1623, %v1667, %v1668
      %v1670 = vrot.slane %v1668, 4
      %v1671 = vrot.slane %v1545, 5
      %v1672 = vsel %vm1623, %v1670, %v1671
      %v1673 = vrot.slane %v1546, 5
      %v1674 = vrot.slane %v1673, 4
      %v1675 = vrot.slane %v1547, 5
      %v1676 = vsel %vm1623, %v1674, %v1675
      %v1677 = vrot.slane %v1675, 4
      %v1678 = vrot.slane %v1548, 5
      %v1679 = vsel %vm1623, %v1677, %v1678
      %v1680 = vrot.slane %v1549, 5
      %v1681 = vrot.slane %v1680, 4
      %v1682 = vrot.slane %v1550, 5
      %v1683 = vsel %vm1623, %v1681, %v1682
      %v1684 = vrot.slane %v1682, 4
      %v1685 = vrot.slane %v1551, 5
      %v1686 = vsel %vm1623, %v1684, %v1685
      %v1687 = vrot.slane %v1552, 5
      %v1688 = vrot.slane %v1687, 4
      %v1689 = vrot.slane %v1553, 5
      %v1690 = vsel %vm1623, %v1688, %v1689
      %v1691 = vrot.slane %v1689, 4
      %v1692 = vrot.slane %v1554, 5
      %v1693 = vsel %vm1623, %v1691, %v1692
      %v1694 = vrot.slane %v1555, 5
      %v1695 = vrot.slane %v1694, 4
      %v1696 = vrot.slane %v1556, 5
      %v1697 = vsel %vm1623, %v1695, %v1696
      %v1698 = vrot.slane %v1696, 4
      %v1699 = vrot.slane %v1557, 5
      %v1700 = vsel %vm1623, %v1698, %v1699
      %v1701 = vrot.slane %v1558, 5
      %v1702 = vrot.slane %v1701, 4
      %v1703 = vrot.slane %v1559, 5
      %v1704 = vsel %vm1623, %v1702, %v1703
      %v1705 = vrot.slane %v1703, 4
      %v1706 = vrot.slane %v1560, 5
      %v1707 = vsel %vm1623, %v1705, %v1706
      %v1708 = vrot.slane %v1561, 5
      %v1709 = vrot.slane %v1708, 4
      %v1710 = vrot.slane %v1562, 5
      %v1711 = vsel %vm1623, %v1709, %v1710
      %v1712 = vrot.slane %v1710, 4
      %v1713 = vrot.slane %v1563, 5
      %v1714 = vsel %vm1623, %v1712, %v1713
      %v1715 = vrot.slane %v1564, 5
      %v1716 = vrot.slane %v1715, 4
      %v1717 = vrot.slane %v1565, 5
      %v1718 = vsel %vm1623, %v1716, %v1717
      %v1719 = vrot.slane %v1717, 4
      %v1720 = vrot.slane %v1566, 5
      %v1721 = vsel %vm1623, %v1719, %v1720
      %v1722 = vrot.slane %v1567, 5
      %v1723 = vrot.slane %v1722, 4
      %v1724 = vrot.slane %v1568, 5
      %v1725 = vsel %vm1623, %v1723, %v1724
      %v1726 = vrot.slane %v1724, 4
      %v1727 = vrot.slane %v1569, 5
      %v1728 = vsel %vm1623, %v1726, %v1727
      %v1729 = vrot.slane %v1570, 5
      %v1730 = vrot.slane %v1729, 4
      %v1731 = vrot.slane %v1571, 5
      %v1732 = vsel %vm1623, %v1730, %v1731
      %v1733 = vrot.slane %v1731, 4
      %v1734 = vrot.slane %v1572, 5
      %v1735 = vsel %vm1623, %v1733, %v1734
      %1768 = vst [vmem:[#allocation3 + $0x8] sm:$0xf] %v1627
      %1769 = vst [vmem:[#allocation3 + $0x2c] sm:$0xf] %v1630
      %1770 = vst [vmem:[#allocation3 + $0x50] sm:$0xf] %v1634
      %1771 = vst [vmem:[#allocation3 + $0x74] sm:$0xf] %v1637
      %1772 = vst [vmem:[#allocation3 + $0x98] sm:$0xf] %v1641
      %1773 = vst [vmem:[#allocation3 + $0xbc] sm:$0xf] %v1644
      %1774 = vst [vmem:[#allocation3 + $0xe0] sm:$0xf] %v1648
      %1775 = vst [vmem:[#allocation3 + $0x104] sm:$0xf] %v1651
      %1776 = vst [vmem:[#allocation3 + $0x128] sm:$0xf] %v1655
      %1777 = vst [vmem:[#allocation3 + $0x14c] sm:$0xf] %v1658
      %1778 = vst [vmem:[#allocation3 + $0x170] sm:$0xf] %v1662
      %1779 = vst [vmem:[#allocation3 + $0x194] sm:$0xf] %v1665
      %1780 = vst [vmem:[#allocation3 + $0x1b8] sm:$0xf] %v1669
      %1781 = vst [vmem:[#allocation3 + $0x1dc] sm:$0xf] %v1672
      %1782 = vst [vmem:[#allocation3 + $0x200] sm:$0xf] %v1676
      %1783 = vst [vmem:[#allocation3 + $0x224] sm:$0xf] %v1679
      %1784 = vst [vmem:[#allocation3 + $0x248] sm:$0xf] %v1683
      %1785 = vst [vmem:[#allocation3 + $0x26c] sm:$0xf] %v1686
      %1786 = vst [vmem:[#allocation3 + $0x290] sm:$0xf] %v1690
      %1787 = vst [vmem:[#allocation3 + $0x2b4] sm:$0xf] %v1693
      %1788 = vst [vmem:[#allocation3 + $0x2d8] sm:$0xf] %v1697
      %1789 = vst [vmem:[#allocation3 + $0x2fc] sm:$0xf] %v1700
      %1790 = vst [vmem:[#allocation3 + $0x320] sm:$0xf] %v1704
      %1791 = vst [vmem:[#allocation3 + $0x344] sm:$0xf] %v1707
      %1792 = vst [vmem:[#allocation3 + $0x368] sm:$0xf] %v1711
      %1793 = vst [vmem:[#allocation3 + $0x38c] sm:$0xf] %v1714
      %1794 = vst [vmem:[#allocation3 + $0x3b0] sm:$0xf] %v1718
      %1795 = vst [vmem:[#allocation3 + $0x3d4] sm:$0xf] %v1721
      %1796 = vst [vmem:[#allocation3 + $0x3f8] sm:$0xf] %v1725
      %1797 = vst [vmem:[#allocation3 + $0x41c] sm:$0xf] %v1728
      %1798 = vst [vmem:[#allocation3 + $0x440] sm:$0xf] %v1732
      %1799 = vst [vmem:[#allocation3 + $0x464] sm:$0xf] %v1735
      %v1800 = vld [vmem:[%s847] sm:$0xf]
      %v1801 = vld [vmem:[%s847 + $0x4] sm:$0xf]
      %v1802 = vld [vmem:[%s847 + $0xc] sm:$0xf]
      %v1803 = vld [vmem:[%s847 + $0x10] sm:$0xf]
      %v1804 = vld [vmem:[%s847 + $0x18] sm:$0xf]
      %v1805 = vld [vmem:[%s847 + $0x1c] sm:$0xf]
      %v1806 = vld [vmem:[%s847 + $0x24] sm:$0xf]
      %v1807 = vld [vmem:[%s847 + $0x28] sm:$0xf]
      %v1808 = vld [vmem:[%s847 + $0x30] sm:$0xf]
      %v1809 = vld [vmem:[%s847 + $0x34] sm:$0xf]
      %v1810 = vld [vmem:[%s847 + $0x3c] sm:$0xf]
      %v1811 = vld [vmem:[%s847 + $0x40] sm:$0xf]
      %v1812 = vld [vmem:[%s847 + $0x48] sm:$0xf]
      %v1813 = vld [vmem:[%s847 + $0x4c] sm:$0xf]
      %v1814 = vld [vmem:[%s847 + $0x54] sm:$0xf]
      %v1815 = vld [vmem:[%s847 + $0x58] sm:$0xf]
      %v1816 = vld [vmem:[%s847 + $0x60] sm:$0xf]
      %v1817 = vld [vmem:[%s847 + $0x64] sm:$0xf]
      %v1818 = vld [vmem:[%s847 + $0x6c] sm:$0xf]
      %v1819 = vld [vmem:[%s847 + $0x70] sm:$0xf]
      %v1820 = vld [vmem:[%s847 + $0x78] sm:$0xf]
      %v1821 = vld [vmem:[%s847 + $0x7c] sm:$0xf]
      %v1822 = vld [vmem:[%s847 + $0x84] sm:$0xf]
      %v1823 = vld [vmem:[%s847 + $0x88] sm:$0xf]
      %v1824 = vld [vmem:[%s847 + $0x90] sm:$0xf]
      %v1825 = vld [vmem:[%s847 + $0x94] sm:$0xf]
      %v1826 = vld [vmem:[%s847 + $0x9c] sm:$0xf]
      %v1827 = vld [vmem:[%s847 + $0xa0] sm:$0xf]
      %v1828 = vld [vmem:[%s847 + $0xa8] sm:$0xf]
      %v1829 = vld [vmem:[%s847 + $0xac] sm:$0xf]
      %v1830 = vld [vmem:[%s847 + $0xb4] sm:$0xf]
      %v1831 = vld [vmem:[%s847 + $0xb8] sm:$0xf]
      %1832 = vst [vmem:[#allocation3 + $0xc] sm:$0xf] %v1800
      %1833 = vst [vmem:[#allocation3 + $0x30] sm:$0xf] %v1801
      %1834 = vst [vmem:[#allocation3 + $0x54] sm:$0xf] %v1802
      %1835 = vst [vmem:[#allocation3 + $0x78] sm:$0xf] %v1803
      %1836 = vst [vmem:[#allocation3 + $0x9c] sm:$0xf] %v1804
      %1837 = vst [vmem:[#allocation3 + $0xc0] sm:$0xf] %v1805
      %1838 = vst [vmem:[#allocation3 + $0xe4] sm:$0xf] %v1806
      %1839 = vst [vmem:[#allocation3 + $0x108] sm:$0xf] %v1807
      %1840 = vst [vmem:[#allocation3 + $0x12c] sm:$0xf] %v1808
      %1841 = vst [vmem:[#allocation3 + $0x150] sm:$0xf] %v1809
      %1842 = vst [vmem:[#allocation3 + $0x174] sm:$0xf] %v1810
      %1843 = vst [vmem:[#allocation3 + $0x198] sm:$0xf] %v1811
      %1844 = vst [vmem:[#allocation3 + $0x1bc] sm:$0xf] %v1812
      %1845 = vst [vmem:[#allocation3 + $0x1e0] sm:$0xf] %v1813
      %1846 = vst [vmem:[#allocation3 + $0x204] sm:$0xf] %v1814
      %1847 = vst [vmem:[#allocation3 + $0x228] sm:$0xf] %v1815
      %1848 = vst [vmem:[#allocation3 + $0x24c] sm:$0xf] %v1816
      %1849 = vst [vmem:[#allocation3 + $0x270] sm:$0xf] %v1817
      %1850 = vst [vmem:[#allocation3 + $0x294] sm:$0xf] %v1818
      %1851 = vst [vmem:[#allocation3 + $0x2b8] sm:$0xf] %v1819
      %1852 = vst [vmem:[#allocation3 + $0x2dc] sm:$0xf] %v1820
      %1853 = vst [vmem:[#allocation3 + $0x300] sm:$0xf] %v1821
      %1854 = vst [vmem:[#allocation3 + $0x324] sm:$0xf] %v1822
      %1855 = vst [vmem:[#allocation3 + $0x348] sm:$0xf] %v1823
      %1856 = vst [vmem:[#allocation3 + $0x36c] sm:$0xf] %v1824
      %1857 = vst [vmem:[#allocation3 + $0x390] sm:$0xf] %v1825
      %1858 = vst [vmem:[#allocation3 + $0x3b4] sm:$0xf] %v1826
      %1859 = vst [vmem:[#allocation3 + $0x3d8] sm:$0xf] %v1827
      %1860 = vst [vmem:[#allocation3 + $0x3fc] sm:$0xf] %v1828
      %1861 = vst [vmem:[#allocation3 + $0x420] sm:$0xf] %v1829
      %1862 = vst [vmem:[#allocation3 + $0x444] sm:$0xf] %v1830
      %1863 = vst [vmem:[#allocation3 + $0x468] sm:$0xf] %v1831
      %v1864 = vld [vmem:[%s847] sm:$0xf]
      %v1865 = vld [vmem:[%s847 + $0x4] sm:$0xf]
      %v1866 = vld [vmem:[%s847 + $0x8] sm:$0x1]
      %v1867 = vld [vmem:[%s847 + $0xc] sm:$0xf]
      %v1868 = vld [vmem:[%s847 + $0x10] sm:$0xf]
      %v1869 = vld [vmem:[%s847 + $0x14] sm:$0x1]
      %v1870 = vld [vmem:[%s847 + $0x18] sm:$0xf]
      %v1871 = vld [vmem:[%s847 + $0x1c] sm:$0xf]
      %v1872 = vld [vmem:[%s847 + $0x20] sm:$0x1]
      %v1873 = vld [vmem:[%s847 + $0x24] sm:$0xf]
      %v1874 = vld [vmem:[%s847 + $0x28] sm:$0xf]
      %v1875 = vld [vmem:[%s847 + $0x2c] sm:$0x1]
      %v1876 = vld [vmem:[%s847 + $0x30] sm:$0xf]
      %v1877 = vld [vmem:[%s847 + $0x34] sm:$0xf]
      %v1878 = vld [vmem:[%s847 + $0x38] sm:$0x1]
      %v1879 = vld [vmem:[%s847 + $0x3c] sm:$0xf]
      %v1880 = vld [vmem:[%s847 + $0x40] sm:$0xf]
      %v1881 = vld [vmem:[%s847 + $0x44] sm:$0x1]
      %v1882 = vld [vmem:[%s847 + $0x48] sm:$0xf]
      %v1883 = vld [vmem:[%s847 + $0x4c] sm:$0xf]
      %v1884 = vld [vmem:[%s847 + $0x50] sm:$0x1]
      %v1885 = vld [vmem:[%s847 + $0x54] sm:$0xf]
      %v1886 = vld [vmem:[%s847 + $0x58] sm:$0xf]
      %v1887 = vld [vmem:[%s847 + $0x5c] sm:$0x1]
      %v1888 = vld [vmem:[%s847 + $0x60] sm:$0xf]
      %v1889 = vld [vmem:[%s847 + $0x64] sm:$0xf]
      %v1890 = vld [vmem:[%s847 + $0x68] sm:$0x1]
      %v1891 = vld [vmem:[%s847 + $0x6c] sm:$0xf]
      %v1892 = vld [vmem:[%s847 + $0x70] sm:$0xf]
      %v1893 = vld [vmem:[%s847 + $0x74] sm:$0x1]
      %v1894 = vld [vmem:[%s847 + $0x78] sm:$0xf]
      %v1895 = vld [vmem:[%s847 + $0x7c] sm:$0xf]
      %v1896 = vld [vmem:[%s847 + $0x80] sm:$0x1]
      %v1897 = vld [vmem:[%s847 + $0x84] sm:$0xf]
      %v1898 = vld [vmem:[%s847 + $0x88] sm:$0xf]
      %v1899 = vld [vmem:[%s847 + $0x8c] sm:$0x1]
      %v1900 = vld [vmem:[%s847 + $0x90] sm:$0xf]
      %v1901 = vld [vmem:[%s847 + $0x94] sm:$0xf]
      %v1902 = vld [vmem:[%s847 + $0x98] sm:$0x1]
      %v1903 = vld [vmem:[%s847 + $0x9c] sm:$0xf]
      %v1904 = vld [vmem:[%s847 + $0xa0] sm:$0xf]
      %v1905 = vld [vmem:[%s847 + $0xa4] sm:$0x1]
      %v1906 = vld [vmem:[%s847 + $0xa8] sm:$0xf]
      %v1907 = vld [vmem:[%s847 + $0xac] sm:$0xf]
      %v1908 = vld [vmem:[%s847 + $0xb0] sm:$0x1]
      %v1909 = vld [vmem:[%s847 + $0xb4] sm:$0xf]
      %v1910 = vld [vmem:[%s847 + $0xb8] sm:$0xf]
      %v1911 = vld [vmem:[%s847 + $0xbc] sm:$0x1]
      %v1913 = vshrl.u32 %v1864, 16
      %v1915 = vrot.slane %v1913, 4
      %v1916 = vshll.u32 %v1864, 16
      %v1918 = vrot.slane %v1916, 5
      %v1919 = vor.u32 %v1915, %v1918
      %v1920 = vrot.slane %v1919, 4
      %v1922 = vshll.u32 %v1865, 16
      %v1924 = vrot.slane %v1922, 5
      %v1925 = vsel %vm1076, %v1920, %v1924
      %v1926 = vshrl.u32 %v1865, 16
      %v1928 = vrot.slane %v1926, 4
      %v1929 = vor.u32 %v1928, %v1924
      %v1930 = vrot.slane %v1929, 4
      %v1932 = vshll.u32 %v1866, 16
      %v1934 = vrot.slane %v1932, 5
      %v1935 = vsel %vm1076, %v1930, %v1934
      %v1937 = vshrl.u32 %v1867, 16
      %v1939 = vrot.slane %v1937, 4
      %v1940 = vshll.u32 %v1867, 16
      %v1942 = vrot.slane %v1940, 5
      %v1943 = vor.u32 %v1939, %v1942
      %v1944 = vrot.slane %v1943, 4
      %v1946 = vshll.u32 %v1868, 16
      %v1948 = vrot.slane %v1946, 5
      %v1949 = vsel %vm1076, %v1944, %v1948
      %v1950 = vshrl.u32 %v1868, 16
      %v1952 = vrot.slane %v1950, 4
      %v1953 = vor.u32 %v1952, %v1948
      %v1954 = vrot.slane %v1953, 4
      %v1956 = vshll.u32 %v1869, 16
      %v1958 = vrot.slane %v1956, 5
      %v1959 = vsel %vm1076, %v1954, %v1958
      %v1961 = vshrl.u32 %v1870, 16
      %v1963 = vrot.slane %v1961, 4
      %v1964 = vshll.u32 %v1870, 16
      %v1966 = vrot.slane %v1964, 5
      %v1967 = vor.u32 %v1963, %v1966
      %v1968 = vrot.slane %v1967, 4
      %v1970 = vshll.u32 %v1871, 16
      %v1972 = vrot.slane %v1970, 5
      %v1973 = vsel %vm1076, %v1968, %v1972
      %v1974 = vshrl.u32 %v1871, 16
      %v1976 = vrot.slane %v1974, 4
      %v1977 = vor.u32 %v1976, %v1972
      %v1978 = vrot.slane %v1977, 4
      %v1980 = vshll.u32 %v1872, 16
      %v1982 = vrot.slane %v1980, 5
      %v1983 = vsel %vm1076, %v1978, %v1982
      %v1985 = vshrl.u32 %v1873, 16
      %v1987 = vrot.slane %v1985, 4
      %v1988 = vshll.u32 %v1873, 16
      %v1990 = vrot.slane %v1988, 5
      %v1991 = vor.u32 %v1987, %v1990
      %v1992 = vrot.slane %v1991, 4
      %v1994 = vshll.u32 %v1874, 16
      %v1996 = vrot.slane %v1994, 5
      %v1997 = vsel %vm1076, %v1992, %v1996
      %v1998 = vshrl.u32 %v1874, 16
      %v2000 = vrot.slane %v1998, 4
      %v2001 = vor.u32 %v2000, %v1996
      %v2002 = vrot.slane %v2001, 4
      %v2004 = vshll.u32 %v1875, 16
      %v2006 = vrot.slane %v2004, 5
      %v2007 = vsel %vm1076, %v2002, %v2006
      %v2009 = vshrl.u32 %v1876, 16
      %v2011 = vrot.slane %v2009, 4
      %v2012 = vshll.u32 %v1876, 16
      %v2014 = vrot.slane %v2012, 5
      %v2015 = vor.u32 %v2011, %v2014
      %v2016 = vrot.slane %v2015, 4
      %v2018 = vshll.u32 %v1877, 16
      %v2020 = vrot.slane %v2018, 5
      %v2021 = vsel %vm1076, %v2016, %v2020
      %v2022 = vshrl.u32 %v1877, 16
      %v2024 = vrot.slane %v2022, 4
      %v2025 = vor.u32 %v2024, %v2020
      %v2026 = vrot.slane %v2025, 4
      %v2028 = vshll.u32 %v1878, 16
      %v2030 = vrot.slane %v2028, 5
      %v2031 = vsel %vm1076, %v2026, %v2030
      %v2033 = vshrl.u32 %v1879, 16
      %v2035 = vrot.slane %v2033, 4
      %v2036 = vshll.u32 %v1879, 16
      %v2038 = vrot.slane %v2036, 5
      %v2039 = vor.u32 %v2035, %v2038
      %v2040 = vrot.slane %v2039, 4
      %v2042 = vshll.u32 %v1880, 16
      %v2044 = vrot.slane %v2042, 5
      %v2045 = vsel %vm1076, %v2040, %v2044
      %v2046 = vshrl.u32 %v1880, 16
      %v2048 = vrot.slane %v2046, 4
      %v2049 = vor.u32 %v2048, %v2044
      %v2050 = vrot.slane %v2049, 4
      %v2052 = vshll.u32 %v1881, 16
      %v2054 = vrot.slane %v2052, 5
      %v2055 = vsel %vm1076, %v2050, %v2054
      %v2057 = vshrl.u32 %v1882, 16
      %v2059 = vrot.slane %v2057, 4
      %v2060 = vshll.u32 %v1882, 16
      %v2062 = vrot.slane %v2060, 5
      %v2063 = vor.u32 %v2059, %v2062
      %v2064 = vrot.slane %v2063, 4
      %v2066 = vshll.u32 %v1883, 16
      %v2068 = vrot.slane %v2066, 5
      %v2069 = vsel %vm1076, %v2064, %v2068
      %v2070 = vshrl.u32 %v1883, 16
      %v2072 = vrot.slane %v2070, 4
      %v2073 = vor.u32 %v2072, %v2068
      %v2074 = vrot.slane %v2073, 4
      %v2076 = vshll.u32 %v1884, 16
      %v2078 = vrot.slane %v2076, 5
      %v2079 = vsel %vm1076, %v2074, %v2078
      %v2081 = vshrl.u32 %v1885, 16
      %v2083 = vrot.slane %v2081, 4
      %v2084 = vshll.u32 %v1885, 16
      %v2086 = vrot.slane %v2084, 5
      %v2087 = vor.u32 %v2083, %v2086
      %v2088 = vrot.slane %v2087, 4
      %v2090 = vshll.u32 %v1886, 16
      %v2092 = vrot.slane %v2090, 5
      %v2093 = vsel %vm1076, %v2088, %v2092
      %v2094 = vshrl.u32 %v1886, 16
      %v2096 = vrot.slane %v2094, 4
      %v2097 = vor.u32 %v2096, %v2092
      %v2098 = vrot.slane %v2097, 4
      %v2100 = vshll.u32 %v1887, 16
      %v2102 = vrot.slane %v2100, 5
      %v2103 = vsel %vm1076, %v2098, %v2102
      %v2105 = vshrl.u32 %v1888, 16
      %v2107 = vrot.slane %v2105, 4
      %v2108 = vshll.u32 %v1888, 16
      %v2110 = vrot.slane %v2108, 5
      %v2111 = vor.u32 %v2107, %v2110
      %v2112 = vrot.slane %v2111, 4
      %v2114 = vshll.u32 %v1889, 16
      %v2116 = vrot.slane %v2114, 5
      %v2117 = vsel %vm1076, %v2112, %v2116
      %v2118 = vshrl.u32 %v1889, 16
      %v2120 = vrot.slane %v2118, 4
      %v2121 = vor.u32 %v2120, %v2116
      %v2122 = vrot.slane %v2121, 4
      %v2124 = vshll.u32 %v1890, 16
      %v2126 = vrot.slane %v2124, 5
      %v2127 = vsel %vm1076, %v2122, %v2126
      %v2129 = vshrl.u32 %v1891, 16
      %v2131 = vrot.slane %v2129, 4
      %v2132 = vshll.u32 %v1891, 16
      %v2134 = vrot.slane %v2132, 5
      %v2135 = vor.u32 %v2131, %v2134
      %v2136 = vrot.slane %v2135, 4
      %v2138 = vshll.u32 %v1892, 16
      %v2140 = vrot.slane %v2138, 5
      %v2141 = vsel %vm1076, %v2136, %v2140
      %v2142 = vshrl.u32 %v1892, 16
      %v2144 = vrot.slane %v2142, 4
      %v2145 = vor.u32 %v2144, %v2140
      %v2146 = vrot.slane %v2145, 4
      %v2148 = vshll.u32 %v1893, 16
      %v2150 = vrot.slane %v2148, 5
      %v2151 = vsel %vm1076, %v2146, %v2150
      %v2153 = vshrl.u32 %v1894, 16
      %v2155 = vrot.slane %v2153, 4
      %v2156 = vshll.u32 %v1894, 16
      %v2158 = vrot.slane %v2156, 5
      %v2159 = vor.u32 %v2155, %v2158
      %v2160 = vrot.slane %v2159, 4
      %v2162 = vshll.u32 %v1895, 16
      %v2164 = vrot.slane %v2162, 5
      %v2165 = vsel %vm1076, %v2160, %v2164
      %v2166 = vshrl.u32 %v1895, 16
      %v2168 = vrot.slane %v2166, 4
      %v2169 = vor.u32 %v2168, %v2164
      %v2170 = vrot.slane %v2169, 4
      %v2172 = vshll.u32 %v1896, 16
      %v2174 = vrot.slane %v2172, 5
      %v2175 = vsel %vm1076, %v2170, %v2174
      %v2177 = vshrl.u32 %v1897, 16
      %v2179 = vrot.slane %v2177, 4
      %v2180 = vshll.u32 %v1897, 16
      %v2182 = vrot.slane %v2180, 5
      %v2183 = vor.u32 %v2179, %v2182
      %v2184 = vrot.slane %v2183, 4
      %v2186 = vshll.u32 %v1898, 16
      %v2188 = vrot.slane %v2186, 5
      %v2189 = vsel %vm1076, %v2184, %v2188
      %v2190 = vshrl.u32 %v1898, 16
      %v2192 = vrot.slane %v2190, 4
      %v2193 = vor.u32 %v2192, %v2188
      %v2194 = vrot.slane %v2193, 4
      %v2196 = vshll.u32 %v1899, 16
      %v2198 = vrot.slane %v2196, 5
      %v2199 = vsel %vm1076, %v2194, %v2198
      %v2201 = vshrl.u32 %v1900, 16
      %v2203 = vrot.slane %v2201, 4
      %v2204 = vshll.u32 %v1900, 16
      %v2206 = vrot.slane %v2204, 5
      %v2207 = vor.u32 %v2203, %v2206
      %v2208 = vrot.slane %v2207, 4
      %v2210 = vshll.u32 %v1901, 16
      %v2212 = vrot.slane %v2210, 5
      %v2213 = vsel %vm1076, %v2208, %v2212
      %v2214 = vshrl.u32 %v1901, 16
      %v2216 = vrot.slane %v2214, 4
      %v2217 = vor.u32 %v2216, %v2212
      %v2218 = vrot.slane %v2217, 4
      %v2220 = vshll.u32 %v1902, 16
      %v2222 = vrot.slane %v2220, 5
      %v2223 = vsel %vm1076, %v2218, %v2222
      %v2225 = vshrl.u32 %v1903, 16
      %v2227 = vrot.slane %v2225, 4
      %v2228 = vshll.u32 %v1903, 16
      %v2230 = vrot.slane %v2228, 5
      %v2231 = vor.u32 %v2227, %v2230
      %v2232 = vrot.slane %v2231, 4
      %v2234 = vshll.u32 %v1904, 16
      %v2236 = vrot.slane %v2234, 5
      %v2237 = vsel %vm1076, %v2232, %v2236
      %v2238 = vshrl.u32 %v1904, 16
      %v2240 = vrot.slane %v2238, 4
      %v2241 = vor.u32 %v2240, %v2236
      %v2242 = vrot.slane %v2241, 4
      %v2244 = vshll.u32 %v1905, 16
      %v2246 = vrot.slane %v2244, 5
      %v2247 = vsel %vm1076, %v2242, %v2246
      %v2249 = vshrl.u32 %v1906, 16
      %v2251 = vrot.slane %v2249, 4
      %v2252 = vshll.u32 %v1906, 16
      %v2254 = vrot.slane %v2252, 5
      %v2255 = vor.u32 %v2251, %v2254
      %v2256 = vrot.slane %v2255, 4
      %v2258 = vshll.u32 %v1907, 16
      %v2260 = vrot.slane %v2258, 5
      %v2261 = vsel %vm1076, %v2256, %v2260
      %v2262 = vshrl.u32 %v1907, 16
      %v2264 = vrot.slane %v2262, 4
      %v2265 = vor.u32 %v2264, %v2260
      %v2266 = vrot.slane %v2265, 4
      %v2268 = vshll.u32 %v1908, 16
      %v2270 = vrot.slane %v2268, 5
      %v2271 = vsel %vm1076, %v2266, %v2270
      %v2273 = vshrl.u32 %v1909, 16
      %v2275 = vrot.slane %v2273, 4
      %v2276 = vshll.u32 %v1909, 16
      %v2278 = vrot.slane %v2276, 5
      %v2279 = vor.u32 %v2275, %v2278
      %v2280 = vrot.slane %v2279, 4
      %v2282 = vshll.u32 %v1910, 16
      %v2284 = vrot.slane %v2282, 5
      %v2285 = vsel %vm1076, %v2280, %v2284
      %v2286 = vshrl.u32 %v1910, 16
      %v2288 = vrot.slane %v2286, 4
      %v2289 = vor.u32 %v2288, %v2284
      %v2290 = vrot.slane %v2289, 4
      %v2292 = vshll.u32 %v1911, 16
      %v2294 = vrot.slane %v2292, 5
      %v2295 = vsel %vm1076, %v2290, %v2294
      %2328 = vst [vmem:[#allocation3 + $0x10] sm:$0xf] %v1925
      %2329 = vst [vmem:[#allocation3 + $0x34] sm:$0xf] %v1935
      %2330 = vst [vmem:[#allocation3 + $0x58] sm:$0xf] %v1949
      %2331 = vst [vmem:[#allocation3 + $0x7c] sm:$0xf] %v1959
      %2332 = vst [vmem:[#allocation3 + $0xa0] sm:$0xf] %v1973
      %2333 = vst [vmem:[#allocation3 + $0xc4] sm:$0xf] %v1983
      %2334 = vst [vmem:[#allocation3 + $0xe8] sm:$0xf] %v1997
      %2335 = vst [vmem:[#allocation3 + $0x10c] sm:$0xf] %v2007
      %2336 = vst [vmem:[#allocation3 + $0x130] sm:$0xf] %v2021
      %2337 = vst [vmem:[#allocation3 + $0x154] sm:$0xf] %v2031
      %2338 = vst [vmem:[#allocation3 + $0x178] sm:$0xf] %v2045
      %2339 = vst [vmem:[#allocation3 + $0x19c] sm:$0xf] %v2055
      %2340 = vst [vmem:[#allocation3 + $0x1c0] sm:$0xf] %v2069
      %2341 = vst [vmem:[#allocation3 + $0x1e4] sm:$0xf] %v2079
      %2342 = vst [vmem:[#allocation3 + $0x208] sm:$0xf] %v2093
      %2343 = vst [vmem:[#allocation3 + $0x22c] sm:$0xf] %v2103
      %2344 = vst [vmem:[#allocation3 + $0x250] sm:$0xf] %v2117
      %2345 = vst [vmem:[#allocation3 + $0x274] sm:$0xf] %v2127
      %2346 = vst [vmem:[#allocation3 + $0x298] sm:$0xf] %v2141
      %2347 = vst [vmem:[#allocation3 + $0x2bc] sm:$0xf] %v2151
      %2348 = vst [vmem:[#allocation3 + $0x2e0] sm:$0xf] %v2165
      %2349 = vst [vmem:[#allocation3 + $0x304] sm:$0xf] %v2175
      %2350 = vst [vmem:[#allocation3 + $0x328] sm:$0xf] %v2189
      %2351 = vst [vmem:[#allocation3 + $0x34c] sm:$0xf] %v2199
      %2352 = vst [vmem:[#allocation3 + $0x370] sm:$0xf] %v2213
      %2353 = vst [vmem:[#allocation3 + $0x394] sm:$0xf] %v2223
      %2354 = vst [vmem:[#allocation3 + $0x3b8] sm:$0xf] %v2237
      %2355 = vst [vmem:[#allocation3 + $0x3dc] sm:$0xf] %v2247
      %2356 = vst [vmem:[#allocation3 + $0x400] sm:$0xf] %v2261
      %2357 = vst [vmem:[#allocation3 + $0x424] sm:$0xf] %v2271
      %2358 = vst [vmem:[#allocation3 + $0x448] sm:$0xf] %v2285
      %2359 = vst [vmem:[#allocation3 + $0x46c] sm:$0xf] %v2295
      %v2360 = vld [vmem:[%s847] sm:$0xe]
      %v2361 = vld [vmem:[%s847 + $0x4] sm:$0xf]
      %v2362 = vld [vmem:[%s847 + $0x8] sm:$0x1]
      %v2363 = vld [vmem:[%s847 + $0xc] sm:$0xe]
      %v2364 = vld [vmem:[%s847 + $0x10] sm:$0xf]
      %v2365 = vld [vmem:[%s847 + $0x14] sm:$0x1]
      %v2366 = vld [vmem:[%s847 + $0x18] sm:$0xe]
      %v2367 = vld [vmem:[%s847 + $0x1c] sm:$0xf]
      %v2368 = vld [vmem:[%s847 + $0x20] sm:$0x1]
      %v2369 = vld [vmem:[%s847 + $0x24] sm:$0xe]
      %v2370 = vld [vmem:[%s847 + $0x28] sm:$0xf]
      %v2371 = vld [vmem:[%s847 + $0x2c] sm:$0x1]
      %v2372 = vld [vmem:[%s847 + $0x30] sm:$0xe]
      %v2373 = vld [vmem:[%s847 + $0x34] sm:$0xf]
      %v2374 = vld [vmem:[%s847 + $0x38] sm:$0x1]
      %v2375 = vld [vmem:[%s847 + $0x3c] sm:$0xe]
      %v2376 = vld [vmem:[%s847 + $0x40] sm:$0xf]
      %v2377 = vld [vmem:[%s847 + $0x44] sm:$0x1]
      %v2378 = vld [vmem:[%s847 + $0x48] sm:$0xe]
      %v2379 = vld [vmem:[%s847 + $0x4c] sm:$0xf]
      %v2380 = vld [vmem:[%s847 + $0x50] sm:$0x1]
      %v2381 = vld [vmem:[%s847 + $0x54] sm:$0xe]
      %v2382 = vld [vmem:[%s847 + $0x58] sm:$0xf]
      %v2383 = vld [vmem:[%s847 + $0x5c] sm:$0x1]
      %v2384 = vld [vmem:[%s847 + $0x60] sm:$0xe]
      %v2385 = vld [vmem:[%s847 + $0x64] sm:$0xf]
      %v2386 = vld [vmem:[%s847 + $0x68] sm:$0x1]
      %v2387 = vld [vmem:[%s847 + $0x6c] sm:$0xe]
      %v2388 = vld [vmem:[%s847 + $0x70] sm:$0xf]
      %v2389 = vld [vmem:[%s847 + $0x74] sm:$0x1]
      %v2390 = vld [vmem:[%s847 + $0x78] sm:$0xe]
      %v2391 = vld [vmem:[%s847 + $0x7c] sm:$0xf]
      %v2392 = vld [vmem:[%s847 + $0x80] sm:$0x1]
      %v2393 = vld [vmem:[%s847 + $0x84] sm:$0xe]
      %v2394 = vld [vmem:[%s847 + $0x88] sm:$0xf]
      %v2395 = vld [vmem:[%s847 + $0x8c] sm:$0x1]
      %v2396 = vld [vmem:[%s847 + $0x90] sm:$0xe]
      %v2397 = vld [vmem:[%s847 + $0x94] sm:$0xf]
      %v2398 = vld [vmem:[%s847 + $0x98] sm:$0x1]
      %v2399 = vld [vmem:[%s847 + $0x9c] sm:$0xe]
      %v2400 = vld [vmem:[%s847 + $0xa0] sm:$0xf]
      %v2401 = vld [vmem:[%s847 + $0xa4] sm:$0x1]
      %v2402 = vld [vmem:[%s847 + $0xa8] sm:$0xe]
      %v2403 = vld [vmem:[%s847 + $0xac] sm:$0xf]
      %v2404 = vld [vmem:[%s847 + $0xb0] sm:$0x1]
      %v2405 = vld [vmem:[%s847 + $0xb4] sm:$0xe]
      %v2406 = vld [vmem:[%s847 + $0xb8] sm:$0xf]
      %v2407 = vld [vmem:[%s847 + $0xbc] sm:$0x1]
      %v2456 = vrot.slane %v2360, 5
      %v2457 = vrot.slane %v2456, 4
      %v2458 = vrot.slane %v2361, 5
      %v2459 = vsel %vm1623, %v2457, %v2458
      %v2460 = vrot.slane %v2458, 4
      %v2461 = vrot.slane %v2362, 5
      %v2462 = vsel %vm1623, %v2460, %v2461
      %v2463 = vrot.slane %v2363, 5
      %v2464 = vrot.slane %v2463, 4
      %v2465 = vrot.slane %v2364, 5
      %v2466 = vsel %vm1623, %v2464, %v2465
      %v2467 = vrot.slane %v2465, 4
      %v2468 = vrot.slane %v2365, 5
      %v2469 = vsel %vm1623, %v2467, %v2468
      %v2470 = vrot.slane %v2366, 5
      %v2471 = vrot.slane %v2470, 4
      %v2472 = vrot.slane %v2367, 5
      %v2473 = vsel %vm1623, %v2471, %v2472
      %v2474 = vrot.slane %v2472, 4
      %v2475 = vrot.slane %v2368, 5
      %v2476 = vsel %vm1623, %v2474, %v2475
      %v2477 = vrot.slane %v2369, 5
      %v2478 = vrot.slane %v2477, 4
      %v2479 = vrot.slane %v2370, 5
      %v2480 = vsel %vm1623, %v2478, %v2479
      %v2481 = vrot.slane %v2479, 4
      %v2482 = vrot.slane %v2371, 5
      %v2483 = vsel %vm1623, %v2481, %v2482
      %v2484 = vrot.slane %v2372, 5
      %v2485 = vrot.slane %v2484, 4
      %v2486 = vrot.slane %v2373, 5
      %v2487 = vsel %vm1623, %v2485, %v2486
      %v2488 = vrot.slane %v2486, 4
      %v2489 = vrot.slane %v2374, 5
      %v2490 = vsel %vm1623, %v2488, %v2489
      %v2491 = vrot.slane %v2375, 5
      %v2492 = vrot.slane %v2491, 4
      %v2493 = vrot.slane %v2376, 5
      %v2494 = vsel %vm1623, %v2492, %v2493
      %v2495 = vrot.slane %v2493, 4
      %v2496 = vrot.slane %v2377, 5
      %v2497 = vsel %vm1623, %v2495, %v2496
      %v2498 = vrot.slane %v2378, 5
      %v2499 = vrot.slane %v2498, 4
      %v2500 = vrot.slane %v2379, 5
      %v2501 = vsel %vm1623, %v2499, %v2500
      %v2502 = vrot.slane %v2500, 4
      %v2503 = vrot.slane %v2380, 5
      %v2504 = vsel %vm1623, %v2502, %v2503
      %v2505 = vrot.slane %v2381, 5
      %v2506 = vrot.slane %v2505, 4
      %v2507 = vrot.slane %v2382, 5
      %v2508 = vsel %vm1623, %v2506, %v2507
      %v2509 = vrot.slane %v2507, 4
      %v2510 = vrot.slane %v2383, 5
      %v2511 = vsel %vm1623, %v2509, %v2510
      %v2512 = vrot.slane %v2384, 5
      %v2513 = vrot.slane %v2512, 4
      %v2514 = vrot.slane %v2385, 5
      %v2515 = vsel %vm1623, %v2513, %v2514
      %v2516 = vrot.slane %v2514, 4
      %v2517 = vrot.slane %v2386, 5
      %v2518 = vsel %vm1623, %v2516, %v2517
      %v2519 = vrot.slane %v2387, 5
      %v2520 = vrot.slane %v2519, 4
      %v2521 = vrot.slane %v2388, 5
      %v2522 = vsel %vm1623, %v2520, %v2521
      %v2523 = vrot.slane %v2521, 4
      %v2524 = vrot.slane %v2389, 5
      %v2525 = vsel %vm1623, %v2523, %v2524
      %v2526 = vrot.slane %v2390, 5
      %v2527 = vrot.slane %v2526, 4
      %v2528 = vrot.slane %v2391, 5
      %v2529 = vsel %vm1623, %v2527, %v2528
      %v2530 = vrot.slane %v2528, 4
      %v2531 = vrot.slane %v2392, 5
      %v2532 = vsel %vm1623, %v2530, %v2531
      %v2533 = vrot.slane %v2393, 5
      %v2534 = vrot.slane %v2533, 4
      %v2535 = vrot.slane %v2394, 5
      %v2536 = vsel %vm1623, %v2534, %v2535
      %v2537 = vrot.slane %v2535, 4
      %v2538 = vrot.slane %v2395, 5
      %v2539 = vsel %vm1623, %v2537, %v2538
      %v2540 = vrot.slane %v2396, 5
      %v2541 = vrot.slane %v2540, 4
      %v2542 = vrot.slane %v2397, 5
      %v2543 = vsel %vm1623, %v2541, %v2542
      %v2544 = vrot.slane %v2542, 4
      %v2545 = vrot.slane %v2398, 5
      %v2546 = vsel %vm1623, %v2544, %v2545
      %v2547 = vrot.slane %v2399, 5
      %v2548 = vrot.slane %v2547, 4
      %v2549 = vrot.slane %v2400, 5
      %v2550 = vsel %vm1623, %v2548, %v2549
      %v2551 = vrot.slane %v2549, 4
      %v2552 = vrot.slane %v2401, 5
      %v2553 = vsel %vm1623, %v2551, %v2552
      %v2554 = vrot.slane %v2402, 5
      %v2555 = vrot.slane %v2554, 4
      %v2556 = vrot.slane %v2403, 5
      %v2557 = vsel %vm1623, %v2555, %v2556
      %v2558 = vrot.slane %v2556, 4
      %v2559 = vrot.slane %v2404, 5
      %v2560 = vsel %vm1623, %v2558, %v2559
      %v2561 = vrot.slane %v2405, 5
      %v2562 = vrot.slane %v2561, 4
      %v2563 = vrot.slane %v2406, 5
      %v2564 = vsel %vm1623, %v2562, %v2563
      %v2565 = vrot.slane %v2563, 4
      %v2566 = vrot.slane %v2407, 5
      %v2567 = vsel %vm1623, %v2565, %v2566
      %2600 = vst [vmem:[#allocation3 + $0x14] sm:$0xf] %v2459
      %2601 = vst [vmem:[#allocation3 + $0x38] sm:$0xf] %v2462
      %2602 = vst [vmem:[#allocation3 + $0x5c] sm:$0xf] %v2466
      %2603 = vst [vmem:[#allocation3 + $0x80] sm:$0xf] %v2469
      %2604 = vst [vmem:[#allocation3 + $0xa4] sm:$0xf] %v2473
      %2605 = vst [vmem:[#allocation3 + $0xc8] sm:$0xf] %v2476
      %2606 = vst [vmem:[#allocation3 + $0xec] sm:$0xf] %v2480
      %2607 = vst [vmem:[#allocation3 + $0x110] sm:$0xf] %v2483
      %2608 = vst [vmem:[#allocation3 + $0x134] sm:$0xf] %v2487
      %2609 = vst [vmem:[#allocation3 + $0x158] sm:$0xf] %v2490
      %2610 = vst [vmem:[#allocation3 + $0x17c] sm:$0xf] %v2494
      %2611 = vst [vmem:[#allocation3 + $0x1a0] sm:$0xf] %v2497
      %2612 = vst [vmem:[#allocation3 + $0x1c4] sm:$0xf] %v2501
      %2613 = vst [vmem:[#allocation3 + $0x1e8] sm:$0xf] %v2504
      %2614 = vst [vmem:[#allocation3 + $0x20c] sm:$0xf] %v2508
      %2615 = vst [vmem:[#allocation3 + $0x230] sm:$0xf] %v2511
      %2616 = vst [vmem:[#allocation3 + $0x254] sm:$0xf] %v2515
      %2617 = vst [vmem:[#allocation3 + $0x278] sm:$0xf] %v2518
      %2618 = vst [vmem:[#allocation3 + $0x29c] sm:$0xf] %v2522
      %2619 = vst [vmem:[#allocation3 + $0x2c0] sm:$0xf] %v2525
      %2620 = vst [vmem:[#allocation3 + $0x2e4] sm:$0xf] %v2529
      %2621 = vst [vmem:[#allocation3 + $0x308] sm:$0xf] %v2532
      %2622 = vst [vmem:[#allocation3 + $0x32c] sm:$0xf] %v2536
      %2623 = vst [vmem:[#allocation3 + $0x350] sm:$0xf] %v2539
      %2624 = vst [vmem:[#allocation3 + $0x374] sm:$0xf] %v2543
      %2625 = vst [vmem:[#allocation3 + $0x398] sm:$0xf] %v2546
      %2626 = vst [vmem:[#allocation3 + $0x3bc] sm:$0xf] %v2550
      %2627 = vst [vmem:[#allocation3 + $0x3e0] sm:$0xf] %v2553
      %2628 = vst [vmem:[#allocation3 + $0x404] sm:$0xf] %v2557
      %2629 = vst [vmem:[#allocation3 + $0x428] sm:$0xf] %v2560
      %2630 = vst [vmem:[#allocation3 + $0x44c] sm:$0xf] %v2564
      %2631 = vst [vmem:[#allocation3 + $0x470] sm:$0xf] %v2567
      %s2632 = scalar_lea.vmem [#allocation2], 24
      %v2633 = vld [vmem:[%s2632] sm:$0xf]
      %v2634 = vld [vmem:[%s2632 + $0x4] sm:$0xf]
      %v2635 = vld [vmem:[%s2632 + $0xc] sm:$0xf]
      %v2636 = vld [vmem:[%s2632 + $0x10] sm:$0xf]
      %v2637 = vld [vmem:[%s2632 + $0x18] sm:$0xf]
      %v2638 = vld [vmem:[%s2632 + $0x1c] sm:$0xf]
      %v2639 = vld [vmem:[%s2632 + $0x24] sm:$0xf]
      %v2640 = vld [vmem:[%s2632 + $0x28] sm:$0xf]
      %v2641 = vld [vmem:[%s2632 + $0x30] sm:$0xf]
      %v2642 = vld [vmem:[%s2632 + $0x34] sm:$0xf]
      %v2643 = vld [vmem:[%s2632 + $0x3c] sm:$0xf]
      %v2644 = vld [vmem:[%s2632 + $0x40] sm:$0xf]
      %v2645 = vld [vmem:[%s2632 + $0x48] sm:$0xf]
      %v2646 = vld [vmem:[%s2632 + $0x4c] sm:$0xf]
      %v2647 = vld [vmem:[%s2632 + $0x54] sm:$0xf]
      %v2648 = vld [vmem:[%s2632 + $0x58] sm:$0xf]
      %v2649 = vld [vmem:[%s2632 + $0x60] sm:$0xf]
      %v2650 = vld [vmem:[%s2632 + $0x64] sm:$0xf]
      %v2651 = vld [vmem:[%s2632 + $0x6c] sm:$0xf]
      %v2652 = vld [vmem:[%s2632 + $0x70] sm:$0xf]
      %v2653 = vld [vmem:[%s2632 + $0x78] sm:$0xf]
      %v2654 = vld [vmem:[%s2632 + $0x7c] sm:$0xf]
      %v2655 = vld [vmem:[%s2632 + $0x84] sm:$0xf]
      %v2656 = vld [vmem:[%s2632 + $0x88] sm:$0xf]
      %v2657 = vld [vmem:[%s2632 + $0x90] sm:$0xf]
      %v2658 = vld [vmem:[%s2632 + $0x94] sm:$0xf]
      %v2659 = vld [vmem:[%s2632 + $0x9c] sm:$0xf]
      %v2660 = vld [vmem:[%s2632 + $0xa0] sm:$0xf]
      %v2661 = vld [vmem:[%s2632 + $0xa8] sm:$0xf]
      %v2662 = vld [vmem:[%s2632 + $0xac] sm:$0xf]
      %v2663 = vld [vmem:[%s2632 + $0xb4] sm:$0xf]
      %v2664 = vld [vmem:[%s2632 + $0xb8] sm:$0xf]
      %2665 = vst [vmem:[#allocation3 + $0x18] sm:$0xf] %v2633
      %2666 = vst [vmem:[#allocation3 + $0x3c] sm:$0xf] %v2634
      %2667 = vst [vmem:[#allocation3 + $0x60] sm:$0xf] %v2635
      %2668 = vst [vmem:[#allocation3 + $0x84] sm:$0xf] %v2636
      %2669 = vst [vmem:[#allocation3 + $0xa8] sm:$0xf] %v2637
      %2670 = vst [vmem:[#allocation3 + $0xcc] sm:$0xf] %v2638
      %2671 = vst [vmem:[#allocation3 + $0xf0] sm:$0xf] %v2639
      %2672 = vst [vmem:[#allocation3 + $0x114] sm:$0xf] %v2640
      %2673 = vst [vmem:[#allocation3 + $0x138] sm:$0xf] %v2641
      %2674 = vst [vmem:[#allocation3 + $0x15c] sm:$0xf] %v2642
      %2675 = vst [vmem:[#allocation3 + $0x180] sm:$0xf] %v2643
      %2676 = vst [vmem:[#allocation3 + $0x1a4] sm:$0xf] %v2644
      %2677 = vst [vmem:[#allocation3 + $0x1c8] sm:$0xf] %v2645
      %2678 = vst [vmem:[#allocation3 + $0x1ec] sm:$0xf] %v2646
      %2679 = vst [vmem:[#allocation3 + $0x210] sm:$0xf] %v2647
      %2680 = vst [vmem:[#allocation3 + $0x234] sm:$0xf] %v2648
      %2681 = vst [vmem:[#allocation3 + $0x258] sm:$0xf] %v2649
      %2682 = vst [vmem:[#allocation3 + $0x27c] sm:$0xf] %v2650
      %2683 = vst [vmem:[#allocation3 + $0x2a0] sm:$0xf] %v2651
      %2684 = vst [vmem:[#allocation3 + $0x2c4] sm:$0xf] %v2652
      %2685 = vst [vmem:[#allocation3 + $0x2e8] sm:$0xf] %v2653
      %2686 = vst [vmem:[#allocation3 + $0x30c] sm:$0xf] %v2654
      %2687 = vst [vmem:[#allocation3 + $0x330] sm:$0xf] %v2655
      %2688 = vst [vmem:[#allocation3 + $0x354] sm:$0xf] %v2656
      %2689 = vst [vmem:[#allocation3 + $0x378] sm:$0xf] %v2657
      %2690 = vst [vmem:[#allocation3 + $0x39c] sm:$0xf] %v2658
      %2691 = vst [vmem:[#allocation3 + $0x3c0] sm:$0xf] %v2659
      %2692 = vst [vmem:[#allocation3 + $0x3e4] sm:$0xf] %v2660
      %2693 = vst [vmem:[#allocation3 + $0x408] sm:$0xf] %v2661
      %2694 = vst [vmem:[#allocation3 + $0x42c] sm:$0xf] %v2662
      %2695 = vst [vmem:[#allocation3 + $0x450] sm:$0xf] %v2663
      %2696 = vst [vmem:[#allocation3 + $0x474] sm:$0xf] %v2664
      %v2697 = vld [vmem:[%s2632] sm:$0xf]
      %v2698 = vld [vmem:[%s2632 + $0x4] sm:$0xf]
      %v2699 = vld [vmem:[%s2632 + $0x8] sm:$0x1]
      %v2700 = vld [vmem:[%s2632 + $0xc] sm:$0xf]
      %v2701 = vld [vmem:[%s2632 + $0x10] sm:$0xf]
      %v2702 = vld [vmem:[%s2632 + $0x14] sm:$0x1]
      %v2703 = vld [vmem:[%s2632 + $0x18] sm:$0xf]
      %v2704 = vld [vmem:[%s2632 + $0x1c] sm:$0xf]
      %v2705 = vld [vmem:[%s2632 + $0x20] sm:$0x1]
      %v2706 = vld [vmem:[%s2632 + $0x24] sm:$0xf]
      %v2707 = vld [vmem:[%s2632 + $0x28] sm:$0xf]
      %v2708 = vld [vmem:[%s2632 + $0x2c] sm:$0x1]
      %v2709 = vld [vmem:[%s2632 + $0x30] sm:$0xf]
      %v2710 = vld [vmem:[%s2632 + $0x34] sm:$0xf]
      %v2711 = vld [vmem:[%s2632 + $0x38] sm:$0x1]
      %v2712 = vld [vmem:[%s2632 + $0x3c] sm:$0xf]
      %v2713 = vld [vmem:[%s2632 + $0x40] sm:$0xf]
      %v2714 = vld [vmem:[%s2632 + $0x44] sm:$0x1]
      %v2715 = vld [vmem:[%s2632 + $0x48] sm:$0xf]
      %v2716 = vld [vmem:[%s2632 + $0x4c] sm:$0xf]
      %v2717 = vld [vmem:[%s2632 + $0x50] sm:$0x1]
      %v2718 = vld [vmem:[%s2632 + $0x54] sm:$0xf]
      %v2719 = vld [vmem:[%s2632 + $0x58] sm:$0xf]
      %v2720 = vld [vmem:[%s2632 + $0x5c] sm:$0x1]
      %v2721 = vld [vmem:[%s2632 + $0x60] sm:$0xf]
      %v2722 = vld [vmem:[%s2632 + $0x64] sm:$0xf]
      %v2723 = vld [vmem:[%s2632 + $0x68] sm:$0x1]
      %v2724 = vld [vmem:[%s2632 + $0x6c] sm:$0xf]
      %v2725 = vld [vmem:[%s2632 + $0x70] sm:$0xf]
      %v2726 = vld [vmem:[%s2632 + $0x74] sm:$0x1]
      %v2727 = vld [vmem:[%s2632 + $0x78] sm:$0xf]
      %v2728 = vld [vmem:[%s2632 + $0x7c] sm:$0xf]
      %v2729 = vld [vmem:[%s2632 + $0x80] sm:$0x1]
      %v2730 = vld [vmem:[%s2632 + $0x84] sm:$0xf]
      %v2731 = vld [vmem:[%s2632 + $0x88] sm:$0xf]
      %v2732 = vld [vmem:[%s2632 + $0x8c] sm:$0x1]
      %v2733 = vld [vmem:[%s2632 + $0x90] sm:$0xf]
      %v2734 = vld [vmem:[%s2632 + $0x94] sm:$0xf]
      %v2735 = vld [vmem:[%s2632 + $0x98] sm:$0x1]
      %v2736 = vld [vmem:[%s2632 + $0x9c] sm:$0xf]
      %v2737 = vld [vmem:[%s2632 + $0xa0] sm:$0xf]
      %v2738 = vld [vmem:[%s2632 + $0xa4] sm:$0x1]
      %v2739 = vld [vmem:[%s2632 + $0xa8] sm:$0xf]
      %v2740 = vld [vmem:[%s2632 + $0xac] sm:$0xf]
      %v2741 = vld [vmem:[%s2632 + $0xb0] sm:$0x1]
      %v2742 = vld [vmem:[%s2632 + $0xb4] sm:$0xf]
      %v2743 = vld [vmem:[%s2632 + $0xb8] sm:$0xf]
      %v2744 = vld [vmem:[%s2632 + $0xbc] sm:$0x1]
      %v2746 = vshrl.u32 %v2697, 16
      %v2748 = vrot.slane %v2746, 4
      %v2749 = vshll.u32 %v2697, 16
      %v2751 = vrot.slane %v2749, 5
      %v2752 = vor.u32 %v2748, %v2751
      %v2753 = vrot.slane %v2752, 4
      %v2755 = vshll.u32 %v2698, 16
      %v2757 = vrot.slane %v2755, 5
      %v2758 = vsel %vm1076, %v2753, %v2757
      %v2759 = vshrl.u32 %v2698, 16
      %v2761 = vrot.slane %v2759, 4
      %v2762 = vor.u32 %v2761, %v2757
      %v2763 = vrot.slane %v2762, 4
      %v2765 = vshll.u32 %v2699, 16
      %v2767 = vrot.slane %v2765, 5
      %v2768 = vsel %vm1076, %v2763, %v2767
      %v2770 = vshrl.u32 %v2700, 16
      %v2772 = vrot.slane %v2770, 4
      %v2773 = vshll.u32 %v2700, 16
      %v2775 = vrot.slane %v2773, 5
      %v2776 = vor.u32 %v2772, %v2775
      %v2777 = vrot.slane %v2776, 4
      %v2779 = vshll.u32 %v2701, 16
      %v2781 = vrot.slane %v2779, 5
      %v2782 = vsel %vm1076, %v2777, %v2781
      %v2783 = vshrl.u32 %v2701, 16
      %v2785 = vrot.slane %v2783, 4
      %v2786 = vor.u32 %v2785, %v2781
      %v2787 = vrot.slane %v2786, 4
      %v2789 = vshll.u32 %v2702, 16
      %v2791 = vrot.slane %v2789, 5
      %v2792 = vsel %vm1076, %v2787, %v2791
      %v2794 = vshrl.u32 %v2703, 16
      %v2796 = vrot.slane %v2794, 4
      %v2797 = vshll.u32 %v2703, 16
      %v2799 = vrot.slane %v2797, 5
      %v2800 = vor.u32 %v2796, %v2799
      %v2801 = vrot.slane %v2800, 4
      %v2803 = vshll.u32 %v2704, 16
      %v2805 = vrot.slane %v2803, 5
      %v2806 = vsel %vm1076, %v2801, %v2805
      %v2807 = vshrl.u32 %v2704, 16
      %v2809 = vrot.slane %v2807, 4
      %v2810 = vor.u32 %v2809, %v2805
      %v2811 = vrot.slane %v2810, 4
      %v2813 = vshll.u32 %v2705, 16
      %v2815 = vrot.slane %v2813, 5
      %v2816 = vsel %vm1076, %v2811, %v2815
      %v2818 = vshrl.u32 %v2706, 16
      %v2820 = vrot.slane %v2818, 4
      %v2821 = vshll.u32 %v2706, 16
      %v2823 = vrot.slane %v2821, 5
      %v2824 = vor.u32 %v2820, %v2823
      %v2825 = vrot.slane %v2824, 4
      %v2827 = vshll.u32 %v2707, 16
      %v2829 = vrot.slane %v2827, 5
      %v2830 = vsel %vm1076, %v2825, %v2829
      %v2831 = vshrl.u32 %v2707, 16
      %v2833 = vrot.slane %v2831, 4
      %v2834 = vor.u32 %v2833, %v2829
      %v2835 = vrot.slane %v2834, 4
      %v2837 = vshll.u32 %v2708, 16
      %v2839 = vrot.slane %v2837, 5
      %v2840 = vsel %vm1076, %v2835, %v2839
      %v2842 = vshrl.u32 %v2709, 16
      %v2844 = vrot.slane %v2842, 4
      %v2845 = vshll.u32 %v2709, 16
      %v2847 = vrot.slane %v2845, 5
      %v2848 = vor.u32 %v2844, %v2847
      %v2849 = vrot.slane %v2848, 4
      %v2851 = vshll.u32 %v2710, 16
      %v2853 = vrot.slane %v2851, 5
      %v2854 = vsel %vm1076, %v2849, %v2853
      %v2855 = vshrl.u32 %v2710, 16
      %v2857 = vrot.slane %v2855, 4
      %v2858 = vor.u32 %v2857, %v2853
      %v2859 = vrot.slane %v2858, 4
      %v2861 = vshll.u32 %v2711, 16
      %v2863 = vrot.slane %v2861, 5
      %v2864 = vsel %vm1076, %v2859, %v2863
      %v2866 = vshrl.u32 %v2712, 16
      %v2868 = vrot.slane %v2866, 4
      %v2869 = vshll.u32 %v2712, 16
      %v2871 = vrot.slane %v2869, 5
      %v2872 = vor.u32 %v2868, %v2871
      %v2873 = vrot.slane %v2872, 4
      %v2875 = vshll.u32 %v2713, 16
      %v2877 = vrot.slane %v2875, 5
      %v2878 = vsel %vm1076, %v2873, %v2877
      %v2879 = vshrl.u32 %v2713, 16
      %v2881 = vrot.slane %v2879, 4
      %v2882 = vor.u32 %v2881, %v2877
      %v2883 = vrot.slane %v2882, 4
      %v2885 = vshll.u32 %v2714, 16
      %v2887 = vrot.slane %v2885, 5
      %v2888 = vsel %vm1076, %v2883, %v2887
      %v2890 = vshrl.u32 %v2715, 16
      %v2892 = vrot.slane %v2890, 4
      %v2893 = vshll.u32 %v2715, 16
      %v2895 = vrot.slane %v2893, 5
      %v2896 = vor.u32 %v2892, %v2895
      %v2897 = vrot.slane %v2896, 4
      %v2899 = vshll.u32 %v2716, 16
      %v2901 = vrot.slane %v2899, 5
      %v2902 = vsel %vm1076, %v2897, %v2901
      %v2903 = vshrl.u32 %v2716, 16
      %v2905 = vrot.slane %v2903, 4
      %v2906 = vor.u32 %v2905, %v2901
      %v2907 = vrot.slane %v2906, 4
      %v2909 = vshll.u32 %v2717, 16
      %v2911 = vrot.slane %v2909, 5
      %v2912 = vsel %vm1076, %v2907, %v2911
      %v2914 = vshrl.u32 %v2718, 16
      %v2916 = vrot.slane %v2914, 4
      %v2917 = vshll.u32 %v2718, 16
      %v2919 = vrot.slane %v2917, 5
      %v2920 = vor.u32 %v2916, %v2919
      %v2921 = vrot.slane %v2920, 4
      %v2923 = vshll.u32 %v2719, 16
      %v2925 = vrot.slane %v2923, 5
      %v2926 = vsel %vm1076, %v2921, %v2925
      %v2927 = vshrl.u32 %v2719, 16
      %v2929 = vrot.slane %v2927, 4
      %v2930 = vor.u32 %v2929, %v2925
      %v2931 = vrot.slane %v2930, 4
      %v2933 = vshll.u32 %v2720, 16
      %v2935 = vrot.slane %v2933, 5
      %v2936 = vsel %vm1076, %v2931, %v2935
      %v2938 = vshrl.u32 %v2721, 16
      %v2940 = vrot.slane %v2938, 4
      %v2941 = vshll.u32 %v2721, 16
      %v2943 = vrot.slane %v2941, 5
      %v2944 = vor.u32 %v2940, %v2943
      %v2945 = vrot.slane %v2944, 4
      %v2947 = vshll.u32 %v2722, 16
      %v2949 = vrot.slane %v2947, 5
      %v2950 = vsel %vm1076, %v2945, %v2949
      %v2951 = vshrl.u32 %v2722, 16
      %v2953 = vrot.slane %v2951, 4
      %v2954 = vor.u32 %v2953, %v2949
      %v2955 = vrot.slane %v2954, 4
      %v2957 = vshll.u32 %v2723, 16
      %v2959 = vrot.slane %v2957, 5
      %v2960 = vsel %vm1076, %v2955, %v2959
      %v2962 = vshrl.u32 %v2724, 16
      %v2964 = vrot.slane %v2962, 4
      %v2965 = vshll.u32 %v2724, 16
      %v2967 = vrot.slane %v2965, 5
      %v2968 = vor.u32 %v2964, %v2967
      %v2969 = vrot.slane %v2968, 4
      %v2971 = vshll.u32 %v2725, 16
      %v2973 = vrot.slane %v2971, 5
      %v2974 = vsel %vm1076, %v2969, %v2973
      %v2975 = vshrl.u32 %v2725, 16
      %v2977 = vrot.slane %v2975, 4
      %v2978 = vor.u32 %v2977, %v2973
      %v2979 = vrot.slane %v2978, 4
      %v2981 = vshll.u32 %v2726, 16
      %v2983 = vrot.slane %v2981, 5
      %v2984 = vsel %vm1076, %v2979, %v2983
      %v2986 = vshrl.u32 %v2727, 16
      %v2988 = vrot.slane %v2986, 4
      %v2989 = vshll.u32 %v2727, 16
      %v2991 = vrot.slane %v2989, 5
      %v2992 = vor.u32 %v2988, %v2991
      %v2993 = vrot.slane %v2992, 4
      %v2995 = vshll.u32 %v2728, 16
      %v2997 = vrot.slane %v2995, 5
      %v2998 = vsel %vm1076, %v2993, %v2997
      %v2999 = vshrl.u32 %v2728, 16
      %v3001 = vrot.slane %v2999, 4
      %v3002 = vor.u32 %v3001, %v2997
      %v3003 = vrot.slane %v3002, 4
      %v3005 = vshll.u32 %v2729, 16
      %v3007 = vrot.slane %v3005, 5
      %v3008 = vsel %vm1076, %v3003, %v3007
      %v3010 = vshrl.u32 %v2730, 16
      %v3012 = vrot.slane %v3010, 4
      %v3013 = vshll.u32 %v2730, 16
      %v3015 = vrot.slane %v3013, 5
      %v3016 = vor.u32 %v3012, %v3015
      %v3017 = vrot.slane %v3016, 4
      %v3019 = vshll.u32 %v2731, 16
      %v3021 = vrot.slane %v3019, 5
      %v3022 = vsel %vm1076, %v3017, %v3021
      %v3023 = vshrl.u32 %v2731, 16
      %v3025 = vrot.slane %v3023, 4
      %v3026 = vor.u32 %v3025, %v3021
      %v3027 = vrot.slane %v3026, 4
      %v3029 = vshll.u32 %v2732, 16
      %v3031 = vrot.slane %v3029, 5
      %v3032 = vsel %vm1076, %v3027, %v3031
      %v3034 = vshrl.u32 %v2733, 16
      %v3036 = vrot.slane %v3034, 4
      %v3037 = vshll.u32 %v2733, 16
      %v3039 = vrot.slane %v3037, 5
      %v3040 = vor.u32 %v3036, %v3039
      %v3041 = vrot.slane %v3040, 4
      %v3043 = vshll.u32 %v2734, 16
      %v3045 = vrot.slane %v3043, 5
      %v3046 = vsel %vm1076, %v3041, %v3045
      %v3047 = vshrl.u32 %v2734, 16
      %v3049 = vrot.slane %v3047, 4
      %v3050 = vor.u32 %v3049, %v3045
      %v3051 = vrot.slane %v3050, 4
      %v3053 = vshll.u32 %v2735, 16
      %v3055 = vrot.slane %v3053, 5
      %v3056 = vsel %vm1076, %v3051, %v3055
      %v3058 = vshrl.u32 %v2736, 16
      %v3060 = vrot.slane %v3058, 4
      %v3061 = vshll.u32 %v2736, 16
      %v3063 = vrot.slane %v3061, 5
      %v3064 = vor.u32 %v3060, %v3063
      %v3065 = vrot.slane %v3064, 4
      %v3067 = vshll.u32 %v2737, 16
      %v3069 = vrot.slane %v3067, 5
      %v3070 = vsel %vm1076, %v3065, %v3069
      %v3071 = vshrl.u32 %v2737, 16
      %v3073 = vrot.slane %v3071, 4
      %v3074 = vor.u32 %v3073, %v3069
      %v3075 = vrot.slane %v3074, 4
      %v3077 = vshll.u32 %v2738, 16
      %v3079 = vrot.slane %v3077, 5
      %v3080 = vsel %vm1076, %v3075, %v3079
      %v3082 = vshrl.u32 %v2739, 16
      %v3084 = vrot.slane %v3082, 4
      %v3085 = vshll.u32 %v2739, 16
      %v3087 = vrot.slane %v3085, 5
      %v3088 = vor.u32 %v3084, %v3087
      %v3089 = vrot.slane %v3088, 4
      %v3091 = vshll.u32 %v2740, 16
      %v3093 = vrot.slane %v3091, 5
      %v3094 = vsel %vm1076, %v3089, %v3093
      %v3095 = vshrl.u32 %v2740, 16
      %v3097 = vrot.slane %v3095, 4
      %v3098 = vor.u32 %v3097, %v3093
      %v3099 = vrot.slane %v3098, 4
      %v3101 = vshll.u32 %v2741, 16
      %v3103 = vrot.slane %v3101, 5
      %v3104 = vsel %vm1076, %v3099, %v3103
      %v3106 = vshrl.u32 %v2742, 16
      %v3108 = vrot.slane %v3106, 4
      %v3109 = vshll.u32 %v2742, 16
      %v3111 = vrot.slane %v3109, 5
      %v3112 = vor.u32 %v3108, %v3111
      %v3113 = vrot.slane %v3112, 4
      %v3115 = vshll.u32 %v2743, 16
      %v3117 = vrot.slane %v3115, 5
      %v3118 = vsel %vm1076, %v3113, %v3117
      %v3119 = vshrl.u32 %v2743, 16
      %v3121 = vrot.slane %v3119, 4
      %v3122 = vor.u32 %v3121, %v3117
      %v3123 = vrot.slane %v3122, 4
      %v3125 = vshll.u32 %v2744, 16
      %v3127 = vrot.slane %v3125, 5
      %v3128 = vsel %vm1076, %v3123, %v3127
      %3161 = vst [vmem:[#allocation3 + $0x1c] sm:$0xf] %v2758
      %3162 = vst [vmem:[#allocation3 + $0x40] sm:$0xf] %v2768
      %3163 = vst [vmem:[#allocation3 + $0x64] sm:$0xf] %v2782
      %3164 = vst [vmem:[#allocation3 + $0x88] sm:$0xf] %v2792
      %3165 = vst [vmem:[#allocation3 + $0xac] sm:$0xf] %v2806
      %3166 = vst [vmem:[#allocation3 + $0xd0] sm:$0xf] %v2816
      %3167 = vst [vmem:[#allocation3 + $0xf4] sm:$0xf] %v2830
      %3168 = vst [vmem:[#allocation3 + $0x118] sm:$0xf] %v2840
      %3169 = vst [vmem:[#allocation3 + $0x13c] sm:$0xf] %v2854
      %3170 = vst [vmem:[#allocation3 + $0x160] sm:$0xf] %v2864
      %3171 = vst [vmem:[#allocation3 + $0x184] sm:$0xf] %v2878
      %3172 = vst [vmem:[#allocation3 + $0x1a8] sm:$0xf] %v2888
      %3173 = vst [vmem:[#allocation3 + $0x1cc] sm:$0xf] %v2902
      %3174 = vst [vmem:[#allocation3 + $0x1f0] sm:$0xf] %v2912
      %3175 = vst [vmem:[#allocation3 + $0x214] sm:$0xf] %v2926
      %3176 = vst [vmem:[#allocation3 + $0x238] sm:$0xf] %v2936
      %3177 = vst [vmem:[#allocation3 + $0x25c] sm:$0xf] %v2950
      %3178 = vst [vmem:[#allocation3 + $0x280] sm:$0xf] %v2960
      %3179 = vst [vmem:[#allocation3 + $0x2a4] sm:$0xf] %v2974
      %3180 = vst [vmem:[#allocation3 + $0x2c8] sm:$0xf] %v2984
      %3181 = vst [vmem:[#allocation3 + $0x2ec] sm:$0xf] %v2998
      %3182 = vst [vmem:[#allocation3 + $0x310] sm:$0xf] %v3008
      %3183 = vst [vmem:[#allocation3 + $0x334] sm:$0xf] %v3022
      %3184 = vst [vmem:[#allocation3 + $0x358] sm:$0xf] %v3032
      %3185 = vst [vmem:[#allocation3 + $0x37c] sm:$0xf] %v3046
      %3186 = vst [vmem:[#allocation3 + $0x3a0] sm:$0xf] %v3056
      %3187 = vst [vmem:[#allocation3 + $0x3c4] sm:$0xf] %v3070
      %3188 = vst [vmem:[#allocation3 + $0x3e8] sm:$0xf] %v3080
      %3189 = vst [vmem:[#allocation3 + $0x40c] sm:$0xf] %v3094
      %3190 = vst [vmem:[#allocation3 + $0x430] sm:$0xf] %v3104
      %3191 = vst [vmem:[#allocation3 + $0x454] sm:$0xf] %v3118
      %3192 = vst [vmem:[#allocation3 + $0x478] sm:$0xf] %v3128
      %v3193 = vld [vmem:[%s2632] sm:$0xe]
      %v3194 = vld [vmem:[%s2632 + $0x4] sm:$0xf]
      %v3195 = vld [vmem:[%s2632 + $0x8] sm:$0x1]
      %v3196 = vld [vmem:[%s2632 + $0xc] sm:$0xe]
      %v3197 = vld [vmem:[%s2632 + $0x10] sm:$0xf]
      %v3198 = vld [vmem:[%s2632 + $0x14] sm:$0x1]
      %v3199 = vld [vmem:[%s2632 + $0x18] sm:$0xe]
      %v3200 = vld [vmem:[%s2632 + $0x1c] sm:$0xf]
      %v3201 = vld [vmem:[%s2632 + $0x20] sm:$0x1]
      %v3202 = vld [vmem:[%s2632 + $0x24] sm:$0xe]
      %v3203 = vld [vmem:[%s2632 + $0x28] sm:$0xf]
      %v3204 = vld [vmem:[%s2632 + $0x2c] sm:$0x1]
      %v3205 = vld [vmem:[%s2632 + $0x30] sm:$0xe]
      %v3206 = vld [vmem:[%s2632 + $0x34] sm:$0xf]
      %v3207 = vld [vmem:[%s2632 + $0x38] sm:$0x1]
      %v3208 = vld [vmem:[%s2632 + $0x3c] sm:$0xe]
      %v3209 = vld [vmem:[%s2632 + $0x40] sm:$0xf]
      %v3210 = vld [vmem:[%s2632 + $0x44] sm:$0x1]
      %v3211 = vld [vmem:[%s2632 + $0x48] sm:$0xe]
      %v3212 = vld [vmem:[%s2632 + $0x4c] sm:$0xf]
      %v3213 = vld [vmem:[%s2632 + $0x50] sm:$0x1]
      %v3214 = vld [vmem:[%s2632 + $0x54] sm:$0xe]
      %v3215 = vld [vmem:[%s2632 + $0x58] sm:$0xf]
      %v3216 = vld [vmem:[%s2632 + $0x5c] sm:$0x1]
      %v3217 = vld [vmem:[%s2632 + $0x60] sm:$0xe]
      %v3218 = vld [vmem:[%s2632 + $0x64] sm:$0xf]
      %v3219 = vld [vmem:[%s2632 + $0x68] sm:$0x1]
      %v3220 = vld [vmem:[%s2632 + $0x6c] sm:$0xe]
      %v3221 = vld [vmem:[%s2632 + $0x70] sm:$0xf]
      %v3222 = vld [vmem:[%s2632 + $0x74] sm:$0x1]
      %v3223 = vld [vmem:[%s2632 + $0x78] sm:$0xe]
      %v3224 = vld [vmem:[%s2632 + $0x7c] sm:$0xf]
      %v3225 = vld [vmem:[%s2632 + $0x80] sm:$0x1]
      %v3226 = vld [vmem:[%s2632 + $0x84] sm:$0xe]
      %v3227 = vld [vmem:[%s2632 + $0x88] sm:$0xf]
      %v3228 = vld [vmem:[%s2632 + $0x8c] sm:$0x1]
      %v3229 = vld [vmem:[%s2632 + $0x90] sm:$0xe]
      %v3230 = vld [vmem:[%s2632 + $0x94] sm:$0xf]
      %v3231 = vld [vmem:[%s2632 + $0x98] sm:$0x1]
      %v3232 = vld [vmem:[%s2632 + $0x9c] sm:$0xe]
      %v3233 = vld [vmem:[%s2632 + $0xa0] sm:$0xf]
      %v3234 = vld [vmem:[%s2632 + $0xa4] sm:$0x1]
      %v3235 = vld [vmem:[%s2632 + $0xa8] sm:$0xe]
      %v3236 = vld [vmem:[%s2632 + $0xac] sm:$0xf]
      %v3237 = vld [vmem:[%s2632 + $0xb0] sm:$0x1]
      %v3238 = vld [vmem:[%s2632 + $0xb4] sm:$0xe]
      %v3239 = vld [vmem:[%s2632 + $0xb8] sm:$0xf]
      %v3240 = vld [vmem:[%s2632 + $0xbc] sm:$0x1]
      %v3289 = vrot.slane %v3193, 5
      %v3290 = vrot.slane %v3289, 4
      %v3291 = vrot.slane %v3194, 5
      %v3292 = vsel %vm1623, %v3290, %v3291
      %v3293 = vrot.slane %v3291, 4
      %v3294 = vrot.slane %v3195, 5
      %v3295 = vsel %vm1623, %v3293, %v3294
      %v3296 = vrot.slane %v3196, 5
      %v3297 = vrot.slane %v3296, 4
      %v3298 = vrot.slane %v3197, 5
      %v3299 = vsel %vm1623, %v3297, %v3298
      %v3300 = vrot.slane %v3298, 4
      %v3301 = vrot.slane %v3198, 5
      %v3302 = vsel %vm1623, %v3300, %v3301
      %v3303 = vrot.slane %v3199, 5
      %v3304 = vrot.slane %v3303, 4
      %v3305 = vrot.slane %v3200, 5
      %v3306 = vsel %vm1623, %v3304, %v3305
      %v3307 = vrot.slane %v3305, 4
      %v3308 = vrot.slane %v3201, 5
      %v3309 = vsel %vm1623, %v3307, %v3308
      %v3310 = vrot.slane %v3202, 5
      %v3311 = vrot.slane %v3310, 4
      %v3312 = vrot.slane %v3203, 5
      %v3313 = vsel %vm1623, %v3311, %v3312
      %v3314 = vrot.slane %v3312, 4
      %v3315 = vrot.slane %v3204, 5
      %v3316 = vsel %vm1623, %v3314, %v3315
      %v3317 = vrot.slane %v3205, 5
      %v3318 = vrot.slane %v3317, 4
      %v3319 = vrot.slane %v3206, 5
      %v3320 = vsel %vm1623, %v3318, %v3319
      %v3321 = vrot.slane %v3319, 4
      %v3322 = vrot.slane %v3207, 5
      %v3323 = vsel %vm1623, %v3321, %v3322
      %v3324 = vrot.slane %v3208, 5
      %v3325 = vrot.slane %v3324, 4
      %v3326 = vrot.slane %v3209, 5
      %v3327 = vsel %vm1623, %v3325, %v3326
      %v3328 = vrot.slane %v3326, 4
      %v3329 = vrot.slane %v3210, 5
      %v3330 = vsel %vm1623, %v3328, %v3329
      %v3331 = vrot.slane %v3211, 5
      %v3332 = vrot.slane %v3331, 4
      %v3333 = vrot.slane %v3212, 5
      %v3334 = vsel %vm1623, %v3332, %v3333
      %v3335 = vrot.slane %v3333, 4
      %v3336 = vrot.slane %v3213, 5
      %v3337 = vsel %vm1623, %v3335, %v3336
      %v3338 = vrot.slane %v3214, 5
      %v3339 = vrot.slane %v3338, 4
      %v3340 = vrot.slane %v3215, 5
      %v3341 = vsel %vm1623, %v3339, %v3340
      %v3342 = vrot.slane %v3340, 4
      %v3343 = vrot.slane %v3216, 5
      %v3344 = vsel %vm1623, %v3342, %v3343
      %v3345 = vrot.slane %v3217, 5
      %v3346 = vrot.slane %v3345, 4
      %v3347 = vrot.slane %v3218, 5
      %v3348 = vsel %vm1623, %v3346, %v3347
      %v3349 = vrot.slane %v3347, 4
      %v3350 = vrot.slane %v3219, 5
      %v3351 = vsel %vm1623, %v3349, %v3350
      %v3352 = vrot.slane %v3220, 5
      %v3353 = vrot.slane %v3352, 4
      %v3354 = vrot.slane %v3221, 5
      %v3355 = vsel %vm1623, %v3353, %v3354
      %v3356 = vrot.slane %v3354, 4
      %v3357 = vrot.slane %v3222, 5
      %v3358 = vsel %vm1623, %v3356, %v3357
      %v3359 = vrot.slane %v3223, 5
      %v3360 = vrot.slane %v3359, 4
      %v3361 = vrot.slane %v3224, 5
      %v3362 = vsel %vm1623, %v3360, %v3361
      %v3363 = vrot.slane %v3361, 4
      %v3364 = vrot.slane %v3225, 5
      %v3365 = vsel %vm1623, %v3363, %v3364
      %v3366 = vrot.slane %v3226, 5
      %v3367 = vrot.slane %v3366, 4
      %v3368 = vrot.slane %v3227, 5
      %v3369 = vsel %vm1623, %v3367, %v3368
      %v3370 = vrot.slane %v3368, 4
      %v3371 = vrot.slane %v3228, 5
      %v3372 = vsel %vm1623, %v3370, %v3371
      %v3373 = vrot.slane %v3229, 5
      %v3374 = vrot.slane %v3373, 4
      %v3375 = vrot.slane %v3230, 5
      %v3376 = vsel %vm1623, %v3374, %v3375
      %v3377 = vrot.slane %v3375, 4
      %v3378 = vrot.slane %v3231, 5
      %v3379 = vsel %vm1623, %v3377, %v3378
      %v3380 = vrot.slane %v3232, 5
      %v3381 = vrot.slane %v3380, 4
      %v3382 = vrot.slane %v3233, 5
      %v3383 = vsel %vm1623, %v3381, %v3382
      %v3384 = vrot.slane %v3382, 4
      %v3385 = vrot.slane %v3234, 5
      %v3386 = vsel %vm1623, %v3384, %v3385
      %v3387 = vrot.slane %v3235, 5
      %v3388 = vrot.slane %v3387, 4
      %v3389 = vrot.slane %v3236, 5
      %v3390 = vsel %vm1623, %v3388, %v3389
      %v3391 = vrot.slane %v3389, 4
      %v3392 = vrot.slane %v3237, 5
      %v3393 = vsel %vm1623, %v3391, %v3392
      %v3394 = vrot.slane %v3238, 5
      %v3395 = vrot.slane %v3394, 4
      %v3396 = vrot.slane %v3239, 5
      %v3397 = vsel %vm1623, %v3395, %v3396
      %v3398 = vrot.slane %v3396, 4
      %v3399 = vrot.slane %v3240, 5
      %v3400 = vsel %vm1623, %v3398, %v3399
      %3433 = vst [vmem:[#allocation3 + $0x20] sm:$0xf] %v3292
      %3434 = vst [vmem:[#allocation3 + $0x44] sm:$0xf] %v3295
      %3435 = vst [vmem:[#allocation3 + $0x68] sm:$0xf] %v3299
      %3436 = vst [vmem:[#allocation3 + $0x8c] sm:$0xf] %v3302
      %3437 = vst [vmem:[#allocation3 + $0xb0] sm:$0xf] %v3306
      %3438 = vst [vmem:[#allocation3 + $0xd4] sm:$0xf] %v3309
      %3439 = vst [vmem:[#allocation3 + $0xf8] sm:$0xf] %v3313
      %3440 = vst [vmem:[#allocation3 + $0x11c] sm:$0xf] %v3316
      %3441 = vst [vmem:[#allocation3 + $0x140] sm:$0xf] %v3320
      %3442 = vst [vmem:[#allocation3 + $0x164] sm:$0xf] %v3323
      %3443 = vst [vmem:[#allocation3 + $0x188] sm:$0xf] %v3327
      %3444 = vst [vmem:[#allocation3 + $0x1ac] sm:$0xf] %v3330
      %3445 = vst [vmem:[#allocation3 + $0x1d0] sm:$0xf] %v3334
      %3446 = vst [vmem:[#allocation3 + $0x1f4] sm:$0xf] %v3337
      %3447 = vst [vmem:[#allocation3 + $0x218] sm:$0xf] %v3341
      %3448 = vst [vmem:[#allocation3 + $0x23c] sm:$0xf] %v3344
      %3449 = vst [vmem:[#allocation3 + $0x260] sm:$0xf] %v3348
      %3450 = vst [vmem:[#allocation3 + $0x284] sm:$0xf] %v3351
      %3451 = vst [vmem:[#allocation3 + $0x2a8] sm:$0xf] %v3355
      %3452 = vst [vmem:[#allocation3 + $0x2cc] sm:$0xf] %v3358
      %3453 = vst [vmem:[#allocation3 + $0x2f0] sm:$0xf] %v3362
      %3454 = vst [vmem:[#allocation3 + $0x314] sm:$0xf] %v3365
      %3455 = vst [vmem:[#allocation3 + $0x338] sm:$0xf] %v3369
      %3456 = vst [vmem:[#allocation3 + $0x35c] sm:$0xf] %v3372
      %3457 = vst [vmem:[#allocation3 + $0x380] sm:$0xf] %v3376
      %3458 = vst [vmem:[#allocation3 + $0x3a4] sm:$0xf] %v3379
      %3459 = vst [vmem:[#allocation3 + $0x3c8] sm:$0xf] %v3383
      %3460 = vst [vmem:[#allocation3 + $0x3ec] sm:$0xf] %v3386
      %3461 = vst [vmem:[#allocation3 + $0x410] sm:$0xf] %v3390
      %3462 = vst [vmem:[#allocation3 + $0x434] sm:$0xf] %v3393
      %3463 = vst [vmem:[#allocation3 + $0x458] sm:$0xf] %v3397
      %3464 = vst [vmem:[#allocation3 + $0x47c] sm:$0xf] %v3400
      %v3465 = vld [vmem:[#allocation3] sm:$0xff]
      %v3466 = vld [vmem:[#allocation3 + $0x8] sm:$0xff]
      %v3467 = vld [vmem:[#allocation3 + $0x10] sm:$0xff]
      %v3468 = vld [vmem:[#allocation3 + $0x18] sm:$0xff]
      %v3469 = vld [vmem:[#allocation3 + $0x20] sm:$0xf]
      %v3470 = vld [vmem:[#allocation3 + $0x24] sm:$0xff]
      %v3471 = vld [vmem:[#allocation3 + $0x2c] sm:$0xff]
      %v3472 = vld [vmem:[#allocation3 + $0x34] sm:$0xff]
      %v3473 = vld [vmem:[#allocation3 + $0x3c] sm:$0xff]
      %v3474 = vld [vmem:[#allocation3 + $0x44] sm:$0xf]
      %v3475 = vld [vmem:[#allocation3 + $0x48] sm:$0xff]
      %v3476 = vld [vmem:[#allocation3 + $0x50] sm:$0xff]
      %v3477 = vld [vmem:[#allocation3 + $0x58] sm:$0xff]
      %v3478 = vld [vmem:[#allocation3 + $0x60] sm:$0xff]
      %v3479 = vld [vmem:[#allocation3 + $0x68] sm:$0xf]
      %v3480 = vld [vmem:[#allocation3 + $0x6c] sm:$0xff]
      %v3481 = vld [vmem:[#allocation3 + $0x74] sm:$0xff]
      %v3482 = vld [vmem:[#allocation3 + $0x7c] sm:$0xff]
      %v3483 = vld [vmem:[#allocation3 + $0x84] sm:$0xff]
      %v3484 = vld [vmem:[#allocation3 + $0x8c] sm:$0xf]
      %v3485 = vld [vmem:[#allocation3 + $0x90] sm:$0xff]
      %v3486 = vld [vmem:[#allocation3 + $0x98] sm:$0xff]
      %v3487 = vld [vmem:[#allocation3 + $0xa0] sm:$0xff]
      %v3488 = vld [vmem:[#allocation3 + $0xa8] sm:$0xff]
      %v3489 = vld [vmem:[#allocation3 + $0xb0] sm:$0xf]
      %v3490 = vld [vmem:[#allocation3 + $0xb4] sm:$0xff]
      %v3491 = vld [vmem:[#allocation3 + $0xbc] sm:$0xff]
      %v3492 = vld [vmem:[#allocation3 + $0xc4] sm:$0xff]
      %v3493 = vld [vmem:[#allocation3 + $0xcc] sm:$0xff]
      %v3494 = vld [vmem:[#allocation3 + $0xd4] sm:$0xf]
      %v3495 = vld [vmem:[#allocation3 + $0xd8] sm:$0xff]
      %v3496 = vld [vmem:[#allocation3 + $0xe0] sm:$0xff]
      %v3497 = vld [vmem:[#allocation3 + $0xe8] sm:$0xff]
      %v3498 = vld [vmem:[#allocation3 + $0xf0] sm:$0xff]
      %v3499 = vld [vmem:[#allocation3 + $0xf8] sm:$0xf]
      %v3500 = vld [vmem:[#allocation3 + $0xfc] sm:$0xff]
      %v3501 = vld [vmem:[#allocation3 + $0x104] sm:$0xff]
      %v3502 = vld [vmem:[#allocation3 + $0x10c] sm:$0xff]
      %v3503 = vld [vmem:[#allocation3 + $0x114] sm:$0xff]
      %v3504 = vld [vmem:[#allocation3 + $0x11c] sm:$0xf]
      %v3505 = vld [vmem:[#allocation3 + $0x120] sm:$0xff]
      %v3506 = vld [vmem:[#allocation3 + $0x128] sm:$0xff]
      %v3507 = vld [vmem:[#allocation3 + $0x130] sm:$0xff]
      %v3508 = vld [vmem:[#allocation3 + $0x138] sm:$0xff]
      %v3509 = vld [vmem:[#allocation3 + $0x140] sm:$0xf]
      %v3510 = vld [vmem:[#allocation3 + $0x144] sm:$0xff]
      %v3511 = vld [vmem:[#allocation3 + $0x14c] sm:$0xff]
      %v3512 = vld [vmem:[#allocation3 + $0x154] sm:$0xff]
      %v3513 = vld [vmem:[#allocation3 + $0x15c] sm:$0xff]
      %v3514 = vld [vmem:[#allocation3 + $0x164] sm:$0xf]
      %v3515 = vld [vmem:[#allocation3 + $0x168] sm:$0xff]
      %v3516 = vld [vmem:[#allocation3 + $0x170] sm:$0xff]
      %v3517 = vld [vmem:[#allocation3 + $0x178] sm:$0xff]
      %v3518 = vld [vmem:[#allocation3 + $0x180] sm:$0xff]
      %v3519 = vld [vmem:[#allocation3 + $0x188] sm:$0xf]
      %v3520 = vld [vmem:[#allocation3 + $0x18c] sm:$0xff]
      %v3521 = vld [vmem:[#allocation3 + $0x194] sm:$0xff]
      %v3522 = vld [vmem:[#allocation3 + $0x19c] sm:$0xff]
      %v3523 = vld [vmem:[#allocation3 + $0x1a4] sm:$0xff]
      %v3524 = vld [vmem:[#allocation3 + $0x1ac] sm:$0xf]
      %v3525 = vld [vmem:[#allocation3 + $0x1b0] sm:$0xff]
      %v3526 = vld [vmem:[#allocation3 + $0x1b8] sm:$0xff]
      %v3527 = vld [vmem:[#allocation3 + $0x1c0] sm:$0xff]
      %v3528 = vld [vmem:[#allocation3 + $0x1c8] sm:$0xff]
      %v3529 = vld [vmem:[#allocation3 + $0x1d0] sm:$0xf]
      %v3530 = vld [vmem:[#allocation3 + $0x1d4] sm:$0xff]
      %v3531 = vld [vmem:[#allocation3 + $0x1dc] sm:$0xff]
      %v3532 = vld [vmem:[#allocation3 + $0x1e4] sm:$0xff]
      %v3533 = vld [vmem:[#allocation3 + $0x1ec] sm:$0xff]
      %v3534 = vld [vmem:[#allocation3 + $0x1f4] sm:$0xf]
      %v3535 = vld [vmem:[#allocation3 + $0x1f8] sm:$0xff]
      %v3536 = vld [vmem:[#allocation3 + $0x200] sm:$0xff]
      %v3537 = vld [vmem:[#allocation3 + $0x208] sm:$0xff]
      %v3538 = vld [vmem:[#allocation3 + $0x210] sm:$0xff]
      %v3539 = vld [vmem:[#allocation3 + $0x218] sm:$0xf]
      %v3540 = vld [vmem:[#allocation3 + $0x21c] sm:$0xff]
      %v3541 = vld [vmem:[#allocation3 + $0x224] sm:$0xff]
      %v3542 = vld [vmem:[#allocation3 + $0x22c] sm:$0xff]
      %v3543 = vld [vmem:[#allocation3 + $0x234] sm:$0xff]
      %v3544 = vld [vmem:[#allocation3 + $0x23c] sm:$0xf]
      %v3545 = vld [vmem:[#allocation3 + $0x240] sm:$0xff]
      %v3546 = vld [vmem:[#allocation3 + $0x248] sm:$0xff]
      %v3547 = vld [vmem:[#allocation3 + $0x250] sm:$0xff]
      %v3548 = vld [vmem:[#allocation3 + $0x258] sm:$0xff]
      %v3549 = vld [vmem:[#allocation3 + $0x260] sm:$0xf]
      %v3550 = vld [vmem:[#allocation3 + $0x264] sm:$0xff]
      %v3551 = vld [vmem:[#allocation3 + $0x26c] sm:$0xff]
      %v3552 = vld [vmem:[#allocation3 + $0x274] sm:$0xff]
      %v3553 = vld [vmem:[#allocation3 + $0x27c] sm:$0xff]
      %v3554 = vld [vmem:[#allocation3 + $0x284] sm:$0xf]
      %v3555 = vld [vmem:[#allocation3 + $0x288] sm:$0xff]
      %v3556 = vld [vmem:[#allocation3 + $0x290] sm:$0xff]
      %v3557 = vld [vmem:[#allocation3 + $0x298] sm:$0xff]
      %v3558 = vld [vmem:[#allocation3 + $0x2a0] sm:$0xff]
      %v3559 = vld [vmem:[#allocation3 + $0x2a8] sm:$0xf]
      %v3560 = vld [vmem:[#allocation3 + $0x2ac] sm:$0xff]
      %v3561 = vld [vmem:[#allocation3 + $0x2b4] sm:$0xff]
      %v3562 = vld [vmem:[#allocation3 + $0x2bc] sm:$0xff]
      %v3563 = vld [vmem:[#allocation3 + $0x2c4] sm:$0xff]
      %v3564 = vld [vmem:[#allocation3 + $0x2cc] sm:$0xf]
      %v3565 = vld [vmem:[#allocation3 + $0x2d0] sm:$0xff]
      %v3566 = vld [vmem:[#allocation3 + $0x2d8] sm:$0xff]
      %v3567 = vld [vmem:[#allocation3 + $0x2e0] sm:$0xff]
      %v3568 = vld [vmem:[#allocation3 + $0x2e8] sm:$0xff]
      %v3569 = vld [vmem:[#allocation3 + $0x2f0] sm:$0xf]
      %v3570 = vld [vmem:[#allocation3 + $0x2f4] sm:$0xff]
      %v3571 = vld [vmem:[#allocation3 + $0x2fc] sm:$0xff]
      %v3572 = vld [vmem:[#allocation3 + $0x304] sm:$0xff]
      %v3573 = vld [vmem:[#allocation3 + $0x30c] sm:$0xff]
      %v3574 = vld [vmem:[#allocation3 + $0x314] sm:$0xf]
      %v3575 = vld [vmem:[#allocation3 + $0x318] sm:$0xff]
      %v3576 = vld [vmem:[#allocation3 + $0x320] sm:$0xff]
      %v3577 = vld [vmem:[#allocation3 + $0x328] sm:$0xff]
      %v3578 = vld [vmem:[#allocation3 + $0x330] sm:$0xff]
      %v3579 = vld [vmem:[#allocation3 + $0x338] sm:$0xf]
      %v3580 = vld [vmem:[#allocation3 + $0x33c] sm:$0xff]
      %v3581 = vld [vmem:[#allocation3 + $0x344] sm:$0xff]
      %v3582 = vld [vmem:[#allocation3 + $0x34c] sm:$0xff]
      %v3583 = vld [vmem:[#allocation3 + $0x354] sm:$0xff]
      %v3584 = vld [vmem:[#allocation3 + $0x35c] sm:$0xf]
      %v3585 = vld [vmem:[#allocation3 + $0x360] sm:$0xff]
      %v3586 = vld [vmem:[#allocation3 + $0x368] sm:$0xff]
      %v3587 = vld [vmem:[#allocation3 + $0x370] sm:$0xff]
      %v3588 = vld [vmem:[#allocation3 + $0x378] sm:$0xff]
      %v3589 = vld [vmem:[#allocation3 + $0x380] sm:$0xf]
      %v3590 = vld [vmem:[#allocation3 + $0x384] sm:$0xff]
      %v3591 = vld [vmem:[#allocation3 + $0x38c] sm:$0xff]
      %v3592 = vld [vmem:[#allocation3 + $0x394] sm:$0xff]
      %v3593 = vld [vmem:[#allocation3 + $0x39c] sm:$0xff]
      %v3594 = vld [vmem:[#allocation3 + $0x3a4] sm:$0xf]
      %v3595 = vld [vmem:[#allocation3 + $0x3a8] sm:$0xff]
      %v3596 = vld [vmem:[#allocation3 + $0x3b0] sm:$0xff]
      %v3597 = vld [vmem:[#allocation3 + $0x3b8] sm:$0xff]
      %v3598 = vld [vmem:[#allocation3 + $0x3c0] sm:$0xff]
      %v3599 = vld [vmem:[#allocation3 + $0x3c8] sm:$0xf]
      %v3600 = vld [vmem:[#allocation3 + $0x3cc] sm:$0xff]
      %v3601 = vld [vmem:[#allocation3 + $0x3d4] sm:$0xff]
      %v3602 = vld [vmem:[#allocation3 + $0x3dc] sm:$0xff]
      %v3603 = vld [vmem:[#allocation3 + $0x3e4] sm:$0xff]
      %v3604 = vld [vmem:[#allocation3 + $0x3ec] sm:$0xf]
      %v3605 = vld [vmem:[#allocation3 + $0x3f0] sm:$0xff]
      %v3606 = vld [vmem:[#allocation3 + $0x3f8] sm:$0xff]
      %v3607 = vld [vmem:[#allocation3 + $0x400] sm:$0xff]
      %v3608 = vld [vmem:[#allocation3 + $0x408] sm:$0xff]
      %v3609 = vld [vmem:[#allocation3 + $0x410] sm:$0xf]
      %v3610 = vld [vmem:[#allocation3 + $0x414] sm:$0xff]
      %v3611 = vld [vmem:[#allocation3 + $0x41c] sm:$0xff]
      %v3612 = vld [vmem:[#allocation3 + $0x424] sm:$0xff]
      %v3613 = vld [vmem:[#allocation3 + $0x42c] sm:$0xff]
      %v3614 = vld [vmem:[#allocation3 + $0x434] sm:$0xf]
      %v3615 = vld [vmem:[#allocation3 + $0x438] sm:$0xff]
      %v3616 = vld [vmem:[#allocation3 + $0x440] sm:$0xff]
      %v3617 = vld [vmem:[#allocation3 + $0x448] sm:$0xff]
      %v3618 = vld [vmem:[#allocation3 + $0x450] sm:$0xff]
      %v3619 = vld [vmem:[#allocation3 + $0x458] sm:$0xf]
      %v3620 = vld [vmem:[#allocation3 + $0x45c] sm:$0xff]
      %v3621 = vld [vmem:[#allocation3 + $0x464] sm:$0xff]
      %v3622 = vld [vmem:[#allocation3 + $0x46c] sm:$0xff]
      %v3623 = vld [vmem:[#allocation3 + $0x474] sm:$0xff]
      %v3624 = vld [vmem:[#allocation3 + $0x47c] sm:$0xf]
      %v3625 = vld [vmem:[%s1] sm:$0xf]
      %v3626 = vld [vmem:[%s1 + $0x4] sm:$0xf]
      %v3627 = vld [vmem:[%s1 + $0x8] sm:$0xf]
      %v3628 = vld [vmem:[%s1 + $0xc] sm:$0xf]
      %v3629 = vld [vmem:[%s1 + $0x10] sm:$0xf]
      %v3630 = vld [vmem:[%s1 + $0x14] sm:$0xf]
      %v3631 = vld [vmem:[%s1 + $0x18] sm:$0xf]
      %v3632 = vld [vmem:[%s1 + $0x1c] sm:$0xf]
      %v3633 = vld [vmem:[%s1 + $0x20] sm:$0xf]
      %v3634 = vld [vmem:[%s1 + $0x24] sm:$0xf]
      %v3635 = vld [vmem:[%s1 + $0x28] sm:$0xf]
      %v3636 = vld [vmem:[%s1 + $0x2c] sm:$0xf]
      %v3637 = vld [vmem:[%s1 + $0x30] sm:$0xf]
      %v3638 = vld [vmem:[%s1 + $0x34] sm:$0xf]
      %v3639 = vld [vmem:[%s1 + $0x38] sm:$0xf]
      %v3640 = vld [vmem:[%s1 + $0x3c] sm:$0xf]
      %v3641 = vld [vmem:[%s1 + $0x40] sm:$0xf]
      %v3642 = vld [vmem:[%s1 + $0x44] sm:$0xf]
      %v3643 = vld [vmem:[%s1 + $0x48] sm:$0xf]
      %v3644 = vld [vmem:[%s1 + $0x4c] sm:$0xf]
      %v3645 = vld [vmem:[%s1 + $0x50] sm:$0xf]
      %v3646 = vld [vmem:[%s1 + $0x54] sm:$0xf]
      %v3647 = vld [vmem:[%s1 + $0x58] sm:$0xf]
      %v3648 = vld [vmem:[%s1 + $0x5c] sm:$0xf]
      %v3649 = vld [vmem:[%s1 + $0x60] sm:$0xf]
      %v3650 = vld [vmem:[%s1 + $0x64] sm:$0xf]
      %v3651 = vld [vmem:[%s1 + $0x68] sm:$0xf]
      %v3652 = vld [vmem:[%s1 + $0x6c] sm:$0xf]
      %v3653 = vld [vmem:[%s1 + $0x70] sm:$0xf]
      %v3654 = vld [vmem:[%s1 + $0x74] sm:$0xf]
      %v3655 = vld [vmem:[%s1 + $0x78] sm:$0xf]
      %v3656 = vld [vmem:[%s1 + $0x7c] sm:$0xf]
      %v3657 = vld [vmem:[%s1 + $0x80] sm:$0xf]
      %v3658 = vld [vmem:[%s1 + $0x84] sm:$0xf]
      %v3659 = vld [vmem:[%s1 + $0x88] sm:$0xf]
      %v3660 = vld [vmem:[%s1 + $0x8c] sm:$0xf]
      %v3661 = vld [vmem:[%s1 + $0x90] sm:$0xf]
      %v3662 = vld [vmem:[%s1 + $0x94] sm:$0xf]
      %v3663 = vld [vmem:[%s1 + $0x98] sm:$0xf]
      %v3664 = vld [vmem:[%s1 + $0x9c] sm:$0xf]
      %v3665 = vld [vmem:[%s1 + $0xa0] sm:$0xf]
      %v3666 = vld [vmem:[%s1 + $0xa4] sm:$0xf]
      %v3667 = vld [vmem:[%s1 + $0xa8] sm:$0xf]
      %v3668 = vld [vmem:[%s1 + $0xac] sm:$0xf]
      %v3669 = vld [vmem:[%s1 + $0xb0] sm:$0xf]
      %v3670 = vld [vmem:[%s1 + $0xb4] sm:$0xf]
      %v3671 = vld [vmem:[%s1 + $0xb8] sm:$0xf]
      %v3672 = vld [vmem:[%s1 + $0xbc] sm:$0xf]
      %v3673 = vld [vmem:[%s1 + $0xc0] sm:$0xf]
      %v3674 = vld [vmem:[%s1 + $0xc4] sm:$0xf]
      %v3675 = vld [vmem:[%s1 + $0xc8] sm:$0xf]
      %v3676 = vld [vmem:[%s1 + $0xcc] sm:$0xf]
      %v3677 = vld [vmem:[%s1 + $0xd0] sm:$0xf]
      %v3678 = vld [vmem:[%s1 + $0xd4] sm:$0xf]
      %v3679 = vld [vmem:[%s1 + $0xd8] sm:$0xf]
      %v3680 = vld [vmem:[%s1 + $0xdc] sm:$0xf]
      %v3681 = vld [vmem:[%s1 + $0xe0] sm:$0xf]
      %v3682 = vld [vmem:[%s1 + $0xe4] sm:$0xf]
      %v3683 = vld [vmem:[%s1 + $0xe8] sm:$0xf]
      %v3684 = vld [vmem:[%s1 + $0xec] sm:$0xf]
      %v3685 = vld [vmem:[%s1 + $0xf0] sm:$0xf]
      %v3686 = vld [vmem:[%s1 + $0xf4] sm:$0xf]
      %v3687 = vld [vmem:[%s1 + $0xf8] sm:$0xf]
      %v3688 = vld [vmem:[%s1 + $0xfc] sm:$0xf]
      %v3689 = vld [vmem:[%s1 + $0x100] sm:$0xf]
      %v3690 = vld [vmem:[%s1 + $0x104] sm:$0xf]
      %v3691 = vld [vmem:[%s1 + $0x108] sm:$0xf]
      %v3692 = vld [vmem:[%s1 + $0x10c] sm:$0xf]
      %v3693 = vld [vmem:[%s1 + $0x110] sm:$0xf]
      %v3694 = vld [vmem:[%s1 + $0x114] sm:$0xf]
      %v3695 = vld [vmem:[%s1 + $0x118] sm:$0xf]
      %v3696 = vld [vmem:[%s1 + $0x11c] sm:$0xf]
      %v3697 = vld [vmem:[%s1 + $0x120] sm:$0xf]
      %v3698 = vld [vmem:[%s1 + $0x124] sm:$0xf]
      %v3699 = vld [vmem:[%s1 + $0x128] sm:$0xf]
      %v3700 = vld [vmem:[%s1 + $0x12c] sm:$0xf]
      %v3701 = vld [vmem:[%s1 + $0x130] sm:$0xf]
      %v3702 = vld [vmem:[%s1 + $0x134] sm:$0xf]
      %v3703 = vld [vmem:[%s1 + $0x138] sm:$0xf]
      %v3704 = vld [vmem:[%s1 + $0x13c] sm:$0xf]
      %v3705 = vld [vmem:[%s1 + $0x140] sm:$0xf]
      %v3706 = vld [vmem:[%s1 + $0x144] sm:$0xf]
      %v3707 = vld [vmem:[%s1 + $0x148] sm:$0xf]
      %v3708 = vld [vmem:[%s1 + $0x14c] sm:$0xf]
      %v3709 = vld [vmem:[%s1 + $0x150] sm:$0xf]
      %v3710 = vld [vmem:[%s1 + $0x154] sm:$0xf]
      %v3711 = vld [vmem:[%s1 + $0x158] sm:$0xf]
      %v3712 = vld [vmem:[%s1 + $0x15c] sm:$0xf]
      %v3713 = vld [vmem:[%s1 + $0x160] sm:$0xf]
      %v3714 = vld [vmem:[%s1 + $0x164] sm:$0xf]
      %v3715 = vld [vmem:[%s1 + $0x168] sm:$0xf]
      %v3716 = vld [vmem:[%s1 + $0x16c] sm:$0xf]
      %v3717 = vld [vmem:[%s1 + $0x170] sm:$0xf]
      %v3718 = vld [vmem:[%s1 + $0x174] sm:$0xf]
      %v3719 = vld [vmem:[%s1 + $0x178] sm:$0xf]
      %v3720 = vld [vmem:[%s1 + $0x17c] sm:$0xf]
      %v3721 = vld [vmem:[%s1 + $0x180] sm:$0xf]
      %v3722 = vld [vmem:[%s1 + $0x184] sm:$0xf]
      %v3723 = vld [vmem:[%s1 + $0x188] sm:$0xf]
      %v3724 = vld [vmem:[%s1 + $0x18c] sm:$0xf]
      %v3725 = vld [vmem:[%s1 + $0x190] sm:$0xf]
      %v3726 = vld [vmem:[%s1 + $0x194] sm:$0xf]
      %v3727 = vld [vmem:[%s1 + $0x198] sm:$0xf]
      %v3728 = vld [vmem:[%s1 + $0x19c] sm:$0xf]
      %v3729 = vld [vmem:[%s1 + $0x1a0] sm:$0xf]
      %v3730 = vld [vmem:[%s1 + $0x1a4] sm:$0xf]
      %v3731 = vld [vmem:[%s1 + $0x1a8] sm:$0xf]
      %v3732 = vld [vmem:[%s1 + $0x1ac] sm:$0xf]
      %v3733 = vld [vmem:[%s1 + $0x1b0] sm:$0xf]
      %v3734 = vld [vmem:[%s1 + $0x1b4] sm:$0xf]
      %v3735 = vld [vmem:[%s1 + $0x1b8] sm:$0xf]
      %v3736 = vld [vmem:[%s1 + $0x1bc] sm:$0xf]
      %v3737 = vld [vmem:[%s1 + $0x1c0] sm:$0xf]
      %v3738 = vld [vmem:[%s1 + $0x1c4] sm:$0xf]
      %v3739 = vld [vmem:[%s1 + $0x1c8] sm:$0xf]
      %v3740 = vld [vmem:[%s1 + $0x1cc] sm:$0xf]
      %v3741 = vld [vmem:[%s1 + $0x1d0] sm:$0xf]
      %v3742 = vld [vmem:[%s1 + $0x1d4] sm:$0xf]
      %v3743 = vld [vmem:[%s1 + $0x1d8] sm:$0xf]
      %v3744 = vld [vmem:[%s1 + $0x1dc] sm:$0xf]
      %v3745 = vld [vmem:[%s1 + $0x1e0] sm:$0xf]
      %v3746 = vld [vmem:[%s1 + $0x1e4] sm:$0xf]
      %v3747 = vld [vmem:[%s1 + $0x1e8] sm:$0xf]
      %v3748 = vld [vmem:[%s1 + $0x1ec] sm:$0xf]
      %v3749 = vld [vmem:[%s1 + $0x1f0] sm:$0xf]
      %v3750 = vld [vmem:[%s1 + $0x1f4] sm:$0xf]
      %v3751 = vld [vmem:[%s1 + $0x1f8] sm:$0xf]
      %v3752 = vld [vmem:[%s1 + $0x1fc] sm:$0xf]
      %v3753 = vld [vmem:[%s1 + $0x200] sm:$0xf]
      %v3754 = vld [vmem:[%s1 + $0x204] sm:$0xf]
      %v3755 = vld [vmem:[%s1 + $0x208] sm:$0xf]
      %v3756 = vld [vmem:[%s1 + $0x20c] sm:$0xf]
      %v3757 = vld [vmem:[%s1 + $0x210] sm:$0xf]
      %v3758 = vld [vmem:[%s1 + $0x214] sm:$0xf]
      %v3759 = vld [vmem:[%s1 + $0x218] sm:$0xf]
      %v3760 = vld [vmem:[%s1 + $0x21c] sm:$0xf]
      %v3761 = vld [vmem:[%s1 + $0x220] sm:$0xf]
      %v3762 = vld [vmem:[%s1 + $0x224] sm:$0xf]
      %v3763 = vld [vmem:[%s1 + $0x228] sm:$0xf]
      %v3764 = vld [vmem:[%s1 + $0x22c] sm:$0xf]
      %v3765 = vld [vmem:[%s1 + $0x230] sm:$0xf]
      %v3766 = vld [vmem:[%s1 + $0x234] sm:$0xf]
      %v3767 = vld [vmem:[%s1 + $0x238] sm:$0xf]
      %v3768 = vld [vmem:[%s1 + $0x23c] sm:$0xf]
      %v3929 = vunpack.c.l.b16 %v3465
      %v3930 = vunpack.c.h.b16 %v3465
      %v3931 = vunpack.c.l.b16 %v3466
      %v3932 = vunpack.c.h.b16 %v3466
      %v3933 = vunpack.c.l.b16 %v3467
      %v3934 = vunpack.c.h.b16 %v3467
      %v3935 = vunpack.c.l.b16 %v3468
      %v3936 = vunpack.c.h.b16 %v3468
      %v3937 = vunpack.c.l.b16 %v3469
      %v3938 = vunpack.c.l.b16 %v3470
      %v3939 = vunpack.c.h.b16 %v3470
      %v3940 = vunpack.c.l.b16 %v3471
      %v3941 = vunpack.c.h.b16 %v3471
      %v3942 = vunpack.c.l.b16 %v3472
      %v3943 = vunpack.c.h.b16 %v3472
      %v3944 = vunpack.c.l.b16 %v3473
      %v3945 = vunpack.c.h.b16 %v3473
      %v3946 = vunpack.c.l.b16 %v3474
      %v3947 = vunpack.c.l.b16 %v3475
      %v3948 = vunpack.c.h.b16 %v3475
      %v3949 = vunpack.c.l.b16 %v3476
      %v3950 = vunpack.c.h.b16 %v3476
      %v3951 = vunpack.c.l.b16 %v3477
      %v3952 = vunpack.c.h.b16 %v3477
      %v3953 = vunpack.c.l.b16 %v3478
      %v3954 = vunpack.c.h.b16 %v3478
      %v3955 = vunpack.c.l.b16 %v3479
      %v3956 = vunpack.c.l.b16 %v3480
      %v3957 = vunpack.c.h.b16 %v3480
      %v3958 = vunpack.c.l.b16 %v3481
      %v3959 = vunpack.c.h.b16 %v3481
      %v3960 = vunpack.c.l.b16 %v3482
      %v3961 = vunpack.c.h.b16 %v3482
      %v3962 = vunpack.c.l.b16 %v3483
      %v3963 = vunpack.c.h.b16 %v3483
      %v3964 = vunpack.c.l.b16 %v3484
      %v3965 = vunpack.c.l.b16 %v3485
      %v3966 = vunpack.c.h.b16 %v3485
      %v3967 = vunpack.c.l.b16 %v3486
      %v3968 = vunpack.c.h.b16 %v3486
      %v3969 = vunpack.c.l.b16 %v3487
      %v3970 = vunpack.c.h.b16 %v3487
      %v3971 = vunpack.c.l.b16 %v3488
      %v3972 = vunpack.c.h.b16 %v3488
      %v3973 = vunpack.c.l.b16 %v3489
      %v3974 = vunpack.c.l.b16 %v3490
      %v3975 = vunpack.c.h.b16 %v3490
      %v3976 = vunpack.c.l.b16 %v3491
      %v3977 = vunpack.c.h.b16 %v3491
      %v3978 = vunpack.c.l.b16 %v3492
      %v3979 = vunpack.c.h.b16 %v3492
      %v3980 = vunpack.c.l.b16 %v3493
      %v3981 = vunpack.c.h.b16 %v3493
      %v3982 = vunpack.c.l.b16 %v3494
      %v3983 = vunpack.c.l.b16 %v3495
      %v3984 = vunpack.c.h.b16 %v3495
      %v3985 = vunpack.c.l.b16 %v3496
      %v3986 = vunpack.c.h.b16 %v3496
      %v3987 = vunpack.c.l.b16 %v3497
      %v3988 = vunpack.c.h.b16 %v3497
      %v3989 = vunpack.c.l.b16 %v3498
      %v3990 = vunpack.c.h.b16 %v3498
      %v3991 = vunpack.c.l.b16 %v3499
      %v3992 = vunpack.c.l.b16 %v3500
      %v3993 = vunpack.c.h.b16 %v3500
      %v3994 = vunpack.c.l.b16 %v3501
      %v3995 = vunpack.c.h.b16 %v3501
      %v3996 = vunpack.c.l.b16 %v3502
      %v3997 = vunpack.c.h.b16 %v3502
      %v3998 = vunpack.c.l.b16 %v3503
      %v3999 = vunpack.c.h.b16 %v3503
      %v4000 = vunpack.c.l.b16 %v3504
      %v4001 = vunpack.c.l.b16 %v3505
      %v4002 = vunpack.c.h.b16 %v3505
      %v4003 = vunpack.c.l.b16 %v3506
      %v4004 = vunpack.c.h.b16 %v3506
      %v4005 = vunpack.c.l.b16 %v3507
      %v4006 = vunpack.c.h.b16 %v3507
      %v4007 = vunpack.c.l.b16 %v3508
      %v4008 = vunpack.c.h.b16 %v3508
      %v4009 = vunpack.c.l.b16 %v3509
      %v4010 = vunpack.c.l.b16 %v3510
      %v4011 = vunpack.c.h.b16 %v3510
      %v4012 = vunpack.c.l.b16 %v3511
      %v4013 = vunpack.c.h.b16 %v3511
      %v4014 = vunpack.c.l.b16 %v3512
      %v4015 = vunpack.c.h.b16 %v3512
      %v4016 = vunpack.c.l.b16 %v3513
      %v4017 = vunpack.c.h.b16 %v3513
      %v4018 = vunpack.c.l.b16 %v3514
      %v4019 = vunpack.c.l.b16 %v3515
      %v4020 = vunpack.c.h.b16 %v3515
      %v4021 = vunpack.c.l.b16 %v3516
      %v4022 = vunpack.c.h.b16 %v3516
      %v4023 = vunpack.c.l.b16 %v3517
      %v4024 = vunpack.c.h.b16 %v3517
      %v4025 = vunpack.c.l.b16 %v3518
      %v4026 = vunpack.c.h.b16 %v3518
      %v4027 = vunpack.c.l.b16 %v3519
      %v4028 = vunpack.c.l.b16 %v3520
      %v4029 = vunpack.c.h.b16 %v3520
      %v4030 = vunpack.c.l.b16 %v3521
      %v4031 = vunpack.c.h.b16 %v3521
      %v4032 = vunpack.c.l.b16 %v3522
      %v4033 = vunpack.c.h.b16 %v3522
      %v4034 = vunpack.c.l.b16 %v3523
      %v4035 = vunpack.c.h.b16 %v3523
      %v4036 = vunpack.c.l.b16 %v3524
      %v4037 = vunpack.c.l.b16 %v3525
      %v4038 = vunpack.c.h.b16 %v3525
      %v4039 = vunpack.c.l.b16 %v3526
      %v4040 = vunpack.c.h.b16 %v3526
      %v4041 = vunpack.c.l.b16 %v3527
      %v4042 = vunpack.c.h.b16 %v3527
      %v4043 = vunpack.c.l.b16 %v3528
      %v4044 = vunpack.c.h.b16 %v3528
      %v4045 = vunpack.c.l.b16 %v3529
      %v4046 = vunpack.c.l.b16 %v3530
      %v4047 = vunpack.c.h.b16 %v3530
      %v4048 = vunpack.c.l.b16 %v3531
      %v4049 = vunpack.c.h.b16 %v3531
      %v4050 = vunpack.c.l.b16 %v3532
      %v4051 = vunpack.c.h.b16 %v3532
      %v4052 = vunpack.c.l.b16 %v3533
      %v4053 = vunpack.c.h.b16 %v3533
      %v4054 = vunpack.c.l.b16 %v3534
      %v4055 = vunpack.c.l.b16 %v3535
      %v4056 = vunpack.c.h.b16 %v3535
      %v4057 = vunpack.c.l.b16 %v3536
      %v4058 = vunpack.c.h.b16 %v3536
      %v4059 = vunpack.c.l.b16 %v3537
      %v4060 = vunpack.c.h.b16 %v3537
      %v4061 = vunpack.c.l.b16 %v3538
      %v4062 = vunpack.c.h.b16 %v3538
      %v4063 = vunpack.c.l.b16 %v3539
      %v4064 = vunpack.c.l.b16 %v3540
      %v4065 = vunpack.c.h.b16 %v3540
      %v4066 = vunpack.c.l.b16 %v3541
      %v4067 = vunpack.c.h.b16 %v3541
      %v4068 = vunpack.c.l.b16 %v3542
      %v4069 = vunpack.c.h.b16 %v3542
      %v4070 = vunpack.c.l.b16 %v3543
      %v4071 = vunpack.c.h.b16 %v3543
      %v4072 = vunpack.c.l.b16 %v3544
      %v4073 = vunpack.c.l.b16 %v3545
      %v4074 = vunpack.c.h.b16 %v3545
      %v4075 = vunpack.c.l.b16 %v3546
      %v4076 = vunpack.c.h.b16 %v3546
      %v4077 = vunpack.c.l.b16 %v3547
      %v4078 = vunpack.c.h.b16 %v3547
      %v4079 = vunpack.c.l.b16 %v3548
      %v4080 = vunpack.c.h.b16 %v3548
      %v4081 = vunpack.c.l.b16 %v3549
      %v4082 = vunpack.c.l.b16 %v3550
      %v4083 = vunpack.c.h.b16 %v3550
      %v4084 = vunpack.c.l.b16 %v3551
      %v4085 = vunpack.c.h.b16 %v3551
      %v4086 = vunpack.c.l.b16 %v3552
      %v4087 = vunpack.c.h.b16 %v3552
      %v4088 = vunpack.c.l.b16 %v3553
      %v4089 = vunpack.c.h.b16 %v3553
      %v4090 = vunpack.c.l.b16 %v3554
      %v4091 = vunpack.c.l.b16 %v3555
      %v4092 = vunpack.c.h.b16 %v3555
      %v4093 = vunpack.c.l.b16 %v3556
      %v4094 = vunpack.c.h.b16 %v3556
      %v4095 = vunpack.c.l.b16 %v3557
      %v4096 = vunpack.c.h.b16 %v3557
      %v4097 = vunpack.c.l.b16 %v3558
      %v4098 = vunpack.c.h.b16 %v3558
      %v4099 = vunpack.c.l.b16 %v3559
      %v4100 = vunpack.c.l.b16 %v3560
      %v4101 = vunpack.c.h.b16 %v3560
      %v4102 = vunpack.c.l.b16 %v3561
      %v4103 = vunpack.c.h.b16 %v3561
      %v4104 = vunpack.c.l.b16 %v3562
      %v4105 = vunpack.c.h.b16 %v3562
      %v4106 = vunpack.c.l.b16 %v3563
      %v4107 = vunpack.c.h.b16 %v3563
      %v4108 = vunpack.c.l.b16 %v3564
      %v4109 = vunpack.c.l.b16 %v3565
      %v4110 = vunpack.c.h.b16 %v3565
      %v4111 = vunpack.c.l.b16 %v3566
      %v4112 = vunpack.c.h.b16 %v3566
      %v4113 = vunpack.c.l.b16 %v3567
      %v4114 = vunpack.c.h.b16 %v3567
      %v4115 = vunpack.c.l.b16 %v3568
      %v4116 = vunpack.c.h.b16 %v3568
      %v4117 = vunpack.c.l.b16 %v3569
      %v4118 = vunpack.c.l.b16 %v3570
      %v4119 = vunpack.c.h.b16 %v3570
      %v4120 = vunpack.c.l.b16 %v3571
      %v4121 = vunpack.c.h.b16 %v3571
      %v4122 = vunpack.c.l.b16 %v3572
      %v4123 = vunpack.c.h.b16 %v3572
      %v4124 = vunpack.c.l.b16 %v3573
      %v4125 = vunpack.c.h.b16 %v3573
      %v4126 = vunpack.c.l.b16 %v3574
      %v4127 = vunpack.c.l.b16 %v3575
      %v4128 = vunpack.c.h.b16 %v3575
      %v4129 = vunpack.c.l.b16 %v3576
      %v4130 = vunpack.c.h.b16 %v3576
      %v4131 = vunpack.c.l.b16 %v3577
      %v4132 = vunpack.c.h.b16 %v3577
      %v4133 = vunpack.c.l.b16 %v3578
      %v4134 = vunpack.c.h.b16 %v3578
      %v4135 = vunpack.c.l.b16 %v3579
      %v4136 = vunpack.c.l.b16 %v3580
      %v4137 = vunpack.c.h.b16 %v3580
      %v4138 = vunpack.c.l.b16 %v3581
      %v4139 = vunpack.c.h.b16 %v3581
      %v4140 = vunpack.c.l.b16 %v3582
      %v4141 = vunpack.c.h.b16 %v3582
      %v4142 = vunpack.c.l.b16 %v3583
      %v4143 = vunpack.c.h.b16 %v3583
      %v4144 = vunpack.c.l.b16 %v3584
      %v4145 = vunpack.c.l.b16 %v3585
      %v4146 = vunpack.c.h.b16 %v3585
      %v4147 = vunpack.c.l.b16 %v3586
      %v4148 = vunpack.c.h.b16 %v3586
      %v4149 = vunpack.c.l.b16 %v3587
      %v4150 = vunpack.c.h.b16 %v3587
      %v4151 = vunpack.c.l.b16 %v3588
      %v4152 = vunpack.c.h.b16 %v3588
      %v4153 = vunpack.c.l.b16 %v3589
      %v4154 = vunpack.c.l.b16 %v3590
      %v4155 = vunpack.c.h.b16 %v3590
      %v4156 = vunpack.c.l.b16 %v3591
      %v4157 = vunpack.c.h.b16 %v3591
      %v4158 = vunpack.c.l.b16 %v3592
      %v4159 = vunpack.c.h.b16 %v3592
      %v4160 = vunpack.c.l.b16 %v3593
      %v4161 = vunpack.c.h.b16 %v3593
      %v4162 = vunpack.c.l.b16 %v3594
      %v4163 = vunpack.c.l.b16 %v3595
      %v4164 = vunpack.c.h.b16 %v3595
      %v4165 = vunpack.c.l.b16 %v3596
      %v4166 = vunpack.c.h.b16 %v3596
      %v4167 = vunpack.c.l.b16 %v3597
      %v4168 = vunpack.c.h.b16 %v3597
      %v4169 = vunpack.c.l.b16 %v3598
      %v4170 = vunpack.c.h.b16 %v3598
      %v4171 = vunpack.c.l.b16 %v3599
      %v4172 = vunpack.c.l.b16 %v3600
      %v4173 = vunpack.c.h.b16 %v3600
      %v4174 = vunpack.c.l.b16 %v3601
      %v4175 = vunpack.c.h.b16 %v3601
      %v4176 = vunpack.c.l.b16 %v3602
      %v4177 = vunpack.c.h.b16 %v3602
      %v4178 = vunpack.c.l.b16 %v3603
      %v4179 = vunpack.c.h.b16 %v3603
      %v4180 = vunpack.c.l.b16 %v3604
      %v4181 = vunpack.c.l.b16 %v3605
      %v4182 = vunpack.c.h.b16 %v3605
      %v4183 = vunpack.c.l.b16 %v3606
      %v4184 = vunpack.c.h.b16 %v3606
      %v4185 = vunpack.c.l.b16 %v3607
      %v4186 = vunpack.c.h.b16 %v3607
      %v4187 = vunpack.c.l.b16 %v3608
      %v4188 = vunpack.c.h.b16 %v3608
      %v4189 = vunpack.c.l.b16 %v3609
      %v4190 = vunpack.c.l.b16 %v3610
      %v4191 = vunpack.c.h.b16 %v3610
      %v4192 = vunpack.c.l.b16 %v3611
      %v4193 = vunpack.c.h.b16 %v3611
      %v4194 = vunpack.c.l.b16 %v3612
      %v4195 = vunpack.c.h.b16 %v3612
      %v4196 = vunpack.c.l.b16 %v3613
      %v4197 = vunpack.c.h.b16 %v3613
      %v4198 = vunpack.c.l.b16 %v3614
      %v4199 = vunpack.c.l.b16 %v3615
      %v4200 = vunpack.c.h.b16 %v3615
      %v4201 = vunpack.c.l.b16 %v3616
      %v4202 = vunpack.c.h.b16 %v3616
      %v4203 = vunpack.c.l.b16 %v3617
      %v4204 = vunpack.c.h.b16 %v3617
      %v4205 = vunpack.c.l.b16 %v3618
      %v4206 = vunpack.c.h.b16 %v3618
      %v4207 = vunpack.c.l.b16 %v3619
      %v4208 = vunpack.c.l.b16 %v3620
      %v4209 = vunpack.c.h.b16 %v3620
      %v4210 = vunpack.c.l.b16 %v3621
      %v4211 = vunpack.c.h.b16 %v3621
      %v4212 = vunpack.c.l.b16 %v3622
      %v4213 = vunpack.c.h.b16 %v3622
      %v4214 = vunpack.c.l.b16 %v3623
      %v4215 = vunpack.c.h.b16 %v3623
      %v4216 = vunpack.c.l.b16 %v3624
      %v4217 = vpack.c.b16 %v3938, %v3929
      %v4218 = vpack.c.b16 %v3939, %v3930
      %v4219 = vpack.c.b16 %v3940, %v3931
      %v4220 = vpack.c.b16 %v3941, %v3932
      %v4221 = vpack.c.b16 %v3942, %v3933
      %v4222 = vpack.c.b16 %v3943, %v3934
      %v4223 = vpack.c.b16 %v3944, %v3935
      %v4224 = vpack.c.b16 %v3945, %v3936
      %v4225 = vpack.c.b16 %v3946, %v3937
      %v4226 = vpack.c.b16 %v3956, %v3947
      %v4227 = vpack.c.b16 %v3957, %v3948
      %v4228 = vpack.c.b16 %v3958, %v3949
      %v4229 = vpack.c.b16 %v3959, %v3950
      %v4230 = vpack.c.b16 %v3960, %v3951
      %v4231 = vpack.c.b16 %v3961, %v3952
      %v4232 = vpack.c.b16 %v3962, %v3953
      %v4233 = vpack.c.b16 %v3963, %v3954
      %v4234 = vpack.c.b16 %v3964, %v3955
      %v4235 = vpack.c.b16 %v3974, %v3965
      %v4236 = vpack.c.b16 %v3975, %v3966
      %v4237 = vpack.c.b16 %v3976, %v3967
      %v4238 = vpack.c.b16 %v3977, %v3968
      %v4239 = vpack.c.b16 %v3978, %v3969
      %v4240 = vpack.c.b16 %v3979, %v3970
      %v4241 = vpack.c.b16 %v3980, %v3971
      %v4242 = vpack.c.b16 %v3981, %v3972
      %v4243 = vpack.c.b16 %v3982, %v3973
      %v4244 = vpack.c.b16 %v3992, %v3983
      %v4245 = vpack.c.b16 %v3993, %v3984
      %v4246 = vpack.c.b16 %v3994, %v3985
      %v4247 = vpack.c.b16 %v3995, %v3986
      %v4248 = vpack.c.b16 %v3996, %v3987
      %v4249 = vpack.c.b16 %v3997, %v3988
      %v4250 = vpack.c.b16 %v3998, %v3989
      %v4251 = vpack.c.b16 %v3999, %v3990
      %v4252 = vpack.c.b16 %v4000, %v3991
      %v4253 = vpack.c.b16 %v4010, %v4001
      %v4254 = vpack.c.b16 %v4011, %v4002
      %v4255 = vpack.c.b16 %v4012, %v4003
      %v4256 = vpack.c.b16 %v4013, %v4004
      %v4257 = vpack.c.b16 %v4014, %v4005
      %v4258 = vpack.c.b16 %v4015, %v4006
      %v4259 = vpack.c.b16 %v4016, %v4007
      %v4260 = vpack.c.b16 %v4017, %v4008
      %v4261 = vpack.c.b16 %v4018, %v4009
      %v4262 = vpack.c.b16 %v4028, %v4019
      %v4263 = vpack.c.b16 %v4029, %v4020
      %v4264 = vpack.c.b16 %v4030, %v4021
      %v4265 = vpack.c.b16 %v4031, %v4022
      %v4266 = vpack.c.b16 %v4032, %v4023
      %v4267 = vpack.c.b16 %v4033, %v4024
      %v4268 = vpack.c.b16 %v4034, %v4025
      %v4269 = vpack.c.b16 %v4035, %v4026
      %v4270 = vpack.c.b16 %v4036, %v4027
      %v4271 = vpack.c.b16 %v4046, %v4037
      %v4272 = vpack.c.b16 %v4047, %v4038
      %v4273 = vpack.c.b16 %v4048, %v4039
      %v4274 = vpack.c.b16 %v4049, %v4040
      %v4275 = vpack.c.b16 %v4050, %v4041
      %v4276 = vpack.c.b16 %v4051, %v4042
      %v4277 = vpack.c.b16 %v4052, %v4043
      %v4278 = vpack.c.b16 %v4053, %v4044
      %v4279 = vpack.c.b16 %v4054, %v4045
      %v4280 = vpack.c.b16 %v4064, %v4055
      %v4281 = vpack.c.b16 %v4065, %v4056
      %v4282 = vpack.c.b16 %v4066, %v4057
      %v4283 = vpack.c.b16 %v4067, %v4058
      %v4284 = vpack.c.b16 %v4068, %v4059
      %v4285 = vpack.c.b16 %v4069, %v4060
      %v4286 = vpack.c.b16 %v4070, %v4061
      %v4287 = vpack.c.b16 %v4071, %v4062
      %v4288 = vpack.c.b16 %v4072, %v4063
      %v4289 = vpack.c.b16 %v4082, %v4073
      %v4290 = vpack.c.b16 %v4083, %v4074
      %v4291 = vpack.c.b16 %v4084, %v4075
      %v4292 = vpack.c.b16 %v4085, %v4076
      %v4293 = vpack.c.b16 %v4086, %v4077
      %v4294 = vpack.c.b16 %v4087, %v4078
      %v4295 = vpack.c.b16 %v4088, %v4079
      %v4296 = vpack.c.b16 %v4089, %v4080
      %v4297 = vpack.c.b16 %v4090, %v4081
      %v4298 = vpack.c.b16 %v4100, %v4091
      %v4299 = vpack.c.b16 %v4101, %v4092
      %v4300 = vpack.c.b16 %v4102, %v4093
      %v4301 = vpack.c.b16 %v4103, %v4094
      %v4302 = vpack.c.b16 %v4104, %v4095
      %v4303 = vpack.c.b16 %v4105, %v4096
      %v4304 = vpack.c.b16 %v4106, %v4097
      %v4305 = vpack.c.b16 %v4107, %v4098
      %v4306 = vpack.c.b16 %v4108, %v4099
      %v4307 = vpack.c.b16 %v4118, %v4109
      %v4308 = vpack.c.b16 %v4119, %v4110
      %v4309 = vpack.c.b16 %v4120, %v4111
      %v4310 = vpack.c.b16 %v4121, %v4112
      %v4311 = vpack.c.b16 %v4122, %v4113
      %v4312 = vpack.c.b16 %v4123, %v4114
      %v4313 = vpack.c.b16 %v4124, %v4115
      %v4314 = vpack.c.b16 %v4125, %v4116
      %v4315 = vpack.c.b16 %v4126, %v4117
      %v4316 = vpack.c.b16 %v4136, %v4127
      %v4317 = vpack.c.b16 %v4137, %v4128
      %v4318 = vpack.c.b16 %v4138, %v4129
      %v4319 = vpack.c.b16 %v4139, %v4130
      %v4320 = vpack.c.b16 %v4140, %v4131
      %v4321 = vpack.c.b16 %v4141, %v4132
      %v4322 = vpack.c.b16 %v4142, %v4133
      %v4323 = vpack.c.b16 %v4143, %v4134
      %v4324 = vpack.c.b16 %v4144, %v4135
      %v4325 = vpack.c.b16 %v4154, %v4145
      %v4326 = vpack.c.b16 %v4155, %v4146
      %v4327 = vpack.c.b16 %v4156, %v4147
      %v4328 = vpack.c.b16 %v4157, %v4148
      %v4329 = vpack.c.b16 %v4158, %v4149
      %v4330 = vpack.c.b16 %v4159, %v4150
      %v4331 = vpack.c.b16 %v4160, %v4151
      %v4332 = vpack.c.b16 %v4161, %v4152
      %v4333 = vpack.c.b16 %v4162, %v4153
      %v4334 = vpack.c.b16 %v4172, %v4163
      %v4335 = vpack.c.b16 %v4173, %v4164
      %v4336 = vpack.c.b16 %v4174, %v4165
      %v4337 = vpack.c.b16 %v4175, %v4166
      %v4338 = vpack.c.b16 %v4176, %v4167
      %v4339 = vpack.c.b16 %v4177, %v4168
      %v4340 = vpack.c.b16 %v4178, %v4169
      %v4341 = vpack.c.b16 %v4179, %v4170
      %v4342 = vpack.c.b16 %v4180, %v4171
      %v4343 = vpack.c.b16 %v4190, %v4181
      %v4344 = vpack.c.b16 %v4191, %v4182
      %v4345 = vpack.c.b16 %v4192, %v4183
      %v4346 = vpack.c.b16 %v4193, %v4184
      %v4347 = vpack.c.b16 %v4194, %v4185
      %v4348 = vpack.c.b16 %v4195, %v4186
      %v4349 = vpack.c.b16 %v4196, %v4187
      %v4350 = vpack.c.b16 %v4197, %v4188
      %v4351 = vpack.c.b16 %v4198, %v4189
      %v4352 = vpack.c.b16 %v4208, %v4199
      %v4353 = vpack.c.b16 %v4209, %v4200
      %v4354 = vpack.c.b16 %v4210, %v4201
      %v4355 = vpack.c.b16 %v4211, %v4202
      %v4356 = vpack.c.b16 %v4212, %v4203
      %v4357 = vpack.c.b16 %v4213, %v4204
      %v4358 = vpack.c.b16 %v4214, %v4205
      %v4359 = vpack.c.b16 %v4215, %v4206
      %v4360 = vpack.c.b16 %v4216, %v4207
      %v4649 = vunpack.c.l.b16 %v3625
      %v4650 = vunpack.c.l.b16 %v3626
      %v4651 = vunpack.c.l.b16 %v3627
      %v4652 = vunpack.c.l.b16 %v3628
      %v4653 = vunpack.c.l.b16 %v3629
      %v4654 = vunpack.c.l.b16 %v3630
      %v4655 = vunpack.c.l.b16 %v3631
      %v4656 = vunpack.c.l.b16 %v3632
      %v4657 = vunpack.c.l.b16 %v3633
      %v4658 = vunpack.c.l.b16 %v3634
      %v4659 = vunpack.c.l.b16 %v3635
      %v4660 = vunpack.c.l.b16 %v3636
      %v4661 = vunpack.c.l.b16 %v3637
      %v4662 = vunpack.c.l.b16 %v3638
      %v4663 = vunpack.c.l.b16 %v3639
      %v4664 = vunpack.c.l.b16 %v3640
      %v4665 = vunpack.c.l.b16 %v3641
      %v4666 = vunpack.c.l.b16 %v3642
      %v4667 = vunpack.c.l.b16 %v3643
      %v4668 = vunpack.c.l.b16 %v3644
      %v4669 = vunpack.c.l.b16 %v3645
      %v4670 = vunpack.c.l.b16 %v3646
      %v4671 = vunpack.c.l.b16 %v3647
      %v4672 = vunpack.c.l.b16 %v3648
      %v4673 = vunpack.c.l.b16 %v3649
      %v4674 = vunpack.c.l.b16 %v3650
      %v4675 = vunpack.c.l.b16 %v3651
      %v4676 = vunpack.c.l.b16 %v3652
      %v4677 = vunpack.c.l.b16 %v3653
      %v4678 = vunpack.c.l.b16 %v3654
      %v4679 = vunpack.c.l.b16 %v3655
      %v4680 = vunpack.c.l.b16 %v3656
      %v4681 = vunpack.c.l.b16 %v3657
      %v4682 = vunpack.c.l.b16 %v3658
      %v4683 = vunpack.c.l.b16 %v3659
      %v4684 = vunpack.c.l.b16 %v3660
      %v4685 = vunpack.c.l.b16 %v3661
      %v4686 = vunpack.c.l.b16 %v3662
      %v4687 = vunpack.c.l.b16 %v3663
      %v4688 = vunpack.c.l.b16 %v3664
      %v4689 = vunpack.c.l.b16 %v3665
      %v4690 = vunpack.c.l.b16 %v3666
      %v4691 = vunpack.c.l.b16 %v3667
      %v4692 = vunpack.c.l.b16 %v3668
      %v4693 = vunpack.c.l.b16 %v3669
      %v4694 = vunpack.c.l.b16 %v3670
      %v4695 = vunpack.c.l.b16 %v3671
      %v4696 = vunpack.c.l.b16 %v3672
      %v4697 = vunpack.c.l.b16 %v3673
      %v4698 = vunpack.c.l.b16 %v3674
      %v4699 = vunpack.c.l.b16 %v3675
      %v4700 = vunpack.c.l.b16 %v3676
      %v4701 = vunpack.c.l.b16 %v3677
      %v4702 = vunpack.c.l.b16 %v3678
      %v4703 = vunpack.c.l.b16 %v3679
      %v4704 = vunpack.c.l.b16 %v3680
      %v4705 = vunpack.c.l.b16 %v3681
      %v4706 = vunpack.c.l.b16 %v3682
      %v4707 = vunpack.c.l.b16 %v3683
      %v4708 = vunpack.c.l.b16 %v3684
      %v4709 = vunpack.c.l.b16 %v3685
      %v4710 = vunpack.c.l.b16 %v3686
      %v4711 = vunpack.c.l.b16 %v3687
      %v4712 = vunpack.c.l.b16 %v3688
      %v4713 = vunpack.c.l.b16 %v3689
      %v4714 = vunpack.c.l.b16 %v3690
      %v4715 = vunpack.c.l.b16 %v3691
      %v4716 = vunpack.c.l.b16 %v3692
      %v4717 = vunpack.c.l.b16 %v3693
      %v4718 = vunpack.c.l.b16 %v3694
      %v4719 = vunpack.c.l.b16 %v3695
      %v4720 = vunpack.c.l.b16 %v3696
      %v4721 = vunpack.c.l.b16 %v3697
      %v4722 = vunpack.c.l.b16 %v3698
      %v4723 = vunpack.c.l.b16 %v3699
      %v4724 = vunpack.c.l.b16 %v3700
      %v4725 = vunpack.c.l.b16 %v3701
      %v4726 = vunpack.c.l.b16 %v3702
      %v4727 = vunpack.c.l.b16 %v3703
      %v4728 = vunpack.c.l.b16 %v3704
      %v4729 = vunpack.c.l.b16 %v3705
      %v4730 = vunpack.c.l.b16 %v3706
      %v4731 = vunpack.c.l.b16 %v3707
      %v4732 = vunpack.c.l.b16 %v3708
      %v4733 = vunpack.c.l.b16 %v3709
      %v4734 = vunpack.c.l.b16 %v3710
      %v4735 = vunpack.c.l.b16 %v3711
      %v4736 = vunpack.c.l.b16 %v3712
      %v4737 = vunpack.c.l.b16 %v3713
      %v4738 = vunpack.c.l.b16 %v3714
      %v4739 = vunpack.c.l.b16 %v3715
      %v4740 = vunpack.c.l.b16 %v3716
      %v4741 = vunpack.c.l.b16 %v3717
      %v4742 = vunpack.c.l.b16 %v3718
      %v4743 = vunpack.c.l.b16 %v3719
      %v4744 = vunpack.c.l.b16 %v3720
      %v4745 = vunpack.c.l.b16 %v3721
      %v4746 = vunpack.c.l.b16 %v3722
      %v4747 = vunpack.c.l.b16 %v3723
      %v4748 = vunpack.c.l.b16 %v3724
      %v4749 = vunpack.c.l.b16 %v3725
      %v4750 = vunpack.c.l.b16 %v3726
      %v4751 = vunpack.c.l.b16 %v3727
      %v4752 = vunpack.c.l.b16 %v3728
      %v4753 = vunpack.c.l.b16 %v3729
      %v4754 = vunpack.c.l.b16 %v3730
      %v4755 = vunpack.c.l.b16 %v3731
      %v4756 = vunpack.c.l.b16 %v3732
      %v4757 = vunpack.c.l.b16 %v3733
      %v4758 = vunpack.c.l.b16 %v3734
      %v4759 = vunpack.c.l.b16 %v3735
      %v4760 = vunpack.c.l.b16 %v3736
      %v4761 = vunpack.c.l.b16 %v3737
      %v4762 = vunpack.c.l.b16 %v3738
      %v4763 = vunpack.c.l.b16 %v3739
      %v4764 = vunpack.c.l.b16 %v3740
      %v4765 = vunpack.c.l.b16 %v3741
      %v4766 = vunpack.c.l.b16 %v3742
      %v4767 = vunpack.c.l.b16 %v3743
      %v4768 = vunpack.c.l.b16 %v3744
      %v4769 = vunpack.c.l.b16 %v3745
      %v4770 = vunpack.c.l.b16 %v3746
      %v4771 = vunpack.c.l.b16 %v3747
      %v4772 = vunpack.c.l.b16 %v3748
      %v4773 = vunpack.c.l.b16 %v3749
      %v4774 = vunpack.c.l.b16 %v3750
      %v4775 = vunpack.c.l.b16 %v3751
      %v4776 = vunpack.c.l.b16 %v3752
      %v4777 = vunpack.c.l.b16 %v3753
      %v4778 = vunpack.c.l.b16 %v3754
      %v4779 = vunpack.c.l.b16 %v3755
      %v4780 = vunpack.c.l.b16 %v3756
      %v4781 = vunpack.c.l.b16 %v3757
      %v4782 = vunpack.c.l.b16 %v3758
      %v4783 = vunpack.c.l.b16 %v3759
      %v4784 = vunpack.c.l.b16 %v3760
      %v4785 = vunpack.c.l.b16 %v3761
      %v4786 = vunpack.c.l.b16 %v3762
      %v4787 = vunpack.c.l.b16 %v3763
      %v4788 = vunpack.c.l.b16 %v3764
      %v4789 = vunpack.c.l.b16 %v3765
      %v4790 = vunpack.c.l.b16 %v3766
      %v4791 = vunpack.c.l.b16 %v3767
      %v4792 = vunpack.c.l.b16 %v3768
      %v4793 = vpack.c.b16 %v4650, %v4649
      %v4794 = vpack.c.b16 %v4652, %v4651
      %v4795 = vpack.c.b16 %v4654, %v4653
      %v4796 = vpack.c.b16 %v4656, %v4655
      %v4797 = vpack.c.b16 %v4658, %v4657
      %v4798 = vpack.c.b16 %v4660, %v4659
      %v4799 = vpack.c.b16 %v4662, %v4661
      %v4800 = vpack.c.b16 %v4664, %v4663
      %v4801 = vpack.c.b16 %v4666, %v4665
      %v4802 = vpack.c.b16 %v4668, %v4667
      %v4803 = vpack.c.b16 %v4670, %v4669
      %v4804 = vpack.c.b16 %v4672, %v4671
      %v4805 = vpack.c.b16 %v4674, %v4673
      %v4806 = vpack.c.b16 %v4676, %v4675
      %v4807 = vpack.c.b16 %v4678, %v4677
      %v4808 = vpack.c.b16 %v4680, %v4679
      %v4809 = vpack.c.b16 %v4682, %v4681
      %v4810 = vpack.c.b16 %v4684, %v4683
      %v4811 = vpack.c.b16 %v4686, %v4685
      %v4812 = vpack.c.b16 %v4688, %v4687
      %v4813 = vpack.c.b16 %v4690, %v4689
      %v4814 = vpack.c.b16 %v4692, %v4691
      %v4815 = vpack.c.b16 %v4694, %v4693
      %v4816 = vpack.c.b16 %v4696, %v4695
      %v4817 = vpack.c.b16 %v4698, %v4697
      %v4818 = vpack.c.b16 %v4700, %v4699
      %v4819 = vpack.c.b16 %v4702, %v4701
      %v4820 = vpack.c.b16 %v4704, %v4703
      %v4821 = vpack.c.b16 %v4706, %v4705
      %v4822 = vpack.c.b16 %v4708, %v4707
      %v4823 = vpack.c.b16 %v4710, %v4709
      %v4824 = vpack.c.b16 %v4712, %v4711
      %v4825 = vpack.c.b16 %v4714, %v4713
      %v4826 = vpack.c.b16 %v4716, %v4715
      %v4827 = vpack.c.b16 %v4718, %v4717
      %v4828 = vpack.c.b16 %v4720, %v4719
      %v4829 = vpack.c.b16 %v4722, %v4721
      %v4830 = vpack.c.b16 %v4724, %v4723
      %v4831 = vpack.c.b16 %v4726, %v4725
      %v4832 = vpack.c.b16 %v4728, %v4727
      %v4833 = vpack.c.b16 %v4730, %v4729
      %v4834 = vpack.c.b16 %v4732, %v4731
      %v4835 = vpack.c.b16 %v4734, %v4733
      %v4836 = vpack.c.b16 %v4736, %v4735
      %v4837 = vpack.c.b16 %v4738, %v4737
      %v4838 = vpack.c.b16 %v4740, %v4739
      %v4839 = vpack.c.b16 %v4742, %v4741
      %v4840 = vpack.c.b16 %v4744, %v4743
      %v4841 = vpack.c.b16 %v4746, %v4745
      %v4842 = vpack.c.b16 %v4748, %v4747
      %v4843 = vpack.c.b16 %v4750, %v4749
      %v4844 = vpack.c.b16 %v4752, %v4751
      %v4845 = vpack.c.b16 %v4754, %v4753
      %v4846 = vpack.c.b16 %v4756, %v4755
      %v4847 = vpack.c.b16 %v4758, %v4757
      %v4848 = vpack.c.b16 %v4760, %v4759
      %v4849 = vpack.c.b16 %v4762, %v4761
      %v4850 = vpack.c.b16 %v4764, %v4763
      %v4851 = vpack.c.b16 %v4766, %v4765
      %v4852 = vpack.c.b16 %v4768, %v4767
      %v4853 = vpack.c.b16 %v4770, %v4769
      %v4854 = vpack.c.b16 %v4772, %v4771
      %v4855 = vpack.c.b16 %v4774, %v4773
      %v4856 = vpack.c.b16 %v4776, %v4775
      %v4857 = vpack.c.b16 %v4778, %v4777
      %v4858 = vpack.c.b16 %v4780, %v4779
      %v4859 = vpack.c.b16 %v4782, %v4781
      %v4860 = vpack.c.b16 %v4784, %v4783
      %v4861 = vpack.c.b16 %v4786, %v4785
      %v4862 = vpack.c.b16 %v4788, %v4787
      %v4863 = vpack.c.b16 %v4790, %v4789
      %v4864 = vpack.c.b16 %v4792, %v4791
      %4937 = vmatpush.bf16.msra.mxu0 %v4800
      %4938 = vmatpush.bf16.msra.mxu0 %v4799
      %4939 = vmatpush.bf16.msra.mxu0 %v4798
      %4940 = vmatpush.bf16.msra.mxu0 %v4797
      %4941 = vmatpush.bf16.msra.mxu0 %v4796
      %4942 = vmatpush.bf16.msra.mxu0 %v4795
      %4943 = vmatpush.bf16.msra.mxu0 %v4794
      %4944 = vmatpush.bf16.msra.mxu0 %v4793
      %4945 = vmatmul.bf16.gmra.mxu0 %v4217
      %v4946 = vpop.f32.mrf.mxu0
      %v4947 = vadd.f32 0.0, %v4946
      %v4948 = vpop.f32.mrf.mxu0
      %v4949 = vadd.f32 0.0, %v4948
      %4950 = vmatmul.bf16.gmra.mxu0 %v4226
      %v4951 = vpop.f32.mrf.mxu0
      %v4952 = vadd.f32 0.0, %v4951
      %v4953 = vpop.f32.mrf.mxu0
      %v4954 = vadd.f32 0.0, %v4953
      %4955 = vmatmul.bf16.gmra.mxu0 %v4235
      %v4956 = vpop.f32.mrf.mxu0
      %v4957 = vadd.f32 0.0, %v4956
      %v4958 = vpop.f32.mrf.mxu0
      %v4959 = vadd.f32 0.0, %v4958
      %4960 = vmatmul.bf16.gmra.mxu0 %v4244
      %v4961 = vpop.f32.mrf.mxu0
      %v4962 = vadd.f32 0.0, %v4961
      %v4963 = vpop.f32.mrf.mxu0
      %v4964 = vadd.f32 0.0, %v4963
      %4965 = vmatmul.bf16.gmra.mxu0 %v4253
      %v4966 = vpop.f32.mrf.mxu0
      %v4967 = vadd.f32 0.0, %v4966
      %v4968 = vpop.f32.mrf.mxu0
      %v4969 = vadd.f32 0.0, %v4968
      %4970 = vmatmul.bf16.gmra.mxu0 %v4262
      %v4971 = vpop.f32.mrf.mxu0
      %v4972 = vadd.f32 0.0, %v4971
      %v4973 = vpop.f32.mrf.mxu0
      %v4974 = vadd.f32 0.0, %v4973
      %4975 = vmatmul.bf16.gmra.mxu0 %v4271
      %v4976 = vpop.f32.mrf.mxu0
      %v4977 = vadd.f32 0.0, %v4976
      %v4978 = vpop.f32.mrf.mxu0
      %v4979 = vadd.f32 0.0, %v4978
      %4980 = vmatmul.bf16.gmra.mxu0 %v4280
      %v4981 = vpop.f32.mrf.mxu0
      %v4982 = vadd.f32 0.0, %v4981
      %v4983 = vpop.f32.mrf.mxu0
      %v4984 = vadd.f32 0.0, %v4983
      %4985 = vmatmul.bf16.gmra.mxu0 %v4289
      %v4986 = vpop.f32.mrf.mxu0
      %v4987 = vadd.f32 0.0, %v4986
      %v4988 = vpop.f32.mrf.mxu0
      %v4989 = vadd.f32 0.0, %v4988
      %4990 = vmatmul.bf16.gmra.mxu0 %v4298
      %v4991 = vpop.f32.mrf.mxu0
      %v4992 = vadd.f32 0.0, %v4991
      %v4993 = vpop.f32.mrf.mxu0
      %v4994 = vadd.f32 0.0, %v4993
      %4995 = vmatmul.bf16.gmra.mxu0 %v4307
      %v4996 = vpop.f32.mrf.mxu0
      %v4997 = vadd.f32 0.0, %v4996
      %v4998 = vpop.f32.mrf.mxu0
      %v4999 = vadd.f32 0.0, %v4998
      %5000 = vmatmul.bf16.gmra.mxu0 %v4316
      %v5001 = vpop.f32.mrf.mxu0
      %v5002 = vadd.f32 0.0, %v5001
      %v5003 = vpop.f32.mrf.mxu0
      %v5004 = vadd.f32 0.0, %v5003
      %5005 = vmatmul.bf16.gmra.mxu0 %v4325
      %v5006 = vpop.f32.mrf.mxu0
      %v5007 = vadd.f32 0.0, %v5006
      %v5008 = vpop.f32.mrf.mxu0
      %v5009 = vadd.f32 0.0, %v5008
      %5010 = vmatmul.bf16.gmra.mxu0 %v4334
      %v5011 = vpop.f32.mrf.mxu0
      %v5012 = vadd.f32 0.0, %v5011
      %v5013 = vpop.f32.mrf.mxu0
      %v5014 = vadd.f32 0.0, %v5013
      %5015 = vmatmul.bf16.gmra.mxu0 %v4343
      %v5016 = vpop.f32.mrf.mxu0
      %v5017 = vadd.f32 0.0, %v5016
      %v5018 = vpop.f32.mrf.mxu0
      %v5019 = vadd.f32 0.0, %v5018
      %5020 = vmatmul.bf16.gmra.mxu0 %v4352
      %v5021 = vpop.f32.mrf.mxu0
      %v5022 = vadd.f32 0.0, %v5021
      %v5023 = vpop.f32.mrf.mxu0
      %v5024 = vadd.f32 0.0, %v5023
      %5025 = vdwg.mxu0
      %5026 = vmatpush.bf16.msra.mxu0 %v4808
      %5027 = vmatpush.bf16.msra.mxu0 %v4807
      %5028 = vmatpush.bf16.msra.mxu0 %v4806
      %5029 = vmatpush.bf16.msra.mxu0 %v4805
      %5030 = vmatpush.bf16.msra.mxu0 %v4804
      %5031 = vmatpush.bf16.msra.mxu0 %v4803
      %5032 = vmatpush.bf16.msra.mxu0 %v4802
      %5033 = vmatpush.bf16.msra.mxu0 %v4801
      %5034 = vmatmul.bf16.gmra.mxu0 %v4218
      %v5035 = vpop.f32.mrf.mxu0
      %v5036 = vadd.f32 %v4947, %v5035
      %v5037 = vpop.f32.mrf.mxu0
      %v5038 = vadd.f32 %v4949, %v5037
      %5039 = vmatmul.bf16.gmra.mxu0 %v4227
      %v5040 = vpop.f32.mrf.mxu0
      %v5041 = vadd.f32 %v4952, %v5040
      %v5042 = vpop.f32.mrf.mxu0
      %v5043 = vadd.f32 %v4954, %v5042
      %5044 = vmatmul.bf16.gmra.mxu0 %v4236
      %v5045 = vpop.f32.mrf.mxu0
      %v5046 = vadd.f32 %v4957, %v5045
      %v5047 = vpop.f32.mrf.mxu0
      %v5048 = vadd.f32 %v4959, %v5047
      %5049 = vmatmul.bf16.gmra.mxu0 %v4245
      %v5050 = vpop.f32.mrf.mxu0
      %v5051 = vadd.f32 %v4962, %v5050
      %v5052 = vpop.f32.mrf.mxu0
      %v5053 = vadd.f32 %v4964, %v5052
      %5054 = vmatmul.bf16.gmra.mxu0 %v4254
      %v5055 = vpop.f32.mrf.mxu0
      %v5056 = vadd.f32 %v4967, %v5055
      %v5057 = vpop.f32.mrf.mxu0
      %v5058 = vadd.f32 %v4969, %v5057
      %5059 = vmatmul.bf16.gmra.mxu0 %v4263
      %v5060 = vpop.f32.mrf.mxu0
      %v5061 = vadd.f32 %v4972, %v5060
      %v5062 = vpop.f32.mrf.mxu0
      %v5063 = vadd.f32 %v4974, %v5062
      %5064 = vmatmul.bf16.gmra.mxu0 %v4272
      %v5065 = vpop.f32.mrf.mxu0
      %v5066 = vadd.f32 %v4977, %v5065
      %v5067 = vpop.f32.mrf.mxu0
      %v5068 = vadd.f32 %v4979, %v5067
      %5069 = vmatmul.bf16.gmra.mxu0 %v4281
      %v5070 = vpop.f32.mrf.mxu0
      %v5071 = vadd.f32 %v4982, %v5070
      %v5072 = vpop.f32.mrf.mxu0
      %v5073 = vadd.f32 %v4984, %v5072
      %5074 = vmatmul.bf16.gmra.mxu0 %v4290
      %v5075 = vpop.f32.mrf.mxu0
      %v5076 = vadd.f32 %v4987, %v5075
      %v5077 = vpop.f32.mrf.mxu0
      %v5078 = vadd.f32 %v4989, %v5077
      %5079 = vmatmul.bf16.gmra.mxu0 %v4299
      %v5080 = vpop.f32.mrf.mxu0
      %v5081 = vadd.f32 %v4992, %v5080
      %v5082 = vpop.f32.mrf.mxu0
      %v5083 = vadd.f32 %v4994, %v5082
      %5084 = vmatmul.bf16.gmra.mxu0 %v4308
      %v5085 = vpop.f32.mrf.mxu0
      %v5086 = vadd.f32 %v4997, %v5085
      %v5087 = vpop.f32.mrf.mxu0
      %v5088 = vadd.f32 %v4999, %v5087
      %5089 = vmatmul.bf16.gmra.mxu0 %v4317
      %v5090 = vpop.f32.mrf.mxu0
      %v5091 = vadd.f32 %v5002, %v5090
      %v5092 = vpop.f32.mrf.mxu0
      %v5093 = vadd.f32 %v5004, %v5092
      %5094 = vmatmul.bf16.gmra.mxu0 %v4326
      %v5095 = vpop.f32.mrf.mxu0
      %v5096 = vadd.f32 %v5007, %v5095
      %v5097 = vpop.f32.mrf.mxu0
      %v5098 = vadd.f32 %v5009, %v5097
      %5099 = vmatmul.bf16.gmra.mxu0 %v4335
      %v5100 = vpop.f32.mrf.mxu0
      %v5101 = vadd.f32 %v5012, %v5100
      %v5102 = vpop.f32.mrf.mxu0
      %v5103 = vadd.f32 %v5014, %v5102
      %5104 = vmatmul.bf16.gmra.mxu0 %v4344
      %v5105 = vpop.f32.mrf.mxu0
      %v5106 = vadd.f32 %v5017, %v5105
      %v5107 = vpop.f32.mrf.mxu0
      %v5108 = vadd.f32 %v5019, %v5107
      %5109 = vmatmul.bf16.gmra.mxu0 %v4353
      %v5110 = vpop.f32.mrf.mxu0
      %v5111 = vadd.f32 %v5022, %v5110
      %v5112 = vpop.f32.mrf.mxu0
      %v5113 = vadd.f32 %v5024, %v5112
      %5114 = vdwg.mxu0
      %5115 = vmatpush.bf16.msra.mxu0 %v4816
      %5116 = vmatpush.bf16.msra.mxu0 %v4815
      %5117 = vmatpush.bf16.msra.mxu0 %v4814
      %5118 = vmatpush.bf16.msra.mxu0 %v4813
      %5119 = vmatpush.bf16.msra.mxu0 %v4812
      %5120 = vmatpush.bf16.msra.mxu0 %v4811
      %5121 = vmatpush.bf16.msra.mxu0 %v4810
      %5122 = vmatpush.bf16.msra.mxu0 %v4809
      %5123 = vmatmul.bf16.gmra.mxu0 %v4219
      %v5124 = vpop.f32.mrf.mxu0
      %v5125 = vadd.f32 %v5036, %v5124
      %v5126 = vpop.f32.mrf.mxu0
      %v5127 = vadd.f32 %v5038, %v5126
      %5128 = vmatmul.bf16.gmra.mxu0 %v4228
      %v5129 = vpop.f32.mrf.mxu0
      %v5130 = vadd.f32 %v5041, %v5129
      %v5131 = vpop.f32.mrf.mxu0
      %v5132 = vadd.f32 %v5043, %v5131
      %5133 = vmatmul.bf16.gmra.mxu0 %v4237
      %v5134 = vpop.f32.mrf.mxu0
      %v5135 = vadd.f32 %v5046, %v5134
      %v5136 = vpop.f32.mrf.mxu0
      %v5137 = vadd.f32 %v5048, %v5136
      %5138 = vmatmul.bf16.gmra.mxu0 %v4246
      %v5139 = vpop.f32.mrf.mxu0
      %v5140 = vadd.f32 %v5051, %v5139
      %v5141 = vpop.f32.mrf.mxu0
      %v5142 = vadd.f32 %v5053, %v5141
      %5143 = vmatmul.bf16.gmra.mxu0 %v4255
      %v5144 = vpop.f32.mrf.mxu0
      %v5145 = vadd.f32 %v5056, %v5144
      %v5146 = vpop.f32.mrf.mxu0
      %v5147 = vadd.f32 %v5058, %v5146
      %5148 = vmatmul.bf16.gmra.mxu0 %v4264
      %v5149 = vpop.f32.mrf.mxu0
      %v5150 = vadd.f32 %v5061, %v5149
      %v5151 = vpop.f32.mrf.mxu0
      %v5152 = vadd.f32 %v5063, %v5151
      %5153 = vmatmul.bf16.gmra.mxu0 %v4273
      %v5154 = vpop.f32.mrf.mxu0
      %v5155 = vadd.f32 %v5066, %v5154
      %v5156 = vpop.f32.mrf.mxu0
      %v5157 = vadd.f32 %v5068, %v5156
      %5158 = vmatmul.bf16.gmra.mxu0 %v4282
      %v5159 = vpop.f32.mrf.mxu0
      %v5160 = vadd.f32 %v5071, %v5159
      %v5161 = vpop.f32.mrf.mxu0
      %v5162 = vadd.f32 %v5073, %v5161
      %5163 = vmatmul.bf16.gmra.mxu0 %v4291
      %v5164 = vpop.f32.mrf.mxu0
      %v5165 = vadd.f32 %v5076, %v5164
      %v5166 = vpop.f32.mrf.mxu0
      %v5167 = vadd.f32 %v5078, %v5166
      %5168 = vmatmul.bf16.gmra.mxu0 %v4300
      %v5169 = vpop.f32.mrf.mxu0
      %v5170 = vadd.f32 %v5081, %v5169
      %v5171 = vpop.f32.mrf.mxu0
      %v5172 = vadd.f32 %v5083, %v5171
      %5173 = vmatmul.bf16.gmra.mxu0 %v4309
      %v5174 = vpop.f32.mrf.mxu0
      %v5175 = vadd.f32 %v5086, %v5174
      %v5176 = vpop.f32.mrf.mxu0
      %v5177 = vadd.f32 %v5088, %v5176
      %5178 = vmatmul.bf16.gmra.mxu0 %v4318
      %v5179 = vpop.f32.mrf.mxu0
      %v5180 = vadd.f32 %v5091, %v5179
      %v5181 = vpop.f32.mrf.mxu0
      %v5182 = vadd.f32 %v5093, %v5181
      %5183 = vmatmul.bf16.gmra.mxu0 %v4327
      %v5184 = vpop.f32.mrf.mxu0
      %v5185 = vadd.f32 %v5096, %v5184
      %v5186 = vpop.f32.mrf.mxu0
      %v5187 = vadd.f32 %v5098, %v5186
      %5188 = vmatmul.bf16.gmra.mxu0 %v4336
      %v5189 = vpop.f32.mrf.mxu0
      %v5190 = vadd.f32 %v5101, %v5189
      %v5191 = vpop.f32.mrf.mxu0
      %v5192 = vadd.f32 %v5103, %v5191
      %5193 = vmatmul.bf16.gmra.mxu0 %v4345
      %v5194 = vpop.f32.mrf.mxu0
      %v5195 = vadd.f32 %v5106, %v5194
      %v5196 = vpop.f32.mrf.mxu0
      %v5197 = vadd.f32 %v5108, %v5196
      %5198 = vmatmul.bf16.gmra.mxu0 %v4354
      %v5199 = vpop.f32.mrf.mxu0
      %v5200 = vadd.f32 %v5111, %v5199
      %v5201 = vpop.f32.mrf.mxu0
      %v5202 = vadd.f32 %v5113, %v5201
      %5203 = vdwg.mxu0
      %5204 = vmatpush.bf16.msra.mxu0 %v4824
      %5205 = vmatpush.bf16.msra.mxu0 %v4823
      %5206 = vmatpush.bf16.msra.mxu0 %v4822
      %5207 = vmatpush.bf16.msra.mxu0 %v4821
      %5208 = vmatpush.bf16.msra.mxu0 %v4820
      %5209 = vmatpush.bf16.msra.mxu0 %v4819
      %5210 = vmatpush.bf16.msra.mxu0 %v4818
      %5211 = vmatpush.bf16.msra.mxu0 %v4817
      %5212 = vmatmul.bf16.gmra.mxu0 %v4220
      %v5213 = vpop.f32.mrf.mxu0
      %v5214 = vadd.f32 %v5125, %v5213
      %v5215 = vpop.f32.mrf.mxu0
      %v5216 = vadd.f32 %v5127, %v5215
      %5217 = vmatmul.bf16.gmra.mxu0 %v4229
      %v5218 = vpop.f32.mrf.mxu0
      %v5219 = vadd.f32 %v5130, %v5218
      %v5220 = vpop.f32.mrf.mxu0
      %v5221 = vadd.f32 %v5132, %v5220
      %5222 = vmatmul.bf16.gmra.mxu0 %v4238
      %v5223 = vpop.f32.mrf.mxu0
      %v5224 = vadd.f32 %v5135, %v5223
      %v5225 = vpop.f32.mrf.mxu0
      %v5226 = vadd.f32 %v5137, %v5225
      %5227 = vmatmul.bf16.gmra.mxu0 %v4247
      %v5228 = vpop.f32.mrf.mxu0
      %v5229 = vadd.f32 %v5140, %v5228
      %v5230 = vpop.f32.mrf.mxu0
      %v5231 = vadd.f32 %v5142, %v5230
      %5232 = vmatmul.bf16.gmra.mxu0 %v4256
      %v5233 = vpop.f32.mrf.mxu0
      %v5234 = vadd.f32 %v5145, %v5233
      %v5235 = vpop.f32.mrf.mxu0
      %v5236 = vadd.f32 %v5147, %v5235
      %5237 = vmatmul.bf16.gmra.mxu0 %v4265
      %v5238 = vpop.f32.mrf.mxu0
      %v5239 = vadd.f32 %v5150, %v5238
      %v5240 = vpop.f32.mrf.mxu0
      %v5241 = vadd.f32 %v5152, %v5240
      %5242 = vmatmul.bf16.gmra.mxu0 %v4274
      %v5243 = vpop.f32.mrf.mxu0
      %v5244 = vadd.f32 %v5155, %v5243
      %v5245 = vpop.f32.mrf.mxu0
      %v5246 = vadd.f32 %v5157, %v5245
      %5247 = vmatmul.bf16.gmra.mxu0 %v4283
      %v5248 = vpop.f32.mrf.mxu0
      %v5249 = vadd.f32 %v5160, %v5248
      %v5250 = vpop.f32.mrf.mxu0
      %v5251 = vadd.f32 %v5162, %v5250
      %5252 = vmatmul.bf16.gmra.mxu0 %v4292
      %v5253 = vpop.f32.mrf.mxu0
      %v5254 = vadd.f32 %v5165, %v5253
      %v5255 = vpop.f32.mrf.mxu0
      %v5256 = vadd.f32 %v5167, %v5255
      %5257 = vmatmul.bf16.gmra.mxu0 %v4301
      %v5258 = vpop.f32.mrf.mxu0
      %v5259 = vadd.f32 %v5170, %v5258
      %v5260 = vpop.f32.mrf.mxu0
      %v5261 = vadd.f32 %v5172, %v5260
      %5262 = vmatmul.bf16.gmra.mxu0 %v4310
      %v5263 = vpop.f32.mrf.mxu0
      %v5264 = vadd.f32 %v5175, %v5263
      %v5265 = vpop.f32.mrf.mxu0
      %v5266 = vadd.f32 %v5177, %v5265
      %5267 = vmatmul.bf16.gmra.mxu0 %v4319
      %v5268 = vpop.f32.mrf.mxu0
      %v5269 = vadd.f32 %v5180, %v5268
      %v5270 = vpop.f32.mrf.mxu0
      %v5271 = vadd.f32 %v5182, %v5270
      %5272 = vmatmul.bf16.gmra.mxu0 %v4328
      %v5273 = vpop.f32.mrf.mxu0
      %v5274 = vadd.f32 %v5185, %v5273
      %v5275 = vpop.f32.mrf.mxu0
      %v5276 = vadd.f32 %v5187, %v5275
      %5277 = vmatmul.bf16.gmra.mxu0 %v4337
      %v5278 = vpop.f32.mrf.mxu0
      %v5279 = vadd.f32 %v5190, %v5278
      %v5280 = vpop.f32.mrf.mxu0
      %v5281 = vadd.f32 %v5192, %v5280
      %5282 = vmatmul.bf16.gmra.mxu0 %v4346
      %v5283 = vpop.f32.mrf.mxu0
      %v5284 = vadd.f32 %v5195, %v5283
      %v5285 = vpop.f32.mrf.mxu0
      %v5286 = vadd.f32 %v5197, %v5285
      %5287 = vmatmul.bf16.gmra.mxu0 %v4355
      %v5288 = vpop.f32.mrf.mxu0
      %v5289 = vadd.f32 %v5200, %v5288
      %v5290 = vpop.f32.mrf.mxu0
      %v5291 = vadd.f32 %v5202, %v5290
      %5292 = vdwg.mxu0
      %5293 = vmatpush.bf16.msra.mxu0 %v4832
      %5294 = vmatpush.bf16.msra.mxu0 %v4831
      %5295 = vmatpush.bf16.msra.mxu0 %v4830
      %5296 = vmatpush.bf16.msra.mxu0 %v4829
      %5297 = vmatpush.bf16.msra.mxu0 %v4828
      %5298 = vmatpush.bf16.msra.mxu0 %v4827
      %5299 = vmatpush.bf16.msra.mxu0 %v4826
      %5300 = vmatpush.bf16.msra.mxu0 %v4825
      %5301 = vmatmul.bf16.gmra.mxu0 %v4221
      %v5302 = vpop.f32.mrf.mxu0
      %v5303 = vadd.f32 %v5214, %v5302
      %v5304 = vpop.f32.mrf.mxu0
      %v5305 = vadd.f32 %v5216, %v5304
      %5306 = vmatmul.bf16.gmra.mxu0 %v4230
      %v5307 = vpop.f32.mrf.mxu0
      %v5308 = vadd.f32 %v5219, %v5307
      %v5309 = vpop.f32.mrf.mxu0
      %v5310 = vadd.f32 %v5221, %v5309
      %5311 = vmatmul.bf16.gmra.mxu0 %v4239
      %v5312 = vpop.f32.mrf.mxu0
      %v5313 = vadd.f32 %v5224, %v5312
      %v5314 = vpop.f32.mrf.mxu0
      %v5315 = vadd.f32 %v5226, %v5314
      %5316 = vmatmul.bf16.gmra.mxu0 %v4248
      %v5317 = vpop.f32.mrf.mxu0
      %v5318 = vadd.f32 %v5229, %v5317
      %v5319 = vpop.f32.mrf.mxu0
      %v5320 = vadd.f32 %v5231, %v5319
      %5321 = vmatmul.bf16.gmra.mxu0 %v4257
      %v5322 = vpop.f32.mrf.mxu0
      %v5323 = vadd.f32 %v5234, %v5322
      %v5324 = vpop.f32.mrf.mxu0
      %v5325 = vadd.f32 %v5236, %v5324
      %5326 = vmatmul.bf16.gmra.mxu0 %v4266
      %v5327 = vpop.f32.mrf.mxu0
      %v5328 = vadd.f32 %v5239, %v5327
      %v5329 = vpop.f32.mrf.mxu0
      %v5330 = vadd.f32 %v5241, %v5329
      %5331 = vmatmul.bf16.gmra.mxu0 %v4275
      %v5332 = vpop.f32.mrf.mxu0
      %v5333 = vadd.f32 %v5244, %v5332
      %v5334 = vpop.f32.mrf.mxu0
      %v5335 = vadd.f32 %v5246, %v5334
      %5336 = vmatmul.bf16.gmra.mxu0 %v4284
      %v5337 = vpop.f32.mrf.mxu0
      %v5338 = vadd.f32 %v5249, %v5337
      %v5339 = vpop.f32.mrf.mxu0
      %v5340 = vadd.f32 %v5251, %v5339
      %5341 = vmatmul.bf16.gmra.mxu0 %v4293
      %v5342 = vpop.f32.mrf.mxu0
      %v5343 = vadd.f32 %v5254, %v5342
      %v5344 = vpop.f32.mrf.mxu0
      %v5345 = vadd.f32 %v5256, %v5344
      %5346 = vmatmul.bf16.gmra.mxu0 %v4302
      %v5347 = vpop.f32.mrf.mxu0
      %v5348 = vadd.f32 %v5259, %v5347
      %v5349 = vpop.f32.mrf.mxu0
      %v5350 = vadd.f32 %v5261, %v5349
      %5351 = vmatmul.bf16.gmra.mxu0 %v4311
      %v5352 = vpop.f32.mrf.mxu0
      %v5353 = vadd.f32 %v5264, %v5352
      %v5354 = vpop.f32.mrf.mxu0
      %v5355 = vadd.f32 %v5266, %v5354
      %5356 = vmatmul.bf16.gmra.mxu0 %v4320
      %v5357 = vpop.f32.mrf.mxu0
      %v5358 = vadd.f32 %v5269, %v5357
      %v5359 = vpop.f32.mrf.mxu0
      %v5360 = vadd.f32 %v5271, %v5359
      %5361 = vmatmul.bf16.gmra.mxu0 %v4329
      %v5362 = vpop.f32.mrf.mxu0
      %v5363 = vadd.f32 %v5274, %v5362
      %v5364 = vpop.f32.mrf.mxu0
      %v5365 = vadd.f32 %v5276, %v5364
      %5366 = vmatmul.bf16.gmra.mxu0 %v4338
      %v5367 = vpop.f32.mrf.mxu0
      %v5368 = vadd.f32 %v5279, %v5367
      %v5369 = vpop.f32.mrf.mxu0
      %v5370 = vadd.f32 %v5281, %v5369
      %5371 = vmatmul.bf16.gmra.mxu0 %v4347
      %v5372 = vpop.f32.mrf.mxu0
      %v5373 = vadd.f32 %v5284, %v5372
      %v5374 = vpop.f32.mrf.mxu0
      %v5375 = vadd.f32 %v5286, %v5374
      %5376 = vmatmul.bf16.gmra.mxu0 %v4356
      %v5377 = vpop.f32.mrf.mxu0
      %v5378 = vadd.f32 %v5289, %v5377
      %v5379 = vpop.f32.mrf.mxu0
      %v5380 = vadd.f32 %v5291, %v5379
      %5381 = vdwg.mxu0
      %5382 = vmatpush.bf16.msra.mxu0 %v4840
      %5383 = vmatpush.bf16.msra.mxu0 %v4839
      %5384 = vmatpush.bf16.msra.mxu0 %v4838
      %5385 = vmatpush.bf16.msra.mxu0 %v4837
      %5386 = vmatpush.bf16.msra.mxu0 %v4836
      %5387 = vmatpush.bf16.msra.mxu0 %v4835
      %5388 = vmatpush.bf16.msra.mxu0 %v4834
      %5389 = vmatpush.bf16.msra.mxu0 %v4833
      %5390 = vmatmul.bf16.gmra.mxu0 %v4222
      %v5391 = vpop.f32.mrf.mxu0
      %v5392 = vadd.f32 %v5303, %v5391
      %v5393 = vpop.f32.mrf.mxu0
      %v5394 = vadd.f32 %v5305, %v5393
      %5395 = vmatmul.bf16.gmra.mxu0 %v4231
      %v5396 = vpop.f32.mrf.mxu0
      %v5397 = vadd.f32 %v5308, %v5396
      %v5398 = vpop.f32.mrf.mxu0
      %v5399 = vadd.f32 %v5310, %v5398
      %5400 = vmatmul.bf16.gmra.mxu0 %v4240
      %v5401 = vpop.f32.mrf.mxu0
      %v5402 = vadd.f32 %v5313, %v5401
      %v5403 = vpop.f32.mrf.mxu0
      %v5404 = vadd.f32 %v5315, %v5403
      %5405 = vmatmul.bf16.gmra.mxu0 %v4249
      %v5406 = vpop.f32.mrf.mxu0
      %v5407 = vadd.f32 %v5318, %v5406
      %v5408 = vpop.f32.mrf.mxu0
      %v5409 = vadd.f32 %v5320, %v5408
      %5410 = vmatmul.bf16.gmra.mxu0 %v4258
      %v5411 = vpop.f32.mrf.mxu0
      %v5412 = vadd.f32 %v5323, %v5411
      %v5413 = vpop.f32.mrf.mxu0
      %v5414 = vadd.f32 %v5325, %v5413
      %5415 = vmatmul.bf16.gmra.mxu0 %v4267
      %v5416 = vpop.f32.mrf.mxu0
      %v5417 = vadd.f32 %v5328, %v5416
      %v5418 = vpop.f32.mrf.mxu0
      %v5419 = vadd.f32 %v5330, %v5418
      %5420 = vmatmul.bf16.gmra.mxu0 %v4276
      %v5421 = vpop.f32.mrf.mxu0
      %v5422 = vadd.f32 %v5333, %v5421
      %v5423 = vpop.f32.mrf.mxu0
      %v5424 = vadd.f32 %v5335, %v5423
      %5425 = vmatmul.bf16.gmra.mxu0 %v4285
      %v5426 = vpop.f32.mrf.mxu0
      %v5427 = vadd.f32 %v5338, %v5426
      %v5428 = vpop.f32.mrf.mxu0
      %v5429 = vadd.f32 %v5340, %v5428
      %5430 = vmatmul.bf16.gmra.mxu0 %v4294
      %v5431 = vpop.f32.mrf.mxu0
      %v5432 = vadd.f32 %v5343, %v5431
      %v5433 = vpop.f32.mrf.mxu0
      %v5434 = vadd.f32 %v5345, %v5433
      %5435 = vmatmul.bf16.gmra.mxu0 %v4303
      %v5436 = vpop.f32.mrf.mxu0
      %v5437 = vadd.f32 %v5348, %v5436
      %v5438 = vpop.f32.mrf.mxu0
      %v5439 = vadd.f32 %v5350, %v5438
      %5440 = vmatmul.bf16.gmra.mxu0 %v4312
      %v5441 = vpop.f32.mrf.mxu0
      %v5442 = vadd.f32 %v5353, %v5441
      %v5443 = vpop.f32.mrf.mxu0
      %v5444 = vadd.f32 %v5355, %v5443
      %5445 = vmatmul.bf16.gmra.mxu0 %v4321
      %v5446 = vpop.f32.mrf.mxu0
      %v5447 = vadd.f32 %v5358, %v5446
      %v5448 = vpop.f32.mrf.mxu0
      %v5449 = vadd.f32 %v5360, %v5448
      %5450 = vmatmul.bf16.gmra.mxu0 %v4330
      %v5451 = vpop.f32.mrf.mxu0
      %v5452 = vadd.f32 %v5363, %v5451
      %v5453 = vpop.f32.mrf.mxu0
      %v5454 = vadd.f32 %v5365, %v5453
      %5455 = vmatmul.bf16.gmra.mxu0 %v4339
      %v5456 = vpop.f32.mrf.mxu0
      %v5457 = vadd.f32 %v5368, %v5456
      %v5458 = vpop.f32.mrf.mxu0
      %v5459 = vadd.f32 %v5370, %v5458
      %5460 = vmatmul.bf16.gmra.mxu0 %v4348
      %v5461 = vpop.f32.mrf.mxu0
      %v5462 = vadd.f32 %v5373, %v5461
      %v5463 = vpop.f32.mrf.mxu0
      %v5464 = vadd.f32 %v5375, %v5463
      %5465 = vmatmul.bf16.gmra.mxu0 %v4357
      %v5466 = vpop.f32.mrf.mxu0
      %v5467 = vadd.f32 %v5378, %v5466
      %v5468 = vpop.f32.mrf.mxu0
      %v5469 = vadd.f32 %v5380, %v5468
      %5470 = vdwg.mxu0
      %5471 = vmatpush.bf16.msra.mxu0 %v4848
      %5472 = vmatpush.bf16.msra.mxu0 %v4847
      %5473 = vmatpush.bf16.msra.mxu0 %v4846
      %5474 = vmatpush.bf16.msra.mxu0 %v4845
      %5475 = vmatpush.bf16.msra.mxu0 %v4844
      %5476 = vmatpush.bf16.msra.mxu0 %v4843
      %5477 = vmatpush.bf16.msra.mxu0 %v4842
      %5478 = vmatpush.bf16.msra.mxu0 %v4841
      %5479 = vmatmul.bf16.gmra.mxu0 %v4223
      %v5480 = vpop.f32.mrf.mxu0
      %v5481 = vadd.f32 %v5392, %v5480
      %v5482 = vpop.f32.mrf.mxu0
      %v5483 = vadd.f32 %v5394, %v5482
      %5484 = vmatmul.bf16.gmra.mxu0 %v4232
      %v5485 = vpop.f32.mrf.mxu0
      %v5486 = vadd.f32 %v5397, %v5485
      %v5487 = vpop.f32.mrf.mxu0
      %v5488 = vadd.f32 %v5399, %v5487
      %5489 = vmatmul.bf16.gmra.mxu0 %v4241
      %v5490 = vpop.f32.mrf.mxu0
      %v5491 = vadd.f32 %v5402, %v5490
      %v5492 = vpop.f32.mrf.mxu0
      %v5493 = vadd.f32 %v5404, %v5492
      %5494 = vmatmul.bf16.gmra.mxu0 %v4250
      %v5495 = vpop.f32.mrf.mxu0
      %v5496 = vadd.f32 %v5407, %v5495
      %v5497 = vpop.f32.mrf.mxu0
      %v5498 = vadd.f32 %v5409, %v5497
      %5499 = vmatmul.bf16.gmra.mxu0 %v4259
      %v5500 = vpop.f32.mrf.mxu0
      %v5501 = vadd.f32 %v5412, %v5500
      %v5502 = vpop.f32.mrf.mxu0
      %v5503 = vadd.f32 %v5414, %v5502
      %5504 = vmatmul.bf16.gmra.mxu0 %v4268
      %v5505 = vpop.f32.mrf.mxu0
      %v5506 = vadd.f32 %v5417, %v5505
      %v5507 = vpop.f32.mrf.mxu0
      %v5508 = vadd.f32 %v5419, %v5507
      %5509 = vmatmul.bf16.gmra.mxu0 %v4277
      %v5510 = vpop.f32.mrf.mxu0
      %v5511 = vadd.f32 %v5422, %v5510
      %v5512 = vpop.f32.mrf.mxu0
      %v5513 = vadd.f32 %v5424, %v5512
      %5514 = vmatmul.bf16.gmra.mxu0 %v4286
      %v5515 = vpop.f32.mrf.mxu0
      %v5516 = vadd.f32 %v5427, %v5515
      %v5517 = vpop.f32.mrf.mxu0
      %v5518 = vadd.f32 %v5429, %v5517
      %5519 = vmatmul.bf16.gmra.mxu0 %v4295
      %v5520 = vpop.f32.mrf.mxu0
      %v5521 = vadd.f32 %v5432, %v5520
      %v5522 = vpop.f32.mrf.mxu0
      %v5523 = vadd.f32 %v5434, %v5522
      %5524 = vmatmul.bf16.gmra.mxu0 %v4304
      %v5525 = vpop.f32.mrf.mxu0
      %v5526 = vadd.f32 %v5437, %v5525
      %v5527 = vpop.f32.mrf.mxu0
      %v5528 = vadd.f32 %v5439, %v5527
      %5529 = vmatmul.bf16.gmra.mxu0 %v4313
      %v5530 = vpop.f32.mrf.mxu0
      %v5531 = vadd.f32 %v5442, %v5530
      %v5532 = vpop.f32.mrf.mxu0
      %v5533 = vadd.f32 %v5444, %v5532
      %5534 = vmatmul.bf16.gmra.mxu0 %v4322
      %v5535 = vpop.f32.mrf.mxu0
      %v5536 = vadd.f32 %v5447, %v5535
      %v5537 = vpop.f32.mrf.mxu0
      %v5538 = vadd.f32 %v5449, %v5537
      %5539 = vmatmul.bf16.gmra.mxu0 %v4331
      %v5540 = vpop.f32.mrf.mxu0
      %v5541 = vadd.f32 %v5452, %v5540
      %v5542 = vpop.f32.mrf.mxu0
      %v5543 = vadd.f32 %v5454, %v5542
      %5544 = vmatmul.bf16.gmra.mxu0 %v4340
      %v5545 = vpop.f32.mrf.mxu0
      %v5546 = vadd.f32 %v5457, %v5545
      %v5547 = vpop.f32.mrf.mxu0
      %v5548 = vadd.f32 %v5459, %v5547
      %5549 = vmatmul.bf16.gmra.mxu0 %v4349
      %v5550 = vpop.f32.mrf.mxu0
      %v5551 = vadd.f32 %v5462, %v5550
      %v5552 = vpop.f32.mrf.mxu0
      %v5553 = vadd.f32 %v5464, %v5552
      %5554 = vmatmul.bf16.gmra.mxu0 %v4358
      %v5555 = vpop.f32.mrf.mxu0
      %v5556 = vadd.f32 %v5467, %v5555
      %v5557 = vpop.f32.mrf.mxu0
      %v5558 = vadd.f32 %v5469, %v5557
      %5559 = vdwg.mxu0
      %5560 = vmatpush.bf16.msra.mxu0 %v4856
      %5561 = vmatpush.bf16.msra.mxu0 %v4855
      %5562 = vmatpush.bf16.msra.mxu0 %v4854
      %5563 = vmatpush.bf16.msra.mxu0 %v4853
      %5564 = vmatpush.bf16.msra.mxu0 %v4852
      %5565 = vmatpush.bf16.msra.mxu0 %v4851
      %5566 = vmatpush.bf16.msra.mxu0 %v4850
      %5567 = vmatpush.bf16.msra.mxu0 %v4849
      %5568 = vmatmul.bf16.gmra.mxu0 %v4224
      %v5569 = vpop.f32.mrf.mxu0
      %v5570 = vadd.f32 %v5481, %v5569
      %v5571 = vpop.f32.mrf.mxu0
      %v5572 = vadd.f32 %v5483, %v5571
      %5573 = vmatmul.bf16.gmra.mxu0 %v4233
      %v5574 = vpop.f32.mrf.mxu0
      %v5575 = vadd.f32 %v5486, %v5574
      %v5576 = vpop.f32.mrf.mxu0
      %v5577 = vadd.f32 %v5488, %v5576
      %5578 = vmatmul.bf16.gmra.mxu0 %v4242
      %v5579 = vpop.f32.mrf.mxu0
      %v5580 = vadd.f32 %v5491, %v5579
      %v5581 = vpop.f32.mrf.mxu0
      %v5582 = vadd.f32 %v5493, %v5581
      %5583 = vmatmul.bf16.gmra.mxu0 %v4251
      %v5584 = vpop.f32.mrf.mxu0
      %v5585 = vadd.f32 %v5496, %v5584
      %v5586 = vpop.f32.mrf.mxu0
      %v5587 = vadd.f32 %v5498, %v5586
      %5588 = vmatmul.bf16.gmra.mxu0 %v4260
      %v5589 = vpop.f32.mrf.mxu0
      %v5590 = vadd.f32 %v5501, %v5589
      %v5591 = vpop.f32.mrf.mxu0
      %v5592 = vadd.f32 %v5503, %v5591
      %5593 = vmatmul.bf16.gmra.mxu0 %v4269
      %v5594 = vpop.f32.mrf.mxu0
      %v5595 = vadd.f32 %v5506, %v5594
      %v5596 = vpop.f32.mrf.mxu0
      %v5597 = vadd.f32 %v5508, %v5596
      %5598 = vmatmul.bf16.gmra.mxu0 %v4278
      %v5599 = vpop.f32.mrf.mxu0
      %v5600 = vadd.f32 %v5511, %v5599
      %v5601 = vpop.f32.mrf.mxu0
      %v5602 = vadd.f32 %v5513, %v5601
      %5603 = vmatmul.bf16.gmra.mxu0 %v4287
      %v5604 = vpop.f32.mrf.mxu0
      %v5605 = vadd.f32 %v5516, %v5604
      %v5606 = vpop.f32.mrf.mxu0
      %v5607 = vadd.f32 %v5518, %v5606
      %5608 = vmatmul.bf16.gmra.mxu0 %v4296
      %v5609 = vpop.f32.mrf.mxu0
      %v5610 = vadd.f32 %v5521, %v5609
      %v5611 = vpop.f32.mrf.mxu0
      %v5612 = vadd.f32 %v5523, %v5611
      %5613 = vmatmul.bf16.gmra.mxu0 %v4305
      %v5614 = vpop.f32.mrf.mxu0
      %v5615 = vadd.f32 %v5526, %v5614
      %v5616 = vpop.f32.mrf.mxu0
      %v5617 = vadd.f32 %v5528, %v5616
      %5618 = vmatmul.bf16.gmra.mxu0 %v4314
      %v5619 = vpop.f32.mrf.mxu0
      %v5620 = vadd.f32 %v5531, %v5619
      %v5621 = vpop.f32.mrf.mxu0
      %v5622 = vadd.f32 %v5533, %v5621
      %5623 = vmatmul.bf16.gmra.mxu0 %v4323
      %v5624 = vpop.f32.mrf.mxu0
      %v5625 = vadd.f32 %v5536, %v5624
      %v5626 = vpop.f32.mrf.mxu0
      %v5627 = vadd.f32 %v5538, %v5626
      %5628 = vmatmul.bf16.gmra.mxu0 %v4332
      %v5629 = vpop.f32.mrf.mxu0
      %v5630 = vadd.f32 %v5541, %v5629
      %v5631 = vpop.f32.mrf.mxu0
      %v5632 = vadd.f32 %v5543, %v5631
      %5633 = vmatmul.bf16.gmra.mxu0 %v4341
      %v5634 = vpop.f32.mrf.mxu0
      %v5635 = vadd.f32 %v5546, %v5634
      %v5636 = vpop.f32.mrf.mxu0
      %v5637 = vadd.f32 %v5548, %v5636
      %5638 = vmatmul.bf16.gmra.mxu0 %v4350
      %v5639 = vpop.f32.mrf.mxu0
      %v5640 = vadd.f32 %v5551, %v5639
      %v5641 = vpop.f32.mrf.mxu0
      %v5642 = vadd.f32 %v5553, %v5641
      %5643 = vmatmul.bf16.gmra.mxu0 %v4359
      %v5644 = vpop.f32.mrf.mxu0
      %v5645 = vadd.f32 %v5556, %v5644
      %v5646 = vpop.f32.mrf.mxu0
      %v5647 = vadd.f32 %v5558, %v5646
      %5648 = vdwg.mxu0
      %5649 = vmatpush.bf16.msra.mxu0 %v4864
      %5650 = vmatpush.bf16.msra.mxu0 %v4863
      %5651 = vmatpush.bf16.msra.mxu0 %v4862
      %5652 = vmatpush.bf16.msra.mxu0 %v4861
      %5653 = vmatpush.bf16.msra.mxu0 %v4860
      %5654 = vmatpush.bf16.msra.mxu0 %v4859
      %5655 = vmatpush.bf16.msra.mxu0 %v4858
      %5656 = vmatpush.bf16.msra.mxu0 %v4857
      %5657 = vmatmul.bf16.gmra.mxu0 %v4225
      %v5658 = vpop.f32.mrf.mxu0
      %v5659 = vadd.f32 %v5570, %v5658
      %v5660 = vpop.f32.mrf.mxu0
      %v5661 = vadd.f32 %v5572, %v5660
      %5662 = vmatmul.bf16.gmra.mxu0 %v4234
      %v5663 = vpop.f32.mrf.mxu0
      %v5664 = vadd.f32 %v5575, %v5663
      %v5665 = vpop.f32.mrf.mxu0
      %v5666 = vadd.f32 %v5577, %v5665
      %5667 = vmatmul.bf16.gmra.mxu0 %v4243
      %v5668 = vpop.f32.mrf.mxu0
      %v5669 = vadd.f32 %v5580, %v5668
      %v5670 = vpop.f32.mrf.mxu0
      %v5671 = vadd.f32 %v5582, %v5670
      %5672 = vmatmul.bf16.gmra.mxu0 %v4252
      %v5673 = vpop.f32.mrf.mxu0
      %v5674 = vadd.f32 %v5585, %v5673
      %v5675 = vpop.f32.mrf.mxu0
      %v5676 = vadd.f32 %v5587, %v5675
      %5677 = vmatmul.bf16.gmra.mxu0 %v4261
      %v5678 = vpop.f32.mrf.mxu0
      %v5679 = vadd.f32 %v5590, %v5678
      %v5680 = vpop.f32.mrf.mxu0
      %v5681 = vadd.f32 %v5592, %v5680
      %5682 = vmatmul.bf16.gmra.mxu0 %v4270
      %v5683 = vpop.f32.mrf.mxu0
      %v5684 = vadd.f32 %v5595, %v5683
      %v5685 = vpop.f32.mrf.mxu0
      %v5686 = vadd.f32 %v5597, %v5685
      %5687 = vmatmul.bf16.gmra.mxu0 %v4279
      %v5688 = vpop.f32.mrf.mxu0
      %v5689 = vadd.f32 %v5600, %v5688
      %v5690 = vpop.f32.mrf.mxu0
      %v5691 = vadd.f32 %v5602, %v5690
      %5692 = vmatmul.bf16.gmra.mxu0 %v4288
      %v5693 = vpop.f32.mrf.mxu0
      %v5694 = vadd.f32 %v5605, %v5693
      %v5695 = vpop.f32.mrf.mxu0
      %v5696 = vadd.f32 %v5607, %v5695
      %5697 = vmatmul.bf16.gmra.mxu0 %v4297
      %v5698 = vpop.f32.mrf.mxu0
      %v5699 = vadd.f32 %v5610, %v5698
      %v5700 = vpop.f32.mrf.mxu0
      %v5701 = vadd.f32 %v5612, %v5700
      %5702 = vmatmul.bf16.gmra.mxu0 %v4306
      %v5703 = vpop.f32.mrf.mxu0
      %v5704 = vadd.f32 %v5615, %v5703
      %v5705 = vpop.f32.mrf.mxu0
      %v5706 = vadd.f32 %v5617, %v5705
      %5707 = vmatmul.bf16.gmra.mxu0 %v4315
      %v5708 = vpop.f32.mrf.mxu0
      %v5709 = vadd.f32 %v5620, %v5708
      %v5710 = vpop.f32.mrf.mxu0
      %v5711 = vadd.f32 %v5622, %v5710
      %5712 = vmatmul.bf16.gmra.mxu0 %v4324
      %v5713 = vpop.f32.mrf.mxu0
      %v5714 = vadd.f32 %v5625, %v5713
      %v5715 = vpop.f32.mrf.mxu0
      %v5716 = vadd.f32 %v5627, %v5715
      %5717 = vmatmul.bf16.gmra.mxu0 %v4333
      %v5718 = vpop.f32.mrf.mxu0
      %v5719 = vadd.f32 %v5630, %v5718
      %v5720 = vpop.f32.mrf.mxu0
      %v5721 = vadd.f32 %v5632, %v5720
      %5722 = vmatmul.bf16.gmra.mxu0 %v4342
      %v5723 = vpop.f32.mrf.mxu0
      %v5724 = vadd.f32 %v5635, %v5723
      %v5725 = vpop.f32.mrf.mxu0
      %v5726 = vadd.f32 %v5637, %v5725
      %5727 = vmatmul.bf16.gmra.mxu0 %v4351
      %v5728 = vpop.f32.mrf.mxu0
      %v5729 = vadd.f32 %v5640, %v5728
      %v5730 = vpop.f32.mrf.mxu0
      %v5731 = vadd.f32 %v5642, %v5730
      %5732 = vmatmul.bf16.gmra.mxu0 %v4360
      %v5733 = vpop.f32.mrf.mxu0
      %v5734 = vadd.f32 %v5645, %v5733
      %v5735 = vpop.f32.mrf.mxu0
      %v5736 = vadd.f32 %v5647, %v5735
      %5737 = vdwg.mxu0
      %v5738 = vadd.f32 %v5659, %v5661
      %v5739 = vadd.f32 %v5738, %v5664
      %v5740 = vadd.f32 %v5739, %v5666
      %v5741 = vadd.f32 %v5740, %v5669
      %v5742 = vadd.f32 %v5741, %v5671
      %v5743 = vadd.f32 %v5742, %v5674
      %v5744 = vadd.f32 %v5743, %v5676
      %v5745 = vadd.f32 %v5744, %v5679
      %v5746 = vadd.f32 %v5745, %v5681
      %v5747 = vadd.f32 %v5746, %v5684
      %v5748 = vadd.f32 %v5747, %v5686
      %v5749 = vadd.f32 %v5748, %v5689
      %v5750 = vadd.f32 %v5749, %v5691
      %v5751 = vadd.f32 %v5750, %v5694
      %v5752 = vadd.f32 %v5751, %v5696
      %v5753 = vadd.f32 %v5752, %v5699
      %v5754 = vadd.f32 %v5753, %v5701
      %v5755 = vadd.f32 %v5754, %v5704
      %v5756 = vadd.f32 %v5755, %v5706
      %v5757 = vadd.f32 %v5756, %v5709
      %v5758 = vadd.f32 %v5757, %v5711
      %v5759 = vadd.f32 %v5758, %v5714
      %v5760 = vadd.f32 %v5759, %v5716
      %v5761 = vadd.f32 %v5760, %v5719
      %v5762 = vadd.f32 %v5761, %v5721
      %v5763 = vadd.f32 %v5762, %v5724
      %v5764 = vadd.f32 %v5763, %v5726
      %v5765 = vadd.f32 %v5764, %v5729
      %v5766 = vadd.f32 %v5765, %v5731
      %v5767 = vadd.f32 %v5766, %v5734
      %v5768 = vadd.f32 %v5767, %v5736
      %v5769 = vrot.slane %v5768, 4
      %v5770 = vadd.f32 %v5768, %v5769
      %v5771 = vrot.slane %v5770, 2
      %v5772 = vadd.f32 %v5770, %v5771
      %v5773 = vrot.slane %v5772, 1
      %v5774 = vadd.f32 %v5772, %v5773
      %5775 = vst [vmem:[%s235] sm:$0x1] %v5774
      %v5776 = vmul.f32 %v5659, %v5659
      %v5777 = vmul.f32 %v5661, %v5661
      %v5778 = vmul.f32 %v5664, %v5664
      %v5779 = vmul.f32 %v5666, %v5666
      %v5780 = vmul.f32 %v5669, %v5669
      %v5781 = vmul.f32 %v5671, %v5671
      %v5782 = vmul.f32 %v5674, %v5674
      %v5783 = vmul.f32 %v5676, %v5676
      %v5784 = vmul.f32 %v5679, %v5679
      %v5785 = vmul.f32 %v5681, %v5681
      %v5786 = vmul.f32 %v5684, %v5684
      %v5787 = vmul.f32 %v5686, %v5686
      %v5788 = vmul.f32 %v5689, %v5689
      %v5789 = vmul.f32 %v5691, %v5691
      %v5790 = vmul.f32 %v5694, %v5694
      %v5791 = vmul.f32 %v5696, %v5696
      %v5792 = vmul.f32 %v5699, %v5699
      %v5793 = vmul.f32 %v5701, %v5701
      %v5794 = vmul.f32 %v5704, %v5704
      %v5795 = vmul.f32 %v5706, %v5706
      %v5796 = vmul.f32 %v5709, %v5709
      %v5797 = vmul.f32 %v5711, %v5711
      %v5798 = vmul.f32 %v5714, %v5714
      %v5799 = vmul.f32 %v5716, %v5716
      %v5800 = vmul.f32 %v5719, %v5719
      %v5801 = vmul.f32 %v5721, %v5721
      %v5802 = vmul.f32 %v5724, %v5724
      %v5803 = vmul.f32 %v5726, %v5726
      %v5804 = vmul.f32 %v5729, %v5729
      %v5805 = vmul.f32 %v5731, %v5731
      %v5806 = vmul.f32 %v5734, %v5734
      %v5807 = vmul.f32 %v5736, %v5736
      %v5808 = vadd.f32 %v5776, %v5777
      %v5809 = vadd.f32 %v5808, %v5778
      %v5810 = vadd.f32 %v5809, %v5779
      %v5811 = vadd.f32 %v5810, %v5780
      %v5812 = vadd.f32 %v5811, %v5781
      %v5813 = vadd.f32 %v5812, %v5782
      %v5814 = vadd.f32 %v5813, %v5783
      %v5815 = vadd.f32 %v5814, %v5784
      %v5816 = vadd.f32 %v5815, %v5785
      %v5817 = vadd.f32 %v5816, %v5786
      %v5818 = vadd.f32 %v5817, %v5787
      %v5819 = vadd.f32 %v5818, %v5788
      %v5820 = vadd.f32 %v5819, %v5789
      %v5821 = vadd.f32 %v5820, %v5790
      %v5822 = vadd.f32 %v5821, %v5791
      %v5823 = vadd.f32 %v5822, %v5792
      %v5824 = vadd.f32 %v5823, %v5793
      %v5825 = vadd.f32 %v5824, %v5794
      %v5826 = vadd.f32 %v5825, %v5795
      %v5827 = vadd.f32 %v5826, %v5796
      %v5828 = vadd.f32 %v5827, %v5797
      %v5829 = vadd.f32 %v5828, %v5798
      %v5830 = vadd.f32 %v5829, %v5799
      %v5831 = vadd.f32 %v5830, %v5800
      %v5832 = vadd.f32 %v5831, %v5801
      %v5833 = vadd.f32 %v5832, %v5802
      %v5834 = vadd.f32 %v5833, %v5803
      %v5835 = vadd.f32 %v5834, %v5804
      %v5836 = vadd.f32 %v5835, %v5805
      %v5837 = vadd.f32 %v5836, %v5806
      %v5838 = vadd.f32 %v5837, %v5807
      %v5839 = vrot.slane %v5838, 4
      %v5840 = vadd.f32 %v5838, %v5839
      %v5841 = vrot.slane %v5840, 2
      %v5842 = vadd.f32 %v5840, %v5841
      %v5843 = vrot.slane %v5842, 1
      %v5844 = vadd.f32 %v5842, %v5843
      %5845 = vst [vmem:[%s235 + $0x1] sm:$0x1] %v5844
      %5846 = vst [vmem:[%s231] sm:$0xff] %v5659
      %5847 = vst [vmem:[%s231 + $0x8] sm:$0xff] %v5661
      %5848 = vst [vmem:[%s231 + $0x10] sm:$0xff] %v5664
      %5849 = vst [vmem:[%s231 + $0x18] sm:$0xff] %v5666
      %5850 = vst [vmem:[%s231 + $0x20] sm:$0xff] %v5669
      %5851 = vst [vmem:[%s231 + $0x28] sm:$0xff] %v5671
      %5852 = vst [vmem:[%s231 + $0x30] sm:$0xff] %v5674
      %5853 = vst [vmem:[%s231 + $0x38] sm:$0xff] %v5676
      %5854 = vst [vmem:[%s231 + $0x40] sm:$0xff] %v5679
      %5855 = vst [vmem:[%s231 + $0x48] sm:$0xff] %v5681
      %5856 = vst [vmem:[%s231 + $0x50] sm:$0xff] %v5684
      %5857 = vst [vmem:[%s231 + $0x58] sm:$0xff] %v5686
      %5858 = vst [vmem:[%s231 + $0x60] sm:$0xff] %v5689
      %5859 = vst [vmem:[%s231 + $0x68] sm:$0xff] %v5691
      %5860 = vst [vmem:[%s231 + $0x70] sm:$0xff] %v5694
      %5861 = vst [vmem:[%s231 + $0x78] sm:$0xff] %v5696
      %5862 = vst [vmem:[%s231 + $0x80] sm:$0xff] %v5699
      %5863 = vst [vmem:[%s231 + $0x88] sm:$0xff] %v5701
      %5864 = vst [vmem:[%s231 + $0x90] sm:$0xff] %v5704
      %5865 = vst [vmem:[%s231 + $0x98] sm:$0xff] %v5706
      %5866 = vst [vmem:[%s231 + $0xa0] sm:$0xff] %v5709
      %5867 = vst [vmem:[%s231 + $0xa8] sm:$0xff] %v5711
      %5868 = vst [vmem:[%s231 + $0xb0] sm:$0xff] %v5714
      %5869 = vst [vmem:[%s231 + $0xb8] sm:$0xff] %v5716
      %5870 = vst [vmem:[%s231 + $0xc0] sm:$0xff] %v5719
      %5871 = vst [vmem:[%s231 + $0xc8] sm:$0xff] %v5721
      %5872 = vst [vmem:[%s231 + $0xd0] sm:$0xff] %v5724
      %5873 = vst [vmem:[%s231 + $0xd8] sm:$0xff] %v5726
      %5874 = vst [vmem:[%s231 + $0xe0] sm:$0xff] %v5729
      %5875 = vst [vmem:[%s231 + $0xe8] sm:$0xff] %v5731
      %5876 = vst [vmem:[%s231 + $0xf0] sm:$0xff] %v5734
      %5877 = vst [vmem:[%s231 + $0xf8] sm:$0xff] %v5736
      %p5878 = scmp.lt.s32.totalorder %s17, 1
      %s5879 = scalar_select %p5878, %s17, 1
      %s5880 = smul.addr %s5879, 32
      %s5881 = smul.addr %s5880, 8
      %s5882 = scalar_lea.vmem %s4, %s5881
      %p5883 = scmp.lt.s32.totalorder %s17, 1
      %s5884 = scalar_select %p5883, %s17, 1
      %s5885 = smul.addr %s5884, 2
      %s5886 = scalar_lea.vmem %s5, %s5885
      // Predicated region
      $region37: #{basic_block.4} parent=35 // pred_check
        %p5887 = pneg %p124
      $region38: #{basic_block.4} parent=35 // pred_check_branch
        %5889 = sbr.rel (%p5887) target = $region40
      $region39: #{basic_block.4} parent=35 // pred_region
        _
      $region40: #{basic_block.4} parent=35 // pred_fallthru
        _
      // Predicated region
      $region41: #{basic_block.4} parent=35 // pred_check
        %p5890 = pneg %p150
      $region42: #{basic_block.4} parent=35 // pred_check_branch
        %5892 = sbr.rel (%p5890) target = $region44
      $region43: #{basic_block.4} parent=35 // pred_region
        _
      $region44: #{basic_block.4} parent=35 // pred_fallthru
        _
    $region36: #{basic_block.4} parent=5 // pred_fallthru
      _
    %p5893 = scmp.le.s32.totalorder 2, %s12
    // Predicated region
    $region45: #{basic_block.4} parent=5 // pred_check
      %p5894 = pneg %p5893
    $region46: #{basic_block.4} parent=5 // pred_check_branch
      %5896 = sbr.rel (%p5894) target = $region48
    $region47: #{basic_block.4} parent=5 // pred_region
      %s5897 = ssub.s32 %s12, 2
      // Predicated region
      $region49: #{basic_block.4} parent=47 // pred_check
        %p5898 = pneg %p130
      $region50: #{basic_block.4} parent=47 // pred_check_branch
        %5900 = sbr.rel (%p5898) target = $region52
      $region51: #{basic_block.4} parent=47 // pred_region
        %p5901 = scmp.lt.s32.totalorder %s18, 1
        %s5902 = scalar_select %p5901, %s18, 1
        %s5903 = smul.addr %s5902, 32
        %s5904 = smul.addr %s5903, 8
        %s5905 = scalar_lea.vmem %s4, %s5904
      $region52: #{basic_block.4} parent=47 // pred_fallthru
        _
      // Predicated region
      $region53: #{basic_block.4} parent=47 // pred_check
        %p5906 = pneg %p156
      $region54: #{basic_block.4} parent=47 // pred_check_branch
        %5908 = sbr.rel (%p5906) target = $region56
      $region55: #{basic_block.4} parent=47 // pred_region
        %p5909 = scmp.lt.s32.totalorder %s18, 1
        %s5910 = scalar_select %p5909, %s18, 1
        %s5911 = smul.addr %s5910, 2
        %s5912 = scalar_lea.vmem %s5, %s5911
      $region56: #{basic_block.4} parent=47 // pred_fallthru
        _
    $region48: #{basic_block.4} parent=5 // pred_fallthru
      _
  $region6: #{basic_block.4} parent=0 // loop_footer
    %s16 = sadd.s32 1, %s12
  $region7: #{basic_block.4} parent=0 // loop_footer_branch
    %11 = sbr.rel target = $region3
  $region8: #{basic_block.4} parent=0 // loop_exit
    _

</llo_original>
